<compile_context>
chip_gen: v7x
topology: tpu7x:2x2x1
jax: 0.10.0
libtpu: 0.0.40
codegen_flags: <defaults>
</compile_context>

<pallas_src>
import functools

import jax
import jax.numpy as jnp
from jax.experimental import pallas as pl
from jax.experimental.pallas import tpu as pltpu

BN_EPS = 1e-5
MXU_DTYPE = jnp.bfloat16      # matmul operand dtype (accumulation stays f32)
OUT_PAD = 128                 # lane padding for the narrow (9 / k) outputs
CONV3_CHUNK = 256             # conv3 output-channel chunk inside pass B


# ---------------------------------------------------------------------------
# Generation / tiling configuration (trace-time decisions)
# ---------------------------------------------------------------------------
def _pass_b_config():
    """(use_gram_reductions, row_tile_target) per TPU generation.

    v5e and older: the 128x128 MXU is already saturated by the conv3 matmul,
    so the s3/q3 reductions stay on the VPU (hidden under MXU slack) and the
    row tile stays at 512.  v6e/v7x: move s3/q3 onto the MXU (sumA2 + Gram)
    and raise the row tile to 1024 to amortise the 256-wide MXU fill/drain.
    """
    try:
        kind = jax.devices()[0].device_kind.lower()
    except Exception:
        kind = ""
    if any(g in kind for g in ("v2", "v3", "v4", "v5")):
        return False, 512
    return True, 1024


def _pick_row_tile(n, target):
    """Fixed row tile (multiple of 8); remainder handled by pad + in-kernel mask."""
    if n >= target:
        return target
    return max(8, ((n + 7) // 8) * 8)


# ---------------------------------------------------------------------------
# BN / moment algebra (wrapper-side, all tiny (C,)-sized ops)
# ---------------------------------------------------------------------------
def _bn_fold(s, q, gamma, beta, rows):
    """Fold batch-stat BN into a per-channel affine: y = slope*h + shift."""
    mean = s / rows
    var = jnp.maximum(q / rows - mean * mean, 0.0)
    slope = gamma * jax.lax.rsqrt(var + BN_EPS)
    return slope, beta - slope * mean


def _shift_stats(s_raw, q_raw, b, rows):
    """Per-channel moments of (h + b) from the moments of h."""
    return s_raw + rows * b, q_raw + 2.0 * b * s_raw + rows * b * b


def _layer1_stats(Sx, M, w1, b1, rows):
    """BN-1 statistics, analytic from the input moments (replaces old pass 1).

    Sx: (B,3), M: (B,3,3), w1: (1|B,3,C1) f32, b1: (C1,).
    """
    sw = jnp.sum(jnp.matmul(Sx[:, None, :], w1)[:, 0, :], axis=0)   # (C1,)
    quad = jnp.sum(w1 * jnp.matmul(M, w1), axis=(0, 1))             # (C1,)
    return _shift_stats(sw, quad, b1, rows)


def _layer3_stats_from_gram(suma2, gram2, w3, b3, rows):
    """s3/q3 from sum_rows(a2) and Gram(a2) (MXU path on v6e/v7x)."""
    sw = suma2 @ w3                                                 # (C3,)
    quad = jnp.sum(w3 * (gram2 @ w3), axis=0)                       # (C3,)
    return _shift_stats(sw, quad, b3, rows)


# ---------------------------------------------------------------------------
# Per-point MLP kernels (two row-tiled passes per branch)
# ---------------------------------------------------------------------------
def _row_mask(tile_rows, n_valid):
    """(tile_rows, 1) bool mask of rows belonging to the un-padded input."""
    row = jax.lax.broadcasted_iota(jnp.int32, (tile_rows, 1), 0)
    return row + pl.program_id(1) * tile_rows < n_valid


def _conv1_act(x_ref, w1_ref, c1_ref):
    """a1 = relu(x @ (W1*sl1) + (sl1*b1 + sh1)) for the current row tile."""
    h1 = jnp.dot(x_ref[0], w1_ref[0],
                 preferred_element_type=jnp.float32) + c1_ref[...]
    return jnp.maximum(h1, 0.0)


def _conv2_act(x_ref, w1_ref, c1_ref, w2_ref, c2_ref, *,
               n_valid, tile_rows, masked):
    """a2 = relu(a1 @ (W2*sl2) + (sl2*b2 + sh2)); padded rows zeroed."""
    a1 = _conv1_act(x_ref, w1_ref, c1_ref).astype(w2_ref.dtype)
    h2 = jnp.dot(a1, w2_ref[...], preferred_element_type=jnp.float32) + c2_ref[...]
    a2 = jnp.maximum(h2, 0.0)
    valid = None
    if masked:
        valid = _row_mask(tile_rows, n_valid)
        a2 = jnp.where(valid, a2, 0.0)
    return a2, valid


def _pp_passA_kernel(x_ref, w1_ref, c1_ref, w2_ref, s2_ref, q2_ref, *,
                     n_valid, tile_rows, masked):
    """conv1(+folded BN/ReLU) -> bias-free conv2 moments per batch."""
    t = pl.program_id(1)
    a1 = _conv1_act(x_ref, w1_ref, c1_ref)
    if masked:
        a1 = jnp.where(_row_mask(tile_rows, n_valid), a1, 0.0)
    h2 = jnp.dot(a1.astype(w2_ref.dtype), w2_ref[...],
                 preferred_element_type=jnp.float32)     # b2 re-added in wrapper
    s = jnp.sum(h2, axis=0, keepdims=True)[None]         # (1, 1, C2)
    q = jnp.sum(h2 * h2, axis=0, keepdims=True)[None]

    @pl.when(t == 0)
    def _():
        s2_ref[...] = s
        q2_ref[...] = q

    @pl.when(t != 0)
    def _():
        s2_ref[...] += s
        q2_ref[...] += q


def _conv3_chunked_reductions(a2b, w3_ref, hmax_ref, hmin_ref, valid, chunk,
                              s3_ref=None, q3_ref=None):
    """Chunked conv3 (bias-free) with fused per-chunk reductions.

    Avoids materialising the full (TR, 1024) f32 activation; max/min always in
    kernel, sum/sumsq only on the VPU variant (v5e).
    """
    c3 = w3_ref.shape[-1]
    for c0 in range(0, c3, chunk):
        h3c = jnp.dot(a2b, w3_ref[:, c0:c0 + chunk],
                      preferred_element_type=jnp.float32)           # (TR, chunk)
        if s3_ref is not None:
            s3_ref[:, :, c0:c0 + chunk] += jnp.sum(
                h3c, axis=0, keepdims=True)[None]
            q3_ref[:, :, c0:c0 + chunk] += jnp.sum(
                h3c * h3c, axis=0, keepdims=True)[None]
        if valid is not None:
            hi = jnp.where(valid, h3c, -jnp.inf)
            lo = jnp.where(valid, h3c, jnp.inf)
        else:
            hi = lo = h3c
        tmax = jnp.max(hi, axis=0, keepdims=True)[None]             # (1,1,chunk)
        tmin = jnp.min(lo, axis=0, keepdims=True)[None]
        hmax_ref[:, :, c0:c0 + chunk] = jnp.maximum(
            hmax_ref[:, :, c0:c0 + chunk], tmax)
        hmin_ref[:, :, c0:c0 + chunk] = jnp.minimum(
            hmin_ref[:, :, c0:c0 + chunk], tmin)


def _pp_passB_gram_kernel(x_ref, w1_ref, c1_ref, w2_ref, c2_ref, w3_ref,
                          suma_ref, gram_ref, hmax_ref, hmin_ref, *,
                          n_valid, tile_rows, masked, chunk):
    """v6e/v7x: a2 moments on the MXU (sum + Gram) + chunked conv3 min/max."""
    t = pl.program_id(1)
    a2, valid = _conv2_act(x_ref, w1_ref, c1_ref, w2_ref, c2_ref,
                           n_valid=n_valid, tile_rows=tile_rows, masked=masked)
    a2b = a2.astype(w3_ref.dtype)
    suma = jnp.sum(a2, axis=0, keepdims=True)[None]                 # (1, 1, C2)
    gram = jax.lax.dot_general(                                     # (1, C2, C2)
        a2b, a2b, (((0,), (0,)), ((), ())),
        preferred_element_type=jnp.float32)[None]

    @pl.when(t == 0)
    def _():
        suma_ref[...] = suma
        gram_ref[...] = gram
        hmax_ref[...] = jnp.full(hmax_ref.shape, -jnp.inf, hmax_ref.dtype)
        hmin_ref[...] = jnp.full(hmin_ref.shape, jnp.inf, hmin_ref.dtype)

    @pl.when(t != 0)
    def _():
        suma_ref[...] += suma
        gram_ref[...] += gram

    _conv3_chunked_reductions(a2b, w3_ref, hmax_ref, hmin_ref, valid, chunk)


def _pp_passB_vpu_kernel(x_ref, w1_ref, c1_ref, w2_ref, c2_ref, w3_ref,
                         s3_ref, q3_ref, hmax_ref, hmin_ref, *,
                         n_valid, tile_rows, masked, chunk):
    """v5e: conv3 sum/sumsq stay on the VPU (hidden under 128-wide MXU slack)."""
    t = pl.program_id(1)
    a2, valid = _conv2_act(x_ref, w1_ref, c1_ref, w2_ref, c2_ref,
                           n_valid=n_valid, tile_rows=tile_rows, masked=masked)
    a2b = a2.astype(w3_ref.dtype)

    @pl.when(t == 0)
    def _():
        s3_ref[...] = jnp.zeros(s3_ref.shape, s3_ref.dtype)
        q3_ref[...] = jnp.zeros(q3_ref.shape, q3_ref.dtype)
        hmax_ref[...] = jnp.full(hmax_ref.shape, -jnp.inf, hmax_ref.dtype)
        hmin_ref[...] = jnp.full(hmin_ref.shape, jnp.inf, hmin_ref.dtype)

    _conv3_chunked_reductions(a2b, w3_ref, hmax_ref, hmin_ref, valid, chunk,
                              s3_ref=s3_ref, q3_ref=q3_ref)


# ---------------------------------------------------------------------------
# Fused FC-stack kernels (rows = B, everything resident in VMEM)
# ---------------------------------------------------------------------------
def _bn_relu_rows(h, g, be):
    """Training-mode BatchNorm over rows (biased variance, eps=1e-5) + ReLU."""
    mean = jnp.mean(h, axis=0, keepdims=True)
    var = jnp.maximum(jnp.mean(h * h, axis=0, keepdims=True) - mean * mean, 0.0)
    return jnp.maximum((h - mean) * jax.lax.rsqrt(var + BN_EPS) * g + be, 0.0)


def _stn_fc_kernel(x_ref, w1_ref, b1_ref, g1_ref, be1_ref,
                   w2_ref, b2_ref, g2_ref, be2_ref,
                   w3_ref, b3_ref, o_ref):
    h = jnp.dot(x_ref[...].astype(w1_ref.dtype), w1_ref[...],
                preferred_element_type=jnp.float32) + b1_ref[...]
    h = _bn_relu_rows(h, g1_ref[...], be1_ref[...])
    h = jnp.dot(h.astype(w2_ref.dtype), w2_ref[...],
                preferred_element_type=jnp.float32) + b2_ref[...]
    h = _bn_relu_rows(h, g2_ref[...], be2_ref[...])
    o_ref[...] = jnp.dot(h.astype(w3_ref.dtype), w3_ref[...],
                         preferred_element_type=jnp.float32) + b3_ref[...]


def _cls_head_kernel(x_ref, w1_ref, b1_ref, g1_ref, be1_ref,
                     w2_ref, b2_ref, g2_ref, be2_ref,
                     w3_ref, b3_ref, g3_ref, be3_ref,
                     w4_ref, b4_ref, o_ref, *, k):
    h = jnp.dot(x_ref[...].astype(w1_ref.dtype), w1_ref[...],
                preferred_element_type=jnp.float32) + b1_ref[...]
    h = _bn_relu_rows(h, g1_ref[...], be1_ref[...])
    h = jnp.dot(h.astype(w2_ref.dtype), w2_ref[...],
                preferred_element_type=jnp.float32) + b2_ref[...]
    h = _bn_relu_rows(h, g2_ref[...], be2_ref[...])
    h = jnp.dot(h.astype(w3_ref.dtype), w3_ref[...],
                preferred_element_type=jnp.float32) + b3_ref[...]
    h = _bn_relu_rows(h, g3_ref[...], be3_ref[...])
    logits = jnp.dot(h.astype(w4_ref.dtype), w4_ref[...],
                     preferred_element_type=jnp.float32) + b4_ref[...]
    # mask the zero-padded lanes (store is 128-lane dense, real width = k)
    col = jax.lax.broadcasted_iota(jnp.int32, logits.shape, 1)
    logits = jnp.where(col < k, logits, jnp.float32(-1e30))
    m = jnp.max(logits, axis=-1, keepdims=True)
    s = jnp.sum(jnp.exp(logits - m), axis=-1, keepdims=True)
    o_ref[...] = logits - m - jnp.log(s)


# ---------------------------------------------------------------------------
# Wrappers
# ---------------------------------------------------------------------------
def point_mlp_maxpool(x_pad, n_points, Sx, M, w1_f32, l1, l2, l3, *,
                      final_relu, use_gram, row_tile, chunk=CONV3_CHUNK):
    """Per-point MLP (3x conv+BN[+ReLU], training-mode stats) + max over points.

    x_pad : (B, N_pad, 3) bf16, zero-padded to a multiple of row_tile.
    w1_f32: (1|B, 3, C1) f32 conv1 weight (per-batch when the STN transform
            has been folded in).  Returns (B, C3) float32 pooled features.
    """
    B, n_pad, cin = x_pad.shape
    C1 = w1_f32.shape[-1]
    C2 = l2["w"].shape[-1]
    C3 = l3["w"].shape[-1]
    TR = row_tile
    n_tiles = n_pad // TR
    grid = (B, n_tiles)
    masked = n_pad != n_points
    rows = float(B * n_points)
    if C3 % chunk != 0:
        chunk = C3

    # ---- layer 1: analytic BN statistics from the input moments (no pass 1)
    s1, q1 = _layer1_stats(Sx, M, w1_f32, l1["b"], rows)
    sl1, sh1 = _bn_fold(s1, q1, l1["gamma"], l1["beta"], rows)
    w1f = (w1_f32 * sl1).astype(MXU_DTYPE)               # BN1 affine folded in
    c1 = (sl1 * l1["b"] + sh1).reshape(1, C1)
    w2_raw = l2["w"].astype(MXU_DTYPE)                   # pre-BN conv2 for stats

    batched_w1 = w1f.shape[0] != 1
    x_spec = pl.BlockSpec((1, TR, cin), lambda b, t: (b, t, 0))
    w1_spec = pl.BlockSpec((1, cin, C1),
                           (lambda b, t: (b, 0, 0)) if batched_w1
                           else (lambda b, t: (0, 0, 0)))

    def resident(arr):          # small operand resident across the whole grid
        return pl.BlockSpec(arr.shape, lambda b, t: (0,) * arr.ndim)

    def acc_spec(shape):        # per-batch accumulator, resident across tiles
        return pl.BlockSpec((1,) + shape, lambda b, t: (b,) + (0,) * len(shape))

    def acc_shape(shape):
        return jax.ShapeDtypeStruct((B,) + shape, jnp.float32)

    cparams = pltpu.CompilerParams(
        dimension_semantics=("parallel", "arbitrary"))
    # Peak VMEM/step is only a few MiB at TR=1024 thanks to the chunked conv3,
    # well under the 32 MiB default scoped limit on v6e/v7x; raise
    # vmem_limit_bytes only if TR is pushed to 2048+.

    # ---- pass A: conv2 statistics (bias re-introduced algebraically below)
    s2r, q2r = pl.pallas_call(
        functools.partial(_pp_passA_kernel, n_valid=n_points,
                          tile_rows=TR, masked=masked),
        grid=grid,
        in_specs=[x_spec, w1_spec, resident(c1), resident(w2_raw)],
        out_specs=[acc_spec((1, C2)), acc_spec((1, C2))],
        out_shape=(acc_shape((1, C2)), acc_shape((1, C2))),
        compiler_params=cparams,
    )(x_pad, w1f, c1, w2_raw)
    s2, q2 = _shift_stats(jnp.sum(s2r[:, 0, :], 0), jnp.sum(q2r[:, 0, :], 0),
                          l2["b"], rows)
    sl2, sh2 = _bn_fold(s2, q2, l2["gamma"], l2["beta"], rows)
    w2f = (l2["w"] * sl2).astype(MXU_DTYPE)              # BN2 affine folded in
    c2 = (sl2 * l2["b"] + sh2).reshape(1, C2)
    w3_raw = l3["w"].astype(MXU_DTYPE)                   # b3/BN3 handled in wrapper

    # ---- pass B: conv3 statistics + per-batch channel min/max of pre-BN conv3
    common_in = [x_spec, w1_spec, resident(c1), resident(w2f), resident(c2),
                 resident(w3_raw)]
    common_args = (x_pad, w1f, c1, w2f, c2, w3_raw)
    if use_gram:
        suma2, gram2, hmax, hmin = pl.pallas_call(
            functools.partial(_pp_passB_gram_kernel, n_valid=n_points,
                              tile_rows=TR, masked=masked, chunk=chunk),
            grid=grid,
            in_specs=common_in,
            out_specs=[acc_spec((1, C2)), acc_spec((C2, C2)),
                       acc_spec((1, C3)), acc_spec((1, C3))],
            out_shape=(acc_shape((1, C2)), acc_shape((C2, C2)),
                       acc_shape((1, C3)), acc_shape((1, C3))),
            compiler_params=cparams,
        )(*common_args)
        s3, q3 = _layer3_stats_from_gram(jnp.sum(suma2[:, 0, :], 0),
                                         jnp.sum(gram2, 0),
                                         l3["w"], l3["b"], rows)
    else:
        s3r, q3r, hmax, hmin = pl.pallas_call(
            functools.partial(_pp_passB_vpu_kernel, n_valid=n_points,
                              tile_rows=TR, masked=masked, chunk=chunk),
            grid=grid,
            in_specs=common_in,
            out_specs=[acc_spec((1, C3)) for _ in range(4)],
            out_shape=tuple(acc_shape((1, C3)) for _ in range(4)),
            compiler_params=cparams,
        )(*common_args)
        s3, q3 = _shift_stats(jnp.sum(s3r[:, 0, :], 0),
                              jnp.sum(q3r[:, 0, :], 0), l3["b"], rows)

    sl3, sh3 = _bn_fold(s3, q3, l3["gamma"], l3["beta"], rows)
    # max_n(slope*h+shift) == slope*max_n(h)+shift when slope>=0, else via min.
    hmax_b = hmax[:, 0, :] + l3["b"]
    hmin_b = hmin[:, 0, :] + l3["b"]
    pooled = jnp.where(sl3 >= 0.0, hmax_b, hmin_b) * sl3 + sh3
    if final_relu:
        pooled = jnp.maximum(pooled, 0.0)
    return pooled                                        # (B, C3) float32


def stn_fc_head(g, fc1, fc2, fc3p):
    """Fused STN fc1->bn->relu->fc2->bn->relu->fc3 (+identity folded in bias)."""
    B = g.shape[0]
    out = pl.pallas_call(
        _stn_fc_kernel,
        out_shape=jax.ShapeDtypeStruct((B, OUT_PAD), jnp.float32),
    )(g, fc1["w"], fc1["b"], fc1["gamma"], fc1["beta"],
      fc2["w"], fc2["b"], fc2["gamma"], fc2["beta"],
      fc3p["w"], fc3p["b"])
    return out[:, :9].reshape(B, 3, 3)


def cls_head(gfeat, l1, l2, l3, l4p, k):
    """Fused classifier conv1..conv4 + log_softmax (conv4 padded to 128 lanes)."""
    B = gfeat.shape[0]
    out = pl.pallas_call(
        functools.partial(_cls_head_kernel, k=k),
        out_shape=jax.ShapeDtypeStruct((B, OUT_PAD), jnp.float32),
    )(gfeat, l1["w"], l1["b"], l1["gamma"], l1["beta"],
      l2["w"], l2["b"], l2["gamma"], l2["beta"],
      l3["w"], l3["b"], l3["gamma"], l3["beta"], l4p["w"], l4p["b"])
    return out[:, :k]


# ---------------------------------------------------------------------------
# Parameters (deterministic, PyTorch-default-style init) + one-time prep
# ---------------------------------------------------------------------------
def make_params(key, k_classes=2):
    keys = iter(jax.random.split(key, 16))

    def layer(cin, cout):
        k1, k2 = jax.random.split(next(keys))
        bound = cin ** -0.5
        return dict(
            w=jax.random.uniform(k1, (cin, cout), jnp.float32, -bound, bound),
            b=jax.random.uniform(k2, (cout,), jnp.float32, -bound, bound),
            gamma=jnp.ones((cout,), jnp.float32),
            beta=jnp.zeros((cout,), jnp.float32),
        )

    p = {}
    # STN3d (input transform net)
    p["stn_conv1"] = layer(3, 64)
    p["stn_conv2"] = layer(64, 128)
    p["stn_conv3"] = layer(128, 1024)
    p["stn_fc1"] = layer(1024, 512)
    p["stn_fc2"] = layer(512, 256)
    p["stn_fc3"] = layer(256, 9)
    # PointNetEncoder
    p["feat_conv1"] = layer(3, 64)
    p["feat_conv2"] = layer(64, 128)
    p["feat_conv3"] = layer(128, 1024)
    # PointNetCls head (1024->512->256->128->k, no dropout in the reference)
    p["cls_conv1"] = layer(1024, 512)
    p["cls_conv2"] = layer(512, 256)
    p["cls_conv3"] = layer(256, 128)
    p["cls_conv4"] = layer(128, k_classes)
    return p


def prepare_params(params):
    """One-time weight preparation, hoisted out of the jitted per-call path."""
    prep = {}
    # Per-point conv layers stay f32: their BN fold / bf16 cast depends on the
    # batch statistics, so it inherently happens per call (tiny (C,)-ops).
    for name in ("stn_conv1", "stn_conv2", "stn_conv3",
                 "feat_conv1", "feat_conv2", "feat_conv3"):
        l = params[name]
        prep[name] = dict(w=l["w"].astype(jnp.float32),
                          b=l["b"].astype(jnp.float32),
                          gamma=l["gamma"].astype(jnp.float32),
                          beta=l["beta"].astype(jnp.float32))

    def fc(l):
        c = l["w"].shape[-1]
        return dict(w=l["w"].astype(MXU_DTYPE),
                    b=l["b"].reshape(1, c).astype(jnp.float32),
                    gamma=l["gamma"].reshape(1, c).astype(jnp.float32),
                    beta=l["beta"].reshape(1, c).astype(jnp.float32))

    prep["stn_fc1"] = fc(params["stn_fc1"])
    prep["stn_fc2"] = fc(params["stn_fc2"])

    # STN fc3: pad 9 output lanes to OUT_PAD and fold the 3x3 identity in.
    w3 = params["stn_fc3"]["w"]
    c3 = w3.shape[-1]
    assert c3 <= OUT_PAD, c3
    w3p = jnp.zeros((w3.shape[0], OUT_PAD), MXU_DTYPE).at[:, :c3].set(
        w3.astype(MXU_DTYPE))
    b3p = jnp.zeros((1, OUT_PAD), jnp.float32).at[0, :c3].set(
        params["stn_fc3"]["b"].astype(jnp.float32)
        + jnp.eye(3, dtype=jnp.float32).reshape(-1))
    prep["stn_fc3"] = dict(w=w3p, b=b3p)

    prep["cls_conv1"] = fc(params["cls_conv1"])
    prep["cls_conv2"] = fc(params["cls_conv2"])
    prep["cls_conv3"] = fc(params["cls_conv3"])

    # cls conv4: pad k output lanes to OUT_PAD.
    w4 = params["cls_conv4"]["w"]
    k = w4.shape[-1]
    assert k <= OUT_PAD, k
    w4p = jnp.zeros((w4.shape[0], OUT_PAD), MXU_DTYPE).at[:, :k].set(
        w4.astype(MXU_DTYPE))
    b4p = jnp.zeros((1, OUT_PAD), jnp.float32).at[0, :k].set(
        params["cls_conv4"]["b"].astype(jnp.float32))
    prep["cls_conv4"] = dict(w=w4p, b=b4p)
    return prep


# ---------------------------------------------------------------------------
# Forward pass
# ---------------------------------------------------------------------------
@functools.partial(jax.jit, static_argnames=("k_classes",))
def pointnet_cls_forward(x_bcn, prep, k_classes=2):
    """x_bcn: (B, 3, N) float32, PyTorch NCW convention -> (log_probs, None)."""
    B, _, N = x_bcn.shape
    x32 = jnp.transpose(x_bcn, (0, 2, 1)).astype(jnp.float32)   # (B, N, 3)

    # Per-batch input moments: replace the old "pass 1" of BOTH branches.
    Sx = jnp.sum(x32, axis=1)                                   # (B, 3)
    M = jnp.einsum("bni,bnj->bij", x32, x32)                    # (B, 3, 3)

    use_gram, row_target = _pass_b_config()
    TR = _pick_row_tile(N, row_target)
    n_tiles = (N + TR - 1) // TR
    n_pad = n_tiles * TR
    if n_pad != N:
        x32p = jnp.pad(x32, ((0, 0), (0, n_pad - N), (0, 0)))
    else:
        x32p = x32
    x_pad = x32p.astype(MXU_DTYPE)

    # ----- STN3d: per-point MLP + maxpool, then fused FC head -> (B, 3, 3)
    stn_w1 = prep["stn_conv1"]["w"][None]                       # (1, 3, 64)
    g = point_mlp_maxpool(x_pad, N, Sx, M, stn_w1,
                          prep["stn_conv1"], prep["stn_conv2"],
                          prep["stn_conv3"], final_relu=True,
                          use_gram=use_gram, row_tile=TR)
    trans = stn_fc_head(g, prep["stn_fc1"], prep["stn_fc2"], prep["stn_fc3"])

    # ----- PointNetEncoder (global_feat=True, feature_transform=False) -----
    # Fold the 3x3 input transform into conv1: (x @ T) @ W1 == x @ (T @ W1).
    w1_fused = jnp.einsum("bij,jk->bik", trans, prep["feat_conv1"]["w"])
    gfeat = point_mlp_maxpool(x_pad, N, Sx, M, w1_fused,
                              prep["feat_conv1"], prep["feat_conv2"],
                              prep["feat_conv3"], final_relu=False,
                              use_gram=use_gram, row_tile=TR)
    trans_feat = None   # feature_transform=False -> encoder returns None

    # ----- classifier head (1x1 convs on a length-1 sequence) + log_softmax
    logp = cls_head(gfeat, prep["cls_conv1"], prep["cls_conv2"],
                    prep["cls_conv3"], prep["cls_conv4"], k_classes)
    return logp, trans_feat


if __name__ == "__main__":
    key = jax.random.PRNGKey(0)
    kp, kx = jax.random.split(key)

    B, C, N, K = 2, 3, 16, 2
    params = make_params(kp, k_classes=K)
    prepped = prepare_params(params)        # one-time weight prep (hoisted)
    x = jax.random.normal(kx, (B, C, N), jnp.float32)

    logp, trans_feat = pointnet_cls_forward(x, prepped, k_classes=K)
    logp = jax.block_until_ready(logp)

    assert logp.shape == (B, K)
    assert trans_feat is None
    assert bool(jnp.all(jnp.isfinite(logp)))
    assert bool(jnp.allclose(jnp.exp(logp).sum(-1), 1.0, atol=1e-3))
    print("KERNEL_OK")
</pallas_src>

<mosaic_0001>
module attributes {stable_mosaic.version = 11 : i64} {
  func.func @_pp_passB_gram_kernel(%arg0: i32, %arg1: i32, %arg2: memref<1x16x3xbf16, #tpu.memory_space<vmem>>, %arg3: memref<1x3x64xbf16, #tpu.memory_space<vmem>>, %arg4: memref<1x64xf32, #tpu.memory_space<vmem>>, %arg5: memref<64x128xbf16, #tpu.memory_space<vmem>>, %arg6: memref<1x128xf32, #tpu.memory_space<vmem>>, %arg7: memref<128x1024xbf16, #tpu.memory_space<vmem>>, %arg8: memref<1x1x128xf32, #tpu.memory_space<vmem>>, %arg9: memref<1x128x128xf32, #tpu.memory_space<vmem>>, %arg10: memref<1x1x1024xf32, #tpu.memory_space<vmem>>, %arg11: memref<1x1x1024xf32, #tpu.memory_space<vmem>>) attributes {dimension_semantics = [#tpu.dimension_semantics<parallel>, #tpu.dimension_semantics<arbitrary>], iteration_bounds = array<i64: 2, 1>, scalar_prefetch = 0 : i64, scratch_operands = 0 : i64, tpu.core_type = #tpu.core_type<tc>, window_params = [{transform_indices = @transform_0, window_bounds = array<i64: 1, 16, 3>}, {pipeline_mode = #tpu.pipeline_mode<synchronous>, transform_indices = @transform_1, window_bounds = array<i64: 1, 3, 64>}, {pipeline_mode = #tpu.pipeline_mode<synchronous>, transform_indices = @transform_2, window_bounds = array<i64: 1, 64>}, {pipeline_mode = #tpu.pipeline_mode<synchronous>, transform_indices = @transform_3, window_bounds = array<i64: 64, 128>}, {pipeline_mode = #tpu.pipeline_mode<synchronous>, transform_indices = @transform_4, window_bounds = array<i64: 1, 128>}, {pipeline_mode = #tpu.pipeline_mode<synchronous>, transform_indices = @transform_5, window_bounds = array<i64: 128, 1024>}, {transform_indices = @transform_6, window_bounds = array<i64: 1, 1, 128>}, {transform_indices = @transform_7, window_bounds = array<i64: 1, 128, 128>}, {transform_indices = @transform_8, window_bounds = array<i64: 1, 1, 1024>}, {transform_indices = @transform_9, window_bounds = array<i64: 1, 1, 1024>}]} {
    %c0 = arith.constant 0 : index
    %c0_0 = arith.constant 0 : index
    %c0_1 = arith.constant 0 : index
    %0 = vector.load %arg2[%c0, %c0_0, %c0_1] : memref<1x16x3xbf16, #tpu.memory_space<vmem>>, vector<1x16x3xbf16>
    %1 = vector.shape_cast %0 : vector<1x16x3xbf16> to vector<16x3xbf16>
    %c0_2 = arith.constant 0 : index
    %c0_3 = arith.constant 0 : index
    %c0_4 = arith.constant 0 : index
    %2 = vector.load %arg3[%c0_2, %c0_3, %c0_4] : memref<1x3x64xbf16, #tpu.memory_space<vmem>>, vector<1x3x64xbf16>
    %3 = vector.shape_cast %2 : vector<1x3x64xbf16> to vector<3x64xbf16>
    %cst = arith.constant dense<0.000000e+00> : vector<16x64xf32>
    %4 = tpu.matmul %1, %3, %cst {dimension_numbers = #tpu.dot_dimension_numbers<[1], [0], [0], [1], [0, 0, 1, 1], [], []>} : vector<16x3xbf16>, vector<3x64xbf16>, vector<16x64xf32> -> vector<16x64xf32>
    %c0_5 = arith.constant 0 : index
    %c0_6 = arith.constant 0 : index
    %5 = vector.load %arg4[%c0_5, %c0_6] : memref<1x64xf32, #tpu.memory_space<vmem>>, vector<1x64xf32>
    %6 = vector.broadcast %5 : vector<1x64xf32> to vector<16x64xf32>
    %7 = arith.addf %4, %6 : vector<16x64xf32>
    %cst_7 = arith.constant 0.000000e+00 : f32
    %8 = vector.broadcast %cst_7 : f32 to vector<16x64xf32>
    %9 = arith.maximumf %7, %8 : vector<16x64xf32>
    %10 = arith.truncf %9 : vector<16x64xf32> to vector<16x64xbf16>
    %c0_8 = arith.constant 0 : index
    %c0_9 = arith.constant 0 : index
    %11 = vector.load %arg5[%c0_8, %c0_9] : memref<64x128xbf16, #tpu.memory_space<vmem>>, vector<64x128xbf16>
    %cst_10 = arith.constant dense<0.000000e+00> : vector<16x128xf32>
    %12 = tpu.matmul %10, %11, %cst_10 {dimension_numbers = #tpu.dot_dimension_numbers<[1], [0], [0], [1], [0, 0, 1, 1], [], []>} : vector<16x64xbf16>, vector<64x128xbf16>, vector<16x128xf32> -> vector<16x128xf32>
    %c0_11 = arith.constant 0 : index
    %c0_12 = arith.constant 0 : index
    %13 = vector.load %arg6[%c0_11, %c0_12] : memref<1x128xf32, #tpu.memory_space<vmem>>, vector<1x128xf32>
    %14 = vector.broadcast %13 : vector<1x128xf32> to vector<16x128xf32>
    %15 = arith.addf %12, %14 : vector<16x128xf32>
    %cst_13 = arith.constant 0.000000e+00 : f32
    %16 = vector.broadcast %cst_13 : f32 to vector<16x128xf32>
    %17 = arith.maximumf %15, %16 : vector<16x128xf32>
    %18 = arith.truncf %17 : vector<16x128xf32> to vector<16x128xbf16>
    %cst_14 = arith.constant dense<0.000000e+00> : vector<128xf32>
    %19 = vector.multi_reduction <add>, %17, %cst_14 [0] : vector<16x128xf32> to vector<128xf32>
    %20 = vector.shape_cast %19 : vector<128xf32> to vector<1x128xf32>
    %21 = vector.shape_cast %20 : vector<1x128xf32> to vector<1x1x128xf32>
    %cst_15 = arith.constant dense<0.000000e+00> : vector<128x128xf32>
    %22 = tpu.matmul %18, %18, %cst_15 {dimension_numbers = #tpu.dot_dimension_numbers<[0], [0], [1], [1], [0, 1, 1, 1], [], []>} : vector<16x128xbf16>, vector<16x128xbf16>, vector<128x128xf32> -> vector<128x128xf32>
    %23 = vector.shape_cast %22 : vector<128x128xf32> to vector<1x128x128xf32>
    %c0_i32 = arith.constant 0 : i32
    %24 = arith.cmpi eq, %arg1, %c0_i32 : i32
    %25 = arith.extui %24 : i1 to i32
    %c0_i32_16 = arith.constant 0 : i32
    %26 = arith.cmpi ne, %25, %c0_i32_16 : i32
    scf.if %26 {
      %c0_84 = arith.constant 0 : index
      %c0_85 = arith.constant 0 : index
      %c0_86 = arith.constant 0 : index
      %86 = vector.load %arg8[%c0_84, %c0_85, %c0_86] : memref<1x1x128xf32, #tpu.memory_space<vmem>>, vector<1x1x128xf32>
      tpu.vector_store %arg8[%c0_84, %c0_85, %c0_86], %21 {strides = array<i32>} : memref<1x1x128xf32, #tpu.memory_space<vmem>>, vector<1x1x128xf32>,
      %c0_87 = arith.constant 0 : index
      %c0_88 = arith.constant 0 : index
      %c0_89 = arith.constant 0 : index
      %87 = vector.load %arg9[%c0_87, %c0_88, %c0_89] : memref<1x128x128xf32, #tpu.memory_space<vmem>>, vector<1x128x128xf32>
      tpu.vector_store %arg9[%c0_87, %c0_88, %c0_89], %23 {strides = array<i32>} : memref<1x128x128xf32, #tpu.memory_space<vmem>>, vector<1x128x128xf32>,
      %cst_90 = arith.constant 0xFF800000 : f32
      %88 = vector.broadcast %cst_90 : f32 to vector<1x1x1024xf32>
      %c0_91 = arith.constant 0 : index
      %c0_92 = arith.constant 0 : index
      %c0_93 = arith.constant 0 : index
      %89 = vector.load %arg10[%c0_91, %c0_92, %c0_93] : memref<1x1x1024xf32, #tpu.memory_space<vmem>>, vector<1x1x1024xf32>
      tpu.vector_store %arg10[%c0_91, %c0_92, %c0_93], %88 {strides = array<i32>} : memref<1x1x1024xf32, #tpu.memory_space<vmem>>, vector<1x1x1024xf32>,
      %cst_94 = arith.constant 0x7F800000 : f32
      %90 = vector.broadcast %cst_94 : f32 to vector<1x1x1024xf32>
      %c0_95 = arith.constant 0 : index
      %c0_96 = arith.constant 0 : index
      %c0_97 = arith.constant 0 : index
      %91 = vector.load %arg11[%c0_95, %c0_96, %c0_97] : memref<1x1x1024xf32, #tpu.memory_space<vmem>>, vector<1x1x1024xf32>
      tpu.vector_store %arg11[%c0_95, %c0_96, %c0_97], %90 {strides = array<i32>} : memref<1x1x1024xf32, #tpu.memory_space<vmem>>, vector<1x1x1024xf32>,
    } else {
    }
    %c0_i32_17 = arith.constant 0 : i32
    %27 = arith.cmpi ne, %arg1, %c0_i32_17 : i32
    %28 = arith.extui %27 : i1 to i32
    %c0_i32_18 = arith.constant 0 : i32
    %29 = arith.cmpi ne, %28, %c0_i32_18 : i32
    scf.if %29 {
      %c0_84 = arith.constant 0 : index
      %c0_85 = arith.constant 0 : index
      %c0_86 = arith.constant 0 : index
      %86 = vector.load %arg8[%c0_84, %c0_85, %c0_86] : memref<1x1x128xf32, #tpu.memory_space<vmem>>, vector<1x1x128xf32>
      %87 = arith.addf %86, %21 : vector<1x1x128xf32>
      %c0_87 = arith.constant 0 : index
      %c0_88 = arith.constant 0 : index
      %c0_89 = arith.constant 0 : index
      %88 = vector.load %arg8[%c0_87, %c0_88, %c0_89] : memref<1x1x128xf32, #tpu.memory_space<vmem>>, vector<1x1x128xf32>
      tpu.vector_store %arg8[%c0_87, %c0_88, %c0_89], %87 {strides = array<i32>} : memref<1x1x128xf32, #tpu.memory_space<vmem>>, vector<1x1x128xf32>,
      %c0_90 = arith.constant 0 : index
      %c0_91 = arith.constant 0 : index
      %c0_92 = arith.constant 0 : index
      %89 = vector.load %arg9[%c0_90, %c0_91, %c0_92] : memref<1x128x128xf32, #tpu.memory_space<vmem>>, vector<1x128x128xf32>
      %90 = arith.addf %89, %23 : vector<1x128x128xf32>
      %c0_93 = arith.constant 0 : index
      %c0_94 = arith.constant 0 : index
      %c0_95 = arith.constant 0 : index
      %91 = vector.load %arg9[%c0_93, %c0_94, %c0_95] : memref<1x128x128xf32, #tpu.memory_space<vmem>>, vector<1x128x128xf32>
      tpu.vector_store %arg9[%c0_93, %c0_94, %c0_95], %90 {strides = array<i32>} : memref<1x128x128xf32, #tpu.memory_space<vmem>>, vector<1x128x128xf32>,
    } else {
    }
    %c0_19 = arith.constant 0 : index
    %c0_20 = arith.constant 0 : index
    %30 = vector.load %arg7[%c0_19, %c0_20] : memref<128x1024xbf16, #tpu.memory_space<vmem>>, vector<128x256xbf16>
    %cst_21 = arith.constant dense<0.000000e+00> : vector<16x256xf32>
    %31 = tpu.matmul %18, %30, %cst_21 {dimension_numbers = #tpu.dot_dimension_numbers<[1], [0], [0], [1], [0, 0, 1, 1], [], []>} : vector<16x128xbf16>, vector<128x256xbf16>, vector<16x256xf32> -> vector<16x256xf32>
    %cst_22 = arith.constant dense<0xFF800000> : vector<256xf32>
    %32 = vector.multi_reduction <maximumf>, %31, %cst_22 [0] : vector<16x256xf32> to vector<256xf32>
    %33 = vector.shape_cast %32 : vector<256xf32> to vector<1x256xf32>
    %34 = vector.shape_cast %33 : vector<1x256xf32> to vector<1x1x256xf32>
    %cst_23 = arith.constant dense<0x7F800000> : vector<256xf32>
    %35 = vector.multi_reduction <minimumf>, %31, %cst_23 [0] : vector<16x256xf32> to vector<256xf32>
    %36 = vector.shape_cast %35 : vector<256xf32> to vector<1x256xf32>
    %37 = vector.shape_cast %36 : vector<1x256xf32> to vector<1x1x256xf32>
    %c0_24 = arith.constant 0 : index
    %c0_25 = arith.constant 0 : index
    %c0_26 = arith.constant 0 : index
    %38 = vector.load %arg10[%c0_24, %c0_25, %c0_26] : memref<1x1x1024xf32, #tpu.memory_space<vmem>>, vector<1x1x256xf32>
    %39 = arith.maximumf %38, %34 : vector<1x1x256xf32>
    %c0_27 = arith.constant 0 : index
    %c0_28 = arith.constant 0 : index
    %c0_29 = arith.constant 0 : index
    %40 = vector.load %arg10[%c0_27, %c0_28, %c0_29] : memref<1x1x1024xf32, #tpu.memory_space<vmem>>, vector<1x1x256xf32>
    tpu.vector_store %arg10[%c0_27, %c0_28, %c0_29], %39 {strides = array<i32>} : memref<1x1x1024xf32, #tpu.memory_space<vmem>>, vector<1x1x256xf32>,
    %c0_30 = arith.constant 0 : index
    %c0_31 = arith.constant 0 : index
    %c0_32 = arith.constant 0 : index
    %41 = vector.load %arg11[%c0_30, %c0_31, %c0_32] : memref<1x1x1024xf32, #tpu.memory_space<vmem>>, vector<1x1x256xf32>
    %42 = arith.minimumf %41, %37 : vector<1x1x256xf32>
    %c0_33 = arith.constant 0 : index
    %c0_34 = arith.constant 0 : index
    %c0_35 = arith.constant 0 : index
    %43 = vector.load %arg11[%c0_33, %c0_34, %c0_35] : memref<1x1x1024xf32, #tpu.memory_space<vmem>>, vector<1x1x256xf32>
    tpu.vector_store %arg11[%c0_33, %c0_34, %c0_35], %42 {strides = array<i32>} : memref<1x1x1024xf32, #tpu.memory_space<vmem>>, vector<1x1x256xf32>,
    %c0_36 = arith.constant 0 : index
    %c256 = arith.constant 256 : index
    %44 = vector.load %arg7[%c0_36, %c256] : memref<128x1024xbf16, #tpu.memory_space<vmem>>, vector<128x256xbf16>
    %cst_37 = arith.constant dense<0.000000e+00> : vector<16x256xf32>
    %45 = tpu.matmul %18, %44, %cst_37 {dimension_numbers = #tpu.dot_dimension_numbers<[1], [0], [0], [1], [0, 0, 1, 1], [], []>} : vector<16x128xbf16>, vector<128x256xbf16>, vector<16x256xf32> -> vector<16x256xf32>
    %cst_38 = arith.constant dense<0xFF800000> : vector<256xf32>
    %46 = vector.multi_reduction <maximumf>, %45, %cst_38 [0] : vector<16x256xf32> to vector<256xf32>
    %47 = vector.shape_cast %46 : vector<256xf32> to vector<1x256xf32>
    %48 = vector.shape_cast %47 : vector<1x256xf32> to vector<1x1x256xf32>
    %cst_39 = arith.constant dense<0x7F800000> : vector<256xf32>
    %49 = vector.multi_reduction <minimumf>, %45, %cst_39 [0] : vector<16x256xf32> to vector<256xf32>
    %50 = vector.shape_cast %49 : vector<256xf32> to vector<1x256xf32>
    %51 = vector.shape_cast %50 : vector<1x256xf32> to vector<1x1x256xf32>
    %c0_40 = arith.constant 0 : index
    %c0_41 = arith.constant 0 : index
    %c256_42 = arith.constant 256 : index
    %52 = vector.load %arg10[%c0_40, %c0_41, %c256_42] : memref<1x1x1024xf32, #tpu.memory_space<vmem>>, vector<1x1x256xf32>
    %53 = arith.maximumf %52, %48 : vector<1x1x256xf32>
    %c0_43 = arith.constant 0 : index
    %c0_44 = arith.constant 0 : index
    %c256_45 = arith.constant 256 : index
    %54 = vector.load %arg10[%c0_43, %c0_44, %c256_45] : memref<1x1x1024xf32, #tpu.memory_space<vmem>>, vector<1x1x256xf32>
    tpu.vector_store %arg10[%c0_43, %c0_44, %c256_45], %53 {strides = array<i32>} : memref<1x1x1024xf32, #tpu.memory_space<vmem>>, vector<1x1x256xf32>,
    %c0_46 = arith.constant 0 : index
    %c0_47 = arith.constant 0 : index
    %c256_48 = arith.constant 256 : index
    %55 = vector.load %arg11[%c0_46, %c0_47, %c256_48] : memref<1x1x1024xf32, #tpu.memory_space<vmem>>, vector<1x1x256xf32>
    %56 = arith.minimumf %55, %51 : vector<1x1x256xf32>
    %c0_49 = arith.constant 0 : index
    %c0_50 = arith.constant 0 : index
    %c256_51 = arith.constant 256 : index
    %57 = vector.load %arg11[%c0_49, %c0_50, %c256_51] : memref<1x1x1024xf32, #tpu.memory_space<vmem>>, vector<1x1x256xf32>
    tpu.vector_store %arg11[%c0_49, %c0_50, %c256_51], %56 {strides = array<i32>} : memref<1x1x1024xf32, #tpu.memory_space<vmem>>, vector<1x1x256xf32>,
    %c0_52 = arith.constant 0 : index
    %c512 = arith.constant 512 : index
    %58 = vector.load %arg7[%c0_52, %c512] : memref<128x1024xbf16, #tpu.memory_space<vmem>>, vector<128x256xbf16>
    %cst_53 = arith.constant dense<0.000000e+00> : vector<16x256xf32>
    %59 = tpu.matmul %18, %58, %cst_53 {dimension_numbers = #tpu.dot_dimension_numbers<[1], [0], [0], [1], [0, 0, 1, 1], [], []>} : vector<16x128xbf16>, vector<128x256xbf16>, vector<16x256xf32> -> vector<16x256xf32>
    %cst_54 = arith.constant dense<0xFF800000> : vector<256xf32>
    %60 = vector.multi_reduction <maximumf>, %59, %cst_54 [0] : vector<16x256xf32> to vector<256xf32>
    %61 = vector.shape_cast %60 : vector<256xf32> to vector<1x256xf32>
    %62 = vector.shape_cast %61 : vector<1x256xf32> to vector<1x1x256xf32>
    %cst_55 = arith.constant dense<0x7F800000> : vector<256xf32>
    %63 = vector.multi_reduction <minimumf>, %59, %cst_55 [0] : vector<16x256xf32> to vector<256xf32>
    %64 = vector.shape_cast %63 : vector<256xf32> to vector<1x256xf32>
    %65 = vector.shape_cast %64 : vector<1x256xf32> to vector<1x1x256xf32>
    %c0_56 = arith.constant 0 : index
    %c0_57 = arith.constant 0 : index
    %c512_58 = arith.constant 512 : index
    %66 = vector.load %arg10[%c0_56, %c0_57, %c512_58] : memref<1x1x1024xf32, #tpu.memory_space<vmem>>, vector<1x1x256xf32>
    %67 = arith.maximumf %66, %62 : vector<1x1x256xf32>
    %c0_59 = arith.constant 0 : index
    %c0_60 = arith.constant 0 : index
    %c512_61 = arith.constant 512 : index
    %68 = vector.load %arg10[%c0_59, %c0_60, %c512_61] : memref<1x1x1024xf32, #tpu.memory_space<vmem>>, vector<1x1x256xf32>
    tpu.vector_store %arg10[%c0_59, %c0_60, %c512_61], %67 {strides = array<i32>} : memref<1x1x1024xf32, #tpu.memory_space<vmem>>, vector<1x1x256xf32>,
    %c0_62 = arith.constant 0 : index
    %c0_63 = arith.constant 0 : index
    %c512_64 = arith.constant 512 : index
    %69 = vector.load %arg11[%c0_62, %c0_63, %c512_64] : memref<1x1x1024xf32, #tpu.memory_space<vmem>>, vector<1x1x256xf32>
    %70 = arith.minimumf %69, %65 : vector<1x1x256xf32>
    %c0_65 = arith.constant 0 : index
    %c0_66 = arith.constant 0 : index
    %c512_67 = arith.constant 512 : index
    %71 = vector.load %arg11[%c0_65, %c0_66, %c512_67] : memref<1x1x1024xf32, #tpu.memory_space<vmem>>, vector<1x1x256xf32>
    tpu.vector_store %arg11[%c0_65, %c0_66, %c512_67], %70 {strides = array<i32>} : memref<1x1x1024xf32, #tpu.memory_space<vmem>>, vector<1x1x256xf32>,
    %c0_68 = arith.constant 0 : index
    %c768 = arith.constant 768 : index
    %72 = vector.load %arg7[%c0_68, %c768] : memref<128x1024xbf16, #tpu.memory_space<vmem>>, vector<128x256xbf16>
    %cst_69 = arith.constant dense<0.000000e+00> : vector<16x256xf32>
    %73 = tpu.matmul %18, %72, %cst_69 {dimension_numbers = #tpu.dot_dimension_numbers<[1], [0], [0], [1], [0, 0, 1, 1], [], []>} : vector<16x128xbf16>, vector<128x256xbf16>, vector<16x256xf32> -> vector<16x256xf32>
    %cst_70 = arith.constant dense<0xFF800000> : vector<256xf32>
    %74 = vector.multi_reduction <maximumf>, %73, %cst_70 [0] : vector<16x256xf32> to vector<256xf32>
    %75 = vector.shape_cast %74 : vector<256xf32> to vector<1x256xf32>
    %76 = vector.shape_cast %75 : vector<1x256xf32> to vector<1x1x256xf32>
    %cst_71 = arith.constant dense<0x7F800000> : vector<256xf32>
    %77 = vector.multi_reduction <minimumf>, %73, %cst_71 [0] : vector<16x256xf32> to vector<256xf32>
    %78 = vector.shape_cast %77 : vector<256xf32> to vector<1x256xf32>
    %79 = vector.shape_cast %78 : vector<1x256xf32> to vector<1x1x256xf32>
    %c0_72 = arith.constant 0 : index
    %c0_73 = arith.constant 0 : index
    %c768_74 = arith.constant 768 : index
    %80 = vector.load %arg10[%c0_72, %c0_73, %c768_74] : memref<1x1x1024xf32, #tpu.memory_space<vmem>>, vector<1x1x256xf32>
    %81 = arith.maximumf %80, %76 : vector<1x1x256xf32>
    %c0_75 = arith.constant 0 : index
    %c0_76 = arith.constant 0 : index
    %c768_77 = arith.constant 768 : index
    %82 = vector.load %arg10[%c0_75, %c0_76, %c768_77] : memref<1x1x1024xf32, #tpu.memory_space<vmem>>, vector<1x1x256xf32>
    tpu.vector_store %arg10[%c0_75, %c0_76, %c768_77], %81 {strides = array<i32>} : memref<1x1x1024xf32, #tpu.memory_space<vmem>>, vector<1x1x256xf32>,
    %c0_78 = arith.constant 0 : index
    %c0_79 = arith.constant 0 : index
    %c768_80 = arith.constant 768 : index
    %83 = vector.load %arg11[%c0_78, %c0_79, %c768_80] : memref<1x1x1024xf32, #tpu.memory_space<vmem>>, vector<1x1x256xf32>
    %84 = arith.minimumf %83, %79 : vector<1x1x256xf32>
    %c0_81 = arith.constant 0 : index
    %c0_82 = arith.constant 0 : index
    %c768_83 = arith.constant 768 : index
    %85 = vector.load %arg11[%c0_81, %c0_82, %c768_83] : memref<1x1x1024xf32, #tpu.memory_space<vmem>>, vector<1x1x256xf32>
    tpu.vector_store %arg11[%c0_81, %c0_82, %c768_83], %84 {strides = array<i32>} : memref<1x1x1024xf32, #tpu.memory_space<vmem>>, vector<1x1x256xf32>,
    return
  }
  func.func @transform_0(%arg0: i32, %arg1: i32) -> (i32, i32, i32) {
    %c0_i32 = arith.constant 0 : i32
    %c0_i32_0 = arith.constant 0 : i32
    return %arg0, %arg1, %c0_i32 : i32, i32, i32
  }
  func.func @transform_1(%arg0: i32, %arg1: i32) -> (i32, i32, i32) {
    %c0_i32 = arith.constant 0 : i32
    %c0_i32_0 = arith.constant 0 : i32
    %c0_i32_1 = arith.constant 0 : i32
    %c0_i32_2 = arith.constant 0 : i32
    return %c0_i32, %c0_i32_0, %c0_i32_1 : i32, i32, i32
  }
  func.func @transform_2(%arg0: i32, %arg1: i32) -> (i32, i32) {
    %c0_i32 = arith.constant 0 : i32
    %c0_i32_0 = arith.constant 0 : i32
    %c0_i32_1 = arith.constant 0 : i32
    return %c0_i32, %c0_i32_0 : i32, i32
  }
  func.func @transform_3(%arg0: i32, %arg1: i32) -> (i32, i32) {
    %c0_i32 = arith.constant 0 : i32
    %c0_i32_0 = arith.constant 0 : i32
    %c0_i32_1 = arith.constant 0 : i32
    return %c0_i32, %c0_i32_0 : i32, i32
  }
  func.func @transform_4(%arg0: i32, %arg1: i32) -> (i32, i32) {
    %c0_i32 = arith.constant 0 : i32
    %c0_i32_0 = arith.constant 0 : i32
    %c0_i32_1 = arith.constant 0 : i32
    return %c0_i32, %c0_i32_0 : i32, i32
  }
  func.func @transform_5(%arg0: i32, %arg1: i32) -> (i32, i32) {
    %c0_i32 = arith.constant 0 : i32
    %c0_i32_0 = arith.constant 0 : i32
    %c0_i32_1 = arith.constant 0 : i32
    return %c0_i32, %c0_i32_0 : i32, i32
  }
  func.func @transform_6(%arg0: i32, %arg1: i32) -> (i32, i32, i32) {
    %c0_i32 = arith.constant 0 : i32
    %c0_i32_0 = arith.constant 0 : i32
    %c0_i32_1 = arith.constant 0 : i32
    return %arg0, %c0_i32, %c0_i32_0 : i32, i32, i32
  }
  func.func @transform_7(%arg0: i32, %arg1: i32) -> (i32, i32, i32) {
    %c0_i32 = arith.constant 0 : i32
    %c0_i32_0 = arith.constant 0 : i32
    %c0_i32_1 = arith.constant 0 : i32
    return %arg0, %c0_i32, %c0_i32_0 : i32, i32, i32
  }
  func.func @transform_8(%arg0: i32, %arg1: i32) -> (i32, i32, i32) {
    %c0_i32 = arith.constant 0 : i32
    %c0_i32_0 = arith.constant 0 : i32
    %c0_i32_1 = arith.constant 0 : i32
    return %arg0, %c0_i32, %c0_i32_0 : i32, i32, i32
  }
  func.func @transform_9(%arg0: i32, %arg1: i32) -> (i32, i32, i32) {
    %c0_i32 = arith.constant 0 : i32
    %c0_i32_0 = arith.constant 0 : i32
    %c0_i32_1 = arith.constant 0 : i32
    return %arg0, %c0_i32, %c0_i32_0 : i32, i32, i32
  }
}

module attributes {stable_mosaic.version = 11 : i64} {
  func.func @_pp_passA_kernel(%arg0: i32, %arg1: i32, %arg2: memref<1x16x3xbf16, #tpu.memory_space<vmem>>, %arg3: memref<1x3x64xbf16, #tpu.memory_space<vmem>>, %arg4: memref<1x64xf32, #tpu.memory_space<vmem>>, %arg5: memref<64x128xbf16, #tpu.memory_space<vmem>>, %arg6: memref<1x1x128xf32, #tpu.memory_space<vmem>>, %arg7: memref<1x1x128xf32, #tpu.memory_space<vmem>>) attributes {dimension_semantics = [#tpu.dimension_semantics<parallel>, #tpu.dimension_semantics<arbitrary>], iteration_bounds = array<i64: 2, 1>, scalar_prefetch = 0 : i64, scratch_operands = 0 : i64, tpu.core_type = #tpu.core_type<tc>, window_params = [{transform_indices = @transform_0, window_bounds = array<i64: 1, 16, 3>}, {pipeline_mode = #tpu.pipeline_mode<synchronous>, transform_indices = @transform_1, window_bounds = array<i64: 1, 3, 64>}, {pipeline_mode = #tpu.pipeline_mode<synchronous>, transform_indices = @transform_2, window_bounds = array<i64: 1, 64>}, {pipeline_mode = #tpu.pipeline_mode<synchronous>, transform_indices = @transform_3, window_bounds = array<i64: 64, 128>}, {transform_indices = @transform_4, window_bounds = array<i64: 1, 1, 128>}, {transform_indices = @transform_5, window_bounds = array<i64: 1, 1, 128>}]} {
    %c0 = arith.constant 0 : index
    %c0_0 = arith.constant 0 : index
    %c0_1 = arith.constant 0 : index
    %0 = vector.load %arg2[%c0, %c0_0, %c0_1] : memref<1x16x3xbf16, #tpu.memory_space<vmem>>, vector<1x16x3xbf16>
    %1 = vector.shape_cast %0 : vector<1x16x3xbf16> to vector<16x3xbf16>
    %c0_2 = arith.constant 0 : index
    %c0_3 = arith.constant 0 : index
    %c0_4 = arith.constant 0 : index
    %2 = vector.load %arg3[%c0_2, %c0_3, %c0_4] : memref<1x3x64xbf16, #tpu.memory_space<vmem>>, vector<1x3x64xbf16>
    %3 = vector.shape_cast %2 : vector<1x3x64xbf16> to vector<3x64xbf16>
    %cst = arith.constant dense<0.000000e+00> : vector<16x64xf32>
    %4 = tpu.matmul %1, %3, %cst {dimension_numbers = #tpu.dot_dimension_numbers<[1], [0], [0], [1], [0, 0, 1, 1], [], []>} : vector<16x3xbf16>, vector<3x64xbf16>, vector<16x64xf32> -> vector<16x64xf32>
    %c0_5 = arith.constant 0 : index
    %c0_6 = arith.constant 0 : index
    %5 = vector.load %arg4[%c0_5, %c0_6] : memref<1x64xf32, #tpu.memory_space<vmem>>, vector<1x64xf32>
    %6 = vector.broadcast %5 : vector<1x64xf32> to vector<16x64xf32>
    %7 = arith.addf %4, %6 : vector<16x64xf32>
    %cst_7 = arith.constant 0.000000e+00 : f32
    %8 = vector.broadcast %cst_7 : f32 to vector<16x64xf32>
    %9 = arith.maximumf %7, %8 : vector<16x64xf32>
    %10 = arith.truncf %9 : vector<16x64xf32> to vector<16x64xbf16>
    %c0_8 = arith.constant 0 : index
    %c0_9 = arith.constant 0 : index
    %11 = vector.load %arg5[%c0_8, %c0_9] : memref<64x128xbf16, #tpu.memory_space<vmem>>, vector<64x128xbf16>
    %cst_10 = arith.constant dense<0.000000e+00> : vector<16x128xf32>
    %12 = tpu.matmul %10, %11, %cst_10 {dimension_numbers = #tpu.dot_dimension_numbers<[1], [0], [0], [1], [0, 0, 1, 1], [], []>} : vector<16x64xbf16>, vector<64x128xbf16>, vector<16x128xf32> -> vector<16x128xf32>
    %cst_11 = arith.constant dense<0.000000e+00> : vector<128xf32>
    %13 = vector.multi_reduction <add>, %12, %cst_11 [0] : vector<16x128xf32> to vector<128xf32>
    %14 = vector.shape_cast %13 : vector<128xf32> to vector<1x128xf32>
    %15 = vector.shape_cast %14 : vector<1x128xf32> to vector<1x1x128xf32>
    %16 = arith.mulf %12, %12 : vector<16x128xf32>
    %cst_12 = arith.constant dense<0.000000e+00> : vector<128xf32>
    %17 = vector.multi_reduction <add>, %16, %cst_12 [0] : vector<16x128xf32> to vector<128xf32>
    %18 = vector.shape_cast %17 : vector<128xf32> to vector<1x128xf32>
    %19 = vector.shape_cast %18 : vector<1x128xf32> to vector<1x1x128xf32>
    %c0_i32 = arith.constant 0 : i32
    %20 = arith.cmpi eq, %arg1, %c0_i32 : i32
    %21 = arith.extui %20 : i1 to i32
    %c0_i32_13 = arith.constant 0 : i32
    %22 = arith.cmpi ne, %21, %c0_i32_13 : i32
    scf.if %22 {
      %c0_16 = arith.constant 0 : index
      %c0_17 = arith.constant 0 : index
      %c0_18 = arith.constant 0 : index
      %26 = vector.load %arg6[%c0_16, %c0_17, %c0_18] : memref<1x1x128xf32, #tpu.memory_space<vmem>>, vector<1x1x128xf32>
      tpu.vector_store %arg6[%c0_16, %c0_17, %c0_18], %15 {strides = array<i32>} : memref<1x1x128xf32, #tpu.memory_space<vmem>>, vector<1x1x128xf32>,
      %c0_19 = arith.constant 0 : index
      %c0_20 = arith.constant 0 : index
      %c0_21 = arith.constant 0 : index
      %27 = vector.load %arg7[%c0_19, %c0_20, %c0_21] : memref<1x1x128xf32, #tpu.memory_space<vmem>>, vector<1x1x128xf32>
      tpu.vector_store %arg7[%c0_19, %c0_20, %c0_21], %19 {strides = array<i32>} : memref<1x1x128xf32, #tpu.memory_space<vmem>>, vector<1x1x128xf32>,
    } else {
    }
    %c0_i32_14 = arith.constant 0 : i32
    %23 = arith.cmpi ne, %arg1, %c0_i32_14 : i32
    %24 = arith.extui %23 : i1 to i32
    %c0_i32_15 = arith.constant 0 : i32
    %25 = arith.cmpi ne, %24, %c0_i32_15 : i32
    scf.if %25 {
      %c0_16 = arith.constant 0 : index
      %c0_17 = arith.constant 0 : index
      %c0_18 = arith.constant 0 : index
      %26 = vector.load %arg6[%c0_16, %c0_17, %c0_18] : memref<1x1x128xf32, #tpu.memory_space<vmem>>, vector<1x1x128xf32>
      %27 = arith.addf %26, %15 : vector<1x1x128xf32>
      %c0_19 = arith.constant 0 : index
      %c0_20 = arith.constant 0 : index
      %c0_21 = arith.constant 0 : index
      %28 = vector.load %arg6[%c0_19, %c0_20, %c0_21] : memref<1x1x128xf32, #tpu.memory_space<vmem>>, vector<1x1x128xf32>
      tpu.vector_store %arg6[%c0_19, %c0_20, %c0_21], %27 {strides = array<i32>} : memref<1x1x128xf32, #tpu.memory_space<vmem>>, vector<1x1x128xf32>,
      %c0_22 = arith.constant 0 : index
      %c0_23 = arith.constant 0 : index
      %c0_24 = arith.constant 0 : index
      %29 = vector.load %arg7[%c0_22, %c0_23, %c0_24] : memref<1x1x128xf32, #tpu.memory_space<vmem>>, vector<1x1x128xf32>
      %30 = arith.addf %29, %19 : vector<1x1x128xf32>
      %c0_25 = arith.constant 0 : index
      %c0_26 = arith.constant 0 : index
      %c0_27 = arith.constant 0 : index
      %31 = vector.load %arg7[%c0_25, %c0_26, %c0_27] : memref<1x1x128xf32, #tpu.memory_space<vmem>>, vector<1x1x128xf32>
      tpu.vector_store %arg7[%c0_25, %c0_26, %c0_27], %30 {strides = array<i32>} : memref<1x1x128xf32, #tpu.memory_space<vmem>>, vector<1x1x128xf32>,
    } else {
    }
    return
  }
  func.func @transform_0(%arg0: i32, %arg1: i32) -> (i32, i32, i32) {
    %c0_i32 = arith.constant 0 : i32
    %c0_i32_0 = arith.constant 0 : i32
    return %arg0, %arg1, %c0_i32 : i32, i32, i32
  }
  func.func @transform_1(%arg0: i32, %arg1: i32) -> (i32, i32, i32) {
    %c0_i32 = arith.constant 0 : i32
    %c0_i32_0 = arith.constant 0 : i32
    %c0_i32_1 = arith.constant 0 : i32
    %c0_i32_2 = arith.constant 0 : i32
    return %c0_i32, %c0_i32_0, %c0_i32_1 : i32, i32, i32
  }
  func.func @transform_2(%arg0: i32, %arg1: i32) -> (i32, i32) {
    %c0_i32 = arith.constant 0 : i32
    %c0_i32_0 = arith.constant 0 : i32
    %c0_i32_1 = arith.constant 0 : i32
    return %c0_i32, %c0_i32_0 : i32, i32
  }
  func.func @transform_3(%arg0: i32, %arg1: i32) -> (i32, i32) {
    %c0_i32 = arith.constant 0 : i32
    %c0_i32_0 = arith.constant 0 : i32
    %c0_i32_1 = arith.constant 0 : i32
    return %c0_i32, %c0_i32_0 : i32, i32
  }
  func.func @transform_4(%arg0: i32, %arg1: i32) -> (i32, i32, i32) {
    %c0_i32 = arith.constant 0 : i32
    %c0_i32_0 = arith.constant 0 : i32
    %c0_i32_1 = arith.constant 0 : i32
    return %arg0, %c0_i32, %c0_i32_0 : i32, i32, i32
  }
  func.func @transform_5(%arg0: i32, %arg1: i32) -> (i32, i32, i32) {
    %c0_i32 = arith.constant 0 : i32
    %c0_i32_0 = arith.constant 0 : i32
    %c0_i32_1 = arith.constant 0 : i32
    return %arg0, %c0_i32, %c0_i32_0 : i32, i32, i32
  }
}

module attributes {stable_mosaic.version = 11 : i64} {
  func.func @_stn_fc_kernel(%arg0: memref<2x1024xf32, #tpu.memory_space<vmem>>, %arg1: memref<1024x512xbf16, #tpu.memory_space<vmem>>, %arg2: memref<1x512xf32, #tpu.memory_space<vmem>>, %arg3: memref<1x512xf32, #tpu.memory_space<vmem>>, %arg4: memref<1x512xf32, #tpu.memory_space<vmem>>, %arg5: memref<512x256xbf16, #tpu.memory_space<vmem>>, %arg6: memref<1x256xf32, #tpu.memory_space<vmem>>, %arg7: memref<1x256xf32, #tpu.memory_space<vmem>>, %arg8: memref<1x256xf32, #tpu.memory_space<vmem>>, %arg9: memref<256x128xbf16, #tpu.memory_space<vmem>>, %arg10: memref<1x128xf32, #tpu.memory_space<vmem>>, %arg11: memref<2x128xf32, #tpu.memory_space<vmem>>) attributes {dimension_semantics = [], scalar_prefetch = 0 : i64, scratch_operands = 0 : i64, tpu.core_type = #tpu.core_type<tc>} {
    %c0 = arith.constant 0 : index
    %c0_0 = arith.constant 0 : index
    %0 = vector.load %arg0[%c0, %c0_0] : memref<2x1024xf32, #tpu.memory_space<vmem>>, vector<2x1024xf32>
    %1 = arith.truncf %0 : vector<2x1024xf32> to vector<2x1024xbf16>
    %c0_1 = arith.constant 0 : index
    %c0_2 = arith.constant 0 : index
    %2 = vector.load %arg1[%c0_1, %c0_2] : memref<1024x512xbf16, #tpu.memory_space<vmem>>, vector<1024x512xbf16>
    %cst = arith.constant dense<0.000000e+00> : vector<2x512xf32>
    %3 = tpu.matmul %1, %2, %cst {dimension_numbers = #tpu.dot_dimension_numbers<[1], [0], [0], [1], [0, 0, 1, 1], [], []>} : vector<2x1024xbf16>, vector<1024x512xbf16>, vector<2x512xf32> -> vector<2x512xf32>
    %c0_3 = arith.constant 0 : index
    %c0_4 = arith.constant 0 : index
    %4 = vector.load %arg2[%c0_3, %c0_4] : memref<1x512xf32, #tpu.memory_space<vmem>>, vector<1x512xf32>
    %5 = vector.broadcast %4 : vector<1x512xf32> to vector<2x512xf32>
    %6 = arith.addf %3, %5 : vector<2x512xf32>
    %c0_5 = arith.constant 0 : index
    %c0_6 = arith.constant 0 : index
    %7 = vector.load %arg3[%c0_5, %c0_6] : memref<1x512xf32, #tpu.memory_space<vmem>>, vector<1x512xf32>
    %c0_7 = arith.constant 0 : index
    %c0_8 = arith.constant 0 : index
    %8 = vector.load %arg4[%c0_7, %c0_8] : memref<1x512xf32, #tpu.memory_space<vmem>>, vector<1x512xf32>
    %cst_9 = arith.constant dense<0.000000e+00> : vector<512xf32>
    %9 = vector.multi_reduction <add>, %6, %cst_9 [0] : vector<2x512xf32> to vector<512xf32>
    %10 = vector.shape_cast %9 : vector<512xf32> to vector<1x512xf32>
    %cst_10 = arith.constant 2.000000e+00 : f32
    %11 = vector.broadcast %cst_10 : f32 to vector<1x512xf32>
    %12 = arith.divf %10, %11 : vector<1x512xf32>
    %13 = arith.mulf %6, %6 : vector<2x512xf32>
    %cst_11 = arith.constant dense<0.000000e+00> : vector<512xf32>
    %14 = vector.multi_reduction <add>, %13, %cst_11 [0] : vector<2x512xf32> to vector<512xf32>
    %15 = vector.shape_cast %14 : vector<512xf32> to vector<1x512xf32>
    %cst_12 = arith.constant 2.000000e+00 : f32
    %16 = vector.broadcast %cst_12 : f32 to vector<1x512xf32>
    %17 = arith.divf %15, %16 : vector<1x512xf32>
    %18 = arith.mulf %12, %12 : vector<1x512xf32>
    %19 = arith.subf %17, %18 : vector<1x512xf32>
    %cst_13 = arith.constant 0.000000e+00 : f32
    %20 = vector.broadcast %cst_13 : f32 to vector<1x512xf32>
    %21 = arith.maximumf %19, %20 : vector<1x512xf32>
    %22 = vector.broadcast %12 : vector<1x512xf32> to vector<2x512xf32>
    %23 = arith.subf %6, %22 : vector<2x512xf32>
    %cst_14 = arith.constant 9.99999974E-6 : f32
    %24 = vector.broadcast %cst_14 : f32 to vector<1x512xf32>
    %25 = arith.addf %21, %24 : vector<1x512xf32>
    %26 = math.rsqrt %25 : vector<1x512xf32>
    %27 = vector.broadcast %26 : vector<1x512xf32> to vector<2x512xf32>
    %28 = arith.mulf %23, %27 : vector<2x512xf32>
    %29 = vector.broadcast %7 : vector<1x512xf32> to vector<2x512xf32>
    %30 = arith.mulf %28, %29 : vector<2x512xf32>
    %31 = vector.broadcast %8 : vector<1x512xf32> to vector<2x512xf32>
    %32 = arith.addf %30, %31 : vector<2x512xf32>
    %cst_15 = arith.constant 0.000000e+00 : f32
    %33 = vector.broadcast %cst_15 : f32 to vector<2x512xf32>
    %34 = arith.maximumf %32, %33 : vector<2x512xf32>
    %35 = arith.truncf %34 : vector<2x512xf32> to vector<2x512xbf16>
    %c0_16 = arith.constant 0 : index
    %c0_17 = arith.constant 0 : index
    %36 = vector.load %arg5[%c0_16, %c0_17] : memref<512x256xbf16, #tpu.memory_space<vmem>>, vector<512x256xbf16>
    %cst_18 = arith.constant dense<0.000000e+00> : vector<2x256xf32>
    %37 = tpu.matmul %35, %36, %cst_18 {dimension_numbers = #tpu.dot_dimension_numbers<[1], [0], [0], [1], [0, 0, 1, 1], [], []>} : vector<2x512xbf16>, vector<512x256xbf16>, vector<2x256xf32> -> vector<2x256xf32>
    %c0_19 = arith.constant 0 : index
    %c0_20 = arith.constant 0 : index
    %38 = vector.load %arg6[%c0_19, %c0_20] : memref<1x256xf32, #tpu.memory_space<vmem>>, vector<1x256xf32>
    %39 = vector.broadcast %38 : vector<1x256xf32> to vector<2x256xf32>
    %40 = arith.addf %37, %39 : vector<2x256xf32>
    %c0_21 = arith.constant 0 : index
    %c0_22 = arith.constant 0 : index
    %41 = vector.load %arg7[%c0_21, %c0_22] : memref<1x256xf32, #tpu.memory_space<vmem>>, vector<1x256xf32>
    %c0_23 = arith.constant 0 : index
    %c0_24 = arith.constant 0 : index
    %42 = vector.load %arg8[%c0_23, %c0_24] : memref<1x256xf32, #tpu.memory_space<vmem>>, vector<1x256xf32>
    %cst_25 = arith.constant dense<0.000000e+00> : vector<256xf32>
    %43 = vector.multi_reduction <add>, %40, %cst_25 [0] : vector<2x256xf32> to vector<256xf32>
    %44 = vector.shape_cast %43 : vector<256xf32> to vector<1x256xf32>
    %cst_26 = arith.constant 2.000000e+00 : f32
    %45 = vector.broadcast %cst_26 : f32 to vector<1x256xf32>
    %46 = arith.divf %44, %45 : vector<1x256xf32>
    %47 = arith.mulf %40, %40 : vector<2x256xf32>
    %cst_27 = arith.constant dense<0.000000e+00> : vector<256xf32>
    %48 = vector.multi_reduction <add>, %47, %cst_27 [0] : vector<2x256xf32> to vector<256xf32>
    %49 = vector.shape_cast %48 : vector<256xf32> to vector<1x256xf32>
    %cst_28 = arith.constant 2.000000e+00 : f32
    %50 = vector.broadcast %cst_28 : f32 to vector<1x256xf32>
    %51 = arith.divf %49, %50 : vector<1x256xf32>
    %52 = arith.mulf %46, %46 : vector<1x256xf32>
    %53 = arith.subf %51, %52 : vector<1x256xf32>
    %cst_29 = arith.constant 0.000000e+00 : f32
    %54 = vector.broadcast %cst_29 : f32 to vector<1x256xf32>
    %55 = arith.maximumf %53, %54 : vector<1x256xf32>
    %56 = vector.broadcast %46 : vector<1x256xf32> to vector<2x256xf32>
    %57 = arith.subf %40, %56 : vector<2x256xf32>
    %cst_30 = arith.constant 9.99999974E-6 : f32
    %58 = vector.broadcast %cst_30 : f32 to vector<1x256xf32>
    %59 = arith.addf %55, %58 : vector<1x256xf32>
    %60 = math.rsqrt %59 : vector<1x256xf32>
    %61 = vector.broadcast %60 : vector<1x256xf32> to vector<2x256xf32>
    %62 = arith.mulf %57, %61 : vector<2x256xf32>
    %63 = vector.broadcast %41 : vector<1x256xf32> to vector<2x256xf32>
    %64 = arith.mulf %62, %63 : vector<2x256xf32>
    %65 = vector.broadcast %42 : vector<1x256xf32> to vector<2x256xf32>
    %66 = arith.addf %64, %65 : vector<2x256xf32>
    %cst_31 = arith.constant 0.000000e+00 : f32
    %67 = vector.broadcast %cst_31 : f32 to vector<2x256xf32>
    %68 = arith.maximumf %66, %67 : vector<2x256xf32>
    %69 = arith.truncf %68 : vector<2x256xf32> to vector<2x256xbf16>
    %c0_32 = arith.constant 0 : index
    %c0_33 = arith.constant 0 : index
    %70 = vector.load %arg9[%c0_32, %c0_33] : memref<256x128xbf16, #tpu.memory_space<vmem>>, vector<256x128xbf16>
    %cst_34 = arith.constant dense<0.000000e+00> : vector<2x128xf32>
    %71 = tpu.matmul %69, %70, %cst_34 {dimension_numbers = #tpu.dot_dimension_numbers<[1], [0], [0], [1], [0, 0, 1, 1], [], []>} : vector<2x256xbf16>, vector<256x128xbf16>, vector<2x128xf32> -> vector<2x128xf32>
    %c0_35 = arith.constant 0 : index
    %c0_36 = arith.constant 0 : index
    %72 = vector.load %arg10[%c0_35, %c0_36] : memref<1x128xf32, #tpu.memory_space<vmem>>, vector<1x128xf32>
    %73 = vector.broadcast %72 : vector<1x128xf32> to vector<2x128xf32>
    %74 = arith.addf %71, %73 : vector<2x128xf32>
    %c0_37 = arith.constant 0 : index
    %c0_38 = arith.constant 0 : index
    %75 = vector.load %arg11[%c0_37, %c0_38] : memref<2x128xf32, #tpu.memory_space<vmem>>, vector<2x128xf32>
    tpu.vector_store %arg11[%c0_37, %c0_38], %74 {strides = array<i32>} : memref<2x128xf32, #tpu.memory_space<vmem>>, vector<2x128xf32>,
    return
  }
}

module attributes {stable_mosaic.version = 11 : i64} {
  func.func @_pp_passA_kernel(%arg0: i32, %arg1: i32, %arg2: memref<1x16x3xbf16, #tpu.memory_space<vmem>>, %arg3: memref<1x3x64xbf16, #tpu.memory_space<vmem>>, %arg4: memref<1x64xf32, #tpu.memory_space<vmem>>, %arg5: memref<64x128xbf16, #tpu.memory_space<vmem>>, %arg6: memref<1x1x128xf32, #tpu.memory_space<vmem>>, %arg7: memref<1x1x128xf32, #tpu.memory_space<vmem>>) attributes {dimension_semantics = [#tpu.dimension_semantics<parallel>, #tpu.dimension_semantics<arbitrary>], iteration_bounds = array<i64: 2, 1>, scalar_prefetch = 0 : i64, scratch_operands = 0 : i64, tpu.core_type = #tpu.core_type<tc>, window_params = [{transform_indices = @transform_0, window_bounds = array<i64: 1, 16, 3>}, {transform_indices = @transform_1, window_bounds = array<i64: 1, 3, 64>}, {pipeline_mode = #tpu.pipeline_mode<synchronous>, transform_indices = @transform_2, window_bounds = array<i64: 1, 64>}, {pipeline_mode = #tpu.pipeline_mode<synchronous>, transform_indices = @transform_3, window_bounds = array<i64: 64, 128>}, {transform_indices = @transform_4, window_bounds = array<i64: 1, 1, 128>}, {transform_indices = @transform_5, window_bounds = array<i64: 1, 1, 128>}]} {
    %c0 = arith.constant 0 : index
    %c0_0 = arith.constant 0 : index
    %c0_1 = arith.constant 0 : index
    %0 = vector.load %arg2[%c0, %c0_0, %c0_1] : memref<1x16x3xbf16, #tpu.memory_space<vmem>>, vector<1x16x3xbf16>
    %1 = vector.shape_cast %0 : vector<1x16x3xbf16> to vector<16x3xbf16>
    %c0_2 = arith.constant 0 : index
    %c0_3 = arith.constant 0 : index
    %c0_4 = arith.constant 0 : index
    %2 = vector.load %arg3[%c0_2, %c0_3, %c0_4] : memref<1x3x64xbf16, #tpu.memory_space<vmem>>, vector<1x3x64xbf16>
    %3 = vector.shape_cast %2 : vector<1x3x64xbf16> to vector<3x64xbf16>
    %cst = arith.constant dense<0.000000e+00> : vector<16x64xf32>
    %4 = tpu.matmul %1, %3, %cst {dimension_numbers = #tpu.dot_dimension_numbers<[1], [0], [0], [1], [0, 0, 1, 1], [], []>} : vector<16x3xbf16>, vector<3x64xbf16>, vector<16x64xf32> -> vector<16x64xf32>
    %c0_5 = arith.constant 0 : index
    %c0_6 = arith.constant 0 : index
    %5 = vector.load %arg4[%c0_5, %c0_6] : memref<1x64xf32, #tpu.memory_space<vmem>>, vector<1x64xf32>
    %6 = vector.broadcast %5 : vector<1x64xf32> to vector<16x64xf32>
    %7 = arith.addf %4, %6 : vector<16x64xf32>
    %cst_7 = arith.constant 0.000000e+00 : f32
    %8 = vector.broadcast %cst_7 : f32 to vector<16x64xf32>
    %9 = arith.maximumf %7, %8 : vector<16x64xf32>
    %10 = arith.truncf %9 : vector<16x64xf32> to vector<16x64xbf16>
    %c0_8 = arith.constant 0 : index
    %c0_9 = arith.constant 0 : index
    %11 = vector.load %arg5[%c0_8, %c0_9] : memref<64x128xbf16, #tpu.memory_space<vmem>>, vector<64x128xbf16>
    %cst_10 = arith.constant dense<0.000000e+00> : vector<16x128xf32>
    %12 = tpu.matmul %10, %11, %cst_10 {dimension_numbers = #tpu.dot_dimension_numbers<[1], [0], [0], [1], [0, 0, 1, 1], [], []>} : vector<16x64xbf16>, vector<64x128xbf16>, vector<16x128xf32> -> vector<16x128xf32>
    %cst_11 = arith.constant dense<0.000000e+00> : vector<128xf32>
    %13 = vector.multi_reduction <add>, %12, %cst_11 [0] : vector<16x128xf32> to vector<128xf32>
    %14 = vector.shape_cast %13 : vector<128xf32> to vector<1x128xf32>
    %15 = vector.shape_cast %14 : vector<1x128xf32> to vector<1x1x128xf32>
    %16 = arith.mulf %12, %12 : vector<16x128xf32>
    %cst_12 = arith.constant dense<0.000000e+00> : vector<128xf32>
    %17 = vector.multi_reduction <add>, %16, %cst_12 [0] : vector<16x128xf32> to vector<128xf32>
    %18 = vector.shape_cast %17 : vector<128xf32> to vector<1x128xf32>
    %19 = vector.shape_cast %18 : vector<1x128xf32> to vector<1x1x128xf32>
    %c0_i32 = arith.constant 0 : i32
    %20 = arith.cmpi eq, %arg1, %c0_i32 : i32
    %21 = arith.extui %20 : i1 to i32
    %c0_i32_13 = arith.constant 0 : i32
    %22 = arith.cmpi ne, %21, %c0_i32_13 : i32
    scf.if %22 {
      %c0_16 = arith.constant 0 : index
      %c0_17 = arith.constant 0 : index
      %c0_18 = arith.constant 0 : index
      %26 = vector.load %arg6[%c0_16, %c0_17, %c0_18] : memref<1x1x128xf32, #tpu.memory_space<vmem>>, vector<1x1x128xf32>
      tpu.vector_store %arg6[%c0_16, %c0_17, %c0_18], %15 {strides = array<i32>} : memref<1x1x128xf32, #tpu.memory_space<vmem>>, vector<1x1x128xf32>,
      %c0_19 = arith.constant 0 : index
      %c0_20 = arith.constant 0 : index
      %c0_21 = arith.constant 0 : index
      %27 = vector.load %arg7[%c0_19, %c0_20, %c0_21] : memref<1x1x128xf32, #tpu.memory_space<vmem>>, vector<1x1x128xf32>
      tpu.vector_store %arg7[%c0_19, %c0_20, %c0_21], %19 {strides = array<i32>} : memref<1x1x128xf32, #tpu.memory_space<vmem>>, vector<1x1x128xf32>,
    } else {
    }
    %c0_i32_14 = arith.constant 0 : i32
    %23 = arith.cmpi ne, %arg1, %c0_i32_14 : i32
    %24 = arith.extui %23 : i1 to i32
    %c0_i32_15 = arith.constant 0 : i32
    %25 = arith.cmpi ne, %24, %c0_i32_15 : i32
    scf.if %25 {
      %c0_16 = arith.constant 0 : index
      %c0_17 = arith.constant 0 : index
      %c0_18 = arith.constant 0 : index
      %26 = vector.load %arg6[%c0_16, %c0_17, %c0_18] : memref<1x1x128xf32, #tpu.memory_space<vmem>>, vector<1x1x128xf32>
      %27 = arith.addf %26, %15 : vector<1x1x128xf32>
      %c0_19 = arith.constant 0 : index
      %c0_20 = arith.constant 0 : index
      %c0_21 = arith.constant 0 : index
      %28 = vector.load %arg6[%c0_19, %c0_20, %c0_21] : memref<1x1x128xf32, #tpu.memory_space<vmem>>, vector<1x1x128xf32>
      tpu.vector_store %arg6[%c0_19, %c0_20, %c0_21], %27 {strides = array<i32>} : memref<1x1x128xf32, #tpu.memory_space<vmem>>, vector<1x1x128xf32>,
      %c0_22 = arith.constant 0 : index
      %c0_23 = arith.constant 0 : index
      %c0_24 = arith.constant 0 : index
      %29 = vector.load %arg7[%c0_22, %c0_23, %c0_24] : memref<1x1x128xf32, #tpu.memory_space<vmem>>, vector<1x1x128xf32>
      %30 = arith.addf %29, %19 : vector<1x1x128xf32>
      %c0_25 = arith.constant 0 : index
      %c0_26 = arith.constant 0 : index
      %c0_27 = arith.constant 0 : index
      %31 = vector.load %arg7[%c0_25, %c0_26, %c0_27] : memref<1x1x128xf32, #tpu.memory_space<vmem>>, vector<1x1x128xf32>
      tpu.vector_store %arg7[%c0_25, %c0_26, %c0_27], %30 {strides = array<i32>} : memref<1x1x128xf32, #tpu.memory_space<vmem>>, vector<1x1x128xf32>,
    } else {
    }
    return
  }
  func.func @transform_0(%arg0: i32, %arg1: i32) -> (i32, i32, i32) {
    %c0_i32 = arith.constant 0 : i32
    %c0_i32_0 = arith.constant 0 : i32
    return %arg0, %arg1, %c0_i32 : i32, i32, i32
  }
  func.func @transform_1(%arg0: i32, %arg1: i32) -> (i32, i32, i32) {
    %c0_i32 = arith.constant 0 : i32
    %c0_i32_0 = arith.constant 0 : i32
    %c0_i32_1 = arith.constant 0 : i32
    return %arg0, %c0_i32, %c0_i32_0 : i32, i32, i32
  }
  func.func @transform_2(%arg0: i32, %arg1: i32) -> (i32, i32) {
    %c0_i32 = arith.constant 0 : i32
    %c0_i32_0 = arith.constant 0 : i32
    %c0_i32_1 = arith.constant 0 : i32
    return %c0_i32, %c0_i32_0 : i32, i32
  }
  func.func @transform_3(%arg0: i32, %arg1: i32) -> (i32, i32) {
    %c0_i32 = arith.constant 0 : i32
    %c0_i32_0 = arith.constant 0 : i32
    %c0_i32_1 = arith.constant 0 : i32
    return %c0_i32, %c0_i32_0 : i32, i32
  }
  func.func @transform_4(%arg0: i32, %arg1: i32) -> (i32, i32, i32) {
    %c0_i32 = arith.constant 0 : i32
    %c0_i32_0 = arith.constant 0 : i32
    %c0_i32_1 = arith.constant 0 : i32
    return %arg0, %c0_i32, %c0_i32_0 : i32, i32, i32
  }
  func.func @transform_5(%arg0: i32, %arg1: i32) -> (i32, i32, i32) {
    %c0_i32 = arith.constant 0 : i32
    %c0_i32_0 = arith.constant 0 : i32
    %c0_i32_1 = arith.constant 0 : i32
    return %arg0, %c0_i32, %c0_i32_0 : i32, i32, i32
  }
}

module attributes {stable_mosaic.version = 11 : i64} {
  func.func @_pp_passB_gram_kernel(%arg0: i32, %arg1: i32, %arg2: memref<1x16x3xbf16, #tpu.memory_space<vmem>>, %arg3: memref<1x3x64xbf16, #tpu.memory_space<vmem>>, %arg4: memref<1x64xf32, #tpu.memory_space<vmem>>, %arg5: memref<64x128xbf16, #tpu.memory_space<vmem>>, %arg6: memref<1x128xf32, #tpu.memory_space<vmem>>, %arg7: memref<128x1024xbf16, #tpu.memory_space<vmem>>, %arg8: memref<1x1x128xf32, #tpu.memory_space<vmem>>, %arg9: memref<1x128x128xf32, #tpu.memory_space<vmem>>, %arg10: memref<1x1x1024xf32, #tpu.memory_space<vmem>>, %arg11: memref<1x1x1024xf32, #tpu.memory_space<vmem>>) attributes {dimension_semantics = [#tpu.dimension_semantics<parallel>, #tpu.dimension_semantics<arbitrary>], iteration_bounds = array<i64: 2, 1>, scalar_prefetch = 0 : i64, scratch_operands = 0 : i64, tpu.core_type = #tpu.core_type<tc>, window_params = [{transform_indices = @transform_0, window_bounds = array<i64: 1, 16, 3>}, {transform_indices = @transform_1, window_bounds = array<i64: 1, 3, 64>}, {pipeline_mode = #tpu.pipeline_mode<synchronous>, transform_indices = @transform_2, window_bounds = array<i64: 1, 64>}, {pipeline_mode = #tpu.pipeline_mode<synchronous>, transform_indices = @transform_3, window_bounds = array<i64: 64, 128>}, {pipeline_mode = #tpu.pipeline_mode<synchronous>, transform_indices = @transform_4, window_bounds = array<i64: 1, 128>}, {pipeline_mode = #tpu.pipeline_mode<synchronous>, transform_indices = @transform_5, window_bounds = array<i64: 128, 1024>}, {transform_indices = @transform_6, window_bounds = array<i64: 1, 1, 128>}, {transform_indices = @transform_7, window_bounds = array<i64: 1, 128, 128>}, {transform_indices = @transform_8, window_bounds = array<i64: 1, 1, 1024>}, {transform_indices = @transform_9, window_bounds = array<i64: 1, 1, 1024>}]} {
    %c0 = arith.constant 0 : index
    %c0_0 = arith.constant 0 : index
    %c0_1 = arith.constant 0 : index
    %0 = vector.load %arg2[%c0, %c0_0, %c0_1] : memref<1x16x3xbf16, #tpu.memory_space<vmem>>, vector<1x16x3xbf16>
    %1 = vector.shape_cast %0 : vector<1x16x3xbf16> to vector<16x3xbf16>
    %c0_2 = arith.constant 0 : index
    %c0_3 = arith.constant 0 : index
    %c0_4 = arith.constant 0 : index
    %2 = vector.load %arg3[%c0_2, %c0_3, %c0_4] : memref<1x3x64xbf16, #tpu.memory_space<vmem>>, vector<1x3x64xbf16>
    %3 = vector.shape_cast %2 : vector<1x3x64xbf16> to vector<3x64xbf16>
    %cst = arith.constant dense<0.000000e+00> : vector<16x64xf32>
    %4 = tpu.matmul %1, %3, %cst {dimension_numbers = #tpu.dot_dimension_numbers<[1], [0], [0], [1], [0, 0, 1, 1], [], []>} : vector<16x3xbf16>, vector<3x64xbf16>, vector<16x64xf32> -> vector<16x64xf32>
    %c0_5 = arith.constant 0 : index
    %c0_6 = arith.constant 0 : index
    %5 = vector.load %arg4[%c0_5, %c0_6] : memref<1x64xf32, #tpu.memory_space<vmem>>, vector<1x64xf32>
    %6 = vector.broadcast %5 : vector<1x64xf32> to vector<16x64xf32>
    %7 = arith.addf %4, %6 : vector<16x64xf32>
    %cst_7 = arith.constant 0.000000e+00 : f32
    %8 = vector.broadcast %cst_7 : f32 to vector<16x64xf32>
    %9 = arith.maximumf %7, %8 : vector<16x64xf32>
    %10 = arith.truncf %9 : vector<16x64xf32> to vector<16x64xbf16>
    %c0_8 = arith.constant 0 : index
    %c0_9 = arith.constant 0 : index
    %11 = vector.load %arg5[%c0_8, %c0_9] : memref<64x128xbf16, #tpu.memory_space<vmem>>, vector<64x128xbf16>
    %cst_10 = arith.constant dense<0.000000e+00> : vector<16x128xf32>
    %12 = tpu.matmul %10, %11, %cst_10 {dimension_numbers = #tpu.dot_dimension_numbers<[1], [0], [0], [1], [0, 0, 1, 1], [], []>} : vector<16x64xbf16>, vector<64x128xbf16>, vector<16x128xf32> -> vector<16x128xf32>
    %c0_11 = arith.constant 0 : index
    %c0_12 = arith.constant 0 : index
    %13 = vector.load %arg6[%c0_11, %c0_12] : memref<1x128xf32, #tpu.memory_space<vmem>>, vector<1x128xf32>
    %14 = vector.broadcast %13 : vector<1x128xf32> to vector<16x128xf32>
    %15 = arith.addf %12, %14 : vector<16x128xf32>
    %cst_13 = arith.constant 0.000000e+00 : f32
    %16 = vector.broadcast %cst_13 : f32 to vector<16x128xf32>
    %17 = arith.maximumf %15, %16 : vector<16x128xf32>
    %18 = arith.truncf %17 : vector<16x128xf32> to vector<16x128xbf16>
    %cst_14 = arith.constant dense<0.000000e+00> : vector<128xf32>
    %19 = vector.multi_reduction <add>, %17, %cst_14 [0] : vector<16x128xf32> to vector<128xf32>
    %20 = vector.shape_cast %19 : vector<128xf32> to vector<1x128xf32>
    %21 = vector.shape_cast %20 : vector<1x128xf32> to vector<1x1x128xf32>
    %cst_15 = arith.constant dense<0.000000e+00> : vector<128x128xf32>
    %22 = tpu.matmul %18, %18, %cst_15 {dimension_numbers = #tpu.dot_dimension_numbers<[0], [0], [1], [1], [0, 1, 1, 1], [], []>} : vector<16x128xbf16>, vector<16x128xbf16>, vector<128x128xf32> -> vector<128x128xf32>
    %23 = vector.shape_cast %22 : vector<128x128xf32> to vector<1x128x128xf32>
    %c0_i32 = arith.constant 0 : i32
    %24 = arith.cmpi eq, %arg1, %c0_i32 : i32
    %25 = arith.extui %24 : i1 to i32
    %c0_i32_16 = arith.constant 0 : i32
    %26 = arith.cmpi ne, %25, %c0_i32_16 : i32
    scf.if %26 {
      %c0_84 = arith.constant 0 : index
      %c0_85 = arith.constant 0 : index
      %c0_86 = arith.constant 0 : index
      %86 = vector.load %arg8[%c0_84, %c0_85, %c0_86] : memref<1x1x128xf32, #tpu.memory_space<vmem>>, vector<1x1x128xf32>
      tpu.vector_store %arg8[%c0_84, %c0_85, %c0_86], %21 {strides = array<i32>} : memref<1x1x128xf32, #tpu.memory_space<vmem>>, vector<1x1x128xf32>,
      %c0_87 = arith.constant 0 : index
      %c0_88 = arith.constant 0 : index
      %c0_89 = arith.constant 0 : index
      %87 = vector.load %arg9[%c0_87, %c0_88, %c0_89] : memref<1x128x128xf32, #tpu.memory_space<vmem>>, vector<1x128x128xf32>
      tpu.vector_store %arg9[%c0_87, %c0_88, %c0_89], %23 {strides = array<i32>} : memref<1x128x128xf32, #tpu.memory_space<vmem>>, vector<1x128x128xf32>,
      %cst_90 = arith.constant 0xFF800000 : f32
      %88 = vector.broadcast %cst_90 : f32 to vector<1x1x1024xf32>
      %c0_91 = arith.constant 0 : index
      %c0_92 = arith.constant 0 : index
      %c0_93 = arith.constant 0 : index
      %89 = vector.load %arg10[%c0_91, %c0_92, %c0_93] : memref<1x1x1024xf32, #tpu.memory_space<vmem>>, vector<1x1x1024xf32>
      tpu.vector_store %arg10[%c0_91, %c0_92, %c0_93], %88 {strides = array<i32>} : memref<1x1x1024xf32, #tpu.memory_space<vmem>>, vector<1x1x1024xf32>,
      %cst_94 = arith.constant 0x7F800000 : f32
      %90 = vector.broadcast %cst_94 : f32 to vector<1x1x1024xf32>
      %c0_95 = arith.constant 0 : index
      %c0_96 = arith.constant 0 : index
      %c0_97 = arith.constant 0 : index
      %91 = vector.load %arg11[%c0_95, %c0_96, %c0_97] : memref<1x1x1024xf32, #tpu.memory_space<vmem>>, vector<1x1x1024xf32>
      tpu.vector_store %arg11[%c0_95, %c0_96, %c0_97], %90 {strides = array<i32>} : memref<1x1x1024xf32, #tpu.memory_space<vmem>>, vector<1x1x1024xf32>,
    } else {
    }
    %c0_i32_17 = arith.constant 0 : i32
    %27 = arith.cmpi ne, %arg1, %c0_i32_17 : i32
    %28 = arith.extui %27 : i1 to i32
    %c0_i32_18 = arith.constant 0 : i32
    %29 = arith.cmpi ne, %28, %c0_i32_18 : i32
    scf.if %29 {
      %c0_84 = arith.constant 0 : index
      %c0_85 = arith.constant 0 : index
      %c0_86 = arith.constant 0 : index
      %86 = vector.load %arg8[%c0_84, %c0_85, %c0_86] : memref<1x1x128xf32, #tpu.memory_space<vmem>>, vector<1x1x128xf32>
      %87 = arith.addf %86, %21 : vector<1x1x128xf32>
      %c0_87 = arith.constant 0 : index
      %c0_88 = arith.constant 0 : index
      %c0_89 = arith.constant 0 : index
      %88 = vector.load %arg8[%c0_87, %c0_88, %c0_89] : memref<1x1x128xf32, #tpu.memory_space<vmem>>, vector<1x1x128xf32>
      tpu.vector_store %arg8[%c0_87, %c0_88, %c0_89], %87 {strides = array<i32>} : memref<1x1x128xf32, #tpu.memory_space<vmem>>, vector<1x1x128xf32>,
      %c0_90 = arith.constant 0 : index
      %c0_91 = arith.constant 0 : index
      %c0_92 = arith.constant 0 : index
      %89 = vector.load %arg9[%c0_90, %c0_91, %c0_92] : memref<1x128x128xf32, #tpu.memory_space<vmem>>, vector<1x128x128xf32>
      %90 = arith.addf %89, %23 : vector<1x128x128xf32>
      %c0_93 = arith.constant 0 : index
      %c0_94 = arith.constant 0 : index
      %c0_95 = arith.constant 0 : index
      %91 = vector.load %arg9[%c0_93, %c0_94, %c0_95] : memref<1x128x128xf32, #tpu.memory_space<vmem>>, vector<1x128x128xf32>
      tpu.vector_store %arg9[%c0_93, %c0_94, %c0_95], %90 {strides = array<i32>} : memref<1x128x128xf32, #tpu.memory_space<vmem>>, vector<1x128x128xf32>,
    } else {
    }
    %c0_19 = arith.constant 0 : index
    %c0_20 = arith.constant 0 : index
    %30 = vector.load %arg7[%c0_19, %c0_20] : memref<128x1024xbf16, #tpu.memory_space<vmem>>, vector<128x256xbf16>
    %cst_21 = arith.constant dense<0.000000e+00> : vector<16x256xf32>
    %31 = tpu.matmul %18, %30, %cst_21 {dimension_numbers = #tpu.dot_dimension_numbers<[1], [0], [0], [1], [0, 0, 1, 1], [], []>} : vector<16x128xbf16>, vector<128x256xbf16>, vector<16x256xf32> -> vector<16x256xf32>
    %cst_22 = arith.constant dense<0xFF800000> : vector<256xf32>
    %32 = vector.multi_reduction <maximumf>, %31, %cst_22 [0] : vector<16x256xf32> to vector<256xf32>
    %33 = vector.shape_cast %32 : vector<256xf32> to vector<1x256xf32>
    %34 = vector.shape_cast %33 : vector<1x256xf32> to vector<1x1x256xf32>
    %cst_23 = arith.constant dense<0x7F800000> : vector<256xf32>
    %35 = vector.multi_reduction <minimumf>, %31, %cst_23 [0] : vector<16x256xf32> to vector<256xf32>
    %36 = vector.shape_cast %35 : vector<256xf32> to vector<1x256xf32>
    %37 = vector.shape_cast %36 : vector<1x256xf32> to vector<1x1x256xf32>
    %c0_24 = arith.constant 0 : index
    %c0_25 = arith.constant 0 : index
    %c0_26 = arith.constant 0 : index
    %38 = vector.load %arg10[%c0_24, %c0_25, %c0_26] : memref<1x1x1024xf32, #tpu.memory_space<vmem>>, vector<1x1x256xf32>
    %39 = arith.maximumf %38, %34 : vector<1x1x256xf32>
    %c0_27 = arith.constant 0 : index
    %c0_28 = arith.constant 0 : index
    %c0_29 = arith.constant 0 : index
    %40 = vector.load %arg10[%c0_27, %c0_28, %c0_29] : memref<1x1x1024xf32, #tpu.memory_space<vmem>>, vector<1x1x256xf32>
    tpu.vector_store %arg10[%c0_27, %c0_28, %c0_29], %39 {strides = array<i32>} : memref<1x1x1024xf32, #tpu.memory_space<vmem>>, vector<1x1x256xf32>,
    %c0_30 = arith.constant 0 : index
    %c0_31 = arith.constant 0 : index
    %c0_32 = arith.constant 0 : index
    %41 = vector.load %arg11[%c0_30, %c0_31, %c0_32] : memref<1x1x1024xf32, #tpu.memory_space<vmem>>, vector<1x1x256xf32>
    %42 = arith.minimumf %41, %37 : vector<1x1x256xf32>
    %c0_33 = arith.constant 0 : index
    %c0_34 = arith.constant 0 : index
    %c0_35 = arith.constant 0 : index
    %43 = vector.load %arg11[%c0_33, %c0_34, %c0_35] : memref<1x1x1024xf32, #tpu.memory_space<vmem>>, vector<1x1x256xf32>
    tpu.vector_store %arg11[%c0_33, %c0_34, %c0_35], %42 {strides = array<i32>} : memref<1x1x1024xf32, #tpu.memory_space<vmem>>, vector<1x1x256xf32>,
    %c0_36 = arith.constant 0 : index
    %c256 = arith.constant 256 : index
    %44 = vector.load %arg7[%c0_36, %c256] : memref<128x1024xbf16, #tpu.memory_space<vmem>>, vector<128x256xbf16>
    %cst_37 = arith.constant dense<0.000000e+00> : vector<16x256xf32>
    %45 = tpu.matmul %18, %44, %cst_37 {dimension_numbers = #tpu.dot_dimension_numbers<[1], [0], [0], [1], [0, 0, 1, 1], [], []>} : vector<16x128xbf16>, vector<128x256xbf16>, vector<16x256xf32> -> vector<16x256xf32>
    %cst_38 = arith.constant dense<0xFF800000> : vector<256xf32>
    %46 = vector.multi_reduction <maximumf>, %45, %cst_38 [0] : vector<16x256xf32> to vector<256xf32>
    %47 = vector.shape_cast %46 : vector<256xf32> to vector<1x256xf32>
    %48 = vector.shape_cast %47 : vector<1x256xf32> to vector<1x1x256xf32>
    %cst_39 = arith.constant dense<0x7F800000> : vector<256xf32>
    %49 = vector.multi_reduction <minimumf>, %45, %cst_39 [0] : vector<16x256xf32> to vector<256xf32>
    %50 = vector.shape_cast %49 : vector<256xf32> to vector<1x256xf32>
    %51 = vector.shape_cast %50 : vector<1x256xf32> to vector<1x1x256xf32>
    %c0_40 = arith.constant 0 : index
    %c0_41 = arith.constant 0 : index
    %c256_42 = arith.constant 256 : index
    %52 = vector.load %arg10[%c0_40, %c0_41, %c256_42] : memref<1x1x1024xf32, #tpu.memory_space<vmem>>, vector<1x1x256xf32>
    %53 = arith.maximumf %52, %48 : vector<1x1x256xf32>
    %c0_43 = arith.constant 0 : index
    %c0_44 = arith.constant 0 : index
    %c256_45 = arith.constant 256 : index
    %54 = vector.load %arg10[%c0_43, %c0_44, %c256_45] : memref<1x1x1024xf32, #tpu.memory_space<vmem>>, vector<1x1x256xf32>
    tpu.vector_store %arg10[%c0_43, %c0_44, %c256_45], %53 {strides = array<i32>} : memref<1x1x1024xf32, #tpu.memory_space<vmem>>, vector<1x1x256xf32>,
    %c0_46 = arith.constant 0 : index
    %c0_47 = arith.constant 0 : index
    %c256_48 = arith.constant 256 : index
    %55 = vector.load %arg11[%c0_46, %c0_47, %c256_48] : memref<1x1x1024xf32, #tpu.memory_space<vmem>>, vector<1x1x256xf32>
    %56 = arith.minimumf %55, %51 : vector<1x1x256xf32>
    %c0_49 = arith.constant 0 : index
    %c0_50 = arith.constant 0 : index
    %c256_51 = arith.constant 256 : index
    %57 = vector.load %arg11[%c0_49, %c0_50, %c256_51] : memref<1x1x1024xf32, #tpu.memory_space<vmem>>, vector<1x1x256xf32>
    tpu.vector_store %arg11[%c0_49, %c0_50, %c256_51], %56 {strides = array<i32>} : memref<1x1x1024xf32, #tpu.memory_space<vmem>>, vector<1x1x256xf32>,
    %c0_52 = arith.constant 0 : index
    %c512 = arith.constant 512 : index
    %58 = vector.load %arg7[%c0_52, %c512] : memref<128x1024xbf16, #tpu.memory_space<vmem>>, vector<128x256xbf16>
    %cst_53 = arith.constant dense<0.000000e+00> : vector<16x256xf32>
    %59 = tpu.matmul %18, %58, %cst_53 {dimension_numbers = #tpu.dot_dimension_numbers<[1], [0], [0], [1], [0, 0, 1, 1], [], []>} : vector<16x128xbf16>, vector<128x256xbf16>, vector<16x256xf32> -> vector<16x256xf32>
    %cst_54 = arith.constant dense<0xFF800000> : vector<256xf32>
    %60 = vector.multi_reduction <maximumf>, %59, %cst_54 [0] : vector<16x256xf32> to vector<256xf32>
    %61 = vector.shape_cast %60 : vector<256xf32> to vector<1x256xf32>
    %62 = vector.shape_cast %61 : vector<1x256xf32> to vector<1x1x256xf32>
    %cst_55 = arith.constant dense<0x7F800000> : vector<256xf32>
    %63 = vector.multi_reduction <minimumf>, %59, %cst_55 [0] : vector<16x256xf32> to vector<256xf32>
    %64 = vector.shape_cast %63 : vector<256xf32> to vector<1x256xf32>
    %65 = vector.shape_cast %64 : vector<1x256xf32> to vector<1x1x256xf32>
    %c0_56 = arith.constant 0 : index
    %c0_57 = arith.constant 0 : index
    %c512_58 = arith.constant 512 : index
    %66 = vector.load %arg10[%c0_56, %c0_57, %c512_58] : memref<1x1x1024xf32, #tpu.memory_space<vmem>>, vector<1x1x256xf32>
    %67 = arith.maximumf %66, %62 : vector<1x1x256xf32>
    %c0_59 = arith.constant 0 : index
    %c0_60 = arith.constant 0 : index
    %c512_61 = arith.constant 512 : index
    %68 = vector.load %arg10[%c0_59, %c0_60, %c512_61] : memref<1x1x1024xf32, #tpu.memory_space<vmem>>, vector<1x1x256xf32>
    tpu.vector_store %arg10[%c0_59, %c0_60, %c512_61], %67 {strides = array<i32>} : memref<1x1x1024xf32, #tpu.memory_space<vmem>>, vector<1x1x256xf32>,
    %c0_62 = arith.constant 0 : index
    %c0_63 = arith.constant 0 : index
    %c512_64 = arith.constant 512 : index
    %69 = vector.load %arg11[%c0_62, %c0_63, %c512_64] : memref<1x1x1024xf32, #tpu.memory_space<vmem>>, vector<1x1x256xf32>
    %70 = arith.minimumf %69, %65 : vector<1x1x256xf32>
    %c0_65 = arith.constant 0 : index
    %c0_66 = arith.constant 0 : index
    %c512_67 = arith.constant 512 : index
    %71 = vector.load %arg11[%c0_65, %c0_66, %c512_67] : memref<1x1x1024xf32, #tpu.memory_space<vmem>>, vector<1x1x256xf32>
    tpu.vector_store %arg11[%c0_65, %c0_66, %c512_67], %70 {strides = array<i32>} : memref<1x1x1024xf32, #tpu.memory_space<vmem>>, vector<1x1x256xf32>,
    %c0_68 = arith.constant 0 : index
    %c768 = arith.constant 768 : index
    %72 = vector.load %arg7[%c0_68, %c768] : memref<128x1024xbf16, #tpu.memory_space<vmem>>, vector<128x256xbf16>
    %cst_69 = arith.constant dense<0.000000e+00> : vector<16x256xf32>
    %73 = tpu.matmul %18, %72, %cst_69 {dimension_numbers = #tpu.dot_dimension_numbers<[1], [0], [0], [1], [0, 0, 1, 1], [], []>} : vector<16x128xbf16>, vector<128x256xbf16>, vector<16x256xf32> -> vector<16x256xf32>
    %cst_70 = arith.constant dense<0xFF800000> : vector<256xf32>
    %74 = vector.multi_reduction <maximumf>, %73, %cst_70 [0] : vector<16x256xf32> to vector<256xf32>
    %75 = vector.shape_cast %74 : vector<256xf32> to vector<1x256xf32>
    %76 = vector.shape_cast %75 : vector<1x256xf32> to vector<1x1x256xf32>
    %cst_71 = arith.constant dense<0x7F800000> : vector<256xf32>
    %77 = vector.multi_reduction <minimumf>, %73, %cst_71 [0] : vector<16x256xf32> to vector<256xf32>
    %78 = vector.shape_cast %77 : vector<256xf32> to vector<1x256xf32>
    %79 = vector.shape_cast %78 : vector<1x256xf32> to vector<1x1x256xf32>
    %c0_72 = arith.constant 0 : index
    %c0_73 = arith.constant 0 : index
    %c768_74 = arith.constant 768 : index
    %80 = vector.load %arg10[%c0_72, %c0_73, %c768_74] : memref<1x1x1024xf32, #tpu.memory_space<vmem>>, vector<1x1x256xf32>
    %81 = arith.maximumf %80, %76 : vector<1x1x256xf32>
    %c0_75 = arith.constant 0 : index
    %c0_76 = arith.constant 0 : index
    %c768_77 = arith.constant 768 : index
    %82 = vector.load %arg10[%c0_75, %c0_76, %c768_77] : memref<1x1x1024xf32, #tpu.memory_space<vmem>>, vector<1x1x256xf32>
    tpu.vector_store %arg10[%c0_75, %c0_76, %c768_77], %81 {strides = array<i32>} : memref<1x1x1024xf32, #tpu.memory_space<vmem>>, vector<1x1x256xf32>,
    %c0_78 = arith.constant 0 : index
    %c0_79 = arith.constant 0 : index
    %c768_80 = arith.constant 768 : index
    %83 = vector.load %arg11[%c0_78, %c0_79, %c768_80] : memref<1x1x1024xf32, #tpu.memory_space<vmem>>, vector<1x1x256xf32>
    %84 = arith.minimumf %83, %79 : vector<1x1x256xf32>
    %c0_81 = arith.constant 0 : index
    %c0_82 = arith.constant 0 : index
    %c768_83 = arith.constant 768 : index
    %85 = vector.load %arg11[%c0_81, %c0_82, %c768_83] : memref<1x1x1024xf32, #tpu.memory_space<vmem>>, vector<1x1x256xf32>
    tpu.vector_store %arg11[%c0_81, %c0_82, %c768_83], %84 {strides = array<i32>} : memref<1x1x1024xf32, #tpu.memory_space<vmem>>, vector<1x1x256xf32>,
    return
  }
  func.func @transform_0(%arg0: i32, %arg1: i32) -> (i32, i32, i32) {
    %c0_i32 = arith.constant 0 : i32
    %c0_i32_0 = arith.constant 0 : i32
    return %arg0, %arg1, %c0_i32 : i32, i32, i32
  }
  func.func @transform_1(%arg0: i32, %arg1: i32) -> (i32, i32, i32) {
    %c0_i32 = arith.constant 0 : i32
    %c0_i32_0 = arith.constant 0 : i32
    %c0_i32_1 = arith.constant 0 : i32
    return %arg0, %c0_i32, %c0_i32_0 : i32, i32, i32
  }
  func.func @transform_2(%arg0: i32, %arg1: i32) -> (i32, i32) {
    %c0_i32 = arith.constant 0 : i32
    %c0_i32_0 = arith.constant 0 : i32
    %c0_i32_1 = arith.constant 0 : i32
    return %c0_i32, %c0_i32_0 : i32, i32
  }
  func.func @transform_3(%arg0: i32, %arg1: i32) -> (i32, i32) {
    %c0_i32 = arith.constant 0 : i32
    %c0_i32_0 = arith.constant 0 : i32
    %c0_i32_1 = arith.constant 0 : i32
    return %c0_i32, %c0_i32_0 : i32, i32
  }
  func.func @transform_4(%arg0: i32, %arg1: i32) -> (i32, i32) {
    %c0_i32 = arith.constant 0 : i32
    %c0_i32_0 = arith.constant 0 : i32
    %c0_i32_1 = arith.constant 0 : i32
    return %c0_i32, %c0_i32_0 : i32, i32
  }
  func.func @transform_5(%arg0: i32, %arg1: i32) -> (i32, i32) {
    %c0_i32 = arith.constant 0 : i32
    %c0_i32_0 = arith.constant 0 : i32
    %c0_i32_1 = arith.constant 0 : i32
    return %c0_i32, %c0_i32_0 : i32, i32
  }
  func.func @transform_6(%arg0: i32, %arg1: i32) -> (i32, i32, i32) {
    %c0_i32 = arith.constant 0 : i32
    %c0_i32_0 = arith.constant 0 : i32
    %c0_i32_1 = arith.constant 0 : i32
    return %arg0, %c0_i32, %c0_i32_0 : i32, i32, i32
  }
  func.func @transform_7(%arg0: i32, %arg1: i32) -> (i32, i32, i32) {
    %c0_i32 = arith.constant 0 : i32
    %c0_i32_0 = arith.constant 0 : i32
    %c0_i32_1 = arith.constant 0 : i32
    return %arg0, %c0_i32, %c0_i32_0 : i32, i32, i32
  }
  func.func @transform_8(%arg0: i32, %arg1: i32) -> (i32, i32, i32) {
    %c0_i32 = arith.constant 0 : i32
    %c0_i32_0 = arith.constant 0 : i32
    %c0_i32_1 = arith.constant 0 : i32
    return %arg0, %c0_i32, %c0_i32_0 : i32, i32, i32
  }
  func.func @transform_9(%arg0: i32, %arg1: i32) -> (i32, i32, i32) {
    %c0_i32 = arith.constant 0 : i32
    %c0_i32_0 = arith.constant 0 : i32
    %c0_i32_1 = arith.constant 0 : i32
    return %arg0, %c0_i32, %c0_i32_0 : i32, i32, i32
  }
}

module attributes {stable_mosaic.version = 11 : i64} {
  func.func @_cls_head_kernel(%arg0: memref<2x1024xf32, #tpu.memory_space<vmem>>, %arg1: memref<1024x512xbf16, #tpu.memory_space<vmem>>, %arg2: memref<1x512xf32, #tpu.memory_space<vmem>>, %arg3: memref<1x512xf32, #tpu.memory_space<vmem>>, %arg4: memref<1x512xf32, #tpu.memory_space<vmem>>, %arg5: memref<512x256xbf16, #tpu.memory_space<vmem>>, %arg6: memref<1x256xf32, #tpu.memory_space<vmem>>, %arg7: memref<1x256xf32, #tpu.memory_space<vmem>>, %arg8: memref<1x256xf32, #tpu.memory_space<vmem>>, %arg9: memref<256x128xbf16, #tpu.memory_space<vmem>>, %arg10: memref<1x128xf32, #tpu.memory_space<vmem>>, %arg11: memref<1x128xf32, #tpu.memory_space<vmem>>, %arg12: memref<1x128xf32, #tpu.memory_space<vmem>>, %arg13: memref<128x128xbf16, #tpu.memory_space<vmem>>, %arg14: memref<1x128xf32, #tpu.memory_space<vmem>>, %arg15: memref<2x128xf32, #tpu.memory_space<vmem>>) attributes {dimension_semantics = [], scalar_prefetch = 0 : i64, scratch_operands = 0 : i64, tpu.core_type = #tpu.core_type<tc>} {
    %c0 = arith.constant 0 : index
    %c0_0 = arith.constant 0 : index
    %0 = vector.load %arg0[%c0, %c0_0] : memref<2x1024xf32, #tpu.memory_space<vmem>>, vector<2x1024xf32>
    %1 = arith.truncf %0 : vector<2x1024xf32> to vector<2x1024xbf16>
    %c0_1 = arith.constant 0 : index
    %c0_2 = arith.constant 0 : index
    %2 = vector.load %arg1[%c0_1, %c0_2] : memref<1024x512xbf16, #tpu.memory_space<vmem>>, vector<1024x512xbf16>
    %cst = arith.constant dense<0.000000e+00> : vector<2x512xf32>
    %3 = tpu.matmul %1, %2, %cst {dimension_numbers = #tpu.dot_dimension_numbers<[1], [0], [0], [1], [0, 0, 1, 1], [], []>} : vector<2x1024xbf16>, vector<1024x512xbf16>, vector<2x512xf32> -> vector<2x512xf32>
    %c0_3 = arith.constant 0 : index
    %c0_4 = arith.constant 0 : index
    %4 = vector.load %arg2[%c0_3, %c0_4] : memref<1x512xf32, #tpu.memory_space<vmem>>, vector<1x512xf32>
    %5 = vector.broadcast %4 : vector<1x512xf32> to vector<2x512xf32>
    %6 = arith.addf %3, %5 : vector<2x512xf32>
    %c0_5 = arith.constant 0 : index
    %c0_6 = arith.constant 0 : index
    %7 = vector.load %arg3[%c0_5, %c0_6] : memref<1x512xf32, #tpu.memory_space<vmem>>, vector<1x512xf32>
    %c0_7 = arith.constant 0 : index
    %c0_8 = arith.constant 0 : index
    %8 = vector.load %arg4[%c0_7, %c0_8] : memref<1x512xf32, #tpu.memory_space<vmem>>, vector<1x512xf32>
    %cst_9 = arith.constant dense<0.000000e+00> : vector<512xf32>
    %9 = vector.multi_reduction <add>, %6, %cst_9 [0] : vector<2x512xf32> to vector<512xf32>
    %10 = vector.shape_cast %9 : vector<512xf32> to vector<1x512xf32>
    %cst_10 = arith.constant 2.000000e+00 : f32
    %11 = vector.broadcast %cst_10 : f32 to vector<1x512xf32>
    %12 = arith.divf %10, %11 : vector<1x512xf32>
    %13 = arith.mulf %6, %6 : vector<2x512xf32>
    %cst_11 = arith.constant dense<0.000000e+00> : vector<512xf32>
    %14 = vector.multi_reduction <add>, %13, %cst_11 [0] : vector<2x512xf32> to vector<512xf32>
    %15 = vector.shape_cast %14 : vector<512xf32> to vector<1x512xf32>
    %cst_12 = arith.constant 2.000000e+00 : f32
    %16 = vector.broadcast %cst_12 : f32 to vector<1x512xf32>
    %17 = arith.divf %15, %16 : vector<1x512xf32>
    %18 = arith.mulf %12, %12 : vector<1x512xf32>
    %19 = arith.subf %17, %18 : vector<1x512xf32>
    %cst_13 = arith.constant 0.000000e+00 : f32
    %20 = vector.broadcast %cst_13 : f32 to vector<1x512xf32>
    %21 = arith.maximumf %19, %20 : vector<1x512xf32>
    %22 = vector.broadcast %12 : vector<1x512xf32> to vector<2x512xf32>
    %23 = arith.subf %6, %22 : vector<2x512xf32>
    %cst_14 = arith.constant 9.99999974E-6 : f32
    %24 = vector.broadcast %cst_14 : f32 to vector<1x512xf32>
    %25 = arith.addf %21, %24 : vector<1x512xf32>
    %26 = math.rsqrt %25 : vector<1x512xf32>
    %27 = vector.broadcast %26 : vector<1x512xf32> to vector<2x512xf32>
    %28 = arith.mulf %23, %27 : vector<2x512xf32>
    %29 = vector.broadcast %7 : vector<1x512xf32> to vector<2x512xf32>
    %30 = arith.mulf %28, %29 : vector<2x512xf32>
    %31 = vector.broadcast %8 : vector<1x512xf32> to vector<2x512xf32>
    %32 = arith.addf %30, %31 : vector<2x512xf32>
    %cst_15 = arith.constant 0.000000e+00 : f32
    %33 = vector.broadcast %cst_15 : f32 to vector<2x512xf32>
    %34 = arith.maximumf %32, %33 : vector<2x512xf32>
    %35 = arith.truncf %34 : vector<2x512xf32> to vector<2x512xbf16>
    %c0_16 = arith.constant 0 : index
    %c0_17 = arith.constant 0 : index
    %36 = vector.load %arg5[%c0_16, %c0_17] : memref<512x256xbf16, #tpu.memory_space<vmem>>, vector<512x256xbf16>
    %cst_18 = arith.constant dense<0.000000e+00> : vector<2x256xf32>
    %37 = tpu.matmul %35, %36, %cst_18 {dimension_numbers = #tpu.dot_dimension_numbers<[1], [0], [0], [1], [0, 0, 1, 1], [], []>} : vector<2x512xbf16>, vector<512x256xbf16>, vector<2x256xf32> -> vector<2x256xf32>
    %c0_19 = arith.constant 0 : index
    %c0_20 = arith.constant 0 : index
    %38 = vector.load %arg6[%c0_19, %c0_20] : memref<1x256xf32, #tpu.memory_space<vmem>>, vector<1x256xf32>
    %39 = vector.broadcast %38 : vector<1x256xf32> to vector<2x256xf32>
    %40 = arith.addf %37, %39 : vector<2x256xf32>
    %c0_21 = arith.constant 0 : index
    %c0_22 = arith.constant 0 : index
    %41 = vector.load %arg7[%c0_21, %c0_22] : memref<1x256xf32, #tpu.memory_space<vmem>>, vector<1x256xf32>
    %c0_23 = arith.constant 0 : index
    %c0_24 = arith.constant 0 : index
    %42 = vector.load %arg8[%c0_23, %c0_24] : memref<1x256xf32, #tpu.memory_space<vmem>>, vector<1x256xf32>
    %cst_25 = arith.constant dense<0.000000e+00> : vector<256xf32>
    %43 = vector.multi_reduction <add>, %40, %cst_25 [0] : vector<2x256xf32> to vector<256xf32>
    %44 = vector.shape_cast %43 : vector<256xf32> to vector<1x256xf32>
    %cst_26 = arith.constant 2.000000e+00 : f32
    %45 = vector.broadcast %cst_26 : f32 to vector<1x256xf32>
    %46 = arith.divf %44, %45 : vector<1x256xf32>
    %47 = arith.mulf %40, %40 : vector<2x256xf32>
    %cst_27 = arith.constant dense<0.000000e+00> : vector<256xf32>
    %48 = vector.multi_reduction <add>, %47, %cst_27 [0] : vector<2x256xf32> to vector<256xf32>
    %49 = vector.shape_cast %48 : vector<256xf32> to vector<1x256xf32>
    %cst_28 = arith.constant 2.000000e+00 : f32
    %50 = vector.broadcast %cst_28 : f32 to vector<1x256xf32>
    %51 = arith.divf %49, %50 : vector<1x256xf32>
    %52 = arith.mulf %46, %46 : vector<1x256xf32>
    %53 = arith.subf %51, %52 : vector<1x256xf32>
    %cst_29 = arith.constant 0.000000e+00 : f32
    %54 = vector.broadcast %cst_29 : f32 to vector<1x256xf32>
    %55 = arith.maximumf %53, %54 : vector<1x256xf32>
    %56 = vector.broadcast %46 : vector<1x256xf32> to vector<2x256xf32>
    %57 = arith.subf %40, %56 : vector<2x256xf32>
    %cst_30 = arith.constant 9.99999974E-6 : f32
    %58 = vector.broadcast %cst_30 : f32 to vector<1x256xf32>
    %59 = arith.addf %55, %58 : vector<1x256xf32>
    %60 = math.rsqrt %59 : vector<1x256xf32>
    %61 = vector.broadcast %60 : vector<1x256xf32> to vector<2x256xf32>
    %62 = arith.mulf %57, %61 : vector<2x256xf32>
    %63 = vector.broadcast %41 : vector<1x256xf32> to vector<2x256xf32>
    %64 = arith.mulf %62, %63 : vector<2x256xf32>
    %65 = vector.broadcast %42 : vector<1x256xf32> to vector<2x256xf32>
    %66 = arith.addf %64, %65 : vector<2x256xf32>
    %cst_31 = arith.constant 0.000000e+00 : f32
    %67 = vector.broadcast %cst_31 : f32 to vector<2x256xf32>
    %68 = arith.maximumf %66, %67 : vector<2x256xf32>
    %69 = arith.truncf %68 : vector<2x256xf32> to vector<2x256xbf16>
    %c0_32 = arith.constant 0 : index
    %c0_33 = arith.constant 0 : index
    %70 = vector.load %arg9[%c0_32, %c0_33] : memref<256x128xbf16, #tpu.memory_space<vmem>>, vector<256x128xbf16>
    %cst_34 = arith.constant dense<0.000000e+00> : vector<2x128xf32>
    %71 = tpu.matmul %69, %70, %cst_34 {dimension_numbers = #tpu.dot_dimension_numbers<[1], [0], [0], [1], [0, 0, 1, 1], [], []>} : vector<2x256xbf16>, vector<256x128xbf16>, vector<2x128xf32> -> vector<2x128xf32>
    %c0_35 = arith.constant 0 : index
    %c0_36 = arith.constant 0 : index
    %72 = vector.load %arg10[%c0_35, %c0_36] : memref<1x128xf32, #tpu.memory_space<vmem>>, vector<1x128xf32>
    %73 = vector.broadcast %72 : vector<1x128xf32> to vector<2x128xf32>
    %74 = arith.addf %71, %73 : vector<2x128xf32>
    %c0_37 = arith.constant 0 : index
    %c0_38 = arith.constant 0 : index
    %75 = vector.load %arg11[%c0_37, %c0_38] : memref<1x128xf32, #tpu.memory_space<vmem>>, vector<1x128xf32>
    %c0_39 = arith.constant 0 : index
    %c0_40 = arith.constant 0 : index
    %76 = vector.load %arg12[%c0_39, %c0_40] : memref<1x128xf32, #tpu.memory_space<vmem>>, vector<1x128xf32>
    %cst_41 = arith.constant dense<0.000000e+00> : vector<128xf32>
    %77 = vector.multi_reduction <add>, %74, %cst_41 [0] : vector<2x128xf32> to vector<128xf32>
    %78 = vector.shape_cast %77 : vector<128xf32> to vector<1x128xf32>
    %cst_42 = arith.constant 2.000000e+00 : f32
    %79 = vector.broadcast %cst_42 : f32 to vector<1x128xf32>
    %80 = arith.divf %78, %79 : vector<1x128xf32>
    %81 = arith.mulf %74, %74 : vector<2x128xf32>
    %cst_43 = arith.constant dense<0.000000e+00> : vector<128xf32>
    %82 = vector.multi_reduction <add>, %81, %cst_43 [0] : vector<2x128xf32> to vector<128xf32>
    %83 = vector.shape_cast %82 : vector<128xf32> to vector<1x128xf32>
    %cst_44 = arith.constant 2.000000e+00 : f32
    %84 = vector.broadcast %cst_44 : f32 to vector<1x128xf32>
    %85 = arith.divf %83, %84 : vector<1x128xf32>
    %86 = arith.mulf %80, %80 : vector<1x128xf32>
    %87 = arith.subf %85, %86 : vector<1x128xf32>
    %cst_45 = arith.constant 0.000000e+00 : f32
    %88 = vector.broadcast %cst_45 : f32 to vector<1x128xf32>
    %89 = arith.maximumf %87, %88 : vector<1x128xf32>
    %90 = vector.broadcast %80 : vector<1x128xf32> to vector<2x128xf32>
    %91 = arith.subf %74, %90 : vector<2x128xf32>
    %cst_46 = arith.constant 9.99999974E-6 : f32
    %92 = vector.broadcast %cst_46 : f32 to vector<1x128xf32>
    %93 = arith.addf %89, %92 : vector<1x128xf32>
    %94 = math.rsqrt %93 : vector<1x128xf32>
    %95 = vector.broadcast %94 : vector<1x128xf32> to vector<2x128xf32>
    %96 = arith.mulf %91, %95 : vector<2x128xf32>
    %97 = vector.broadcast %75 : vector<1x128xf32> to vector<2x128xf32>
    %98 = arith.mulf %96, %97 : vector<2x128xf32>
    %99 = vector.broadcast %76 : vector<1x128xf32> to vector<2x128xf32>
    %100 = arith.addf %98, %99 : vector<2x128xf32>
    %cst_47 = arith.constant 0.000000e+00 : f32
    %101 = vector.broadcast %cst_47 : f32 to vector<2x128xf32>
    %102 = arith.maximumf %100, %101 : vector<2x128xf32>
    %103 = arith.truncf %102 : vector<2x128xf32> to vector<2x128xbf16>
    %c0_48 = arith.constant 0 : index
    %c0_49 = arith.constant 0 : index
    %104 = vector.load %arg13[%c0_48, %c0_49] : memref<128x128xbf16, #tpu.memory_space<vmem>>, vector<128x128xbf16>
    %cst_50 = arith.constant dense<0.000000e+00> : vector<2x128xf32>
    %105 = tpu.matmul %103, %104, %cst_50 {dimension_numbers = #tpu.dot_dimension_numbers<[1], [0], [0], [1], [0, 0, 1, 1], [], []>} : vector<2x128xbf16>, vector<128x128xbf16>, vector<2x128xf32> -> vector<2x128xf32>
    %c0_51 = arith.constant 0 : index
    %c0_52 = arith.constant 0 : index
    %106 = vector.load %arg14[%c0_51, %c0_52] : memref<1x128xf32, #tpu.memory_space<vmem>>, vector<1x128xf32>
    %107 = vector.broadcast %106 : vector<1x128xf32> to vector<2x128xf32>
    %108 = arith.addf %105, %107 : vector<2x128xf32>
    %109 = tpu.iota {dimensions = array<i32: 1>} : vector<2x128xi32>
    %c2_i32 = arith.constant 2 : i32
    %110 = vector.broadcast %c2_i32 : i32 to vector<2x128xi32>
    %111 = arith.cmpi slt, %109, %110 : vector<2x128xi32>
    %cst_53 = arith.constant -1.000000e+30 : f32
    %112 = vector.broadcast %cst_53 : f32 to vector<2x128xf32>
    %113 = arith.select %111, %108, %112 : vector<2x128xi1>, vector<2x128xf32>
    %cst_54 = arith.constant dense<0xFF800000> : vector<2xf32>
    %114 = vector.multi_reduction <maximumf>, %113, %cst_54 [1] : vector<2x128xf32> to vector<2xf32>
    %115 = vector.shape_cast %114 : vector<2xf32> to vector<2x1xf32>
    %116 = vector.broadcast %115 : vector<2x1xf32> to vector<2x128xf32>
    %117 = arith.subf %113, %116 : vector<2x128xf32>
    %118 = math.exp %117 : vector<2x128xf32>
    %cst_55 = arith.constant dense<0.000000e+00> : vector<2xf32>
    %119 = vector.multi_reduction <add>, %118, %cst_55 [1] : vector<2x128xf32> to vector<2xf32>
    %120 = vector.shape_cast %119 : vector<2xf32> to vector<2x1xf32>
    %121 = vector.broadcast %115 : vector<2x1xf32> to vector<2x128xf32>
    %122 = arith.subf %113, %121 : vector<2x128xf32>
    %123 = math.log %120 : vector<2x1xf32>
    %124 = vector.broadcast %123 : vector<2x1xf32> to vector<2x128xf32>
    %125 = arith.subf %122, %124 : vector<2x128xf32>
    %c0_56 = arith.constant 0 : index
    %c0_57 = arith.constant 0 : index
    %126 = vector.load %arg15[%c0_56, %c0_57] : memref<2x128xf32, #tpu.memory_space<vmem>>, vector<2x128xf32>
    tpu.vector_store %arg15[%c0_56, %c0_57], %125 {strides = array<i32>} : memref<2x128xf32, #tpu.memory_space<vmem>>, vector<2x128xf32>,
    return
  }
}

</mosaic_0001>

<llo_original>
// kernel: pointnet_cls_forward.6
$region0: #{pointnet_cls_forward.6}
  #allocation0 [shape = 'u32[]', space=smem, size = 0x4, offset = 0x4, fixed_abs, tag = 'smem constant byte address 0x4 - core index']
  #allocation1 [shape = 'u32[144,128]{1,0:T(1,128)}', space=vmem, size = 0x12000, scoped, tag = 'internal scratch']
  %s0 = inlined_call_operand.vmem [shape: bf16[2,16,3], index: 0, kind: input, shape index: {}]
  %s1 = inlined_call_operand.vmem [shape: bf16[1,3,64], index: 1, kind: input, shape index: {}]
  %s2 = inlined_call_operand.vmem [shape: f32[1,64], index: 2, kind: input, shape index: {}]
  %s3 = inlined_call_operand.vmem [shape: bf16[64,128], index: 3, kind: input, shape index: {}]
  %s4 = inlined_call_operand.vmem [shape: f32[2,1,128], index: 4, kind: output, shape index: {0}]
  %s5 = inlined_call_operand.vmem [shape: f32[2,1,128], index: 5, kind: output, shape index: {1}]
  %6 = xla_tuple %s4, %s5
  %s7 = sld [smem:[#allocation0]]
  $region65: #{pointnet_cls_forward.6} parent=0
    _
  %s9 = ssub.s32 1, %s7
  %s10 = scalar_select 0, %s9, %s7
  loop: start=0, step=1, limit=4
  $region2: #{pointnet_cls_forward.6} parent=0 // loop_pre_header
    _
  $region3: #{pointnet_cls_forward.6} parent=0 // loop_header
    %s12 = sphi 0, %s16
    %p13 = scmp.ge.s32.totalorder %s12, 4
    %s19 = sphi 0, %s31
    %s20 = sphi 0, %s27
    %s21 = sphi 0, %s19
    %s22 = sphi 0, %s20
    %s23 = sphi 0, %s21
    %s24 = sphi 0, %s22
    %s36 = sphi 0, %s38
    %s39 = sphi 0, %s36
    %s40 = sphi 0, %s39
    %s56 = sphi 0, %s40
    %s60 = sphi 0, %s60
    %s62 = sphi 0, %s60
    %s63 = sphi 0, %s62
    %s77 = sphi 0, %s63
    %s81 = sphi 0, %s81
    %s83 = sphi 0, %s81
    %s84 = sphi 0, %s83
    %s98 = sphi 0, %s84
    %s102 = sphi 0, %s102
    %s104 = sphi 0, %s102
    %s105 = sphi 0, %s104
    %s119 = sphi 0, %s105
    %s125 = sphi 0, %s127
    %s128 = sphi 0, %s125
    %s129 = sphi 0, %s128
    %s145 = sphi 0, %s129
    %s151 = sphi 0, %s153
    %s154 = sphi 0, %s151
    %s155 = sphi 0, %s154
    %s171 = sphi 0, %s155
  $region4: #{pointnet_cls_forward.6} parent=0 // loop_header_branch
    %15 = sbr.rel (%p13) target = $region8
  $region5: #{pointnet_cls_forward.6} parent=0 // loop_body
    %s17 = ssub.s32 %s12, 1
    %s18 = ssub.s32 %s12, 2
    %s25 = sadd.s32 1, %s20
    %p26 = scmp.ge.s32.totalorder %s25, 1
    %s27 = scalar_select %p26, 0, %s25
    %s28 = sadd.s32 1, %s19
    %s29 = scalar_select %p26, %s28, %s19
    %p30 = scmp.ge.s32.totalorder %s29, 2
    %s31 = scalar_select %p30, 0, %s29
    %s32 = ssub.s32 %s19, %s31
    %s33 = ssub.s32 %s20, %s27
    %s34 = sor.u32 %s32, %s33
    %p35 = scmp.eq.s32.totalorder %s34, 0
    %s37 = sadd.s32 %s36, 1
    %s38 = scalar_select %p35, %s36, %s37
    %p41 = pneg %p35
    %p42 = scmp.eq.s32.totalorder %s12, 1
    %p43 = por %p41, %p42
    %p44 = scmp.ne.s32.totalorder %s36, %s39
    %p45 = scmp.eq.s32.totalorder %s12, 0
    %p46 = por %p44, %p45
    %p47 = scmp.ne.s32.totalorder %s36, %s39
    %p48 = scmp.eq.s32.totalorder %s17, 1
    %p49 = por %p47, %p48
    %p50 = scmp.ne.s32.totalorder %s39, %s40
    %p51 = scmp.eq.s32.totalorder %s17, 0
    %p52 = por %p50, %p51
    %p53 = scmp.ne.s32.totalorder %s39, %s40
    %p54 = scmp.eq.s32.totalorder %s18, 1
    %p55 = por %p53, %p54
    %p57 = scmp.ne.s32.totalorder %s40, %s56
    %p58 = scmp.eq.s32.totalorder %s18, 0
    %p59 = por %p57, %p58
    %s61 = sadd.s32 %s60, 1
    %p64 = scmp.eq.s32.totalorder %s12, 1
    %p65 = scmp.ne.s32.totalorder %s60, %s62
    %p66 = scmp.eq.s32.totalorder %s12, 0
    %p67 = por %p65, %p66
    %p68 = scmp.ne.s32.totalorder %s60, %s62
    %p69 = scmp.eq.s32.totalorder %s17, 1
    %p70 = por %p68, %p69
    %p71 = scmp.ne.s32.totalorder %s62, %s63
    %p72 = scmp.eq.s32.totalorder %s17, 0
    %p73 = por %p71, %p72
    %p74 = scmp.ne.s32.totalorder %s62, %s63
    %p75 = scmp.eq.s32.totalorder %s18, 1
    %p76 = por %p74, %p75
    %p78 = scmp.ne.s32.totalorder %s63, %s77
    %p79 = scmp.eq.s32.totalorder %s18, 0
    %p80 = por %p78, %p79
    %s82 = sadd.s32 %s81, 1
    %p85 = scmp.eq.s32.totalorder %s12, 1
    %p86 = scmp.ne.s32.totalorder %s81, %s83
    %p87 = scmp.eq.s32.totalorder %s12, 0
    %p88 = por %p86, %p87
    %p89 = scmp.ne.s32.totalorder %s81, %s83
    %p90 = scmp.eq.s32.totalorder %s17, 1
    %p91 = por %p89, %p90
    %p92 = scmp.ne.s32.totalorder %s83, %s84
    %p93 = scmp.eq.s32.totalorder %s17, 0
    %p94 = por %p92, %p93
    %p95 = scmp.ne.s32.totalorder %s83, %s84
    %p96 = scmp.eq.s32.totalorder %s18, 1
    %p97 = por %p95, %p96
    %p99 = scmp.ne.s32.totalorder %s84, %s98
    %p100 = scmp.eq.s32.totalorder %s18, 0
    %p101 = por %p99, %p100
    %s103 = sadd.s32 %s102, 1
    %p106 = scmp.eq.s32.totalorder %s12, 1
    %p107 = scmp.ne.s32.totalorder %s102, %s104
    %p108 = scmp.eq.s32.totalorder %s12, 0
    %p109 = por %p107, %p108
    %p110 = scmp.ne.s32.totalorder %s102, %s104
    %p111 = scmp.eq.s32.totalorder %s17, 1
    %p112 = por %p110, %p111
    %p113 = scmp.ne.s32.totalorder %s104, %s105
    %p114 = scmp.eq.s32.totalorder %s17, 0
    %p115 = por %p113, %p114
    %p116 = scmp.ne.s32.totalorder %s104, %s105
    %p117 = scmp.eq.s32.totalorder %s18, 1
    %p118 = por %p116, %p117
    %p120 = scmp.ne.s32.totalorder %s105, %s119
    %p121 = scmp.eq.s32.totalorder %s18, 0
    %p122 = por %p120, %p121
    %s123 = ssub.s32 %s19, %s31
    %p124 = scmp.eq.s32.totalorder %s123, 0
    %s126 = sadd.s32 %s125, 1
    %s127 = scalar_select %p124, %s125, %s126
    %p130 = pneg %p124
    %p131 = scmp.eq.s32.totalorder %s12, 1
    %p132 = por %p130, %p131
    %p133 = scmp.ne.s32.totalorder %s125, %s128
    %p134 = scmp.eq.s32.totalorder %s12, 0
    %p135 = por %p133, %p134
    %p136 = scmp.ne.s32.totalorder %s125, %s128
    %p137 = scmp.eq.s32.totalorder %s17, 1
    %p138 = por %p136, %p137
    %p139 = scmp.ne.s32.totalorder %s128, %s129
    %p140 = scmp.eq.s32.totalorder %s17, 0
    %p141 = por %p139, %p140
    %p142 = scmp.ne.s32.totalorder %s128, %s129
    %p143 = scmp.eq.s32.totalorder %s18, 1
    %p144 = por %p142, %p143
    %p146 = scmp.ne.s32.totalorder %s129, %s145
    %p147 = scmp.eq.s32.totalorder %s18, 0
    %p148 = por %p146, %p147
    %s149 = ssub.s32 %s19, %s31
    %p150 = scmp.eq.s32.totalorder %s149, 0
    %s152 = sadd.s32 %s151, 1
    %s153 = scalar_select %p150, %s151, %s152
    %p156 = pneg %p150
    %p157 = scmp.eq.s32.totalorder %s12, 1
    %p158 = por %p156, %p157
    %p159 = scmp.ne.s32.totalorder %s151, %s154
    %p160 = scmp.eq.s32.totalorder %s12, 0
    %p161 = por %p159, %p160
    %p162 = scmp.ne.s32.totalorder %s151, %s154
    %p163 = scmp.eq.s32.totalorder %s17, 1
    %p164 = por %p162, %p163
    %p165 = scmp.ne.s32.totalorder %s154, %s155
    %p166 = scmp.eq.s32.totalorder %s17, 0
    %p167 = por %p165, %p166
    %p168 = scmp.ne.s32.totalorder %s154, %s155
    %p169 = scmp.eq.s32.totalorder %s18, 1
    %p170 = por %p168, %p169
    %p172 = scmp.ne.s32.totalorder %s155, %s171
    %p173 = scmp.eq.s32.totalorder %s18, 0
    %p174 = por %p172, %p173
    %p175 = scmp.le.s32.totalorder 1, %s12
    %p176 = scmp.lt.s32.totalorder %s12, 3
    %p177 = pnand %p175, %p176
    %p178 = pneg %p177
    // Predicated region
    $region9: #{pointnet_cls_forward.6} parent=5 // pred_check
      _
    $region10: #{pointnet_cls_forward.6} parent=5 // pred_check_branch
      %180 = sbr.rel (%p177) target = $region12
    $region11: #{pointnet_cls_forward.6} parent=5 // pred_region
      %s181 = ssub.s32 %s12, 1
      // Predicated region
      $region13: #{pointnet_cls_forward.6} parent=11 // pred_check
        %p182 = pneg %p73
      $region14: #{pointnet_cls_forward.6} parent=11 // pred_check_branch
        %184 = sbr.rel (%p182) target = $region16
      $region15: #{pointnet_cls_forward.6} parent=11 // pred_region
        _
      $region16: #{pointnet_cls_forward.6} parent=11 // pred_fallthru
        _
      // Predicated region
      $region17: #{pointnet_cls_forward.6} parent=11 // pred_check
        %p185 = pneg %p94
      $region18: #{pointnet_cls_forward.6} parent=11 // pred_check_branch
        %187 = sbr.rel (%p185) target = $region20
      $region19: #{pointnet_cls_forward.6} parent=11 // pred_region
        _
      $region20: #{pointnet_cls_forward.6} parent=11 // pred_fallthru
        _
      // Predicated region
      $region21: #{pointnet_cls_forward.6} parent=11 // pred_check
        %p188 = pneg %p115
      $region22: #{pointnet_cls_forward.6} parent=11 // pred_check_branch
        %190 = sbr.rel (%p188) target = $region24
      $region23: #{pointnet_cls_forward.6} parent=11 // pred_region
        _
      $region24: #{pointnet_cls_forward.6} parent=11 // pred_fallthru
        _
    $region12: #{pointnet_cls_forward.6} parent=5 // pred_fallthru
      _
    %p191 = scmp.lt.s32.totalorder %s12, 2
    // Predicated region
    $region25: #{pointnet_cls_forward.6} parent=5 // pred_check
      %p192 = pneg %p191
    $region26: #{pointnet_cls_forward.6} parent=5 // pred_check_branch
      %194 = sbr.rel (%p192) target = $region28
    $region27: #{pointnet_cls_forward.6} parent=5 // pred_region
      // Predicated region
      $region29: #{pointnet_cls_forward.6} parent=27 // pred_check
        %p195 = pneg %p46
      $region30: #{pointnet_cls_forward.6} parent=27 // pred_check_branch
        %197 = sbr.rel (%p195) target = $region32
      $region31: #{pointnet_cls_forward.6} parent=27 // pred_region
        %s198 = smul.u32 2, %s20
        %p199 = scmp.lt.s32.totalorder %s19, 1
        %s200 = scalar_select %p199, %s19, 1
        %p201 = scmp.lt.s32.totalorder %s198, 1
        %s202 = scalar_select %p201, %s198, 1
        %s203 = smul.addr %s200, 2
        %s204 = sadd.s32 %s202, %s203
        %s205 = smul.addr %s204, 4
        %s206 = scalar_lea.vmem %s0, %s205
        %s207 = smul.u32 2, %s20
      $region32: #{pointnet_cls_forward.6} parent=27 // pred_fallthru
        _
    $region28: #{pointnet_cls_forward.6} parent=5 // pred_fallthru
      _
    %p208 = scmp.le.s32.totalorder 1, %s12
    %p209 = scmp.lt.s32.totalorder %s12, 3
    %p210 = pnand %p208, %p209
    %p211 = pneg %p210
    // Predicated region
    $region33: #{pointnet_cls_forward.6} parent=5 // pred_check
      _
    $region34: #{pointnet_cls_forward.6} parent=5 // pred_check_branch
      %213 = sbr.rel (%p210) target = $region36
    $region35: #{pointnet_cls_forward.6} parent=5 // pred_region
      %s214 = ssub.s32 %s12, 1
      %s215 = smul.u32 2, %s22
      %p216 = scmp.lt.s32.totalorder %s21, 1
      %s217 = scalar_select %p216, %s21, 1
      %p218 = scmp.lt.s32.totalorder %s215, 1
      %s219 = scalar_select %p218, %s215, 1
      %s220 = smul.addr %s217, 2
      %s221 = sadd.s32 %s219, %s220
      %s222 = smul.addr %s221, 4
      %s223 = scalar_lea.vmem %s0, %s222
      %p224 = pneg %p52
      %p225 = pneg %p49
      %p226 = pneg %p73
      %p227 = pneg %p70
      %p228 = pneg %p94
      %p229 = pneg %p91
      %p230 = pneg %p115
      %p231 = pneg %p112
      %p232 = pneg %p141
      %p233 = pneg %p138
      %p234 = scmp.lt.s32.totalorder %s21, 1
      %s235 = scalar_select %p234, %s21, 1
      %s236 = scalar_lea.vmem %s4, %s235
      %p237 = pneg %p167
      %p238 = pneg %p164
      %p239 = scmp.lt.s32.totalorder %s21, 1
      %s240 = scalar_select %p239, %s21, 1
      %s241 = scalar_lea.vmem %s5, %s240
      %s242 = smul.u32 2, %s22
      %p243 = scmp.lt.s32.totalorder %s21, 1
      %s244 = scalar_select %p243, %s21, 1
      %p245 = scmp.lt.s32.totalorder %s242, 1
      %s246 = scalar_select %p245, %s242, 1
      %s247 = smul.addr %s244, 2
      %s248 = sadd.s32 %s246, %s247
      %s249 = smul.addr %s248, 4
      %s250 = scalar_lea.vmem %s0, %s249
      %s251 = smul.u32 2, %s22
      %p252 = scmp.lt.s32.totalorder %s21, 1
      %s253 = scalar_select %p252, %s21, 1
      %s254 = scalar_lea.vmem %s4, %s253
      %p255 = scmp.lt.s32.totalorder %s21, 1
      %s256 = scalar_select %p255, %s21, 1
      %s257 = scalar_lea.vmem %s5, %s256
      %v259 = vld [vmem:[%s250] sm:$0xf]
      %v260 = vld [vmem:[%s250 + $0x4] sm:$0xf]
      %v261 = vld [vmem:[%s1] sm:$0x3]
      %v262 = vld [vmem:[%s2] sm:$0x1]
      %v264 = vlaneseq
      %v265 = vshrl.u32 %v264, 7
      %v266 = vsub.s32 0, %v265
      %v267 = vrot.slane %v262, %v266
      %v271 = vunpack.c.l.b16 %v259
      %v272 = vunpack.c.l.b16 %v260
      %v273 = vpack.c.b16 %v272, %v271
      %vm274 = vcmask 23552
      %v276 = vsel %vm274, %v273, 0
      %vm278 = vcmask 1040384
      %vm279 = vcmask 1041408
      %v280 = vsel %vm278, 4294967295, 65535
      %v281 = vsel %vm279, %v280, 0
      %v283 = vand.u32 %v261, %v281
      %285 = vmatprep.subr.bf16.mxu0 0
      %286 = vmatpush1.bf16.msra.mxu0 %v283
      %287 = vmatprep.subr.bf16.mxu0 0
      %288 = vmatpush1.bf16.msra.mxu0 0
      %289 = vmatprep.subr.bf16.mxu0 0
      %290 = vmatpush1.bf16.msra.mxu0 0
      %291 = vmatprep.subr.bf16.mxu0 0
      %292 = vmatpush1.bf16.msra.mxu0 0
      %293 = vmatprep.subr.bf16.mxu0 0
      %294 = vmatpush1.bf16.msra.mxu0 0
      %295 = vmatprep.subr.bf16.mxu0 0
      %296 = vmatpush1.bf16.msra.mxu0 0
      %297 = vmatprep.subr.bf16.mxu0 0
      %298 = vmatpush1.bf16.msra.mxu0 0
      %299 = vmatprep.subr.bf16.mxu0 0
      %300 = vmatpush1.bf16.msra.mxu0 0
      %301 = vmatprep.subr.bf16.mxu0 0
      %302 = vmatpush1.bf16.msra.mxu0 0
      %303 = vmatprep.subr.bf16.mxu0 0
      %304 = vmatpush1.bf16.msra.mxu0 0
      %305 = vmatprep.subr.bf16.mxu0 0
      %306 = vmatpush1.bf16.msra.mxu0 0
      %307 = vmatprep.subr.bf16.mxu0 0
      %308 = vmatpush1.bf16.msra.mxu0 0
      %309 = vmatprep.subr.bf16.mxu0 0
      %310 = vmatpush1.bf16.msra.mxu0 0
      %311 = vmatprep.subr.bf16.mxu0 0
      %312 = vmatpush1.bf16.msra.mxu0 0
      %313 = vmatprep.subr.bf16.mxu0 0
      %314 = vmatpush1.bf16.msra.mxu0 0
      %315 = vmatprep.subr.bf16.mxu0 0
      %316 = vmatpush1.bf16.msra.mxu0 0
      %317 = vmatprep.mubr.bf16.mxu0 0
      %318 = vmatmul.mubr.bf16.gmra.mrb[0].mxu0 %v276
      %v319 = vpop.f32.mrb[0].mxu0
      %v320 = vadd.f32 %v267, %v319
      %v321 = vpop.f32.mrb[0].mxu0
      %v322 = vpop.f32.mrb[0].mxu0
      %v323 = vadd.f32 %v267, %v322
      %v324 = vpop.f32.mrb[0].mxu0
      %325 = vdwg.mxu0
      %v326 = vmax.f32 %v320, 0.0
      %v327 = vmax.f32 %v323, 0.0
      %v328 = vpack.c.bf16 %v327, %v326
      %v329 = vld [vmem:[%s3] sm:$0xf]
      %v330 = vld [vmem:[%s3 + $0x4] sm:$0xf]
      %v331 = vld [vmem:[%s3 + $0x8] sm:$0xf]
      %v332 = vld [vmem:[%s3 + $0xc] sm:$0xf]
      %v333 = vld [vmem:[%s3 + $0x10] sm:$0xf]
      %v334 = vld [vmem:[%s3 + $0x14] sm:$0xf]
      %v335 = vld [vmem:[%s3 + $0x18] sm:$0xf]
      %v336 = vld [vmem:[%s3 + $0x1c] sm:$0xf]
      %v345 = vunpack.c.l.b16 %v329
      %v346 = vunpack.c.l.b16 %v330
      %v347 = vunpack.c.l.b16 %v331
      %v348 = vunpack.c.l.b16 %v332
      %v349 = vunpack.c.l.b16 %v333
      %v350 = vunpack.c.l.b16 %v334
      %v351 = vunpack.c.l.b16 %v335
      %v352 = vunpack.c.l.b16 %v336
      %v353 = vpack.c.b16 %v346, %v345
      %v354 = vpack.c.b16 %v348, %v347
      %v355 = vpack.c.b16 %v350, %v349
      %v356 = vpack.c.b16 %v352, %v351
      %vm361 = vcmask 523264
      %v363 = vsel %vm361, %v328, 0
      %365 = vmatprep.subr.bf16.mxu0 0
      %366 = vmatpush1.bf16.msra.mxu0 %v353
      %367 = vmatprep.subr.bf16.mxu0 0
      %368 = vmatpush1.bf16.msra.mxu0 %v354
      %369 = vmatprep.subr.bf16.mxu0 0
      %370 = vmatpush1.bf16.msra.mxu0 %v355
      %371 = vmatprep.subr.bf16.mxu0 0
      %372 = vmatpush1.bf16.msra.mxu0 %v356
      %373 = vmatprep.subr.bf16.mxu0 0
      %374 = vmatpush1.bf16.msra.mxu0 0
      %375 = vmatprep.subr.bf16.mxu0 0
      %376 = vmatpush1.bf16.msra.mxu0 0
      %377 = vmatprep.subr.bf16.mxu0 0
      %378 = vmatpush1.bf16.msra.mxu0 0
      %379 = vmatprep.subr.bf16.mxu0 0
      %380 = vmatpush1.bf16.msra.mxu0 0
      %381 = vmatprep.subr.bf16.mxu0 0
      %382 = vmatpush1.bf16.msra.mxu0 0
      %383 = vmatprep.subr.bf16.mxu0 0
      %384 = vmatpush1.bf16.msra.mxu0 0
      %385 = vmatprep.subr.bf16.mxu0 0
      %386 = vmatpush1.bf16.msra.mxu0 0
      %387 = vmatprep.subr.bf16.mxu0 0
      %388 = vmatpush1.bf16.msra.mxu0 0
      %389 = vmatprep.subr.bf16.mxu0 0
      %390 = vmatpush1.bf16.msra.mxu0 0
      %391 = vmatprep.subr.bf16.mxu0 0
      %392 = vmatpush1.bf16.msra.mxu0 0
      %393 = vmatprep.subr.bf16.mxu0 0
      %394 = vmatpush1.bf16.msra.mxu0 0
      %395 = vmatprep.subr.bf16.mxu0 0
      %396 = vmatpush1.bf16.msra.mxu0 0
      %397 = vmatprep.mubr.bf16.mxu0 0
      %398 = vmatmul.mubr.bf16.gmra.mrb[0].mxu0 %v363
      %v399 = vpop.f32.mrb[0].mxu0
      %v400 = vadd.f32 0.0, %v399
      %v401 = vpop.f32.mrb[0].mxu0
      %v402 = vpop.f32.mrb[0].mxu0
      %v403 = vadd.f32 0.0, %v402
      %v404 = vpop.f32.mrb[0].mxu0
      %405 = vdwg.mxu0
      %v406 = vadd.f32 %v400, %v403
      %v407 = vrot.slane %v406, 4
      %v408 = vadd.f32 %v406, %v407
      %v409 = vrot.slane %v408, 2
      %v410 = vadd.f32 %v408, %v409
      %v411 = vrot.slane %v410, 1
      %v412 = vadd.f32 %v410, %v411
      %v413 = vmul.f32 %v400, %v400
      %v414 = vmul.f32 %v403, %v403
      %v415 = vadd.f32 %v413, %v414
      %v416 = vrot.slane %v415, 4
      %v417 = vadd.f32 %v415, %v416
      %v418 = vrot.slane %v417, 2
      %v419 = vadd.f32 %v417, %v418
      %v420 = vrot.slane %v419, 1
      %v421 = vadd.f32 %v419, %v420
      %p422 = scmp.eq.s32.totalorder %s22, 0
      // Predicated region
      $region37: #{pointnet_cls_forward.6} parent=35 // pred_check
        %p423 = pneg %p422
      $region38: #{pointnet_cls_forward.6} parent=35 // pred_check_branch
        %425 = sbr.rel (%p423) target = $region40
      $region39: #{pointnet_cls_forward.6} parent=35 // pred_region
        %426 = vst [vmem:[%s254] sm:$0x1] %v412
        %427 = vst [vmem:[%s257] sm:$0x1] %v421
      $region40: #{pointnet_cls_forward.6} parent=35 // pred_fallthru
        _
      %p428 = scmp.ne.s32.totalorder %s22, 0
      // Predicated region
      $region41: #{pointnet_cls_forward.6} parent=35 // pred_check
        %p429 = pneg %p428
      $region42: #{pointnet_cls_forward.6} parent=35 // pred_check_branch
        %431 = sbr.rel (%p429) target = $region44
      $region43: #{pointnet_cls_forward.6} parent=35 // pred_region
        %v432 = vld [vmem:[%s254] sm:$0x1]
        %v433 = vadd.f32 %v432, %v412
        %434 = vst [vmem:[%s254] sm:$0x1] %v433
        %v435 = vld [vmem:[%s257] sm:$0x1]
        %v436 = vadd.f32 %v435, %v421
        %437 = vst [vmem:[%s257] sm:$0x1] %v436
      $region44: #{pointnet_cls_forward.6} parent=35 // pred_fallthru
        _
      %p438 = scmp.lt.s32.totalorder %s21, 1
      %s439 = scalar_select %p438, %s21, 1
      %s440 = scalar_lea.vmem %s4, %s439
      %p441 = scmp.lt.s32.totalorder %s21, 1
      %s442 = scalar_select %p441, %s21, 1
      %s443 = scalar_lea.vmem %s5, %s442
      // Predicated region
      $region45: #{pointnet_cls_forward.6} parent=35 // pred_check
        %p444 = pneg %p138
      $region46: #{pointnet_cls_forward.6} parent=35 // pred_check_branch
        %446 = sbr.rel (%p444) target = $region48
      $region47: #{pointnet_cls_forward.6} parent=35 // pred_region
        _
      $region48: #{pointnet_cls_forward.6} parent=35 // pred_fallthru
        _
      // Predicated region
      $region49: #{pointnet_cls_forward.6} parent=35 // pred_check
        %p447 = pneg %p164
      $region50: #{pointnet_cls_forward.6} parent=35 // pred_check_branch
        %449 = sbr.rel (%p447) target = $region52
      $region51: #{pointnet_cls_forward.6} parent=35 // pred_region
        _
      $region52: #{pointnet_cls_forward.6} parent=35 // pred_fallthru
        _
    $region36: #{pointnet_cls_forward.6} parent=5 // pred_fallthru
      _
    %p450 = scmp.le.s32.totalorder 2, %s12
    // Predicated region
    $region53: #{pointnet_cls_forward.6} parent=5 // pred_check
      %p451 = pneg %p450
    $region54: #{pointnet_cls_forward.6} parent=5 // pred_check_branch
      %453 = sbr.rel (%p451) target = $region56
    $region55: #{pointnet_cls_forward.6} parent=5 // pred_region
      %s454 = ssub.s32 %s12, 2
      // Predicated region
      $region57: #{pointnet_cls_forward.6} parent=55 // pred_check
        %p455 = pneg %p144
      $region58: #{pointnet_cls_forward.6} parent=55 // pred_check_branch
        %457 = sbr.rel (%p455) target = $region60
      $region59: #{pointnet_cls_forward.6} parent=55 // pred_region
        %p458 = scmp.lt.s32.totalorder %s23, 1
        %s459 = scalar_select %p458, %s23, 1
        %s460 = scalar_lea.vmem %s4, %s459
      $region60: #{pointnet_cls_forward.6} parent=55 // pred_fallthru
        _
      // Predicated region
      $region61: #{pointnet_cls_forward.6} parent=55 // pred_check
        %p461 = pneg %p170
      $region62: #{pointnet_cls_forward.6} parent=55 // pred_check_branch
        %463 = sbr.rel (%p461) target = $region64
      $region63: #{pointnet_cls_forward.6} parent=55 // pred_region
        %p464 = scmp.lt.s32.totalorder %s23, 1
        %s465 = scalar_select %p464, %s23, 1
        %s466 = scalar_lea.vmem %s5, %s465
      $region64: #{pointnet_cls_forward.6} parent=55 // pred_fallthru
        _
    $region56: #{pointnet_cls_forward.6} parent=5 // pred_fallthru
      _
  $region6: #{pointnet_cls_forward.6} parent=0 // loop_footer
    %s16 = sadd.s32 1, %s12
  $region7: #{pointnet_cls_forward.6} parent=0 // loop_footer_branch
    %11 = sbr.rel target = $region3
  $region8: #{pointnet_cls_forward.6} parent=0 // loop_exit
    _

// kernel: pointnet_cls_forward.7
$region0: #{pointnet_cls_forward.7}
  #allocation0 [shape = 'u32[]', space=smem, size = 0x4, offset = 0x4, fixed_abs, tag = 'smem constant byte address 0x4 - core index']
  #allocation1 [shape = 'u32[144,128]{1,0:T(1,128)}', space=vmem, size = 0x12000, scoped, tag = 'internal scratch']
  %s0 = inlined_call_operand.vmem [shape: bf16[2,16,3], index: 0, kind: input, shape index: {}]
  %s1 = inlined_call_operand.vmem [shape: bf16[1,3,64], index: 1, kind: input, shape index: {}]
  %s2 = inlined_call_operand.vmem [shape: f32[1,64], index: 2, kind: input, shape index: {}]
  %s3 = inlined_call_operand.vmem [shape: bf16[64,128], index: 3, kind: input, shape index: {}]
  %s4 = inlined_call_operand.vmem [shape: f32[1,128], index: 4, kind: input, shape index: {}]
  %s5 = inlined_call_operand.vmem [shape: bf16[128,1024], index: 5, kind: input, shape index: {}]
  %s6 = inlined_call_operand.vmem [shape: f32[2,1,128], index: 6, kind: output, shape index: {0}]
  %s7 = inlined_call_operand.vmem [shape: f32[2,128,128], index: 7, kind: output, shape index: {1}]
  %s8 = inlined_call_operand.vmem [shape: f32[2,1,1024], index: 8, kind: output, shape index: {2}]
  %s9 = inlined_call_operand.vmem [shape: f32[2,1,1024], index: 9, kind: output, shape index: {3}]
  %10 = xla_tuple %s6, %s7, %s8, %s9
  %s11 = sld [smem:[#allocation0]]
  $region89: #{pointnet_cls_forward.7} parent=0
    _
  %s13 = ssub.s32 1, %s11
  %s14 = scalar_select 0, %s13, %s11
  loop: start=0, step=1, limit=4
  $region2: #{pointnet_cls_forward.7} parent=0 // loop_pre_header
    _
  $region3: #{pointnet_cls_forward.7} parent=0 // loop_header
    %s16 = sphi 0, %s20
    %p17 = scmp.ge.s32.totalorder %s16, 4
    %s23 = sphi 0, %s35
    %s24 = sphi 0, %s31
    %s25 = sphi 0, %s23
    %s26 = sphi 0, %s24
    %s27 = sphi 0, %s25
    %s28 = sphi 0, %s26
    %s40 = sphi 0, %s42
    %s43 = sphi 0, %s40
    %s44 = sphi 0, %s43
    %s60 = sphi 0, %s44
    %s64 = sphi 0, %s64
    %s66 = sphi 0, %s64
    %s67 = sphi 0, %s66
    %s81 = sphi 0, %s67
    %s85 = sphi 0, %s85
    %s87 = sphi 0, %s85
    %s88 = sphi 0, %s87
    %s102 = sphi 0, %s88
    %s106 = sphi 0, %s106
    %s108 = sphi 0, %s106
    %s109 = sphi 0, %s108
    %s123 = sphi 0, %s109
    %s127 = sphi 0, %s127
    %s129 = sphi 0, %s127
    %s130 = sphi 0, %s129
    %s144 = sphi 0, %s130
    %s148 = sphi 0, %s148
    %s150 = sphi 0, %s148
    %s151 = sphi 0, %s150
    %s165 = sphi 0, %s151
    %s171 = sphi 0, %s173
    %s174 = sphi 0, %s171
    %s175 = sphi 0, %s174
    %s191 = sphi 0, %s175
    %s197 = sphi 0, %s199
    %s200 = sphi 0, %s197
    %s201 = sphi 0, %s200
    %s217 = sphi 0, %s201
    %s223 = sphi 0, %s225
    %s226 = sphi 0, %s223
    %s227 = sphi 0, %s226
    %s243 = sphi 0, %s227
    %s249 = sphi 0, %s251
    %s252 = sphi 0, %s249
    %s253 = sphi 0, %s252
    %s269 = sphi 0, %s253
  $region4: #{pointnet_cls_forward.7} parent=0 // loop_header_branch
    %19 = sbr.rel (%p17) target = $region8
  $region5: #{pointnet_cls_forward.7} parent=0 // loop_body
    %s21 = ssub.s32 %s16, 1
    %s22 = ssub.s32 %s16, 2
    %s29 = sadd.s32 1, %s24
    %p30 = scmp.ge.s32.totalorder %s29, 1
    %s31 = scalar_select %p30, 0, %s29
    %s32 = sadd.s32 1, %s23
    %s33 = scalar_select %p30, %s32, %s23
    %p34 = scmp.ge.s32.totalorder %s33, 2
    %s35 = scalar_select %p34, 0, %s33
    %s36 = ssub.s32 %s23, %s35
    %s37 = ssub.s32 %s24, %s31
    %s38 = sor.u32 %s36, %s37
    %p39 = scmp.eq.s32.totalorder %s38, 0
    %s41 = sadd.s32 %s40, 1
    %s42 = scalar_select %p39, %s40, %s41
    %p45 = pneg %p39
    %p46 = scmp.eq.s32.totalorder %s16, 1
    %p47 = por %p45, %p46
    %p48 = scmp.ne.s32.totalorder %s40, %s43
    %p49 = scmp.eq.s32.totalorder %s16, 0
    %p50 = por %p48, %p49
    %p51 = scmp.ne.s32.totalorder %s40, %s43
    %p52 = scmp.eq.s32.totalorder %s21, 1
    %p53 = por %p51, %p52
    %p54 = scmp.ne.s32.totalorder %s43, %s44
    %p55 = scmp.eq.s32.totalorder %s21, 0
    %p56 = por %p54, %p55
    %p57 = scmp.ne.s32.totalorder %s43, %s44
    %p58 = scmp.eq.s32.totalorder %s22, 1
    %p59 = por %p57, %p58
    %p61 = scmp.ne.s32.totalorder %s44, %s60
    %p62 = scmp.eq.s32.totalorder %s22, 0
    %p63 = por %p61, %p62
    %s65 = sadd.s32 %s64, 1
    %p68 = scmp.eq.s32.totalorder %s16, 1
    %p69 = scmp.ne.s32.totalorder %s64, %s66
    %p70 = scmp.eq.s32.totalorder %s16, 0
    %p71 = por %p69, %p70
    %p72 = scmp.ne.s32.totalorder %s64, %s66
    %p73 = scmp.eq.s32.totalorder %s21, 1
    %p74 = por %p72, %p73
    %p75 = scmp.ne.s32.totalorder %s66, %s67
    %p76 = scmp.eq.s32.totalorder %s21, 0
    %p77 = por %p75, %p76
    %p78 = scmp.ne.s32.totalorder %s66, %s67
    %p79 = scmp.eq.s32.totalorder %s22, 1
    %p80 = por %p78, %p79
    %p82 = scmp.ne.s32.totalorder %s67, %s81
    %p83 = scmp.eq.s32.totalorder %s22, 0
    %p84 = por %p82, %p83
    %s86 = sadd.s32 %s85, 1
    %p89 = scmp.eq.s32.totalorder %s16, 1
    %p90 = scmp.ne.s32.totalorder %s85, %s87
    %p91 = scmp.eq.s32.totalorder %s16, 0
    %p92 = por %p90, %p91
    %p93 = scmp.ne.s32.totalorder %s85, %s87
    %p94 = scmp.eq.s32.totalorder %s21, 1
    %p95 = por %p93, %p94
    %p96 = scmp.ne.s32.totalorder %s87, %s88
    %p97 = scmp.eq.s32.totalorder %s21, 0
    %p98 = por %p96, %p97
    %p99 = scmp.ne.s32.totalorder %s87, %s88
    %p100 = scmp.eq.s32.totalorder %s22, 1
    %p101 = por %p99, %p100
    %p103 = scmp.ne.s32.totalorder %s88, %s102
    %p104 = scmp.eq.s32.totalorder %s22, 0
    %p105 = por %p103, %p104
    %s107 = sadd.s32 %s106, 1
    %p110 = scmp.eq.s32.totalorder %s16, 1
    %p111 = scmp.ne.s32.totalorder %s106, %s108
    %p112 = scmp.eq.s32.totalorder %s16, 0
    %p113 = por %p111, %p112
    %p114 = scmp.ne.s32.totalorder %s106, %s108
    %p115 = scmp.eq.s32.totalorder %s21, 1
    %p116 = por %p114, %p115
    %p117 = scmp.ne.s32.totalorder %s108, %s109
    %p118 = scmp.eq.s32.totalorder %s21, 0
    %p119 = por %p117, %p118
    %p120 = scmp.ne.s32.totalorder %s108, %s109
    %p121 = scmp.eq.s32.totalorder %s22, 1
    %p122 = por %p120, %p121
    %p124 = scmp.ne.s32.totalorder %s109, %s123
    %p125 = scmp.eq.s32.totalorder %s22, 0
    %p126 = por %p124, %p125
    %s128 = sadd.s32 %s127, 1
    %p131 = scmp.eq.s32.totalorder %s16, 1
    %p132 = scmp.ne.s32.totalorder %s127, %s129
    %p133 = scmp.eq.s32.totalorder %s16, 0
    %p134 = por %p132, %p133
    %p135 = scmp.ne.s32.totalorder %s127, %s129
    %p136 = scmp.eq.s32.totalorder %s21, 1
    %p137 = por %p135, %p136
    %p138 = scmp.ne.s32.totalorder %s129, %s130
    %p139 = scmp.eq.s32.totalorder %s21, 0
    %p140 = por %p138, %p139
    %p141 = scmp.ne.s32.totalorder %s129, %s130
    %p142 = scmp.eq.s32.totalorder %s22, 1
    %p143 = por %p141, %p142
    %p145 = scmp.ne.s32.totalorder %s130, %s144
    %p146 = scmp.eq.s32.totalorder %s22, 0
    %p147 = por %p145, %p146
    %s149 = sadd.s32 %s148, 1
    %p152 = scmp.eq.s32.totalorder %s16, 1
    %p153 = scmp.ne.s32.totalorder %s148, %s150
    %p154 = scmp.eq.s32.totalorder %s16, 0
    %p155 = por %p153, %p154
    %p156 = scmp.ne.s32.totalorder %s148, %s150
    %p157 = scmp.eq.s32.totalorder %s21, 1
    %p158 = por %p156, %p157
    %p159 = scmp.ne.s32.totalorder %s150, %s151
    %p160 = scmp.eq.s32.totalorder %s21, 0
    %p161 = por %p159, %p160
    %p162 = scmp.ne.s32.totalorder %s150, %s151
    %p163 = scmp.eq.s32.totalorder %s22, 1
    %p164 = por %p162, %p163
    %p166 = scmp.ne.s32.totalorder %s151, %s165
    %p167 = scmp.eq.s32.totalorder %s22, 0
    %p168 = por %p166, %p167
    %s169 = ssub.s32 %s23, %s35
    %p170 = scmp.eq.s32.totalorder %s169, 0
    %s172 = sadd.s32 %s171, 1
    %s173 = scalar_select %p170, %s171, %s172
    %p176 = pneg %p170
    %p177 = scmp.eq.s32.totalorder %s16, 1
    %p178 = por %p176, %p177
    %p179 = scmp.ne.s32.totalorder %s171, %s174
    %p180 = scmp.eq.s32.totalorder %s16, 0
    %p181 = por %p179, %p180
    %p182 = scmp.ne.s32.totalorder %s171, %s174
    %p183 = scmp.eq.s32.totalorder %s21, 1
    %p184 = por %p182, %p183
    %p185 = scmp.ne.s32.totalorder %s174, %s175
    %p186 = scmp.eq.s32.totalorder %s21, 0
    %p187 = por %p185, %p186
    %p188 = scmp.ne.s32.totalorder %s174, %s175
    %p189 = scmp.eq.s32.totalorder %s22, 1
    %p190 = por %p188, %p189
    %p192 = scmp.ne.s32.totalorder %s175, %s191
    %p193 = scmp.eq.s32.totalorder %s22, 0
    %p194 = por %p192, %p193
    %s195 = ssub.s32 %s23, %s35
    %p196 = scmp.eq.s32.totalorder %s195, 0
    %s198 = sadd.s32 %s197, 1
    %s199 = scalar_select %p196, %s197, %s198
    %p202 = pneg %p196
    %p203 = scmp.eq.s32.totalorder %s16, 1
    %p204 = por %p202, %p203
    %p205 = scmp.ne.s32.totalorder %s197, %s200
    %p206 = scmp.eq.s32.totalorder %s16, 0
    %p207 = por %p205, %p206
    %p208 = scmp.ne.s32.totalorder %s197, %s200
    %p209 = scmp.eq.s32.totalorder %s21, 1
    %p210 = por %p208, %p209
    %p211 = scmp.ne.s32.totalorder %s200, %s201
    %p212 = scmp.eq.s32.totalorder %s21, 0
    %p213 = por %p211, %p212
    %p214 = scmp.ne.s32.totalorder %s200, %s201
    %p215 = scmp.eq.s32.totalorder %s22, 1
    %p216 = por %p214, %p215
    %p218 = scmp.ne.s32.totalorder %s201, %s217
    %p219 = scmp.eq.s32.totalorder %s22, 0
    %p220 = por %p218, %p219
    %s221 = ssub.s32 %s23, %s35
    %p222 = scmp.eq.s32.totalorder %s221, 0
    %s224 = sadd.s32 %s223, 1
    %s225 = scalar_select %p222, %s223, %s224
    %p228 = pneg %p222
    %p229 = scmp.eq.s32.totalorder %s16, 1
    %p230 = por %p228, %p229
    %p231 = scmp.ne.s32.totalorder %s223, %s226
    %p232 = scmp.eq.s32.totalorder %s16, 0
    %p233 = por %p231, %p232
    %p234 = scmp.ne.s32.totalorder %s223, %s226
    %p235 = scmp.eq.s32.totalorder %s21, 1
    %p236 = por %p234, %p235
    %p237 = scmp.ne.s32.totalorder %s226, %s227
    %p238 = scmp.eq.s32.totalorder %s21, 0
    %p239 = por %p237, %p238
    %p240 = scmp.ne.s32.totalorder %s226, %s227
    %p241 = scmp.eq.s32.totalorder %s22, 1
    %p242 = por %p240, %p241
    %p244 = scmp.ne.s32.totalorder %s227, %s243
    %p245 = scmp.eq.s32.totalorder %s22, 0
    %p246 = por %p244, %p245
    %s247 = ssub.s32 %s23, %s35
    %p248 = scmp.eq.s32.totalorder %s247, 0
    %s250 = sadd.s32 %s249, 1
    %s251 = scalar_select %p248, %s249, %s250
    %p254 = pneg %p248
    %p255 = scmp.eq.s32.totalorder %s16, 1
    %p256 = por %p254, %p255
    %p257 = scmp.ne.s32.totalorder %s249, %s252
    %p258 = scmp.eq.s32.totalorder %s16, 0
    %p259 = por %p257, %p258
    %p260 = scmp.ne.s32.totalorder %s249, %s252
    %p261 = scmp.eq.s32.totalorder %s21, 1
    %p262 = por %p260, %p261
    %p263 = scmp.ne.s32.totalorder %s252, %s253
    %p264 = scmp.eq.s32.totalorder %s21, 0
    %p265 = por %p263, %p264
    %p266 = scmp.ne.s32.totalorder %s252, %s253
    %p267 = scmp.eq.s32.totalorder %s22, 1
    %p268 = por %p266, %p267
    %p270 = scmp.ne.s32.totalorder %s253, %s269
    %p271 = scmp.eq.s32.totalorder %s22, 0
    %p272 = por %p270, %p271
    %p273 = scmp.le.s32.totalorder 1, %s16
    %p274 = scmp.lt.s32.totalorder %s16, 3
    %p275 = pnand %p273, %p274
    %p276 = pneg %p275
    // Predicated region
    $region9: #{pointnet_cls_forward.7} parent=5 // pred_check
      _
    $region10: #{pointnet_cls_forward.7} parent=5 // pred_check_branch
      %278 = sbr.rel (%p275) target = $region12
    $region11: #{pointnet_cls_forward.7} parent=5 // pred_region
      %s279 = ssub.s32 %s16, 1
      // Predicated region
      $region13: #{pointnet_cls_forward.7} parent=11 // pred_check
        %p280 = pneg %p77
      $region14: #{pointnet_cls_forward.7} parent=11 // pred_check_branch
        %282 = sbr.rel (%p280) target = $region16
      $region15: #{pointnet_cls_forward.7} parent=11 // pred_region
        _
      $region16: #{pointnet_cls_forward.7} parent=11 // pred_fallthru
        _
      // Predicated region
      $region17: #{pointnet_cls_forward.7} parent=11 // pred_check
        %p283 = pneg %p98
      $region18: #{pointnet_cls_forward.7} parent=11 // pred_check_branch
        %285 = sbr.rel (%p283) target = $region20
      $region19: #{pointnet_cls_forward.7} parent=11 // pred_region
        _
      $region20: #{pointnet_cls_forward.7} parent=11 // pred_fallthru
        _
      // Predicated region
      $region21: #{pointnet_cls_forward.7} parent=11 // pred_check
        %p286 = pneg %p119
      $region22: #{pointnet_cls_forward.7} parent=11 // pred_check_branch
        %288 = sbr.rel (%p286) target = $region24
      $region23: #{pointnet_cls_forward.7} parent=11 // pred_region
        _
      $region24: #{pointnet_cls_forward.7} parent=11 // pred_fallthru
        _
      // Predicated region
      $region25: #{pointnet_cls_forward.7} parent=11 // pred_check
        %p289 = pneg %p140
      $region26: #{pointnet_cls_forward.7} parent=11 // pred_check_branch
        %291 = sbr.rel (%p289) target = $region28
      $region27: #{pointnet_cls_forward.7} parent=11 // pred_region
        _
      $region28: #{pointnet_cls_forward.7} parent=11 // pred_fallthru
        _
      // Predicated region
      $region29: #{pointnet_cls_forward.7} parent=11 // pred_check
        %p292 = pneg %p161
      $region30: #{pointnet_cls_forward.7} parent=11 // pred_check_branch
        %294 = sbr.rel (%p292) target = $region32
      $region31: #{pointnet_cls_forward.7} parent=11 // pred_region
        _
      $region32: #{pointnet_cls_forward.7} parent=11 // pred_fallthru
        _
    $region12: #{pointnet_cls_forward.7} parent=5 // pred_fallthru
      _
    %p295 = scmp.lt.s32.totalorder %s16, 2
    // Predicated region
    $region33: #{pointnet_cls_forward.7} parent=5 // pred_check
      %p296 = pneg %p295
    $region34: #{pointnet_cls_forward.7} parent=5 // pred_check_branch
      %298 = sbr.rel (%p296) target = $region36
    $region35: #{pointnet_cls_forward.7} parent=5 // pred_region
      // Predicated region
      $region37: #{pointnet_cls_forward.7} parent=35 // pred_check
        %p299 = pneg %p50
      $region38: #{pointnet_cls_forward.7} parent=35 // pred_check_branch
        %301 = sbr.rel (%p299) target = $region40
      $region39: #{pointnet_cls_forward.7} parent=35 // pred_region
        %s302 = smul.u32 2, %s24
        %p303 = scmp.lt.s32.totalorder %s23, 1
        %s304 = scalar_select %p303, %s23, 1
        %p305 = scmp.lt.s32.totalorder %s302, 1
        %s306 = scalar_select %p305, %s302, 1
        %s307 = smul.addr %s304, 2
        %s308 = sadd.s32 %s306, %s307
        %s309 = smul.addr %s308, 4
        %s310 = scalar_lea.vmem %s0, %s309
        %s311 = smul.u32 2, %s24
      $region40: #{pointnet_cls_forward.7} parent=35 // pred_fallthru
        _
    $region36: #{pointnet_cls_forward.7} parent=5 // pred_fallthru
      _
    %p312 = scmp.le.s32.totalorder 1, %s16
    %p313 = scmp.lt.s32.totalorder %s16, 3
    %p314 = pnand %p312, %p313
    %p315 = pneg %p314
    // Predicated region
    $region41: #{pointnet_cls_forward.7} parent=5 // pred_check
      _
    $region42: #{pointnet_cls_forward.7} parent=5 // pred_check_branch
      %317 = sbr.rel (%p314) target = $region44
    $region43: #{pointnet_cls_forward.7} parent=5 // pred_region
      %s318 = ssub.s32 %s16, 1
      %s319 = smul.u32 2, %s26
      %p320 = scmp.lt.s32.totalorder %s25, 1
      %s321 = scalar_select %p320, %s25, 1
      %p322 = scmp.lt.s32.totalorder %s319, 1
      %s323 = scalar_select %p322, %s319, 1
      %s324 = smul.addr %s321, 2
      %s325 = sadd.s32 %s323, %s324
      %s326 = smul.addr %s325, 4
      %s327 = scalar_lea.vmem %s0, %s326
      %p328 = pneg %p56
      %p329 = pneg %p53
      %p330 = pneg %p77
      %p331 = pneg %p74
      %p332 = pneg %p98
      %p333 = pneg %p95
      %p334 = pneg %p119
      %p335 = pneg %p116
      %p336 = pneg %p140
      %p337 = pneg %p137
      %p338 = pneg %p161
      %p339 = pneg %p158
      %p340 = pneg %p187
      %p341 = pneg %p184
      %p342 = scmp.lt.s32.totalorder %s25, 1
      %s343 = scalar_select %p342, %s25, 1
      %s344 = scalar_lea.vmem %s6, %s343
      %p345 = pneg %p213
      %p346 = pneg %p210
      %p347 = scmp.lt.s32.totalorder %s25, 1
      %s348 = scalar_select %p347, %s25, 1
      %s349 = smul.addr %s348, 16
      %s350 = smul.addr %s349, 8
      %s351 = scalar_lea.vmem %s7, %s350
      %p352 = pneg %p239
      %p353 = pneg %p236
      %p354 = scmp.lt.s32.totalorder %s25, 1
      %s355 = scalar_select %p354, %s25, 1
      %s356 = smul.addr %s355, 8
      %s357 = scalar_lea.vmem %s8, %s356
      %p358 = pneg %p265
      %p359 = pneg %p262
      %p360 = scmp.lt.s32.totalorder %s25, 1
      %s361 = scalar_select %p360, %s25, 1
      %s362 = smul.addr %s361, 8
      %s363 = scalar_lea.vmem %s9, %s362
      %s364 = smul.u32 2, %s26
      %p365 = scmp.lt.s32.totalorder %s25, 1
      %s366 = scalar_select %p365, %s25, 1
      %p367 = scmp.lt.s32.totalorder %s364, 1
      %s368 = scalar_select %p367, %s364, 1
      %s369 = smul.addr %s366, 2
      %s370 = sadd.s32 %s368, %s369
      %s371 = smul.addr %s370, 4
      %s372 = scalar_lea.vmem %s0, %s371
      %s373 = smul.u32 2, %s26
      %p374 = scmp.lt.s32.totalorder %s25, 1
      %s375 = scalar_select %p374, %s25, 1
      %s376 = scalar_lea.vmem %s6, %s375
      %p377 = scmp.lt.s32.totalorder %s25, 1
      %s378 = scalar_select %p377, %s25, 1
      %s379 = smul.addr %s378, 16
      %s380 = smul.addr %s379, 8
      %s381 = scalar_lea.vmem %s7, %s380
      %p382 = scmp.lt.s32.totalorder %s25, 1
      %s383 = scalar_select %p382, %s25, 1
      %s384 = smul.addr %s383, 8
      %s385 = scalar_lea.vmem %s8, %s384
      %p386 = scmp.lt.s32.totalorder %s25, 1
      %s387 = scalar_select %p386, %s25, 1
      %s388 = smul.addr %s387, 8
      %s389 = scalar_lea.vmem %s9, %s388
      %v391 = vld [vmem:[%s372] sm:$0xf]
      %v392 = vld [vmem:[%s372 + $0x4] sm:$0xf]
      %v393 = vld [vmem:[%s1] sm:$0x3]
      %v394 = vld [vmem:[%s2] sm:$0x1]
      %v396 = vlaneseq
      %v397 = vshrl.u32 %v396, 7
      %v398 = vsub.s32 0, %v397
      %v399 = vrot.slane %v394, %v398
      %v403 = vunpack.c.l.b16 %v391
      %v404 = vunpack.c.l.b16 %v392
      %v405 = vpack.c.b16 %v404, %v403
      %vm406 = vcmask 23552
      %v408 = vsel %vm406, %v405, 0
      %vm410 = vcmask 1040384
      %vm411 = vcmask 1041408
      %v412 = vsel %vm410, 4294967295, 65535
      %v413 = vsel %vm411, %v412, 0
      %v415 = vand.u32 %v393, %v413
      %417 = vmatprep.subr.bf16.mxu0 0
      %418 = vmatpush1.bf16.msra.mxu0 %v415
      %419 = vmatprep.subr.bf16.mxu0 0
      %420 = vmatpush1.bf16.msra.mxu0 0
      %421 = vmatprep.subr.bf16.mxu0 0
      %422 = vmatpush1.bf16.msra.mxu0 0
      %423 = vmatprep.subr.bf16.mxu0 0
      %424 = vmatpush1.bf16.msra.mxu0 0
      %425 = vmatprep.subr.bf16.mxu0 0
      %426 = vmatpush1.bf16.msra.mxu0 0
      %427 = vmatprep.subr.bf16.mxu0 0
      %428 = vmatpush1.bf16.msra.mxu0 0
      %429 = vmatprep.subr.bf16.mxu0 0
      %430 = vmatpush1.bf16.msra.mxu0 0
      %431 = vmatprep.subr.bf16.mxu0 0
      %432 = vmatpush1.bf16.msra.mxu0 0
      %433 = vmatprep.subr.bf16.mxu0 0
      %434 = vmatpush1.bf16.msra.mxu0 0
      %435 = vmatprep.subr.bf16.mxu0 0
      %436 = vmatpush1.bf16.msra.mxu0 0
      %437 = vmatprep.subr.bf16.mxu0 0
      %438 = vmatpush1.bf16.msra.mxu0 0
      %439 = vmatprep.subr.bf16.mxu0 0
      %440 = vmatpush1.bf16.msra.mxu0 0
      %441 = vmatprep.subr.bf16.mxu0 0
      %442 = vmatpush1.bf16.msra.mxu0 0
      %443 = vmatprep.subr.bf16.mxu0 0
      %444 = vmatpush1.bf16.msra.mxu0 0
      %445 = vmatprep.subr.bf16.mxu0 0
      %446 = vmatpush1.bf16.msra.mxu0 0
      %447 = vmatprep.subr.bf16.mxu0 0
      %448 = vmatpush1.bf16.msra.mxu0 0
      %449 = vmatprep.mubr.bf16.mxu0 0
      %450 = vmatmul.mubr.bf16.gmra.mrb[0].mxu0 %v408
      %v451 = vpop.f32.mrb[0].mxu0
      %v452 = vadd.f32 %v399, %v451
      %v453 = vpop.f32.mrb[0].mxu0
      %v454 = vpop.f32.mrb[0].mxu0
      %v455 = vadd.f32 %v399, %v454
      %v456 = vpop.f32.mrb[0].mxu0
      %457 = vdwg.mxu0
      %v458 = vmax.f32 %v452, 0.0
      %v459 = vmax.f32 %v455, 0.0
      %v460 = vpack.c.bf16 %v459, %v458
      %v461 = vld [vmem:[%s3] sm:$0xf]
      %v462 = vld [vmem:[%s3 + $0x4] sm:$0xf]
      %v463 = vld [vmem:[%s3 + $0x8] sm:$0xf]
      %v464 = vld [vmem:[%s3 + $0xc] sm:$0xf]
      %v465 = vld [vmem:[%s3 + $0x10] sm:$0xf]
      %v466 = vld [vmem:[%s3 + $0x14] sm:$0xf]
      %v467 = vld [vmem:[%s3 + $0x18] sm:$0xf]
      %v468 = vld [vmem:[%s3 + $0x1c] sm:$0xf]
      %v469 = vld [vmem:[%s4] sm:$0x1]
      %v471 = vlaneseq
      %v472 = vshrl.u32 %v471, 7
      %v473 = vsub.s32 0, %v472
      %v474 = vrot.slane %v469, %v473
      %v484 = vunpack.c.l.b16 %v461
      %v485 = vunpack.c.l.b16 %v462
      %v486 = vunpack.c.l.b16 %v463
      %v487 = vunpack.c.l.b16 %v464
      %v488 = vunpack.c.l.b16 %v465
      %v489 = vunpack.c.l.b16 %v466
      %v490 = vunpack.c.l.b16 %v467
      %v491 = vunpack.c.l.b16 %v468
      %v492 = vpack.c.b16 %v485, %v484
      %v493 = vpack.c.b16 %v487, %v486
      %v494 = vpack.c.b16 %v489, %v488
      %v495 = vpack.c.b16 %v491, %v490
      %vm500 = vcmask 523264
      %v502 = vsel %vm500, %v460, 0
      %504 = vmatprep.subr.bf16.mxu0 0
      %505 = vmatpush1.bf16.msra.mxu0 %v492
      %506 = vmatprep.subr.bf16.mxu0 0
      %507 = vmatpush1.bf16.msra.mxu0 %v493
      %508 = vmatprep.subr.bf16.mxu0 0
      %509 = vmatpush1.bf16.msra.mxu0 %v494
      %510 = vmatprep.subr.bf16.mxu0 0
      %511 = vmatpush1.bf16.msra.mxu0 %v495
      %512 = vmatprep.subr.bf16.mxu0 0
      %513 = vmatpush1.bf16.msra.mxu0 0
      %514 = vmatprep.subr.bf16.mxu0 0
      %515 = vmatpush1.bf16.msra.mxu0 0
      %516 = vmatprep.subr.bf16.mxu0 0
      %517 = vmatpush1.bf16.msra.mxu0 0
      %518 = vmatprep.subr.bf16.mxu0 0
      %519 = vmatpush1.bf16.msra.mxu0 0
      %520 = vmatprep.subr.bf16.mxu0 0
      %521 = vmatpush1.bf16.msra.mxu0 0
      %522 = vmatprep.subr.bf16.mxu0 0
      %523 = vmatpush1.bf16.msra.mxu0 0
      %524 = vmatprep.subr.bf16.mxu0 0
      %525 = vmatpush1.bf16.msra.mxu0 0
      %526 = vmatprep.subr.bf16.mxu0 0
      %527 = vmatpush1.bf16.msra.mxu0 0
      %528 = vmatprep.subr.bf16.mxu0 0
      %529 = vmatpush1.bf16.msra.mxu0 0
      %530 = vmatprep.subr.bf16.mxu0 0
      %531 = vmatpush1.bf16.msra.mxu0 0
      %532 = vmatprep.subr.bf16.mxu0 0
      %533 = vmatpush1.bf16.msra.mxu0 0
      %534 = vmatprep.subr.bf16.mxu0 0
      %535 = vmatpush1.bf16.msra.mxu0 0
      %536 = vmatprep.mubr.bf16.mxu0 0
      %537 = vmatmul.mubr.bf16.gmra.mrb[0].mxu0 %v502
      %v538 = vpop.f32.mrb[0].mxu0
      %v539 = vadd.f32 %v474, %v538
      %v540 = vpop.f32.mrb[0].mxu0
      %v541 = vpop.f32.mrb[0].mxu0
      %v542 = vadd.f32 %v474, %v541
      %v543 = vpop.f32.mrb[0].mxu0
      %544 = vdwg.mxu0
      %v545 = vmax.f32 %v539, 0.0
      %v546 = vmax.f32 %v542, 0.0
      %v547 = vpack.c.bf16 %v546, %v545
      %v548 = vadd.f32 %v545, %v546
      %v549 = vrot.slane %v548, 4
      %v550 = vadd.f32 %v548, %v549
      %v551 = vrot.slane %v550, 2
      %v552 = vadd.f32 %v550, %v551
      %v553 = vrot.slane %v552, 1
      %v554 = vadd.f32 %v552, %v553
      %555 = vxpose.xlu0.c.b16.start [1/8] %v547, 128
      %556 = vxpose.xlu0.c.b16.cont [2/8] 0, 128
      %557 = vxpose.xlu0.c.b16.cont [3/8] 0, 128
      %558 = vxpose.xlu0.c.b16.cont [4/8] 0, 128
      %559 = vxpose.xlu0.c.b16.cont [5/8] 0, 128
      %560 = vxpose.xlu0.c.b16.cont [6/8] 0, 128
      %561 = vxpose.xlu0.c.b16.cont [7/8] 0, 128
      %562 = vxpose.xlu0.c.b16.end [8/8] 0, 128
      %v563 = vpop.trf.xlu0
      %v564 = vpop.trf.xlu0
      %v565 = vpop.trf.xlu0
      %v566 = vpop.trf.xlu0
      %v567 = vpop.trf.xlu0
      %v568 = vpop.trf.xlu0
      %v569 = vpop.trf.xlu0
      %v570 = vpop.trf.xlu0
      %vm571 = vcmask 130048
      %v573 = vsel %vm571, %v563, 0
      %v576 = vsel %vm571, %v564, 0
      %v579 = vsel %vm571, %v565, 0
      %v582 = vsel %vm571, %v566, 0
      %v585 = vsel %vm571, %v567, 0
      %v588 = vsel %vm571, %v568, 0
      %v591 = vsel %vm571, %v569, 0
      %v594 = vsel %vm571, %v570, 0
      %596 = vmatprep.subr.bf16.mxu0 0
      %597 = vmatpush1.bf16.msra.mxu0 %v547
      %598 = vmatprep.subr.bf16.mxu0 0
      %599 = vmatpush1.bf16.msra.mxu0 0
      %600 = vmatprep.subr.bf16.mxu0 0
      %601 = vmatpush1.bf16.msra.mxu0 0
      %602 = vmatprep.subr.bf16.mxu0 0
      %603 = vmatpush1.bf16.msra.mxu0 0
      %604 = vmatprep.subr.bf16.mxu0 0
      %605 = vmatpush1.bf16.msra.mxu0 0
      %606 = vmatprep.subr.bf16.mxu0 0
      %607 = vmatpush1.bf16.msra.mxu0 0
      %608 = vmatprep.subr.bf16.mxu0 0
      %609 = vmatpush1.bf16.msra.mxu0 0
      %610 = vmatprep.subr.bf16.mxu0 0
      %611 = vmatpush1.bf16.msra.mxu0 0
      %612 = vmatprep.subr.bf16.mxu0 0
      %613 = vmatpush1.bf16.msra.mxu0 0
      %614 = vmatprep.subr.bf16.mxu0 0
      %615 = vmatpush1.bf16.msra.mxu0 0
      %616 = vmatprep.subr.bf16.mxu0 0
      %617 = vmatpush1.bf16.msra.mxu0 0
      %618 = vmatprep.subr.bf16.mxu0 0
      %619 = vmatpush1.bf16.msra.mxu0 0
      %620 = vmatprep.subr.bf16.mxu0 0
      %621 = vmatpush1.bf16.msra.mxu0 0
      %622 = vmatprep.subr.bf16.mxu0 0
      %623 = vmatpush1.bf16.msra.mxu0 0
      %624 = vmatprep.subr.bf16.mxu0 0
      %625 = vmatpush1.bf16.msra.mxu0 0
      %626 = vmatprep.subr.bf16.mxu0 0
      %627 = vmatpush1.bf16.msra.mxu0 0
      %628 = vmatprep.mubr.bf16.mxu0 0
      %629 = vmatmul.mubr.bf16.gmra.mrb[0].mxu0 %v573
      %v630 = vpop.f32.mrb[0].mxu0
      %v631 = vadd.f32 0.0, %v630
      %v632 = vpop.f32.mrb[0].mxu0
      %v633 = vpop.f32.mrb[0].mxu0
      %v634 = vadd.f32 0.0, %v633
      %v635 = vpop.f32.mrb[0].mxu0
      %636 = vmatprep.mubr.bf16.mxu0 0
      %637 = vmatmul.mubr.bf16.gmra.mrb[0].mxu0 %v576
      %v638 = vpop.f32.mrb[0].mxu0
      %v639 = vadd.f32 0.0, %v638
      %v640 = vpop.f32.mrb[0].mxu0
      %v641 = vpop.f32.mrb[0].mxu0
      %v642 = vadd.f32 0.0, %v641
      %v643 = vpop.f32.mrb[0].mxu0
      %644 = vmatprep.mubr.bf16.mxu0 0
      %645 = vmatmul.mubr.bf16.gmra.mrb[0].mxu0 %v579
      %v646 = vpop.f32.mrb[0].mxu0
      %v647 = vadd.f32 0.0, %v646
      %v648 = vpop.f32.mrb[0].mxu0
      %v649 = vpop.f32.mrb[0].mxu0
      %v650 = vadd.f32 0.0, %v649
      %v651 = vpop.f32.mrb[0].mxu0
      %652 = vmatprep.mubr.bf16.mxu0 0
      %653 = vmatmul.mubr.bf16.gmra.mrb[0].mxu0 %v582
      %v654 = vpop.f32.mrb[0].mxu0
      %v655 = vadd.f32 0.0, %v654
      %v656 = vpop.f32.mrb[0].mxu0
      %v657 = vpop.f32.mrb[0].mxu0
      %v658 = vadd.f32 0.0, %v657
      %v659 = vpop.f32.mrb[0].mxu0
      %660 = vmatprep.mubr.bf16.mxu0 0
      %661 = vmatmul.mubr.bf16.gmra.mrb[0].mxu0 %v585
      %v662 = vpop.f32.mrb[0].mxu0
      %v663 = vadd.f32 0.0, %v662
      %v664 = vpop.f32.mrb[0].mxu0
      %v665 = vpop.f32.mrb[0].mxu0
      %v666 = vadd.f32 0.0, %v665
      %v667 = vpop.f32.mrb[0].mxu0
      %668 = vmatprep.mubr.bf16.mxu0 0
      %669 = vmatmul.mubr.bf16.gmra.mrb[0].mxu0 %v588
      %v670 = vpop.f32.mrb[0].mxu0
      %v671 = vadd.f32 0.0, %v670
      %v672 = vpop.f32.mrb[0].mxu0
      %v673 = vpop.f32.mrb[0].mxu0
      %v674 = vadd.f32 0.0, %v673
      %v675 = vpop.f32.mrb[0].mxu0
      %676 = vmatprep.mubr.bf16.mxu0 0
      %677 = vmatmul.mubr.bf16.gmra.mrb[0].mxu0 %v591
      %v678 = vpop.f32.mrb[0].mxu0
      %v679 = vadd.f32 0.0, %v678
      %v680 = vpop.f32.mrb[0].mxu0
      %v681 = vpop.f32.mrb[0].mxu0
      %v682 = vadd.f32 0.0, %v681
      %v683 = vpop.f32.mrb[0].mxu0
      %684 = vmatprep.mubr.bf16.mxu0 0
      %685 = vmatmul.mubr.bf16.gmra.mrb[0].mxu0 %v594
      %v686 = vpop.f32.mrb[0].mxu0
      %v687 = vadd.f32 0.0, %v686
      %v688 = vpop.f32.mrb[0].mxu0
      %v689 = vpop.f32.mrb[0].mxu0
      %v690 = vadd.f32 0.0, %v689
      %v691 = vpop.f32.mrb[0].mxu0
      %692 = vdwg.mxu0
      %p693 = scmp.eq.s32.totalorder %s26, 0
      // Predicated region
      $region45: #{pointnet_cls_forward.7} parent=43 // pred_check
        %p694 = pneg %p693
      $region46: #{pointnet_cls_forward.7} parent=43 // pred_check_branch
        %696 = sbr.rel (%p694) target = $region48
      $region47: #{pointnet_cls_forward.7} parent=43 // pred_region
        %697 = vst [vmem:[%s376] sm:$0x1] %v554
        %698 = vst [vmem:[%s381] sm:$0xff] %v631
        %699 = vst [vmem:[%s381 + $0x8] sm:$0xff] %v634
        %700 = vst [vmem:[%s381 + $0x10] sm:$0xff] %v639
        %701 = vst [vmem:[%s381 + $0x18] sm:$0xff] %v642
        %702 = vst [vmem:[%s381 + $0x20] sm:$0xff] %v647
        %703 = vst [vmem:[%s381 + $0x28] sm:$0xff] %v650
        %704 = vst [vmem:[%s381 + $0x30] sm:$0xff] %v655
        %705 = vst [vmem:[%s381 + $0x38] sm:$0xff] %v658
        %706 = vst [vmem:[%s381 + $0x40] sm:$0xff] %v663
        %707 = vst [vmem:[%s381 + $0x48] sm:$0xff] %v666
        %708 = vst [vmem:[%s381 + $0x50] sm:$0xff] %v671
        %709 = vst [vmem:[%s381 + $0x58] sm:$0xff] %v674
        %710 = vst [vmem:[%s381 + $0x60] sm:$0xff] %v679
        %711 = vst [vmem:[%s381 + $0x68] sm:$0xff] %v682
        %712 = vst [vmem:[%s381 + $0x70] sm:$0xff] %v687
        %713 = vst [vmem:[%s381 + $0x78] sm:$0xff] %v690
        %714 = vst [vmem:[%s385] sm:$0xff] -inf
        %715 = vst [vmem:[%s389] sm:$0xff] inf
      $region48: #{pointnet_cls_forward.7} parent=43 // pred_fallthru
        _
      %p716 = scmp.ne.s32.totalorder %s26, 0
      // Predicated region
      $region49: #{pointnet_cls_forward.7} parent=43 // pred_check
        %p717 = pneg %p716
      $region50: #{pointnet_cls_forward.7} parent=43 // pred_check_branch
        %719 = sbr.rel (%p717) target = $region52
      $region51: #{pointnet_cls_forward.7} parent=43 // pred_region
        %v720 = vld [vmem:[%s376] sm:$0x1]
        %v721 = vadd.f32 %v720, %v554
        %722 = vst [vmem:[%s376] sm:$0x1] %v721
        %v723 = vld [vmem:[%s381] sm:$0xff]
        %v724 = vld [vmem:[%s381 + $0x8] sm:$0xff]
        %v725 = vld [vmem:[%s381 + $0x10] sm:$0xff]
        %v726 = vld [vmem:[%s381 + $0x18] sm:$0xff]
        %v727 = vld [vmem:[%s381 + $0x20] sm:$0xff]
        %v728 = vld [vmem:[%s381 + $0x28] sm:$0xff]
        %v729 = vld [vmem:[%s381 + $0x30] sm:$0xff]
        %v730 = vld [vmem:[%s381 + $0x38] sm:$0xff]
        %v731 = vld [vmem:[%s381 + $0x40] sm:$0xff]
        %v732 = vld [vmem:[%s381 + $0x48] sm:$0xff]
        %v733 = vld [vmem:[%s381 + $0x50] sm:$0xff]
        %v734 = vld [vmem:[%s381 + $0x58] sm:$0xff]
        %v735 = vld [vmem:[%s381 + $0x60] sm:$0xff]
        %v736 = vld [vmem:[%s381 + $0x68] sm:$0xff]
        %v737 = vld [vmem:[%s381 + $0x70] sm:$0xff]
        %v738 = vld [vmem:[%s381 + $0x78] sm:$0xff]
        %v739 = vadd.f32 %v723, %v631
        %v740 = vadd.f32 %v724, %v634
        %v741 = vadd.f32 %v725, %v639
        %v742 = vadd.f32 %v726, %v642
        %v743 = vadd.f32 %v727, %v647
        %v744 = vadd.f32 %v728, %v650
        %v745 = vadd.f32 %v729, %v655
        %v746 = vadd.f32 %v730, %v658
        %v747 = vadd.f32 %v731, %v663
        %v748 = vadd.f32 %v732, %v666
        %v749 = vadd.f32 %v733, %v671
        %v750 = vadd.f32 %v734, %v674
        %v751 = vadd.f32 %v735, %v679
        %v752 = vadd.f32 %v736, %v682
        %v753 = vadd.f32 %v737, %v687
        %v754 = vadd.f32 %v738, %v690
        %755 = vst [vmem:[%s381] sm:$0xff] %v739
        %756 = vst [vmem:[%s381 + $0x8] sm:$0xff] %v740
        %757 = vst [vmem:[%s381 + $0x10] sm:$0xff] %v741
        %758 = vst [vmem:[%s381 + $0x18] sm:$0xff] %v742
        %759 = vst [vmem:[%s381 + $0x20] sm:$0xff] %v743
        %760 = vst [vmem:[%s381 + $0x28] sm:$0xff] %v744
        %761 = vst [vmem:[%s381 + $0x30] sm:$0xff] %v745
        %762 = vst [vmem:[%s381 + $0x38] sm:$0xff] %v746
        %763 = vst [vmem:[%s381 + $0x40] sm:$0xff] %v747
        %764 = vst [vmem:[%s381 + $0x48] sm:$0xff] %v748
        %765 = vst [vmem:[%s381 + $0x50] sm:$0xff] %v749
        %766 = vst [vmem:[%s381 + $0x58] sm:$0xff] %v750
        %767 = vst [vmem:[%s381 + $0x60] sm:$0xff] %v751
        %768 = vst [vmem:[%s381 + $0x68] sm:$0xff] %v752
        %769 = vst [vmem:[%s381 + $0x70] sm:$0xff] %v753
        %770 = vst [vmem:[%s381 + $0x78] sm:$0xff] %v754
      $region52: #{pointnet_cls_forward.7} parent=43 // pred_fallthru
        _
      %v771 = vld [vmem:[%s5] sm:$0xff]
      %v772 = vld [vmem:[%s5 + $0x20] sm:$0xff]
      %v773 = vld [vmem:[%s5 + $0x40] sm:$0xff]
      %v774 = vld [vmem:[%s5 + $0x60] sm:$0xff]
      %v775 = vld [vmem:[%s5 + $0x80] sm:$0xff]
      %v776 = vld [vmem:[%s5 + $0xa0] sm:$0xff]
      %v777 = vld [vmem:[%s5 + $0xc0] sm:$0xff]
      %v778 = vld [vmem:[%s5 + $0xe0] sm:$0xff]
      %v779 = vld [vmem:[%s5 + $0x100] sm:$0xff]
      %v780 = vld [vmem:[%s5 + $0x120] sm:$0xff]
      %v781 = vld [vmem:[%s5 + $0x140] sm:$0xff]
      %v782 = vld [vmem:[%s5 + $0x160] sm:$0xff]
      %v783 = vld [vmem:[%s5 + $0x180] sm:$0xff]
      %v784 = vld [vmem:[%s5 + $0x1a0] sm:$0xff]
      %v785 = vld [vmem:[%s5 + $0x1c0] sm:$0xff]
      %v786 = vld [vmem:[%s5 + $0x1e0] sm:$0xff]
      %v803 = vunpack.c.l.b16 %v771
      %v804 = vunpack.c.h.b16 %v771
      %v805 = vunpack.c.l.b16 %v772
      %v806 = vunpack.c.h.b16 %v772
      %v807 = vunpack.c.l.b16 %v773
      %v808 = vunpack.c.h.b16 %v773
      %v809 = vunpack.c.l.b16 %v774
      %v810 = vunpack.c.h.b16 %v774
      %v811 = vunpack.c.l.b16 %v775
      %v812 = vunpack.c.h.b16 %v775
      %v813 = vunpack.c.l.b16 %v776
      %v814 = vunpack.c.h.b16 %v776
      %v815 = vunpack.c.l.b16 %v777
      %v816 = vunpack.c.h.b16 %v777
      %v817 = vunpack.c.l.b16 %v778
      %v818 = vunpack.c.h.b16 %v778
      %v819 = vunpack.c.l.b16 %v779
      %v820 = vunpack.c.h.b16 %v779
      %v821 = vunpack.c.l.b16 %v780
      %v822 = vunpack.c.h.b16 %v780
      %v823 = vunpack.c.l.b16 %v781
      %v824 = vunpack.c.h.b16 %v781
      %v825 = vunpack.c.l.b16 %v782
      %v826 = vunpack.c.h.b16 %v782
      %v827 = vunpack.c.l.b16 %v783
      %v828 = vunpack.c.h.b16 %v783
      %v829 = vunpack.c.l.b16 %v784
      %v830 = vunpack.c.h.b16 %v784
      %v831 = vunpack.c.l.b16 %v785
      %v832 = vunpack.c.h.b16 %v785
      %v833 = vunpack.c.l.b16 %v786
      %v834 = vunpack.c.h.b16 %v786
      %v835 = vpack.c.b16 %v805, %v803
      %v836 = vpack.c.b16 %v806, %v804
      %v837 = vpack.c.b16 %v809, %v807
      %v838 = vpack.c.b16 %v810, %v808
      %v839 = vpack.c.b16 %v813, %v811
      %v840 = vpack.c.b16 %v814, %v812
      %v841 = vpack.c.b16 %v817, %v815
      %v842 = vpack.c.b16 %v818, %v816
      %v843 = vpack.c.b16 %v821, %v819
      %v844 = vpack.c.b16 %v822, %v820
      %v845 = vpack.c.b16 %v825, %v823
      %v846 = vpack.c.b16 %v826, %v824
      %v847 = vpack.c.b16 %v829, %v827
      %v848 = vpack.c.b16 %v830, %v828
      %v849 = vpack.c.b16 %v833, %v831
      %v850 = vpack.c.b16 %v834, %v832
      %867 = vmatprep.subr.bf16.mxu0 %v836
      %868 = vmatpush1.bf16.msra.mxu0 %v835
      %869 = vmatprep.subr.bf16.mxu0 %v838
      %870 = vmatpush1.bf16.msra.mxu0 %v837
      %871 = vmatprep.subr.bf16.mxu0 %v840
      %872 = vmatpush1.bf16.msra.mxu0 %v839
      %873 = vmatprep.subr.bf16.mxu0 %v842
      %874 = vmatpush1.bf16.msra.mxu0 %v841
      %875 = vmatprep.subr.bf16.mxu0 %v844
      %876 = vmatpush1.bf16.msra.mxu0 %v843
      %877 = vmatprep.subr.bf16.mxu0 %v846
      %878 = vmatpush1.bf16.msra.mxu0 %v845
      %879 = vmatprep.subr.bf16.mxu0 %v848
      %880 = vmatpush1.bf16.msra.mxu0 %v847
      %881 = vmatprep.subr.bf16.mxu0 %v850
      %882 = vmatpush1.bf16.msra.mxu0 %v849
      %883 = vmatprep.subr.bf16.mxu0 0
      %884 = vmatpush1.bf16.msra.mxu0 0
      %885 = vmatprep.subr.bf16.mxu0 0
      %886 = vmatpush1.bf16.msra.mxu0 0
      %887 = vmatprep.subr.bf16.mxu0 0
      %888 = vmatpush1.bf16.msra.mxu0 0
      %889 = vmatprep.subr.bf16.mxu0 0
      %890 = vmatpush1.bf16.msra.mxu0 0
      %891 = vmatprep.subr.bf16.mxu0 0
      %892 = vmatpush1.bf16.msra.mxu0 0
      %893 = vmatprep.subr.bf16.mxu0 0
      %894 = vmatpush1.bf16.msra.mxu0 0
      %895 = vmatprep.subr.bf16.mxu0 0
      %896 = vmatpush1.bf16.msra.mxu0 0
      %897 = vmatprep.subr.bf16.mxu0 0
      %898 = vmatpush1.bf16.msra.mxu0 0
      %899 = vmatprep.mubr.bf16.mxu0 0
      %900 = vmatmul.mubr.bf16.gmra.mrb[0].mxu0 %v547
      %v901 = vpop.f32.mrb[0].mxu0
      %v902 = vadd.f32 0.0, %v901
      %v903 = vpop.f32.mrb[0].mxu0
      %v904 = vadd.f32 0.0, %v903
      %v905 = vpop.f32.mrb[0].mxu0
      %v906 = vadd.f32 0.0, %v905
      %v907 = vpop.f32.mrb[0].mxu0
      %v908 = vadd.f32 0.0, %v907
      %909 = vdwg.mxu0
      %v910 = vmax.f32 %v902, %v906
      %v911 = vrot.slane %v910, 4
      %v912 = vmax.f32 %v910, %v911
      %v913 = vrot.slane %v912, 2
      %v914 = vmax.f32 %v912, %v913
      %v915 = vrot.slane %v914, 1
      %v916 = vmax.f32 %v914, %v915
      %v917 = vmax.f32 %v904, %v908
      %v918 = vrot.slane %v917, 4
      %v919 = vmax.f32 %v917, %v918
      %v920 = vrot.slane %v919, 2
      %v921 = vmax.f32 %v919, %v920
      %v922 = vrot.slane %v921, 1
      %v923 = vmax.f32 %v921, %v922
      %v924 = vmin.f32 %v902, %v906
      %v925 = vrot.slane %v924, 4
      %v926 = vmin.f32 %v924, %v925
      %v927 = vrot.slane %v926, 2
      %v928 = vmin.f32 %v926, %v927
      %v929 = vrot.slane %v928, 1
      %v930 = vmin.f32 %v928, %v929
      %v931 = vmin.f32 %v904, %v908
      %v932 = vrot.slane %v931, 4
      %v933 = vmin.f32 %v931, %v932
      %v934 = vrot.slane %v933, 2
      %v935 = vmin.f32 %v933, %v934
      %v936 = vrot.slane %v935, 1
      %v937 = vmin.f32 %v935, %v936
      %v938 = vld [vmem:[%s385] sm:$0x3]
      %v941 = vcombine.low %v916, %v923
      %v943 = vunpack.c.l.s4 1966171168
      %v944 = vunpack.c.0.s8 %v943
      %v945 = vlaneseq
      %v946 = vshrl.u32 %v945, 7
      %v947 = vsub.s32 %v944, %v946
      %v948 = vrot.slane %v941, %v947
      %v950 = vunpack.c.l.s4 1966171168
      %v951 = vunpack.c.0.s8 %v950
      %v952 = vlaneseq
      %v953 = vshrl.u32 %v952, 7
      %v954 = vsub.s32 %v951, %v953
      %v955 = vrot.slane %v948, %v954
      %v957 = vmax.f32 %v938, %v955
      %v958 = vlaneseq
      %vm959 = vcmp.ge.s32.totalorder %v958, 0
      %vm960 = vcmp.lt.s32.totalorder %v958, 256
      %vm961 = vmand %vm959, %vm960
      %962 = vst.msk [vmem:[%s385] sm:$0x3] %vm961, %v957
      %v963 = vld [vmem:[%s389] sm:$0x3]
      %v966 = vcombine.low %v930, %v937
      %v968 = vunpack.c.l.s4 1966171168
      %v969 = vunpack.c.0.s8 %v968
      %v970 = vlaneseq
      %v971 = vshrl.u32 %v970, 7
      %v972 = vsub.s32 %v969, %v971
      %v973 = vrot.slane %v966, %v972
      %v975 = vunpack.c.l.s4 1966171168
      %v976 = vunpack.c.0.s8 %v975
      %v977 = vlaneseq
      %v978 = vshrl.u32 %v977, 7
      %v979 = vsub.s32 %v976, %v978
      %v980 = vrot.slane %v973, %v979
      %v982 = vmin.f32 %v963, %v980
      %983 = vst.msk [vmem:[%s389] sm:$0x3] %vm961, %v982
      %v984 = vld [vmem:[%s5 + $0x8] sm:$0xff]
      %v985 = vld [vmem:[%s5 + $0x28] sm:$0xff]
      %v986 = vld [vmem:[%s5 + $0x48] sm:$0xff]
      %v987 = vld [vmem:[%s5 + $0x68] sm:$0xff]
      %v988 = vld [vmem:[%s5 + $0x88] sm:$0xff]
      %v989 = vld [vmem:[%s5 + $0xa8] sm:$0xff]
      %v990 = vld [vmem:[%s5 + $0xc8] sm:$0xff]
      %v991 = vld [vmem:[%s5 + $0xe8] sm:$0xff]
      %v992 = vld [vmem:[%s5 + $0x108] sm:$0xff]
      %v993 = vld [vmem:[%s5 + $0x128] sm:$0xff]
      %v994 = vld [vmem:[%s5 + $0x148] sm:$0xff]
      %v995 = vld [vmem:[%s5 + $0x168] sm:$0xff]
      %v996 = vld [vmem:[%s5 + $0x188] sm:$0xff]
      %v997 = vld [vmem:[%s5 + $0x1a8] sm:$0xff]
      %v998 = vld [vmem:[%s5 + $0x1c8] sm:$0xff]
      %v999 = vld [vmem:[%s5 + $0x1e8] sm:$0xff]
      %v1016 = vunpack.c.l.b16 %v984
      %v1017 = vunpack.c.h.b16 %v984
      %v1018 = vunpack.c.l.b16 %v985
      %v1019 = vunpack.c.h.b16 %v985
      %v1020 = vunpack.c.l.b16 %v986
      %v1021 = vunpack.c.h.b16 %v986
      %v1022 = vunpack.c.l.b16 %v987
      %v1023 = vunpack.c.h.b16 %v987
      %v1024 = vunpack.c.l.b16 %v988
      %v1025 = vunpack.c.h.b16 %v988
      %v1026 = vunpack.c.l.b16 %v989
      %v1027 = vunpack.c.h.b16 %v989
      %v1028 = vunpack.c.l.b16 %v990
      %v1029 = vunpack.c.h.b16 %v990
      %v1030 = vunpack.c.l.b16 %v991
      %v1031 = vunpack.c.h.b16 %v991
      %v1032 = vunpack.c.l.b16 %v992
      %v1033 = vunpack.c.h.b16 %v992
      %v1034 = vunpack.c.l.b16 %v993
      %v1035 = vunpack.c.h.b16 %v993
      %v1036 = vunpack.c.l.b16 %v994
      %v1037 = vunpack.c.h.b16 %v994
      %v1038 = vunpack.c.l.b16 %v995
      %v1039 = vunpack.c.h.b16 %v995
      %v1040 = vunpack.c.l.b16 %v996
      %v1041 = vunpack.c.h.b16 %v996
      %v1042 = vunpack.c.l.b16 %v997
      %v1043 = vunpack.c.h.b16 %v997
      %v1044 = vunpack.c.l.b16 %v998
      %v1045 = vunpack.c.h.b16 %v998
      %v1046 = vunpack.c.l.b16 %v999
      %v1047 = vunpack.c.h.b16 %v999
      %v1048 = vpack.c.b16 %v1018, %v1016
      %v1049 = vpack.c.b16 %v1019, %v1017
      %v1050 = vpack.c.b16 %v1022, %v1020
      %v1051 = vpack.c.b16 %v1023, %v1021
      %v1052 = vpack.c.b16 %v1026, %v1024
      %v1053 = vpack.c.b16 %v1027, %v1025
      %v1054 = vpack.c.b16 %v1030, %v1028
      %v1055 = vpack.c.b16 %v1031, %v1029
      %v1056 = vpack.c.b16 %v1034, %v1032
      %v1057 = vpack.c.b16 %v1035, %v1033
      %v1058 = vpack.c.b16 %v1038, %v1036
      %v1059 = vpack.c.b16 %v1039, %v1037
      %v1060 = vpack.c.b16 %v1042, %v1040
      %v1061 = vpack.c.b16 %v1043, %v1041
      %v1062 = vpack.c.b16 %v1046, %v1044
      %v1063 = vpack.c.b16 %v1047, %v1045
      %1080 = vmatprep.subr.bf16.mxu0 %v1049
      %1081 = vmatpush1.bf16.msra.mxu0 %v1048
      %1082 = vmatprep.subr.bf16.mxu0 %v1051
      %1083 = vmatpush1.bf16.msra.mxu0 %v1050
      %1084 = vmatprep.subr.bf16.mxu0 %v1053
      %1085 = vmatpush1.bf16.msra.mxu0 %v1052
      %1086 = vmatprep.subr.bf16.mxu0 %v1055
      %1087 = vmatpush1.bf16.msra.mxu0 %v1054
      %1088 = vmatprep.subr.bf16.mxu0 %v1057
      %1089 = vmatpush1.bf16.msra.mxu0 %v1056
      %1090 = vmatprep.subr.bf16.mxu0 %v1059
      %1091 = vmatpush1.bf16.msra.mxu0 %v1058
      %1092 = vmatprep.subr.bf16.mxu0 %v1061
      %1093 = vmatpush1.bf16.msra.mxu0 %v1060
      %1094 = vmatprep.subr.bf16.mxu0 %v1063
      %1095 = vmatpush1.bf16.msra.mxu0 %v1062
      %1096 = vmatprep.subr.bf16.mxu0 0
      %1097 = vmatpush1.bf16.msra.mxu0 0
      %1098 = vmatprep.subr.bf16.mxu0 0
      %1099 = vmatpush1.bf16.msra.mxu0 0
      %1100 = vmatprep.subr.bf16.mxu0 0
      %1101 = vmatpush1.bf16.msra.mxu0 0
      %1102 = vmatprep.subr.bf16.mxu0 0
      %1103 = vmatpush1.bf16.msra.mxu0 0
      %1104 = vmatprep.subr.bf16.mxu0 0
      %1105 = vmatpush1.bf16.msra.mxu0 0
      %1106 = vmatprep.subr.bf16.mxu0 0
      %1107 = vmatpush1.bf16.msra.mxu0 0
      %1108 = vmatprep.subr.bf16.mxu0 0
      %1109 = vmatpush1.bf16.msra.mxu0 0
      %1110 = vmatprep.subr.bf16.mxu0 0
      %1111 = vmatpush1.bf16.msra.mxu0 0
      %1112 = vmatprep.mubr.bf16.mxu0 0
      %1113 = vmatmul.mubr.bf16.gmra.mrb[0].mxu0 %v547
      %v1114 = vpop.f32.mrb[0].mxu0
      %v1115 = vadd.f32 0.0, %v1114
      %v1116 = vpop.f32.mrb[0].mxu0
      %v1117 = vadd.f32 0.0, %v1116
      %v1118 = vpop.f32.mrb[0].mxu0
      %v1119 = vadd.f32 0.0, %v1118
      %v1120 = vpop.f32.mrb[0].mxu0
      %v1121 = vadd.f32 0.0, %v1120
      %1122 = vdwg.mxu0
      %v1123 = vmax.f32 %v1115, %v1119
      %v1124 = vrot.slane %v1123, 4
      %v1125 = vmax.f32 %v1123, %v1124
      %v1126 = vrot.slane %v1125, 2
      %v1127 = vmax.f32 %v1125, %v1126
      %v1128 = vrot.slane %v1127, 1
      %v1129 = vmax.f32 %v1127, %v1128
      %v1130 = vmax.f32 %v1117, %v1121
      %v1131 = vrot.slane %v1130, 4
      %v1132 = vmax.f32 %v1130, %v1131
      %v1133 = vrot.slane %v1132, 2
      %v1134 = vmax.f32 %v1132, %v1133
      %v1135 = vrot.slane %v1134, 1
      %v1136 = vmax.f32 %v1134, %v1135
      %v1137 = vmin.f32 %v1115, %v1119
      %v1138 = vrot.slane %v1137, 4
      %v1139 = vmin.f32 %v1137, %v1138
      %v1140 = vrot.slane %v1139, 2
      %v1141 = vmin.f32 %v1139, %v1140
      %v1142 = vrot.slane %v1141, 1
      %v1143 = vmin.f32 %v1141, %v1142
      %v1144 = vmin.f32 %v1117, %v1121
      %v1145 = vrot.slane %v1144, 4
      %v1146 = vmin.f32 %v1144, %v1145
      %v1147 = vrot.slane %v1146, 2
      %v1148 = vmin.f32 %v1146, %v1147
      %v1149 = vrot.slane %v1148, 1
      %v1150 = vmin.f32 %v1148, %v1149
      %v1151 = vld [vmem:[%s385 + $0x2] sm:$0x3]
      %v1154 = vcombine.low %v1129, %v1136
      %v1156 = vunpack.c.l.s4 1966171168
      %v1157 = vunpack.c.0.s8 %v1156
      %v1158 = vlaneseq
      %v1159 = vshrl.u32 %v1158, 7
      %v1160 = vsub.s32 %v1157, %v1159
      %v1161 = vrot.slane %v1154, %v1160
      %v1163 = vunpack.c.l.s4 1966171168
      %v1164 = vunpack.c.0.s8 %v1163
      %v1165 = vlaneseq
      %v1166 = vshrl.u32 %v1165, 7
      %v1167 = vsub.s32 %v1164, %v1166
      %v1168 = vrot.slane %v1161, %v1167
      %v1170 = vmax.f32 %v1151, %v1168
      %1171 = vst.msk [vmem:[%s385 + $0x2] sm:$0x3] %vm961, %v1170
      %v1172 = vld [vmem:[%s389 + $0x2] sm:$0x3]
      %v1175 = vcombine.low %v1143, %v1150
      %v1177 = vunpack.c.l.s4 1966171168
      %v1178 = vunpack.c.0.s8 %v1177
      %v1179 = vlaneseq
      %v1180 = vshrl.u32 %v1179, 7
      %v1181 = vsub.s32 %v1178, %v1180
      %v1182 = vrot.slane %v1175, %v1181
      %v1184 = vunpack.c.l.s4 1966171168
      %v1185 = vunpack.c.0.s8 %v1184
      %v1186 = vlaneseq
      %v1187 = vshrl.u32 %v1186, 7
      %v1188 = vsub.s32 %v1185, %v1187
      %v1189 = vrot.slane %v1182, %v1188
      %v1191 = vmin.f32 %v1172, %v1189
      %1192 = vst.msk [vmem:[%s389 + $0x2] sm:$0x3] %vm961, %v1191
      %v1193 = vld [vmem:[%s5 + $0x10] sm:$0xff]
      %v1194 = vld [vmem:[%s5 + $0x30] sm:$0xff]
      %v1195 = vld [vmem:[%s5 + $0x50] sm:$0xff]
      %v1196 = vld [vmem:[%s5 + $0x70] sm:$0xff]
      %v1197 = vld [vmem:[%s5 + $0x90] sm:$0xff]
      %v1198 = vld [vmem:[%s5 + $0xb0] sm:$0xff]
      %v1199 = vld [vmem:[%s5 + $0xd0] sm:$0xff]
      %v1200 = vld [vmem:[%s5 + $0xf0] sm:$0xff]
      %v1201 = vld [vmem:[%s5 + $0x110] sm:$0xff]
      %v1202 = vld [vmem:[%s5 + $0x130] sm:$0xff]
      %v1203 = vld [vmem:[%s5 + $0x150] sm:$0xff]
      %v1204 = vld [vmem:[%s5 + $0x170] sm:$0xff]
      %v1205 = vld [vmem:[%s5 + $0x190] sm:$0xff]
      %v1206 = vld [vmem:[%s5 + $0x1b0] sm:$0xff]
      %v1207 = vld [vmem:[%s5 + $0x1d0] sm:$0xff]
      %v1208 = vld [vmem:[%s5 + $0x1f0] sm:$0xff]
      %v1225 = vunpack.c.l.b16 %v1193
      %v1226 = vunpack.c.h.b16 %v1193
      %v1227 = vunpack.c.l.b16 %v1194
      %v1228 = vunpack.c.h.b16 %v1194
      %v1229 = vunpack.c.l.b16 %v1195
      %v1230 = vunpack.c.h.b16 %v1195
      %v1231 = vunpack.c.l.b16 %v1196
      %v1232 = vunpack.c.h.b16 %v1196
      %v1233 = vunpack.c.l.b16 %v1197
      %v1234 = vunpack.c.h.b16 %v1197
      %v1235 = vunpack.c.l.b16 %v1198
      %v1236 = vunpack.c.h.b16 %v1198
      %v1237 = vunpack.c.l.b16 %v1199
      %v1238 = vunpack.c.h.b16 %v1199
      %v1239 = vunpack.c.l.b16 %v1200
      %v1240 = vunpack.c.h.b16 %v1200
      %v1241 = vunpack.c.l.b16 %v1201
      %v1242 = vunpack.c.h.b16 %v1201
      %v1243 = vunpack.c.l.b16 %v1202
      %v1244 = vunpack.c.h.b16 %v1202
      %v1245 = vunpack.c.l.b16 %v1203
      %v1246 = vunpack.c.h.b16 %v1203
      %v1247 = vunpack.c.l.b16 %v1204
      %v1248 = vunpack.c.h.b16 %v1204
      %v1249 = vunpack.c.l.b16 %v1205
      %v1250 = vunpack.c.h.b16 %v1205
      %v1251 = vunpack.c.l.b16 %v1206
      %v1252 = vunpack.c.h.b16 %v1206
      %v1253 = vunpack.c.l.b16 %v1207
      %v1254 = vunpack.c.h.b16 %v1207
      %v1255 = vunpack.c.l.b16 %v1208
      %v1256 = vunpack.c.h.b16 %v1208
      %v1257 = vpack.c.b16 %v1227, %v1225
      %v1258 = vpack.c.b16 %v1228, %v1226
      %v1259 = vpack.c.b16 %v1231, %v1229
      %v1260 = vpack.c.b16 %v1232, %v1230
      %v1261 = vpack.c.b16 %v1235, %v1233
      %v1262 = vpack.c.b16 %v1236, %v1234
      %v1263 = vpack.c.b16 %v1239, %v1237
      %v1264 = vpack.c.b16 %v1240, %v1238
      %v1265 = vpack.c.b16 %v1243, %v1241
      %v1266 = vpack.c.b16 %v1244, %v1242
      %v1267 = vpack.c.b16 %v1247, %v1245
      %v1268 = vpack.c.b16 %v1248, %v1246
      %v1269 = vpack.c.b16 %v1251, %v1249
      %v1270 = vpack.c.b16 %v1252, %v1250
      %v1271 = vpack.c.b16 %v1255, %v1253
      %v1272 = vpack.c.b16 %v1256, %v1254
      %1289 = vmatprep.subr.bf16.mxu0 %v1258
      %1290 = vmatpush1.bf16.msra.mxu0 %v1257
      %1291 = vmatprep.subr.bf16.mxu0 %v1260
      %1292 = vmatpush1.bf16.msra.mxu0 %v1259
      %1293 = vmatprep.subr.bf16.mxu0 %v1262
      %1294 = vmatpush1.bf16.msra.mxu0 %v1261
      %1295 = vmatprep.subr.bf16.mxu0 %v1264
      %1296 = vmatpush1.bf16.msra.mxu0 %v1263
      %1297 = vmatprep.subr.bf16.mxu0 %v1266
      %1298 = vmatpush1.bf16.msra.mxu0 %v1265
      %1299 = vmatprep.subr.bf16.mxu0 %v1268
      %1300 = vmatpush1.bf16.msra.mxu0 %v1267
      %1301 = vmatprep.subr.bf16.mxu0 %v1270
      %1302 = vmatpush1.bf16.msra.mxu0 %v1269
      %1303 = vmatprep.subr.bf16.mxu0 %v1272
      %1304 = vmatpush1.bf16.msra.mxu0 %v1271
      %1305 = vmatprep.subr.bf16.mxu0 0
      %1306 = vmatpush1.bf16.msra.mxu0 0
      %1307 = vmatprep.subr.bf16.mxu0 0
      %1308 = vmatpush1.bf16.msra.mxu0 0
      %1309 = vmatprep.subr.bf16.mxu0 0
      %1310 = vmatpush1.bf16.msra.mxu0 0
      %1311 = vmatprep.subr.bf16.mxu0 0
      %1312 = vmatpush1.bf16.msra.mxu0 0
      %1313 = vmatprep.subr.bf16.mxu0 0
      %1314 = vmatpush1.bf16.msra.mxu0 0
      %1315 = vmatprep.subr.bf16.mxu0 0
      %1316 = vmatpush1.bf16.msra.mxu0 0
      %1317 = vmatprep.subr.bf16.mxu0 0
      %1318 = vmatpush1.bf16.msra.mxu0 0
      %1319 = vmatprep.subr.bf16.mxu0 0
      %1320 = vmatpush1.bf16.msra.mxu0 0
      %1321 = vmatprep.mubr.bf16.mxu0 0
      %1322 = vmatmul.mubr.bf16.gmra.mrb[0].mxu0 %v547
      %v1323 = vpop.f32.mrb[0].mxu0
      %v1324 = vadd.f32 0.0, %v1323
      %v1325 = vpop.f32.mrb[0].mxu0
      %v1326 = vadd.f32 0.0, %v1325
      %v1327 = vpop.f32.mrb[0].mxu0
      %v1328 = vadd.f32 0.0, %v1327
      %v1329 = vpop.f32.mrb[0].mxu0
      %v1330 = vadd.f32 0.0, %v1329
      %1331 = vdwg.mxu0
      %v1332 = vmax.f32 %v1324, %v1328
      %v1333 = vrot.slane %v1332, 4
      %v1334 = vmax.f32 %v1332, %v1333
      %v1335 = vrot.slane %v1334, 2
      %v1336 = vmax.f32 %v1334, %v1335
      %v1337 = vrot.slane %v1336, 1
      %v1338 = vmax.f32 %v1336, %v1337
      %v1339 = vmax.f32 %v1326, %v1330
      %v1340 = vrot.slane %v1339, 4
      %v1341 = vmax.f32 %v1339, %v1340
      %v1342 = vrot.slane %v1341, 2
      %v1343 = vmax.f32 %v1341, %v1342
      %v1344 = vrot.slane %v1343, 1
      %v1345 = vmax.f32 %v1343, %v1344
      %v1346 = vmin.f32 %v1324, %v1328
      %v1347 = vrot.slane %v1346, 4
      %v1348 = vmin.f32 %v1346, %v1347
      %v1349 = vrot.slane %v1348, 2
      %v1350 = vmin.f32 %v1348, %v1349
      %v1351 = vrot.slane %v1350, 1
      %v1352 = vmin.f32 %v1350, %v1351
      %v1353 = vmin.f32 %v1326, %v1330
      %v1354 = vrot.slane %v1353, 4
      %v1355 = vmin.f32 %v1353, %v1354
      %v1356 = vrot.slane %v1355, 2
      %v1357 = vmin.f32 %v1355, %v1356
      %v1358 = vrot.slane %v1357, 1
      %v1359 = vmin.f32 %v1357, %v1358
      %v1360 = vld [vmem:[%s385 + $0x4] sm:$0x3]
      %v1363 = vcombine.low %v1338, %v1345
      %v1365 = vunpack.c.l.s4 1966171168
      %v1366 = vunpack.c.0.s8 %v1365
      %v1367 = vlaneseq
      %v1368 = vshrl.u32 %v1367, 7
      %v1369 = vsub.s32 %v1366, %v1368
      %v1370 = vrot.slane %v1363, %v1369
      %v1372 = vunpack.c.l.s4 1966171168
      %v1373 = vunpack.c.0.s8 %v1372
      %v1374 = vlaneseq
      %v1375 = vshrl.u32 %v1374, 7
      %v1376 = vsub.s32 %v1373, %v1375
      %v1377 = vrot.slane %v1370, %v1376
      %v1379 = vmax.f32 %v1360, %v1377
      %1380 = vst.msk [vmem:[%s385 + $0x4] sm:$0x3] %vm961, %v1379
      %v1381 = vld [vmem:[%s389 + $0x4] sm:$0x3]
      %v1384 = vcombine.low %v1352, %v1359
      %v1386 = vunpack.c.l.s4 1966171168
      %v1387 = vunpack.c.0.s8 %v1386
      %v1388 = vlaneseq
      %v1389 = vshrl.u32 %v1388, 7
      %v1390 = vsub.s32 %v1387, %v1389
      %v1391 = vrot.slane %v1384, %v1390
      %v1393 = vunpack.c.l.s4 1966171168
      %v1394 = vunpack.c.0.s8 %v1393
      %v1395 = vlaneseq
      %v1396 = vshrl.u32 %v1395, 7
      %v1397 = vsub.s32 %v1394, %v1396
      %v1398 = vrot.slane %v1391, %v1397
      %v1400 = vmin.f32 %v1381, %v1398
      %1401 = vst.msk [vmem:[%s389 + $0x4] sm:$0x3] %vm961, %v1400
      %v1402 = vld [vmem:[%s5 + $0x18] sm:$0xff]
      %v1403 = vld [vmem:[%s5 + $0x38] sm:$0xff]
      %v1404 = vld [vmem:[%s5 + $0x58] sm:$0xff]
      %v1405 = vld [vmem:[%s5 + $0x78] sm:$0xff]
      %v1406 = vld [vmem:[%s5 + $0x98] sm:$0xff]
      %v1407 = vld [vmem:[%s5 + $0xb8] sm:$0xff]
      %v1408 = vld [vmem:[%s5 + $0xd8] sm:$0xff]
      %v1409 = vld [vmem:[%s5 + $0xf8] sm:$0xff]
      %v1410 = vld [vmem:[%s5 + $0x118] sm:$0xff]
      %v1411 = vld [vmem:[%s5 + $0x138] sm:$0xff]
      %v1412 = vld [vmem:[%s5 + $0x158] sm:$0xff]
      %v1413 = vld [vmem:[%s5 + $0x178] sm:$0xff]
      %v1414 = vld [vmem:[%s5 + $0x198] sm:$0xff]
      %v1415 = vld [vmem:[%s5 + $0x1b8] sm:$0xff]
      %v1416 = vld [vmem:[%s5 + $0x1d8] sm:$0xff]
      %v1417 = vld [vmem:[%s5 + $0x1f8] sm:$0xff]
      %v1434 = vunpack.c.l.b16 %v1402
      %v1435 = vunpack.c.h.b16 %v1402
      %v1436 = vunpack.c.l.b16 %v1403
      %v1437 = vunpack.c.h.b16 %v1403
      %v1438 = vunpack.c.l.b16 %v1404
      %v1439 = vunpack.c.h.b16 %v1404
      %v1440 = vunpack.c.l.b16 %v1405
      %v1441 = vunpack.c.h.b16 %v1405
      %v1442 = vunpack.c.l.b16 %v1406
      %v1443 = vunpack.c.h.b16 %v1406
      %v1444 = vunpack.c.l.b16 %v1407
      %v1445 = vunpack.c.h.b16 %v1407
      %v1446 = vunpack.c.l.b16 %v1408
      %v1447 = vunpack.c.h.b16 %v1408
      %v1448 = vunpack.c.l.b16 %v1409
      %v1449 = vunpack.c.h.b16 %v1409
      %v1450 = vunpack.c.l.b16 %v1410
      %v1451 = vunpack.c.h.b16 %v1410
      %v1452 = vunpack.c.l.b16 %v1411
      %v1453 = vunpack.c.h.b16 %v1411
      %v1454 = vunpack.c.l.b16 %v1412
      %v1455 = vunpack.c.h.b16 %v1412
      %v1456 = vunpack.c.l.b16 %v1413
      %v1457 = vunpack.c.h.b16 %v1413
      %v1458 = vunpack.c.l.b16 %v1414
      %v1459 = vunpack.c.h.b16 %v1414
      %v1460 = vunpack.c.l.b16 %v1415
      %v1461 = vunpack.c.h.b16 %v1415
      %v1462 = vunpack.c.l.b16 %v1416
      %v1463 = vunpack.c.h.b16 %v1416
      %v1464 = vunpack.c.l.b16 %v1417
      %v1465 = vunpack.c.h.b16 %v1417
      %v1466 = vpack.c.b16 %v1436, %v1434
      %v1467 = vpack.c.b16 %v1437, %v1435
      %v1468 = vpack.c.b16 %v1440, %v1438
      %v1469 = vpack.c.b16 %v1441, %v1439
      %v1470 = vpack.c.b16 %v1444, %v1442
      %v1471 = vpack.c.b16 %v1445, %v1443
      %v1472 = vpack.c.b16 %v1448, %v1446
      %v1473 = vpack.c.b16 %v1449, %v1447
      %v1474 = vpack.c.b16 %v1452, %v1450
      %v1475 = vpack.c.b16 %v1453, %v1451
      %v1476 = vpack.c.b16 %v1456, %v1454
      %v1477 = vpack.c.b16 %v1457, %v1455
      %v1478 = vpack.c.b16 %v1460, %v1458
      %v1479 = vpack.c.b16 %v1461, %v1459
      %v1480 = vpack.c.b16 %v1464, %v1462
      %v1481 = vpack.c.b16 %v1465, %v1463
      %1498 = vmatprep.subr.bf16.mxu0 %v1467
      %1499 = vmatpush1.bf16.msra.mxu0 %v1466
      %1500 = vmatprep.subr.bf16.mxu0 %v1469
      %1501 = vmatpush1.bf16.msra.mxu0 %v1468
      %1502 = vmatprep.subr.bf16.mxu0 %v1471
      %1503 = vmatpush1.bf16.msra.mxu0 %v1470
      %1504 = vmatprep.subr.bf16.mxu0 %v1473
      %1505 = vmatpush1.bf16.msra.mxu0 %v1472
      %1506 = vmatprep.subr.bf16.mxu0 %v1475
      %1507 = vmatpush1.bf16.msra.mxu0 %v1474
      %1508 = vmatprep.subr.bf16.mxu0 %v1477
      %1509 = vmatpush1.bf16.msra.mxu0 %v1476
      %1510 = vmatprep.subr.bf16.mxu0 %v1479
      %1511 = vmatpush1.bf16.msra.mxu0 %v1478
      %1512 = vmatprep.subr.bf16.mxu0 %v1481
      %1513 = vmatpush1.bf16.msra.mxu0 %v1480
      %1514 = vmatprep.subr.bf16.mxu0 0
      %1515 = vmatpush1.bf16.msra.mxu0 0
      %1516 = vmatprep.subr.bf16.mxu0 0
      %1517 = vmatpush1.bf16.msra.mxu0 0
      %1518 = vmatprep.subr.bf16.mxu0 0
      %1519 = vmatpush1.bf16.msra.mxu0 0
      %1520 = vmatprep.subr.bf16.mxu0 0
      %1521 = vmatpush1.bf16.msra.mxu0 0
      %1522 = vmatprep.subr.bf16.mxu0 0
      %1523 = vmatpush1.bf16.msra.mxu0 0
      %1524 = vmatprep.subr.bf16.mxu0 0
      %1525 = vmatpush1.bf16.msra.mxu0 0
      %1526 = vmatprep.subr.bf16.mxu0 0
      %1527 = vmatpush1.bf16.msra.mxu0 0
      %1528 = vmatprep.subr.bf16.mxu0 0
      %1529 = vmatpush1.bf16.msra.mxu0 0
      %1530 = vmatprep.mubr.bf16.mxu0 0
      %1531 = vmatmul.mubr.bf16.gmra.mrb[0].mxu0 %v547
      %v1532 = vpop.f32.mrb[0].mxu0
      %v1533 = vadd.f32 0.0, %v1532
      %v1534 = vpop.f32.mrb[0].mxu0
      %v1535 = vadd.f32 0.0, %v1534
      %v1536 = vpop.f32.mrb[0].mxu0
      %v1537 = vadd.f32 0.0, %v1536
      %v1538 = vpop.f32.mrb[0].mxu0
      %v1539 = vadd.f32 0.0, %v1538
      %1540 = vdwg.mxu0
      %v1541 = vmax.f32 %v1533, %v1537
      %v1542 = vrot.slane %v1541, 4
      %v1543 = vmax.f32 %v1541, %v1542
      %v1544 = vrot.slane %v1543, 2
      %v1545 = vmax.f32 %v1543, %v1544
      %v1546 = vrot.slane %v1545, 1
      %v1547 = vmax.f32 %v1545, %v1546
      %v1548 = vmax.f32 %v1535, %v1539
      %v1549 = vrot.slane %v1548, 4
      %v1550 = vmax.f32 %v1548, %v1549
      %v1551 = vrot.slane %v1550, 2
      %v1552 = vmax.f32 %v1550, %v1551
      %v1553 = vrot.slane %v1552, 1
      %v1554 = vmax.f32 %v1552, %v1553
      %v1555 = vmin.f32 %v1533, %v1537
      %v1556 = vrot.slane %v1555, 4
      %v1557 = vmin.f32 %v1555, %v1556
      %v1558 = vrot.slane %v1557, 2
      %v1559 = vmin.f32 %v1557, %v1558
      %v1560 = vrot.slane %v1559, 1
      %v1561 = vmin.f32 %v1559, %v1560
      %v1562 = vmin.f32 %v1535, %v1539
      %v1563 = vrot.slane %v1562, 4
      %v1564 = vmin.f32 %v1562, %v1563
      %v1565 = vrot.slane %v1564, 2
      %v1566 = vmin.f32 %v1564, %v1565
      %v1567 = vrot.slane %v1566, 1
      %v1568 = vmin.f32 %v1566, %v1567
      %v1569 = vld [vmem:[%s385 + $0x6] sm:$0x3]
      %v1572 = vcombine.low %v1547, %v1554
      %v1574 = vunpack.c.l.s4 1966171168
      %v1575 = vunpack.c.0.s8 %v1574
      %v1576 = vlaneseq
      %v1577 = vshrl.u32 %v1576, 7
      %v1578 = vsub.s32 %v1575, %v1577
      %v1579 = vrot.slane %v1572, %v1578
      %v1581 = vunpack.c.l.s4 1966171168
      %v1582 = vunpack.c.0.s8 %v1581
      %v1583 = vlaneseq
      %v1584 = vshrl.u32 %v1583, 7
      %v1585 = vsub.s32 %v1582, %v1584
      %v1586 = vrot.slane %v1579, %v1585
      %v1588 = vmax.f32 %v1569, %v1586
      %1589 = vst.msk [vmem:[%s385 + $0x6] sm:$0x3] %vm961, %v1588
      %v1590 = vld [vmem:[%s389 + $0x6] sm:$0x3]
      %v1593 = vcombine.low %v1561, %v1568
      %v1595 = vunpack.c.l.s4 1966171168
      %v1596 = vunpack.c.0.s8 %v1595
      %v1597 = vlaneseq
      %v1598 = vshrl.u32 %v1597, 7
      %v1599 = vsub.s32 %v1596, %v1598
      %v1600 = vrot.slane %v1593, %v1599
      %v1602 = vunpack.c.l.s4 1966171168
      %v1603 = vunpack.c.0.s8 %v1602
      %v1604 = vlaneseq
      %v1605 = vshrl.u32 %v1604, 7
      %v1606 = vsub.s32 %v1603, %v1605
      %v1607 = vrot.slane %v1600, %v1606
      %v1609 = vmin.f32 %v1590, %v1607
      %1610 = vst.msk [vmem:[%s389 + $0x6] sm:$0x3] %vm961, %v1609
      %p1611 = scmp.lt.s32.totalorder %s25, 1
      %s1612 = scalar_select %p1611, %s25, 1
      %s1613 = scalar_lea.vmem %s6, %s1612
      %p1614 = scmp.lt.s32.totalorder %s25, 1
      %s1615 = scalar_select %p1614, %s25, 1
      %s1616 = smul.addr %s1615, 16
      %s1617 = smul.addr %s1616, 8
      %s1618 = scalar_lea.vmem %s7, %s1617
      %p1619 = scmp.lt.s32.totalorder %s25, 1
      %s1620 = scalar_select %p1619, %s25, 1
      %s1621 = smul.addr %s1620, 8
      %s1622 = scalar_lea.vmem %s8, %s1621
      %p1623 = scmp.lt.s32.totalorder %s25, 1
      %s1624 = scalar_select %p1623, %s25, 1
      %s1625 = smul.addr %s1624, 8
      %s1626 = scalar_lea.vmem %s9, %s1625
      // Predicated region
      $region53: #{pointnet_cls_forward.7} parent=43 // pred_check
        %p1627 = pneg %p184
      $region54: #{pointnet_cls_forward.7} parent=43 // pred_check_branch
        %1629 = sbr.rel (%p1627) target = $region56
      $region55: #{pointnet_cls_forward.7} parent=43 // pred_region
        _
      $region56: #{pointnet_cls_forward.7} parent=43 // pred_fallthru
        _
      // Predicated region
      $region57: #{pointnet_cls_forward.7} parent=43 // pred_check
        %p1630 = pneg %p210
      $region58: #{pointnet_cls_forward.7} parent=43 // pred_check_branch
        %1632 = sbr.rel (%p1630) target = $region60
      $region59: #{pointnet_cls_forward.7} parent=43 // pred_region
        _
      $region60: #{pointnet_cls_forward.7} parent=43 // pred_fallthru
        _
      // Predicated region
      $region61: #{pointnet_cls_forward.7} parent=43 // pred_check
        %p1633 = pneg %p236
      $region62: #{pointnet_cls_forward.7} parent=43 // pred_check_branch
        %1635 = sbr.rel (%p1633) target = $region64
      $region63: #{pointnet_cls_forward.7} parent=43 // pred_region
        _
      $region64: #{pointnet_cls_forward.7} parent=43 // pred_fallthru
        _
      // Predicated region
      $region65: #{pointnet_cls_forward.7} parent=43 // pred_check
        %p1636 = pneg %p262
      $region66: #{pointnet_cls_forward.7} parent=43 // pred_check_branch
        %1638 = sbr.rel (%p1636) target = $region68
      $region67: #{pointnet_cls_forward.7} parent=43 // pred_region
        _
      $region68: #{pointnet_cls_forward.7} parent=43 // pred_fallthru
        _
    $region44: #{pointnet_cls_forward.7} parent=5 // pred_fallthru
      _
    %p1639 = scmp.le.s32.totalorder 2, %s16
    // Predicated region
    $region69: #{pointnet_cls_forward.7} parent=5 // pred_check
      %p1640 = pneg %p1639
    $region70: #{pointnet_cls_forward.7} parent=5 // pred_check_branch
      %1642 = sbr.rel (%p1640) target = $region72
    $region71: #{pointnet_cls_forward.7} parent=5 // pred_region
      %s1643 = ssub.s32 %s16, 2
      // Predicated region
      $region73: #{pointnet_cls_forward.7} parent=71 // pred_check
        %p1644 = pneg %p190
      $region74: #{pointnet_cls_forward.7} parent=71 // pred_check_branch
        %1646 = sbr.rel (%p1644) target = $region76
      $region75: #{pointnet_cls_forward.7} parent=71 // pred_region
        %p1647 = scmp.lt.s32.totalorder %s27, 1
        %s1648 = scalar_select %p1647, %s27, 1
        %s1649 = scalar_lea.vmem %s6, %s1648
      $region76: #{pointnet_cls_forward.7} parent=71 // pred_fallthru
        _
      // Predicated region
      $region77: #{pointnet_cls_forward.7} parent=71 // pred_check
        %p1650 = pneg %p216
      $region78: #{pointnet_cls_forward.7} parent=71 // pred_check_branch
        %1652 = sbr.rel (%p1650) target = $region80
      $region79: #{pointnet_cls_forward.7} parent=71 // pred_region
        %p1653 = scmp.lt.s32.totalorder %s27, 1
        %s1654 = scalar_select %p1653, %s27, 1
        %s1655 = smul.addr %s1654, 16
        %s1656 = smul.addr %s1655, 8
        %s1657 = scalar_lea.vmem %s7, %s1656
      $region80: #{pointnet_cls_forward.7} parent=71 // pred_fallthru
        _
      // Predicated region
      $region81: #{pointnet_cls_forward.7} parent=71 // pred_check
        %p1658 = pneg %p242
      $region82: #{pointnet_cls_forward.7} parent=71 // pred_check_branch
        %1660 = sbr.rel (%p1658) target = $region84
      $region83: #{pointnet_cls_forward.7} parent=71 // pred_region
        %p1661 = scmp.lt.s32.totalorder %s27, 1
        %s1662 = scalar_select %p1661, %s27, 1
        %s1663 = smul.addr %s1662, 8
        %s1664 = scalar_lea.vmem %s8, %s1663
      $region84: #{pointnet_cls_forward.7} parent=71 // pred_fallthru
        _
      // Predicated region
      $region85: #{pointnet_cls_forward.7} parent=71 // pred_check
        %p1665 = pneg %p268
      $region86: #{pointnet_cls_forward.7} parent=71 // pred_check_branch
        %1667 = sbr.rel (%p1665) target = $region88
      $region87: #{pointnet_cls_forward.7} parent=71 // pred_region
        %p1668 = scmp.lt.s32.totalorder %s27, 1
        %s1669 = scalar_select %p1668, %s27, 1
        %s1670 = smul.addr %s1669, 8
        %s1671 = scalar_lea.vmem %s9, %s1670
      $region88: #{pointnet_cls_forward.7} parent=71 // pred_fallthru
        _
    $region72: #{pointnet_cls_forward.7} parent=5 // pred_fallthru
      _
  $region6: #{pointnet_cls_forward.7} parent=0 // loop_footer
    %s20 = sadd.s32 1, %s16
  $region7: #{pointnet_cls_forward.7} parent=0 // loop_footer_branch
    %15 = sbr.rel target = $region3
  $region8: #{pointnet_cls_forward.7} parent=0 // loop_exit
    _

// kernel: pointnet_cls_forward.9
$region0: #{pointnet_cls_forward.9}
  #allocation0 [shape = 'u32[]', space=smem, size = 0x4, offset = 0x4, fixed_abs, tag = 'smem constant byte address 0x4 - core index']
  #allocation1 [shape = 'u32[144,128]{1,0:T(1,128)}', space=vmem, size = 0x12000, scoped, tag = 'internal scratch']
  %s0 = inlined_call_operand.vmem [shape: bf16[2,16,3], index: 0, kind: input, shape index: {}]
  %s1 = inlined_call_operand.vmem [shape: bf16[2,3,64], index: 1, kind: input, shape index: {}]
  %s2 = inlined_call_operand.vmem [shape: f32[1,64], index: 2, kind: input, shape index: {}]
  %s3 = inlined_call_operand.vmem [shape: bf16[64,128], index: 3, kind: input, shape index: {}]
  %s4 = inlined_call_operand.vmem [shape: f32[2,1,128], index: 4, kind: output, shape index: {0}]
  %s5 = inlined_call_operand.vmem [shape: f32[2,1,128], index: 5, kind: output, shape index: {1}]
  %6 = xla_tuple %s4, %s5
  %s7 = sld [smem:[#allocation0]]
  $region65: #{pointnet_cls_forward.9} parent=0
    _
  %s9 = ssub.s32 1, %s7
  %s10 = scalar_select 0, %s9, %s7
  loop: start=0, step=1, limit=4
  $region2: #{pointnet_cls_forward.9} parent=0 // loop_pre_header
    _
  $region3: #{pointnet_cls_forward.9} parent=0 // loop_header
    %s12 = sphi 0, %s16
    %p13 = scmp.ge.s32.totalorder %s12, 4
    %s19 = sphi 0, %s31
    %s20 = sphi 0, %s27
    %s21 = sphi 0, %s19
    %s22 = sphi 0, %s20
    %s23 = sphi 0, %s21
    %s24 = sphi 0, %s22
    %s36 = sphi 0, %s38
    %s39 = sphi 0, %s36
    %s40 = sphi 0, %s39
    %s56 = sphi 0, %s40
    %s62 = sphi 0, %s64
    %s65 = sphi 0, %s62
    %s66 = sphi 0, %s65
    %s82 = sphi 0, %s66
    %s86 = sphi 0, %s86
    %s88 = sphi 0, %s86
    %s89 = sphi 0, %s88
    %s103 = sphi 0, %s89
    %s107 = sphi 0, %s107
    %s109 = sphi 0, %s107
    %s110 = sphi 0, %s109
    %s124 = sphi 0, %s110
    %s130 = sphi 0, %s132
    %s133 = sphi 0, %s130
    %s134 = sphi 0, %s133
    %s150 = sphi 0, %s134
    %s156 = sphi 0, %s158
    %s159 = sphi 0, %s156
    %s160 = sphi 0, %s159
    %s176 = sphi 0, %s160
  $region4: #{pointnet_cls_forward.9} parent=0 // loop_header_branch
    %15 = sbr.rel (%p13) target = $region8
  $region5: #{pointnet_cls_forward.9} parent=0 // loop_body
    %s17 = ssub.s32 %s12, 1
    %s18 = ssub.s32 %s12, 2
    %s25 = sadd.s32 1, %s20
    %p26 = scmp.ge.s32.totalorder %s25, 1
    %s27 = scalar_select %p26, 0, %s25
    %s28 = sadd.s32 1, %s19
    %s29 = scalar_select %p26, %s28, %s19
    %p30 = scmp.ge.s32.totalorder %s29, 2
    %s31 = scalar_select %p30, 0, %s29
    %s32 = ssub.s32 %s19, %s31
    %s33 = ssub.s32 %s20, %s27
    %s34 = sor.u32 %s32, %s33
    %p35 = scmp.eq.s32.totalorder %s34, 0
    %s37 = sadd.s32 %s36, 1
    %s38 = scalar_select %p35, %s36, %s37
    %p41 = pneg %p35
    %p42 = scmp.eq.s32.totalorder %s12, 1
    %p43 = por %p41, %p42
    %p44 = scmp.ne.s32.totalorder %s36, %s39
    %p45 = scmp.eq.s32.totalorder %s12, 0
    %p46 = por %p44, %p45
    %p47 = scmp.ne.s32.totalorder %s36, %s39
    %p48 = scmp.eq.s32.totalorder %s17, 1
    %p49 = por %p47, %p48
    %p50 = scmp.ne.s32.totalorder %s39, %s40
    %p51 = scmp.eq.s32.totalorder %s17, 0
    %p52 = por %p50, %p51
    %p53 = scmp.ne.s32.totalorder %s39, %s40
    %p54 = scmp.eq.s32.totalorder %s18, 1
    %p55 = por %p53, %p54
    %p57 = scmp.ne.s32.totalorder %s40, %s56
    %p58 = scmp.eq.s32.totalorder %s18, 0
    %p59 = por %p57, %p58
    %s60 = ssub.s32 %s19, %s31
    %p61 = scmp.eq.s32.totalorder %s60, 0
    %s63 = sadd.s32 %s62, 1
    %s64 = scalar_select %p61, %s62, %s63
    %p67 = pneg %p61
    %p68 = scmp.eq.s32.totalorder %s12, 1
    %p69 = por %p67, %p68
    %p70 = scmp.ne.s32.totalorder %s62, %s65
    %p71 = scmp.eq.s32.totalorder %s12, 0
    %p72 = por %p70, %p71
    %p73 = scmp.ne.s32.totalorder %s62, %s65
    %p74 = scmp.eq.s32.totalorder %s17, 1
    %p75 = por %p73, %p74
    %p76 = scmp.ne.s32.totalorder %s65, %s66
    %p77 = scmp.eq.s32.totalorder %s17, 0
    %p78 = por %p76, %p77
    %p79 = scmp.ne.s32.totalorder %s65, %s66
    %p80 = scmp.eq.s32.totalorder %s18, 1
    %p81 = por %p79, %p80
    %p83 = scmp.ne.s32.totalorder %s66, %s82
    %p84 = scmp.eq.s32.totalorder %s18, 0
    %p85 = por %p83, %p84
    %s87 = sadd.s32 %s86, 1
    %p90 = scmp.eq.s32.totalorder %s12, 1
    %p91 = scmp.ne.s32.totalorder %s86, %s88
    %p92 = scmp.eq.s32.totalorder %s12, 0
    %p93 = por %p91, %p92
    %p94 = scmp.ne.s32.totalorder %s86, %s88
    %p95 = scmp.eq.s32.totalorder %s17, 1
    %p96 = por %p94, %p95
    %p97 = scmp.ne.s32.totalorder %s88, %s89
    %p98 = scmp.eq.s32.totalorder %s17, 0
    %p99 = por %p97, %p98
    %p100 = scmp.ne.s32.totalorder %s88, %s89
    %p101 = scmp.eq.s32.totalorder %s18, 1
    %p102 = por %p100, %p101
    %p104 = scmp.ne.s32.totalorder %s89, %s103
    %p105 = scmp.eq.s32.totalorder %s18, 0
    %p106 = por %p104, %p105
    %s108 = sadd.s32 %s107, 1
    %p111 = scmp.eq.s32.totalorder %s12, 1
    %p112 = scmp.ne.s32.totalorder %s107, %s109
    %p113 = scmp.eq.s32.totalorder %s12, 0
    %p114 = por %p112, %p113
    %p115 = scmp.ne.s32.totalorder %s107, %s109
    %p116 = scmp.eq.s32.totalorder %s17, 1
    %p117 = por %p115, %p116
    %p118 = scmp.ne.s32.totalorder %s109, %s110
    %p119 = scmp.eq.s32.totalorder %s17, 0
    %p120 = por %p118, %p119
    %p121 = scmp.ne.s32.totalorder %s109, %s110
    %p122 = scmp.eq.s32.totalorder %s18, 1
    %p123 = por %p121, %p122
    %p125 = scmp.ne.s32.totalorder %s110, %s124
    %p126 = scmp.eq.s32.totalorder %s18, 0
    %p127 = por %p125, %p126
    %s128 = ssub.s32 %s19, %s31
    %p129 = scmp.eq.s32.totalorder %s128, 0
    %s131 = sadd.s32 %s130, 1
    %s132 = scalar_select %p129, %s130, %s131
    %p135 = pneg %p129
    %p136 = scmp.eq.s32.totalorder %s12, 1
    %p137 = por %p135, %p136
    %p138 = scmp.ne.s32.totalorder %s130, %s133
    %p139 = scmp.eq.s32.totalorder %s12, 0
    %p140 = por %p138, %p139
    %p141 = scmp.ne.s32.totalorder %s130, %s133
    %p142 = scmp.eq.s32.totalorder %s17, 1
    %p143 = por %p141, %p142
    %p144 = scmp.ne.s32.totalorder %s133, %s134
    %p145 = scmp.eq.s32.totalorder %s17, 0
    %p146 = por %p144, %p145
    %p147 = scmp.ne.s32.totalorder %s133, %s134
    %p148 = scmp.eq.s32.totalorder %s18, 1
    %p149 = por %p147, %p148
    %p151 = scmp.ne.s32.totalorder %s134, %s150
    %p152 = scmp.eq.s32.totalorder %s18, 0
    %p153 = por %p151, %p152
    %s154 = ssub.s32 %s19, %s31
    %p155 = scmp.eq.s32.totalorder %s154, 0
    %s157 = sadd.s32 %s156, 1
    %s158 = scalar_select %p155, %s156, %s157
    %p161 = pneg %p155
    %p162 = scmp.eq.s32.totalorder %s12, 1
    %p163 = por %p161, %p162
    %p164 = scmp.ne.s32.totalorder %s156, %s159
    %p165 = scmp.eq.s32.totalorder %s12, 0
    %p166 = por %p164, %p165
    %p167 = scmp.ne.s32.totalorder %s156, %s159
    %p168 = scmp.eq.s32.totalorder %s17, 1
    %p169 = por %p167, %p168
    %p170 = scmp.ne.s32.totalorder %s159, %s160
    %p171 = scmp.eq.s32.totalorder %s17, 0
    %p172 = por %p170, %p171
    %p173 = scmp.ne.s32.totalorder %s159, %s160
    %p174 = scmp.eq.s32.totalorder %s18, 1
    %p175 = por %p173, %p174
    %p177 = scmp.ne.s32.totalorder %s160, %s176
    %p178 = scmp.eq.s32.totalorder %s18, 0
    %p179 = por %p177, %p178
    %p180 = scmp.le.s32.totalorder 1, %s12
    %p181 = scmp.lt.s32.totalorder %s12, 3
    %p182 = pnand %p180, %p181
    %p183 = pneg %p182
    // Predicated region
    $region9: #{pointnet_cls_forward.9} parent=5 // pred_check
      _
    $region10: #{pointnet_cls_forward.9} parent=5 // pred_check_branch
      %185 = sbr.rel (%p182) target = $region12
    $region11: #{pointnet_cls_forward.9} parent=5 // pred_region
      %s186 = ssub.s32 %s12, 1
      // Predicated region
      $region13: #{pointnet_cls_forward.9} parent=11 // pred_check
        %p187 = pneg %p99
      $region14: #{pointnet_cls_forward.9} parent=11 // pred_check_branch
        %189 = sbr.rel (%p187) target = $region16
      $region15: #{pointnet_cls_forward.9} parent=11 // pred_region
        _
      $region16: #{pointnet_cls_forward.9} parent=11 // pred_fallthru
        _
      // Predicated region
      $region17: #{pointnet_cls_forward.9} parent=11 // pred_check
        %p190 = pneg %p120
      $region18: #{pointnet_cls_forward.9} parent=11 // pred_check_branch
        %192 = sbr.rel (%p190) target = $region20
      $region19: #{pointnet_cls_forward.9} parent=11 // pred_region
        _
      $region20: #{pointnet_cls_forward.9} parent=11 // pred_fallthru
        _
    $region12: #{pointnet_cls_forward.9} parent=5 // pred_fallthru
      _
    %p193 = scmp.lt.s32.totalorder %s12, 2
    // Predicated region
    $region21: #{pointnet_cls_forward.9} parent=5 // pred_check
      %p194 = pneg %p193
    $region22: #{pointnet_cls_forward.9} parent=5 // pred_check_branch
      %196 = sbr.rel (%p194) target = $region24
    $region23: #{pointnet_cls_forward.9} parent=5 // pred_region
      // Predicated region
      $region25: #{pointnet_cls_forward.9} parent=23 // pred_check
        %p197 = pneg %p46
      $region26: #{pointnet_cls_forward.9} parent=23 // pred_check_branch
        %199 = sbr.rel (%p197) target = $region28
      $region27: #{pointnet_cls_forward.9} parent=23 // pred_region
        %s200 = smul.u32 2, %s20
        %p201 = scmp.lt.s32.totalorder %s19, 1
        %s202 = scalar_select %p201, %s19, 1
        %p203 = scmp.lt.s32.totalorder %s200, 1
        %s204 = scalar_select %p203, %s200, 1
        %s205 = smul.addr %s202, 2
        %s206 = sadd.s32 %s204, %s205
        %s207 = smul.addr %s206, 4
        %s208 = scalar_lea.vmem %s0, %s207
        %s209 = smul.u32 2, %s20
      $region28: #{pointnet_cls_forward.9} parent=23 // pred_fallthru
        _
      // Predicated region
      $region29: #{pointnet_cls_forward.9} parent=23 // pred_check
        %p210 = pneg %p72
      $region30: #{pointnet_cls_forward.9} parent=23 // pred_check_branch
        %212 = sbr.rel (%p210) target = $region32
      $region31: #{pointnet_cls_forward.9} parent=23 // pred_region
        %p213 = scmp.lt.s32.totalorder %s19, 1
        %s214 = scalar_select %p213, %s19, 1
        %s215 = smul.addr %s214, 2
        %s216 = scalar_lea.vmem %s1, %s215
      $region32: #{pointnet_cls_forward.9} parent=23 // pred_fallthru
        _
    $region24: #{pointnet_cls_forward.9} parent=5 // pred_fallthru
      _
    %p217 = scmp.le.s32.totalorder 1, %s12
    %p218 = scmp.lt.s32.totalorder %s12, 3
    %p219 = pnand %p217, %p218
    %p220 = pneg %p219
    // Predicated region
    $region33: #{pointnet_cls_forward.9} parent=5 // pred_check
      _
    $region34: #{pointnet_cls_forward.9} parent=5 // pred_check_branch
      %222 = sbr.rel (%p219) target = $region36
    $region35: #{pointnet_cls_forward.9} parent=5 // pred_region
      %s223 = ssub.s32 %s12, 1
      %s224 = smul.u32 2, %s22
      %p225 = scmp.lt.s32.totalorder %s21, 1
      %s226 = scalar_select %p225, %s21, 1
      %p227 = scmp.lt.s32.totalorder %s224, 1
      %s228 = scalar_select %p227, %s224, 1
      %s229 = smul.addr %s226, 2
      %s230 = sadd.s32 %s228, %s229
      %s231 = smul.addr %s230, 4
      %s232 = scalar_lea.vmem %s0, %s231
      %p233 = pneg %p52
      %p234 = pneg %p49
      %p235 = scmp.lt.s32.totalorder %s21, 1
      %s236 = scalar_select %p235, %s21, 1
      %s237 = smul.addr %s236, 2
      %s238 = scalar_lea.vmem %s1, %s237
      %p239 = pneg %p78
      %p240 = pneg %p75
      %p241 = pneg %p99
      %p242 = pneg %p96
      %p243 = pneg %p120
      %p244 = pneg %p117
      %p245 = pneg %p146
      %p246 = pneg %p143
      %p247 = scmp.lt.s32.totalorder %s21, 1
      %s248 = scalar_select %p247, %s21, 1
      %s249 = scalar_lea.vmem %s4, %s248
      %p250 = pneg %p172
      %p251 = pneg %p169
      %p252 = scmp.lt.s32.totalorder %s21, 1
      %s253 = scalar_select %p252, %s21, 1
      %s254 = scalar_lea.vmem %s5, %s253
      %s255 = smul.u32 2, %s22
      %p256 = scmp.lt.s32.totalorder %s21, 1
      %s257 = scalar_select %p256, %s21, 1
      %p258 = scmp.lt.s32.totalorder %s255, 1
      %s259 = scalar_select %p258, %s255, 1
      %s260 = smul.addr %s257, 2
      %s261 = sadd.s32 %s259, %s260
      %s262 = smul.addr %s261, 4
      %s263 = scalar_lea.vmem %s0, %s262
      %s264 = smul.u32 2, %s22
      %p265 = scmp.lt.s32.totalorder %s21, 1
      %s266 = scalar_select %p265, %s21, 1
      %s267 = smul.addr %s266, 2
      %s268 = scalar_lea.vmem %s1, %s267
      %p269 = scmp.lt.s32.totalorder %s21, 1
      %s270 = scalar_select %p269, %s21, 1
      %s271 = scalar_lea.vmem %s4, %s270
      %p272 = scmp.lt.s32.totalorder %s21, 1
      %s273 = scalar_select %p272, %s21, 1
      %s274 = scalar_lea.vmem %s5, %s273
      %v276 = vld [vmem:[%s263] sm:$0xf]
      %v277 = vld [vmem:[%s263 + $0x4] sm:$0xf]
      %v278 = vld [vmem:[%s268] sm:$0x3]
      %v279 = vld [vmem:[%s2] sm:$0x1]
      %v281 = vlaneseq
      %v282 = vshrl.u32 %v281, 7
      %v283 = vsub.s32 0, %v282
      %v284 = vrot.slane %v279, %v283
      %v288 = vunpack.c.l.b16 %v276
      %v289 = vunpack.c.l.b16 %v277
      %v290 = vpack.c.b16 %v289, %v288
      %vm291 = vcmask 23552
      %v293 = vsel %vm291, %v290, 0
      %vm295 = vcmask 1040384
      %vm296 = vcmask 1041408
      %v297 = vsel %vm295, 4294967295, 65535
      %v298 = vsel %vm296, %v297, 0
      %v300 = vand.u32 %v278, %v298
      %302 = vmatprep.subr.bf16.mxu0 0
      %303 = vmatpush1.bf16.msra.mxu0 %v300
      %304 = vmatprep.subr.bf16.mxu0 0
      %305 = vmatpush1.bf16.msra.mxu0 0
      %306 = vmatprep.subr.bf16.mxu0 0
      %307 = vmatpush1.bf16.msra.mxu0 0
      %308 = vmatprep.subr.bf16.mxu0 0
      %309 = vmatpush1.bf16.msra.mxu0 0
      %310 = vmatprep.subr.bf16.mxu0 0
      %311 = vmatpush1.bf16.msra.mxu0 0
      %312 = vmatprep.subr.bf16.mxu0 0
      %313 = vmatpush1.bf16.msra.mxu0 0
      %314 = vmatprep.subr.bf16.mxu0 0
      %315 = vmatpush1.bf16.msra.mxu0 0
      %316 = vmatprep.subr.bf16.mxu0 0
      %317 = vmatpush1.bf16.msra.mxu0 0
      %318 = vmatprep.subr.bf16.mxu0 0
      %319 = vmatpush1.bf16.msra.mxu0 0
      %320 = vmatprep.subr.bf16.mxu0 0
      %321 = vmatpush1.bf16.msra.mxu0 0
      %322 = vmatprep.subr.bf16.mxu0 0
      %323 = vmatpush1.bf16.msra.mxu0 0
      %324 = vmatprep.subr.bf16.mxu0 0
      %325 = vmatpush1.bf16.msra.mxu0 0
      %326 = vmatprep.subr.bf16.mxu0 0
      %327 = vmatpush1.bf16.msra.mxu0 0
      %328 = vmatprep.subr.bf16.mxu0 0
      %329 = vmatpush1.bf16.msra.mxu0 0
      %330 = vmatprep.subr.bf16.mxu0 0
      %331 = vmatpush1.bf16.msra.mxu0 0
      %332 = vmatprep.subr.bf16.mxu0 0
      %333 = vmatpush1.bf16.msra.mxu0 0
      %334 = vmatprep.mubr.bf16.mxu0 0
      %335 = vmatmul.mubr.bf16.gmra.mrb[0].mxu0 %v293
      %v336 = vpop.f32.mrb[0].mxu0
      %v337 = vadd.f32 %v284, %v336
      %v338 = vpop.f32.mrb[0].mxu0
      %v339 = vpop.f32.mrb[0].mxu0
      %v340 = vadd.f32 %v284, %v339
      %v341 = vpop.f32.mrb[0].mxu0
      %342 = vdwg.mxu0
      %v343 = vmax.f32 %v337, 0.0
      %v344 = vmax.f32 %v340, 0.0
      %v345 = vpack.c.bf16 %v344, %v343
      %v346 = vld [vmem:[%s3] sm:$0xf]
      %v347 = vld [vmem:[%s3 + $0x4] sm:$0xf]
      %v348 = vld [vmem:[%s3 + $0x8] sm:$0xf]
      %v349 = vld [vmem:[%s3 + $0xc] sm:$0xf]
      %v350 = vld [vmem:[%s3 + $0x10] sm:$0xf]
      %v351 = vld [vmem:[%s3 + $0x14] sm:$0xf]
      %v352 = vld [vmem:[%s3 + $0x18] sm:$0xf]
      %v353 = vld [vmem:[%s3 + $0x1c] sm:$0xf]
      %v362 = vunpack.c.l.b16 %v346
      %v363 = vunpack.c.l.b16 %v347
      %v364 = vunpack.c.l.b16 %v348
      %v365 = vunpack.c.l.b16 %v349
      %v366 = vunpack.c.l.b16 %v350
      %v367 = vunpack.c.l.b16 %v351
      %v368 = vunpack.c.l.b16 %v352
      %v369 = vunpack.c.l.b16 %v353
      %v370 = vpack.c.b16 %v363, %v362
      %v371 = vpack.c.b16 %v365, %v364
      %v372 = vpack.c.b16 %v367, %v366
      %v373 = vpack.c.b16 %v369, %v368
      %vm378 = vcmask 523264
      %v380 = vsel %vm378, %v345, 0
      %382 = vmatprep.subr.bf16.mxu0 0
      %383 = vmatpush1.bf16.msra.mxu0 %v370
      %384 = vmatprep.subr.bf16.mxu0 0
      %385 = vmatpush1.bf16.msra.mxu0 %v371
      %386 = vmatprep.subr.bf16.mxu0 0
      %387 = vmatpush1.bf16.msra.mxu0 %v372
      %388 = vmatprep.subr.bf16.mxu0 0
      %389 = vmatpush1.bf16.msra.mxu0 %v373
      %390 = vmatprep.subr.bf16.mxu0 0
      %391 = vmatpush1.bf16.msra.mxu0 0
      %392 = vmatprep.subr.bf16.mxu0 0
      %393 = vmatpush1.bf16.msra.mxu0 0
      %394 = vmatprep.subr.bf16.mxu0 0
      %395 = vmatpush1.bf16.msra.mxu0 0
      %396 = vmatprep.subr.bf16.mxu0 0
      %397 = vmatpush1.bf16.msra.mxu0 0
      %398 = vmatprep.subr.bf16.mxu0 0
      %399 = vmatpush1.bf16.msra.mxu0 0
      %400 = vmatprep.subr.bf16.mxu0 0
      %401 = vmatpush1.bf16.msra.mxu0 0
      %402 = vmatprep.subr.bf16.mxu0 0
      %403 = vmatpush1.bf16.msra.mxu0 0
      %404 = vmatprep.subr.bf16.mxu0 0
      %405 = vmatpush1.bf16.msra.mxu0 0
      %406 = vmatprep.subr.bf16.mxu0 0
      %407 = vmatpush1.bf16.msra.mxu0 0
      %408 = vmatprep.subr.bf16.mxu0 0
      %409 = vmatpush1.bf16.msra.mxu0 0
      %410 = vmatprep.subr.bf16.mxu0 0
      %411 = vmatpush1.bf16.msra.mxu0 0
      %412 = vmatprep.subr.bf16.mxu0 0
      %413 = vmatpush1.bf16.msra.mxu0 0
      %414 = vmatprep.mubr.bf16.mxu0 0
      %415 = vmatmul.mubr.bf16.gmra.mrb[0].mxu0 %v380
      %v416 = vpop.f32.mrb[0].mxu0
      %v417 = vadd.f32 0.0, %v416
      %v418 = vpop.f32.mrb[0].mxu0
      %v419 = vpop.f32.mrb[0].mxu0
      %v420 = vadd.f32 0.0, %v419
      %v421 = vpop.f32.mrb[0].mxu0
      %422 = vdwg.mxu0
      %v423 = vadd.f32 %v417, %v420
      %v424 = vrot.slane %v423, 4
      %v425 = vadd.f32 %v423, %v424
      %v426 = vrot.slane %v425, 2
      %v427 = vadd.f32 %v425, %v426
      %v428 = vrot.slane %v427, 1
      %v429 = vadd.f32 %v427, %v428
      %v430 = vmul.f32 %v417, %v417
      %v431 = vmul.f32 %v420, %v420
      %v432 = vadd.f32 %v430, %v431
      %v433 = vrot.slane %v432, 4
      %v434 = vadd.f32 %v432, %v433
      %v435 = vrot.slane %v434, 2
      %v436 = vadd.f32 %v434, %v435
      %v437 = vrot.slane %v436, 1
      %v438 = vadd.f32 %v436, %v437
      %p439 = scmp.eq.s32.totalorder %s22, 0
      // Predicated region
      $region37: #{pointnet_cls_forward.9} parent=35 // pred_check
        %p440 = pneg %p439
      $region38: #{pointnet_cls_forward.9} parent=35 // pred_check_branch
        %442 = sbr.rel (%p440) target = $region40
      $region39: #{pointnet_cls_forward.9} parent=35 // pred_region
        %443 = vst [vmem:[%s271] sm:$0x1] %v429
        %444 = vst [vmem:[%s274] sm:$0x1] %v438
      $region40: #{pointnet_cls_forward.9} parent=35 // pred_fallthru
        _
      %p445 = scmp.ne.s32.totalorder %s22, 0
      // Predicated region
      $region41: #{pointnet_cls_forward.9} parent=35 // pred_check
        %p446 = pneg %p445
      $region42: #{pointnet_cls_forward.9} parent=35 // pred_check_branch
        %448 = sbr.rel (%p446) target = $region44
      $region43: #{pointnet_cls_forward.9} parent=35 // pred_region
        %v449 = vld [vmem:[%s271] sm:$0x1]
        %v450 = vadd.f32 %v449, %v429
        %451 = vst [vmem:[%s271] sm:$0x1] %v450
        %v452 = vld [vmem:[%s274] sm:$0x1]
        %v453 = vadd.f32 %v452, %v438
        %454 = vst [vmem:[%s274] sm:$0x1] %v453
      $region44: #{pointnet_cls_forward.9} parent=35 // pred_fallthru
        _
      %p455 = scmp.lt.s32.totalorder %s21, 1
      %s456 = scalar_select %p455, %s21, 1
      %s457 = scalar_lea.vmem %s4, %s456
      %p458 = scmp.lt.s32.totalorder %s21, 1
      %s459 = scalar_select %p458, %s21, 1
      %s460 = scalar_lea.vmem %s5, %s459
      // Predicated region
      $region45: #{pointnet_cls_forward.9} parent=35 // pred_check
        %p461 = pneg %p143
      $region46: #{pointnet_cls_forward.9} parent=35 // pred_check_branch
        %463 = sbr.rel (%p461) target = $region48
      $region47: #{pointnet_cls_forward.9} parent=35 // pred_region
        _
      $region48: #{pointnet_cls_forward.9} parent=35 // pred_fallthru
        _
      // Predicated region
      $region49: #{pointnet_cls_forward.9} parent=35 // pred_check
        %p464 = pneg %p169
      $region50: #{pointnet_cls_forward.9} parent=35 // pred_check_branch
        %466 = sbr.rel (%p464) target = $region52
      $region51: #{pointnet_cls_forward.9} parent=35 // pred_region
        _
      $region52: #{pointnet_cls_forward.9} parent=35 // pred_fallthru
        _
    $region36: #{pointnet_cls_forward.9} parent=5 // pred_fallthru
      _
    %p467 = scmp.le.s32.totalorder 2, %s12
    // Predicated region
    $region53: #{pointnet_cls_forward.9} parent=5 // pred_check
      %p468 = pneg %p467
    $region54: #{pointnet_cls_forward.9} parent=5 // pred_check_branch
      %470 = sbr.rel (%p468) target = $region56
    $region55: #{pointnet_cls_forward.9} parent=5 // pred_region
      %s471 = ssub.s32 %s12, 2
      // Predicated region
      $region57: #{pointnet_cls_forward.9} parent=55 // pred_check
        %p472 = pneg %p149
      $region58: #{pointnet_cls_forward.9} parent=55 // pred_check_branch
        %474 = sbr.rel (%p472) target = $region60
      $region59: #{pointnet_cls_forward.9} parent=55 // pred_region
        %p475 = scmp.lt.s32.totalorder %s23, 1
        %s476 = scalar_select %p475, %s23, 1
        %s477 = scalar_lea.vmem %s4, %s476
      $region60: #{pointnet_cls_forward.9} parent=55 // pred_fallthru
        _
      // Predicated region
      $region61: #{pointnet_cls_forward.9} parent=55 // pred_check
        %p478 = pneg %p175
      $region62: #{pointnet_cls_forward.9} parent=55 // pred_check_branch
        %480 = sbr.rel (%p478) target = $region64
      $region63: #{pointnet_cls_forward.9} parent=55 // pred_region
        %p481 = scmp.lt.s32.totalorder %s23, 1
        %s482 = scalar_select %p481, %s23, 1
        %s483 = scalar_lea.vmem %s5, %s482
      $region64: #{pointnet_cls_forward.9} parent=55 // pred_fallthru
        _
    $region56: #{pointnet_cls_forward.9} parent=5 // pred_fallthru
      _
  $region6: #{pointnet_cls_forward.9} parent=0 // loop_footer
    %s16 = sadd.s32 1, %s12
  $region7: #{pointnet_cls_forward.9} parent=0 // loop_footer_branch
    %11 = sbr.rel target = $region3
  $region8: #{pointnet_cls_forward.9} parent=0 // loop_exit
    _

// kernel: pointnet_cls_forward.8
$region0: #{pointnet_cls_forward.8}
  #allocation0 [shape = 'u32[]', space=smem, size = 0x4, offset = 0x4, fixed_abs, tag = 'smem constant byte address 0x4 - core index']
  #allocation1 [shape = 'u32[144,128]{1,0:T(1,128)}', space=vmem, size = 0x12000, scoped, tag = 'internal scratch']
  %s0 = inlined_call_operand.vmem [shape: f32[2,1024], index: 0, kind: input, shape index: {}]
  %s1 = inlined_call_operand.vmem [shape: bf16[1024,512], index: 1, kind: input, shape index: {}]
  %s2 = inlined_call_operand.vmem [shape: f32[1,512], index: 2, kind: input, shape index: {}]
  %s3 = inlined_call_operand.vmem [shape: f32[1,512], index: 3, kind: input, shape index: {}]
  %s4 = inlined_call_operand.vmem [shape: f32[1,512], index: 4, kind: input, shape index: {}]
  %s5 = inlined_call_operand.vmem [shape: bf16[512,256], index: 5, kind: input, shape index: {}]
  %s6 = inlined_call_operand.vmem [shape: f32[1,256], index: 6, kind: input, shape index: {}]
  %s7 = inlined_call_operand.vmem [shape: f32[1,256], index: 7, kind: input, shape index: {}]
  %s8 = inlined_call_operand.vmem [shape: f32[1,256], index: 8, kind: input, shape index: {}]
  %s9 = inlined_call_operand.vmem [shape: bf16[256,128], index: 9, kind: input, shape index: {}]
  %s10 = inlined_call_operand.vmem [shape: f32[1,128], index: 10, kind: input, shape index: {}]
  %s11 = inlined_call_operand.vmem [shape: f32[2,128], index: 11, kind: output, shape index: {}]
  %s12 = sld [smem:[#allocation0]]
  $region54: #{pointnet_cls_forward.8} parent=0
    _
  %s14 = ssub.s32 1, %s12
  %s15 = scalar_select 0, %s14, %s12
  // Predicated region
  $region2: #{pointnet_cls_forward.8} parent=0 // pred_check
    _
  $region3: #{pointnet_cls_forward.8} parent=0 // pred_check_branch
    %17 = sbr.rel (0) target = $region5
  $region4: #{pointnet_cls_forward.8} parent=0 // pred_region
    _
  $region5: #{pointnet_cls_forward.8} parent=0 // pred_fallthru
    _
  // Predicated region
  $region6: #{pointnet_cls_forward.8} parent=0 // pred_check
    _
  $region7: #{pointnet_cls_forward.8} parent=0 // pred_check_branch
    %19 = sbr.rel (0) target = $region9
  $region8: #{pointnet_cls_forward.8} parent=0 // pred_region
    _
  $region9: #{pointnet_cls_forward.8} parent=0 // pred_fallthru
    _
  // Predicated region
  $region10: #{pointnet_cls_forward.8} parent=0 // pred_check
    _
  $region11: #{pointnet_cls_forward.8} parent=0 // pred_check_branch
    %21 = sbr.rel (0) target = $region13
  $region12: #{pointnet_cls_forward.8} parent=0 // pred_region
    _
  $region13: #{pointnet_cls_forward.8} parent=0 // pred_fallthru
    _
  // Predicated region
  $region14: #{pointnet_cls_forward.8} parent=0 // pred_check
    _
  $region15: #{pointnet_cls_forward.8} parent=0 // pred_check_branch
    %23 = sbr.rel (0) target = $region17
  $region16: #{pointnet_cls_forward.8} parent=0 // pred_region
    _
  $region17: #{pointnet_cls_forward.8} parent=0 // pred_fallthru
    _
  // Predicated region
  $region18: #{pointnet_cls_forward.8} parent=0 // pred_check
    _
  $region19: #{pointnet_cls_forward.8} parent=0 // pred_check_branch
    %25 = sbr.rel (0) target = $region21
  $region20: #{pointnet_cls_forward.8} parent=0 // pred_region
    _
  $region21: #{pointnet_cls_forward.8} parent=0 // pred_fallthru
    _
  // Predicated region
  $region22: #{pointnet_cls_forward.8} parent=0 // pred_check
    _
  $region23: #{pointnet_cls_forward.8} parent=0 // pred_check_branch
    %27 = sbr.rel (0) target = $region25
  $region24: #{pointnet_cls_forward.8} parent=0 // pred_region
    _
  $region25: #{pointnet_cls_forward.8} parent=0 // pred_fallthru
    _
  // Predicated region
  $region26: #{pointnet_cls_forward.8} parent=0 // pred_check
    _
  $region27: #{pointnet_cls_forward.8} parent=0 // pred_check_branch
    %29 = sbr.rel (0) target = $region29
  $region28: #{pointnet_cls_forward.8} parent=0 // pred_region
    _
  $region29: #{pointnet_cls_forward.8} parent=0 // pred_fallthru
    _
  // Predicated region
  $region30: #{pointnet_cls_forward.8} parent=0 // pred_check
    _
  $region31: #{pointnet_cls_forward.8} parent=0 // pred_check_branch
    %31 = sbr.rel (0) target = $region33
  $region32: #{pointnet_cls_forward.8} parent=0 // pred_region
    _
  $region33: #{pointnet_cls_forward.8} parent=0 // pred_fallthru
    _
  // Predicated region
  $region34: #{pointnet_cls_forward.8} parent=0 // pred_check
    _
  $region35: #{pointnet_cls_forward.8} parent=0 // pred_check_branch
    %33 = sbr.rel (0) target = $region37
  $region36: #{pointnet_cls_forward.8} parent=0 // pred_region
    _
  $region37: #{pointnet_cls_forward.8} parent=0 // pred_fallthru
    _
  // Predicated region
  $region38: #{pointnet_cls_forward.8} parent=0 // pred_check
    _
  $region39: #{pointnet_cls_forward.8} parent=0 // pred_check_branch
    %35 = sbr.rel (0) target = $region41
  $region40: #{pointnet_cls_forward.8} parent=0 // pred_region
    _
  $region41: #{pointnet_cls_forward.8} parent=0 // pred_fallthru
    _
  // Predicated region
  $region42: #{pointnet_cls_forward.8} parent=0 // pred_check
    _
  $region43: #{pointnet_cls_forward.8} parent=0 // pred_check_branch
    %37 = sbr.rel (0) target = $region45
  $region44: #{pointnet_cls_forward.8} parent=0 // pred_region
    _
  $region45: #{pointnet_cls_forward.8} parent=0 // pred_fallthru
    _
  %v39 = vld [vmem:[%s0] sm:$0xff]
  %v40 = vld [vmem:[%s0 + $0x8] sm:$0xff]
  %v43 = vcombine.high %v39, %v39
  %v45 = vunpack.c.l.s4 1983009808
  %v46 = vunpack.c.0.s8 %v45
  %v47 = vlaneseq
  %v48 = vshrl.u32 %v47, 7
  %v49 = vsub.s32 %v46, %v48
  %v50 = vrot.slane %v39, %v49
  %v52 = vunpack.c.l.s4 1983009808
  %v53 = vunpack.c.0.s8 %v52
  %v54 = vlaneseq
  %v55 = vshrl.u32 %v54, 7
  %v56 = vsub.s32 %v53, %v55
  %v57 = vrot.slane %v43, %v56
  %v58 = vcombine.high %v50, %v50
  %v59 = vcombine.high %v57, %v57
  %v60 = vcombine.high %v40, %v40
  %v62 = vunpack.c.l.s4 1983009808
  %v63 = vunpack.c.0.s8 %v62
  %v64 = vlaneseq
  %v65 = vshrl.u32 %v64, 7
  %v66 = vsub.s32 %v63, %v65
  %v67 = vrot.slane %v40, %v66
  %v69 = vunpack.c.l.s4 1983009808
  %v70 = vunpack.c.0.s8 %v69
  %v71 = vlaneseq
  %v72 = vshrl.u32 %v71, 7
  %v73 = vsub.s32 %v70, %v72
  %v74 = vrot.slane %v60, %v73
  %v75 = vcombine.high %v67, %v67
  %v76 = vcombine.high %v74, %v74
  %v85 = vpack.c.bf16 %v50, %v50
  %v86 = vpack.c.bf16 %v58, %v58
  %v87 = vpack.c.bf16 %v57, %v57
  %v88 = vpack.c.bf16 %v59, %v59
  %v89 = vpack.c.bf16 %v67, %v67
  %v90 = vpack.c.bf16 %v75, %v75
  %v91 = vpack.c.bf16 %v74, %v74
  %v92 = vpack.c.bf16 %v76, %v76
  %v93 = vld [vmem:[%s1] sm:$0xff]
  %v94 = vld [vmem:[%s1 + $0x8] sm:$0xff]
  %v95 = vld [vmem:[%s1 + $0x10] sm:$0xff]
  %v96 = vld [vmem:[%s1 + $0x18] sm:$0xff]
  %v97 = vld [vmem:[%s1 + $0x20] sm:$0xff]
  %v98 = vld [vmem:[%s1 + $0x28] sm:$0xff]
  %v99 = vld [vmem:[%s1 + $0x30] sm:$0xff]
  %v100 = vld [vmem:[%s1 + $0x38] sm:$0xff]
  %v101 = vld [vmem:[%s1 + $0x40] sm:$0xff]
  %v102 = vld [vmem:[%s1 + $0x48] sm:$0xff]
  %v103 = vld [vmem:[%s1 + $0x50] sm:$0xff]
  %v104 = vld [vmem:[%s1 + $0x58] sm:$0xff]
  %v105 = vld [vmem:[%s1 + $0x60] sm:$0xff]
  %v106 = vld [vmem:[%s1 + $0x68] sm:$0xff]
  %v107 = vld [vmem:[%s1 + $0x70] sm:$0xff]
  %v108 = vld [vmem:[%s1 + $0x78] sm:$0xff]
  %v109 = vld [vmem:[%s1 + $0x80] sm:$0xff]
  %v110 = vld [vmem:[%s1 + $0x88] sm:$0xff]
  %v111 = vld [vmem:[%s1 + $0x90] sm:$0xff]
  %v112 = vld [vmem:[%s1 + $0x98] sm:$0xff]
  %v113 = vld [vmem:[%s1 + $0xa0] sm:$0xff]
  %v114 = vld [vmem:[%s1 + $0xa8] sm:$0xff]
  %v115 = vld [vmem:[%s1 + $0xb0] sm:$0xff]
  %v116 = vld [vmem:[%s1 + $0xb8] sm:$0xff]
  %v117 = vld [vmem:[%s1 + $0xc0] sm:$0xff]
  %v118 = vld [vmem:[%s1 + $0xc8] sm:$0xff]
  %v119 = vld [vmem:[%s1 + $0xd0] sm:$0xff]
  %v120 = vld [vmem:[%s1 + $0xd8] sm:$0xff]
  %v121 = vld [vmem:[%s1 + $0xe0] sm:$0xff]
  %v122 = vld [vmem:[%s1 + $0xe8] sm:$0xff]
  %v123 = vld [vmem:[%s1 + $0xf0] sm:$0xff]
  %v124 = vld [vmem:[%s1 + $0xf8] sm:$0xff]
  %v125 = vld [vmem:[%s1 + $0x100] sm:$0xff]
  %v126 = vld [vmem:[%s1 + $0x108] sm:$0xff]
  %v127 = vld [vmem:[%s1 + $0x110] sm:$0xff]
  %v128 = vld [vmem:[%s1 + $0x118] sm:$0xff]
  %v129 = vld [vmem:[%s1 + $0x120] sm:$0xff]
  %v130 = vld [vmem:[%s1 + $0x128] sm:$0xff]
  %v131 = vld [vmem:[%s1 + $0x130] sm:$0xff]
  %v132 = vld [vmem:[%s1 + $0x138] sm:$0xff]
  %v133 = vld [vmem:[%s1 + $0x140] sm:$0xff]
  %v134 = vld [vmem:[%s1 + $0x148] sm:$0xff]
  %v135 = vld [vmem:[%s1 + $0x150] sm:$0xff]
  %v136 = vld [vmem:[%s1 + $0x158] sm:$0xff]
  %v137 = vld [vmem:[%s1 + $0x160] sm:$0xff]
  %v138 = vld [vmem:[%s1 + $0x168] sm:$0xff]
  %v139 = vld [vmem:[%s1 + $0x170] sm:$0xff]
  %v140 = vld [vmem:[%s1 + $0x178] sm:$0xff]
  %v141 = vld [vmem:[%s1 + $0x180] sm:$0xff]
  %v142 = vld [vmem:[%s1 + $0x188] sm:$0xff]
  %v143 = vld [vmem:[%s1 + $0x190] sm:$0xff]
  %v144 = vld [vmem:[%s1 + $0x198] sm:$0xff]
  %v145 = vld [vmem:[%s1 + $0x1a0] sm:$0xff]
  %v146 = vld [vmem:[%s1 + $0x1a8] sm:$0xff]
  %v147 = vld [vmem:[%s1 + $0x1b0] sm:$0xff]
  %v148 = vld [vmem:[%s1 + $0x1b8] sm:$0xff]
  %v149 = vld [vmem:[%s1 + $0x1c0] sm:$0xff]
  %v150 = vld [vmem:[%s1 + $0x1c8] sm:$0xff]
  %v151 = vld [vmem:[%s1 + $0x1d0] sm:$0xff]
  %v152 = vld [vmem:[%s1 + $0x1d8] sm:$0xff]
  %v153 = vld [vmem:[%s1 + $0x1e0] sm:$0xff]
  %v154 = vld [vmem:[%s1 + $0x1e8] sm:$0xff]
  %v155 = vld [vmem:[%s1 + $0x1f0] sm:$0xff]
  %v156 = vld [vmem:[%s1 + $0x1f8] sm:$0xff]
  %v157 = vld [vmem:[%s1 + $0x200] sm:$0xff]
  %v158 = vld [vmem:[%s1 + $0x208] sm:$0xff]
  %v159 = vld [vmem:[%s1 + $0x210] sm:$0xff]
  %v160 = vld [vmem:[%s1 + $0x218] sm:$0xff]
  %v161 = vld [vmem:[%s1 + $0x220] sm:$0xff]
  %v162 = vld [vmem:[%s1 + $0x228] sm:$0xff]
  %v163 = vld [vmem:[%s1 + $0x230] sm:$0xff]
  %v164 = vld [vmem:[%s1 + $0x238] sm:$0xff]
  %v165 = vld [vmem:[%s1 + $0x240] sm:$0xff]
  %v166 = vld [vmem:[%s1 + $0x248] sm:$0xff]
  %v167 = vld [vmem:[%s1 + $0x250] sm:$0xff]
  %v168 = vld [vmem:[%s1 + $0x258] sm:$0xff]
  %v169 = vld [vmem:[%s1 + $0x260] sm:$0xff]
  %v170 = vld [vmem:[%s1 + $0x268] sm:$0xff]
  %v171 = vld [vmem:[%s1 + $0x270] sm:$0xff]
  %v172 = vld [vmem:[%s1 + $0x278] sm:$0xff]
  %v173 = vld [vmem:[%s1 + $0x280] sm:$0xff]
  %v174 = vld [vmem:[%s1 + $0x288] sm:$0xff]
  %v175 = vld [vmem:[%s1 + $0x290] sm:$0xff]
  %v176 = vld [vmem:[%s1 + $0x298] sm:$0xff]
  %v177 = vld [vmem:[%s1 + $0x2a0] sm:$0xff]
  %v178 = vld [vmem:[%s1 + $0x2a8] sm:$0xff]
  %v179 = vld [vmem:[%s1 + $0x2b0] sm:$0xff]
  %v180 = vld [vmem:[%s1 + $0x2b8] sm:$0xff]
  %v181 = vld [vmem:[%s1 + $0x2c0] sm:$0xff]
  %v182 = vld [vmem:[%s1 + $0x2c8] sm:$0xff]
  %v183 = vld [vmem:[%s1 + $0x2d0] sm:$0xff]
  %v184 = vld [vmem:[%s1 + $0x2d8] sm:$0xff]
  %v185 = vld [vmem:[%s1 + $0x2e0] sm:$0xff]
  %v186 = vld [vmem:[%s1 + $0x2e8] sm:$0xff]
  %v187 = vld [vmem:[%s1 + $0x2f0] sm:$0xff]
  %v188 = vld [vmem:[%s1 + $0x2f8] sm:$0xff]
  %v189 = vld [vmem:[%s1 + $0x300] sm:$0xff]
  %v190 = vld [vmem:[%s1 + $0x308] sm:$0xff]
  %v191 = vld [vmem:[%s1 + $0x310] sm:$0xff]
  %v192 = vld [vmem:[%s1 + $0x318] sm:$0xff]
  %v193 = vld [vmem:[%s1 + $0x320] sm:$0xff]
  %v194 = vld [vmem:[%s1 + $0x328] sm:$0xff]
  %v195 = vld [vmem:[%s1 + $0x330] sm:$0xff]
  %v196 = vld [vmem:[%s1 + $0x338] sm:$0xff]
  %v197 = vld [vmem:[%s1 + $0x340] sm:$0xff]
  %v198 = vld [vmem:[%s1 + $0x348] sm:$0xff]
  %v199 = vld [vmem:[%s1 + $0x350] sm:$0xff]
  %v200 = vld [vmem:[%s1 + $0x358] sm:$0xff]
  %v201 = vld [vmem:[%s1 + $0x360] sm:$0xff]
  %v202 = vld [vmem:[%s1 + $0x368] sm:$0xff]
  %v203 = vld [vmem:[%s1 + $0x370] sm:$0xff]
  %v204 = vld [vmem:[%s1 + $0x378] sm:$0xff]
  %v205 = vld [vmem:[%s1 + $0x380] sm:$0xff]
  %v206 = vld [vmem:[%s1 + $0x388] sm:$0xff]
  %v207 = vld [vmem:[%s1 + $0x390] sm:$0xff]
  %v208 = vld [vmem:[%s1 + $0x398] sm:$0xff]
  %v209 = vld [vmem:[%s1 + $0x3a0] sm:$0xff]
  %v210 = vld [vmem:[%s1 + $0x3a8] sm:$0xff]
  %v211 = vld [vmem:[%s1 + $0x3b0] sm:$0xff]
  %v212 = vld [vmem:[%s1 + $0x3b8] sm:$0xff]
  %v213 = vld [vmem:[%s1 + $0x3c0] sm:$0xff]
  %v214 = vld [vmem:[%s1 + $0x3c8] sm:$0xff]
  %v215 = vld [vmem:[%s1 + $0x3d0] sm:$0xff]
  %v216 = vld [vmem:[%s1 + $0x3d8] sm:$0xff]
  %v217 = vld [vmem:[%s1 + $0x3e0] sm:$0xff]
  %v218 = vld [vmem:[%s1 + $0x3e8] sm:$0xff]
  %v219 = vld [vmem:[%s1 + $0x3f0] sm:$0xff]
  %v220 = vld [vmem:[%s1 + $0x3f8] sm:$0xff]
  %v221 = vld [vmem:[%s1 + $0x400] sm:$0xff]
  %v222 = vld [vmem:[%s1 + $0x408] sm:$0xff]
  %v223 = vld [vmem:[%s1 + $0x410] sm:$0xff]
  %v224 = vld [vmem:[%s1 + $0x418] sm:$0xff]
  %v225 = vld [vmem:[%s1 + $0x420] sm:$0xff]
  %v226 = vld [vmem:[%s1 + $0x428] sm:$0xff]
  %v227 = vld [vmem:[%s1 + $0x430] sm:$0xff]
  %v228 = vld [vmem:[%s1 + $0x438] sm:$0xff]
  %v229 = vld [vmem:[%s1 + $0x440] sm:$0xff]
  %v230 = vld [vmem:[%s1 + $0x448] sm:$0xff]
  %v231 = vld [vmem:[%s1 + $0x450] sm:$0xff]
  %v232 = vld [vmem:[%s1 + $0x458] sm:$0xff]
  %v233 = vld [vmem:[%s1 + $0x460] sm:$0xff]
  %v234 = vld [vmem:[%s1 + $0x468] sm:$0xff]
  %v235 = vld [vmem:[%s1 + $0x470] sm:$0xff]
  %v236 = vld [vmem:[%s1 + $0x478] sm:$0xff]
  %v237 = vld [vmem:[%s1 + $0x480] sm:$0xff]
  %v238 = vld [vmem:[%s1 + $0x488] sm:$0xff]
  %v239 = vld [vmem:[%s1 + $0x490] sm:$0xff]
  %v240 = vld [vmem:[%s1 + $0x498] sm:$0xff]
  %v241 = vld [vmem:[%s1 + $0x4a0] sm:$0xff]
  %v242 = vld [vmem:[%s1 + $0x4a8] sm:$0xff]
  %v243 = vld [vmem:[%s1 + $0x4b0] sm:$0xff]
  %v244 = vld [vmem:[%s1 + $0x4b8] sm:$0xff]
  %v245 = vld [vmem:[%s1 + $0x4c0] sm:$0xff]
  %v246 = vld [vmem:[%s1 + $0x4c8] sm:$0xff]
  %v247 = vld [vmem:[%s1 + $0x4d0] sm:$0xff]
  %v248 = vld [vmem:[%s1 + $0x4d8] sm:$0xff]
  %v249 = vld [vmem:[%s1 + $0x4e0] sm:$0xff]
  %v250 = vld [vmem:[%s1 + $0x4e8] sm:$0xff]
  %v251 = vld [vmem:[%s1 + $0x4f0] sm:$0xff]
  %v252 = vld [vmem:[%s1 + $0x4f8] sm:$0xff]
  %v253 = vld [vmem:[%s1 + $0x500] sm:$0xff]
  %v254 = vld [vmem:[%s1 + $0x508] sm:$0xff]
  %v255 = vld [vmem:[%s1 + $0x510] sm:$0xff]
  %v256 = vld [vmem:[%s1 + $0x518] sm:$0xff]
  %v257 = vld [vmem:[%s1 + $0x520] sm:$0xff]
  %v258 = vld [vmem:[%s1 + $0x528] sm:$0xff]
  %v259 = vld [vmem:[%s1 + $0x530] sm:$0xff]
  %v260 = vld [vmem:[%s1 + $0x538] sm:$0xff]
  %v261 = vld [vmem:[%s1 + $0x540] sm:$0xff]
  %v262 = vld [vmem:[%s1 + $0x548] sm:$0xff]
  %v263 = vld [vmem:[%s1 + $0x550] sm:$0xff]
  %v264 = vld [vmem:[%s1 + $0x558] sm:$0xff]
  %v265 = vld [vmem:[%s1 + $0x560] sm:$0xff]
  %v266 = vld [vmem:[%s1 + $0x568] sm:$0xff]
  %v267 = vld [vmem:[%s1 + $0x570] sm:$0xff]
  %v268 = vld [vmem:[%s1 + $0x578] sm:$0xff]
  %v269 = vld [vmem:[%s1 + $0x580] sm:$0xff]
  %v270 = vld [vmem:[%s1 + $0x588] sm:$0xff]
  %v271 = vld [vmem:[%s1 + $0x590] sm:$0xff]
  %v272 = vld [vmem:[%s1 + $0x598] sm:$0xff]
  %v273 = vld [vmem:[%s1 + $0x5a0] sm:$0xff]
  %v274 = vld [vmem:[%s1 + $0x5a8] sm:$0xff]
  %v275 = vld [vmem:[%s1 + $0x5b0] sm:$0xff]
  %v276 = vld [vmem:[%s1 + $0x5b8] sm:$0xff]
  %v277 = vld [vmem:[%s1 + $0x5c0] sm:$0xff]
  %v278 = vld [vmem:[%s1 + $0x5c8] sm:$0xff]
  %v279 = vld [vmem:[%s1 + $0x5d0] sm:$0xff]
  %v280 = vld [vmem:[%s1 + $0x5d8] sm:$0xff]
  %v281 = vld [vmem:[%s1 + $0x5e0] sm:$0xff]
  %v282 = vld [vmem:[%s1 + $0x5e8] sm:$0xff]
  %v283 = vld [vmem:[%s1 + $0x5f0] sm:$0xff]
  %v284 = vld [vmem:[%s1 + $0x5f8] sm:$0xff]
  %v285 = vld [vmem:[%s1 + $0x600] sm:$0xff]
  %v286 = vld [vmem:[%s1 + $0x608] sm:$0xff]
  %v287 = vld [vmem:[%s1 + $0x610] sm:$0xff]
  %v288 = vld [vmem:[%s1 + $0x618] sm:$0xff]
  %v289 = vld [vmem:[%s1 + $0x620] sm:$0xff]
  %v290 = vld [vmem:[%s1 + $0x628] sm:$0xff]
  %v291 = vld [vmem:[%s1 + $0x630] sm:$0xff]
  %v292 = vld [vmem:[%s1 + $0x638] sm:$0xff]
  %v293 = vld [vmem:[%s1 + $0x640] sm:$0xff]
  %v294 = vld [vmem:[%s1 + $0x648] sm:$0xff]
  %v295 = vld [vmem:[%s1 + $0x650] sm:$0xff]
  %v296 = vld [vmem:[%s1 + $0x658] sm:$0xff]
  %v297 = vld [vmem:[%s1 + $0x660] sm:$0xff]
  %v298 = vld [vmem:[%s1 + $0x668] sm:$0xff]
  %v299 = vld [vmem:[%s1 + $0x670] sm:$0xff]
  %v300 = vld [vmem:[%s1 + $0x678] sm:$0xff]
  %v301 = vld [vmem:[%s1 + $0x680] sm:$0xff]
  %v302 = vld [vmem:[%s1 + $0x688] sm:$0xff]
  %v303 = vld [vmem:[%s1 + $0x690] sm:$0xff]
  %v304 = vld [vmem:[%s1 + $0x698] sm:$0xff]
  %v305 = vld [vmem:[%s1 + $0x6a0] sm:$0xff]
  %v306 = vld [vmem:[%s1 + $0x6a8] sm:$0xff]
  %v307 = vld [vmem:[%s1 + $0x6b0] sm:$0xff]
  %v308 = vld [vmem:[%s1 + $0x6b8] sm:$0xff]
  %v309 = vld [vmem:[%s1 + $0x6c0] sm:$0xff]
  %v310 = vld [vmem:[%s1 + $0x6c8] sm:$0xff]
  %v311 = vld [vmem:[%s1 + $0x6d0] sm:$0xff]
  %v312 = vld [vmem:[%s1 + $0x6d8] sm:$0xff]
  %v313 = vld [vmem:[%s1 + $0x6e0] sm:$0xff]
  %v314 = vld [vmem:[%s1 + $0x6e8] sm:$0xff]
  %v315 = vld [vmem:[%s1 + $0x6f0] sm:$0xff]
  %v316 = vld [vmem:[%s1 + $0x6f8] sm:$0xff]
  %v317 = vld [vmem:[%s1 + $0x700] sm:$0xff]
  %v318 = vld [vmem:[%s1 + $0x708] sm:$0xff]
  %v319 = vld [vmem:[%s1 + $0x710] sm:$0xff]
  %v320 = vld [vmem:[%s1 + $0x718] sm:$0xff]
  %v321 = vld [vmem:[%s1 + $0x720] sm:$0xff]
  %v322 = vld [vmem:[%s1 + $0x728] sm:$0xff]
  %v323 = vld [vmem:[%s1 + $0x730] sm:$0xff]
  %v324 = vld [vmem:[%s1 + $0x738] sm:$0xff]
  %v325 = vld [vmem:[%s1 + $0x740] sm:$0xff]
  %v326 = vld [vmem:[%s1 + $0x748] sm:$0xff]
  %v327 = vld [vmem:[%s1 + $0x750] sm:$0xff]
  %v328 = vld [vmem:[%s1 + $0x758] sm:$0xff]
  %v329 = vld [vmem:[%s1 + $0x760] sm:$0xff]
  %v330 = vld [vmem:[%s1 + $0x768] sm:$0xff]
  %v331 = vld [vmem:[%s1 + $0x770] sm:$0xff]
  %v332 = vld [vmem:[%s1 + $0x778] sm:$0xff]
  %v333 = vld [vmem:[%s1 + $0x780] sm:$0xff]
  %v334 = vld [vmem:[%s1 + $0x788] sm:$0xff]
  %v335 = vld [vmem:[%s1 + $0x790] sm:$0xff]
  %v336 = vld [vmem:[%s1 + $0x798] sm:$0xff]
  %v337 = vld [vmem:[%s1 + $0x7a0] sm:$0xff]
  %v338 = vld [vmem:[%s1 + $0x7a8] sm:$0xff]
  %v339 = vld [vmem:[%s1 + $0x7b0] sm:$0xff]
  %v340 = vld [vmem:[%s1 + $0x7b8] sm:$0xff]
  %v341 = vld [vmem:[%s1 + $0x7c0] sm:$0xff]
  %v342 = vld [vmem:[%s1 + $0x7c8] sm:$0xff]
  %v343 = vld [vmem:[%s1 + $0x7d0] sm:$0xff]
  %v344 = vld [vmem:[%s1 + $0x7d8] sm:$0xff]
  %v345 = vld [vmem:[%s1 + $0x7e0] sm:$0xff]
  %v346 = vld [vmem:[%s1 + $0x7e8] sm:$0xff]
  %v347 = vld [vmem:[%s1 + $0x7f0] sm:$0xff]
  %v348 = vld [vmem:[%s1 + $0x7f8] sm:$0xff]
  %v349 = vld [vmem:[%s2] sm:$0xf]
  %v351 = vlaneseq
  %v352 = vshrl.u32 %v351, 7
  %v353 = vsub.s32 0, %v352
  %v354 = vrot.slane %v349, %v353
  %v355 = vlaneseq
  %v356 = vshrl.u32 %v355, 7
  %v357 = vsub.s32 1, %v356
  %v358 = vrot.slane %v349, %v357
  %v359 = vlaneseq
  %v360 = vshrl.u32 %v359, 7
  %v361 = vsub.s32 2, %v360
  %v362 = vrot.slane %v349, %v361
  %v363 = vlaneseq
  %v364 = vshrl.u32 %v363, 7
  %v365 = vsub.s32 3, %v364
  %v366 = vrot.slane %v349, %v365
  %v627 = vunpack.c.l.b16 %v93
  %v628 = vunpack.c.h.b16 %v93
  %v629 = vunpack.c.l.b16 %v94
  %v630 = vunpack.c.h.b16 %v94
  %v631 = vunpack.c.l.b16 %v95
  %v632 = vunpack.c.h.b16 %v95
  %v633 = vunpack.c.l.b16 %v96
  %v634 = vunpack.c.h.b16 %v96
  %v635 = vunpack.c.l.b16 %v97
  %v636 = vunpack.c.h.b16 %v97
  %v637 = vunpack.c.l.b16 %v98
  %v638 = vunpack.c.h.b16 %v98
  %v639 = vunpack.c.l.b16 %v99
  %v640 = vunpack.c.h.b16 %v99
  %v641 = vunpack.c.l.b16 %v100
  %v642 = vunpack.c.h.b16 %v100
  %v643 = vunpack.c.l.b16 %v101
  %v644 = vunpack.c.h.b16 %v101
  %v645 = vunpack.c.l.b16 %v102
  %v646 = vunpack.c.h.b16 %v102
  %v647 = vunpack.c.l.b16 %v103
  %v648 = vunpack.c.h.b16 %v103
  %v649 = vunpack.c.l.b16 %v104
  %v650 = vunpack.c.h.b16 %v104
  %v651 = vunpack.c.l.b16 %v105
  %v652 = vunpack.c.h.b16 %v105
  %v653 = vunpack.c.l.b16 %v106
  %v654 = vunpack.c.h.b16 %v106
  %v655 = vunpack.c.l.b16 %v107
  %v656 = vunpack.c.h.b16 %v107
  %v657 = vunpack.c.l.b16 %v108
  %v658 = vunpack.c.h.b16 %v108
  %v659 = vunpack.c.l.b16 %v109
  %v660 = vunpack.c.h.b16 %v109
  %v661 = vunpack.c.l.b16 %v110
  %v662 = vunpack.c.h.b16 %v110
  %v663 = vunpack.c.l.b16 %v111
  %v664 = vunpack.c.h.b16 %v111
  %v665 = vunpack.c.l.b16 %v112
  %v666 = vunpack.c.h.b16 %v112
  %v667 = vunpack.c.l.b16 %v113
  %v668 = vunpack.c.h.b16 %v113
  %v669 = vunpack.c.l.b16 %v114
  %v670 = vunpack.c.h.b16 %v114
  %v671 = vunpack.c.l.b16 %v115
  %v672 = vunpack.c.h.b16 %v115
  %v673 = vunpack.c.l.b16 %v116
  %v674 = vunpack.c.h.b16 %v116
  %v675 = vunpack.c.l.b16 %v117
  %v676 = vunpack.c.h.b16 %v117
  %v677 = vunpack.c.l.b16 %v118
  %v678 = vunpack.c.h.b16 %v118
  %v679 = vunpack.c.l.b16 %v119
  %v680 = vunpack.c.h.b16 %v119
  %v681 = vunpack.c.l.b16 %v120
  %v682 = vunpack.c.h.b16 %v120
  %v683 = vunpack.c.l.b16 %v121
  %v684 = vunpack.c.h.b16 %v121
  %v685 = vunpack.c.l.b16 %v122
  %v686 = vunpack.c.h.b16 %v122
  %v687 = vunpack.c.l.b16 %v123
  %v688 = vunpack.c.h.b16 %v123
  %v689 = vunpack.c.l.b16 %v124
  %v690 = vunpack.c.h.b16 %v124
  %v691 = vunpack.c.l.b16 %v125
  %v692 = vunpack.c.h.b16 %v125
  %v693 = vunpack.c.l.b16 %v126
  %v694 = vunpack.c.h.b16 %v126
  %v695 = vunpack.c.l.b16 %v127
  %v696 = vunpack.c.h.b16 %v127
  %v697 = vunpack.c.l.b16 %v128
  %v698 = vunpack.c.h.b16 %v128
  %v699 = vunpack.c.l.b16 %v129
  %v700 = vunpack.c.h.b16 %v129
  %v701 = vunpack.c.l.b16 %v130
  %v702 = vunpack.c.h.b16 %v130
  %v703 = vunpack.c.l.b16 %v131
  %v704 = vunpack.c.h.b16 %v131
  %v705 = vunpack.c.l.b16 %v132
  %v706 = vunpack.c.h.b16 %v132
  %v707 = vunpack.c.l.b16 %v133
  %v708 = vunpack.c.h.b16 %v133
  %v709 = vunpack.c.l.b16 %v134
  %v710 = vunpack.c.h.b16 %v134
  %v711 = vunpack.c.l.b16 %v135
  %v712 = vunpack.c.h.b16 %v135
  %v713 = vunpack.c.l.b16 %v136
  %v714 = vunpack.c.h.b16 %v136
  %v715 = vunpack.c.l.b16 %v137
  %v716 = vunpack.c.h.b16 %v137
  %v717 = vunpack.c.l.b16 %v138
  %v718 = vunpack.c.h.b16 %v138
  %v719 = vunpack.c.l.b16 %v139
  %v720 = vunpack.c.h.b16 %v139
  %v721 = vunpack.c.l.b16 %v140
  %v722 = vunpack.c.h.b16 %v140
  %v723 = vunpack.c.l.b16 %v141
  %v724 = vunpack.c.h.b16 %v141
  %v725 = vunpack.c.l.b16 %v142
  %v726 = vunpack.c.h.b16 %v142
  %v727 = vunpack.c.l.b16 %v143
  %v728 = vunpack.c.h.b16 %v143
  %v729 = vunpack.c.l.b16 %v144
  %v730 = vunpack.c.h.b16 %v144
  %v731 = vunpack.c.l.b16 %v145
  %v732 = vunpack.c.h.b16 %v145
  %v733 = vunpack.c.l.b16 %v146
  %v734 = vunpack.c.h.b16 %v146
  %v735 = vunpack.c.l.b16 %v147
  %v736 = vunpack.c.h.b16 %v147
  %v737 = vunpack.c.l.b16 %v148
  %v738 = vunpack.c.h.b16 %v148
  %v739 = vunpack.c.l.b16 %v149
  %v740 = vunpack.c.h.b16 %v149
  %v741 = vunpack.c.l.b16 %v150
  %v742 = vunpack.c.h.b16 %v150
  %v743 = vunpack.c.l.b16 %v151
  %v744 = vunpack.c.h.b16 %v151
  %v745 = vunpack.c.l.b16 %v152
  %v746 = vunpack.c.h.b16 %v152
  %v747 = vunpack.c.l.b16 %v153
  %v748 = vunpack.c.h.b16 %v153
  %v749 = vunpack.c.l.b16 %v154
  %v750 = vunpack.c.h.b16 %v154
  %v751 = vunpack.c.l.b16 %v155
  %v752 = vunpack.c.h.b16 %v155
  %v753 = vunpack.c.l.b16 %v156
  %v754 = vunpack.c.h.b16 %v156
  %v755 = vunpack.c.l.b16 %v157
  %v756 = vunpack.c.h.b16 %v157
  %v757 = vunpack.c.l.b16 %v158
  %v758 = vunpack.c.h.b16 %v158
  %v759 = vunpack.c.l.b16 %v159
  %v760 = vunpack.c.h.b16 %v159
  %v761 = vunpack.c.l.b16 %v160
  %v762 = vunpack.c.h.b16 %v160
  %v763 = vunpack.c.l.b16 %v161
  %v764 = vunpack.c.h.b16 %v161
  %v765 = vunpack.c.l.b16 %v162
  %v766 = vunpack.c.h.b16 %v162
  %v767 = vunpack.c.l.b16 %v163
  %v768 = vunpack.c.h.b16 %v163
  %v769 = vunpack.c.l.b16 %v164
  %v770 = vunpack.c.h.b16 %v164
  %v771 = vunpack.c.l.b16 %v165
  %v772 = vunpack.c.h.b16 %v165
  %v773 = vunpack.c.l.b16 %v166
  %v774 = vunpack.c.h.b16 %v166
  %v775 = vunpack.c.l.b16 %v167
  %v776 = vunpack.c.h.b16 %v167
  %v777 = vunpack.c.l.b16 %v168
  %v778 = vunpack.c.h.b16 %v168
  %v779 = vunpack.c.l.b16 %v169
  %v780 = vunpack.c.h.b16 %v169
  %v781 = vunpack.c.l.b16 %v170
  %v782 = vunpack.c.h.b16 %v170
  %v783 = vunpack.c.l.b16 %v171
  %v784 = vunpack.c.h.b16 %v171
  %v785 = vunpack.c.l.b16 %v172
  %v786 = vunpack.c.h.b16 %v172
  %v787 = vunpack.c.l.b16 %v173
  %v788 = vunpack.c.h.b16 %v173
  %v789 = vunpack.c.l.b16 %v174
  %v790 = vunpack.c.h.b16 %v174
  %v791 = vunpack.c.l.b16 %v175
  %v792 = vunpack.c.h.b16 %v175
  %v793 = vunpack.c.l.b16 %v176
  %v794 = vunpack.c.h.b16 %v176
  %v795 = vunpack.c.l.b16 %v177
  %v796 = vunpack.c.h.b16 %v177
  %v797 = vunpack.c.l.b16 %v178
  %v798 = vunpack.c.h.b16 %v178
  %v799 = vunpack.c.l.b16 %v179
  %v800 = vunpack.c.h.b16 %v179
  %v801 = vunpack.c.l.b16 %v180
  %v802 = vunpack.c.h.b16 %v180
  %v803 = vunpack.c.l.b16 %v181
  %v804 = vunpack.c.h.b16 %v181
  %v805 = vunpack.c.l.b16 %v182
  %v806 = vunpack.c.h.b16 %v182
  %v807 = vunpack.c.l.b16 %v183
  %v808 = vunpack.c.h.b16 %v183
  %v809 = vunpack.c.l.b16 %v184
  %v810 = vunpack.c.h.b16 %v184
  %v811 = vunpack.c.l.b16 %v185
  %v812 = vunpack.c.h.b16 %v185
  %v813 = vunpack.c.l.b16 %v186
  %v814 = vunpack.c.h.b16 %v186
  %v815 = vunpack.c.l.b16 %v187
  %v816 = vunpack.c.h.b16 %v187
  %v817 = vunpack.c.l.b16 %v188
  %v818 = vunpack.c.h.b16 %v188
  %v819 = vunpack.c.l.b16 %v189
  %v820 = vunpack.c.h.b16 %v189
  %v821 = vunpack.c.l.b16 %v190
  %v822 = vunpack.c.h.b16 %v190
  %v823 = vunpack.c.l.b16 %v191
  %v824 = vunpack.c.h.b16 %v191
  %v825 = vunpack.c.l.b16 %v192
  %v826 = vunpack.c.h.b16 %v192
  %v827 = vunpack.c.l.b16 %v193
  %v828 = vunpack.c.h.b16 %v193
  %v829 = vunpack.c.l.b16 %v194
  %v830 = vunpack.c.h.b16 %v194
  %v831 = vunpack.c.l.b16 %v195
  %v832 = vunpack.c.h.b16 %v195
  %v833 = vunpack.c.l.b16 %v196
  %v834 = vunpack.c.h.b16 %v196
  %v835 = vunpack.c.l.b16 %v197
  %v836 = vunpack.c.h.b16 %v197
  %v837 = vunpack.c.l.b16 %v198
  %v838 = vunpack.c.h.b16 %v198
  %v839 = vunpack.c.l.b16 %v199
  %v840 = vunpack.c.h.b16 %v199
  %v841 = vunpack.c.l.b16 %v200
  %v842 = vunpack.c.h.b16 %v200
  %v843 = vunpack.c.l.b16 %v201
  %v844 = vunpack.c.h.b16 %v201
  %v845 = vunpack.c.l.b16 %v202
  %v846 = vunpack.c.h.b16 %v202
  %v847 = vunpack.c.l.b16 %v203
  %v848 = vunpack.c.h.b16 %v203
  %v849 = vunpack.c.l.b16 %v204
  %v850 = vunpack.c.h.b16 %v204
  %v851 = vunpack.c.l.b16 %v205
  %v852 = vunpack.c.h.b16 %v205
  %v853 = vunpack.c.l.b16 %v206
  %v854 = vunpack.c.h.b16 %v206
  %v855 = vunpack.c.l.b16 %v207
  %v856 = vunpack.c.h.b16 %v207
  %v857 = vunpack.c.l.b16 %v208
  %v858 = vunpack.c.h.b16 %v208
  %v859 = vunpack.c.l.b16 %v209
  %v860 = vunpack.c.h.b16 %v209
  %v861 = vunpack.c.l.b16 %v210
  %v862 = vunpack.c.h.b16 %v210
  %v863 = vunpack.c.l.b16 %v211
  %v864 = vunpack.c.h.b16 %v211
  %v865 = vunpack.c.l.b16 %v212
  %v866 = vunpack.c.h.b16 %v212
  %v867 = vunpack.c.l.b16 %v213
  %v868 = vunpack.c.h.b16 %v213
  %v869 = vunpack.c.l.b16 %v214
  %v870 = vunpack.c.h.b16 %v214
  %v871 = vunpack.c.l.b16 %v215
  %v872 = vunpack.c.h.b16 %v215
  %v873 = vunpack.c.l.b16 %v216
  %v874 = vunpack.c.h.b16 %v216
  %v875 = vunpack.c.l.b16 %v217
  %v876 = vunpack.c.h.b16 %v217
  %v877 = vunpack.c.l.b16 %v218
  %v878 = vunpack.c.h.b16 %v218
  %v879 = vunpack.c.l.b16 %v219
  %v880 = vunpack.c.h.b16 %v219
  %v881 = vunpack.c.l.b16 %v220
  %v882 = vunpack.c.h.b16 %v220
  %v883 = vunpack.c.l.b16 %v221
  %v884 = vunpack.c.h.b16 %v221
  %v885 = vunpack.c.l.b16 %v222
  %v886 = vunpack.c.h.b16 %v222
  %v887 = vunpack.c.l.b16 %v223
  %v888 = vunpack.c.h.b16 %v223
  %v889 = vunpack.c.l.b16 %v224
  %v890 = vunpack.c.h.b16 %v224
  %v891 = vunpack.c.l.b16 %v225
  %v892 = vunpack.c.h.b16 %v225
  %v893 = vunpack.c.l.b16 %v226
  %v894 = vunpack.c.h.b16 %v226
  %v895 = vunpack.c.l.b16 %v227
  %v896 = vunpack.c.h.b16 %v227
  %v897 = vunpack.c.l.b16 %v228
  %v898 = vunpack.c.h.b16 %v228
  %v899 = vunpack.c.l.b16 %v229
  %v900 = vunpack.c.h.b16 %v229
  %v901 = vunpack.c.l.b16 %v230
  %v902 = vunpack.c.h.b16 %v230
  %v903 = vunpack.c.l.b16 %v231
  %v904 = vunpack.c.h.b16 %v231
  %v905 = vunpack.c.l.b16 %v232
  %v906 = vunpack.c.h.b16 %v232
  %v907 = vunpack.c.l.b16 %v233
  %v908 = vunpack.c.h.b16 %v233
  %v909 = vunpack.c.l.b16 %v234
  %v910 = vunpack.c.h.b16 %v234
  %v911 = vunpack.c.l.b16 %v235
  %v912 = vunpack.c.h.b16 %v235
  %v913 = vunpack.c.l.b16 %v236
  %v914 = vunpack.c.h.b16 %v236
  %v915 = vunpack.c.l.b16 %v237
  %v916 = vunpack.c.h.b16 %v237
  %v917 = vunpack.c.l.b16 %v238
  %v918 = vunpack.c.h.b16 %v238
  %v919 = vunpack.c.l.b16 %v239
  %v920 = vunpack.c.h.b16 %v239
  %v921 = vunpack.c.l.b16 %v240
  %v922 = vunpack.c.h.b16 %v240
  %v923 = vunpack.c.l.b16 %v241
  %v924 = vunpack.c.h.b16 %v241
  %v925 = vunpack.c.l.b16 %v242
  %v926 = vunpack.c.h.b16 %v242
  %v927 = vunpack.c.l.b16 %v243
  %v928 = vunpack.c.h.b16 %v243
  %v929 = vunpack.c.l.b16 %v244
  %v930 = vunpack.c.h.b16 %v244
  %v931 = vunpack.c.l.b16 %v245
  %v932 = vunpack.c.h.b16 %v245
  %v933 = vunpack.c.l.b16 %v246
  %v934 = vunpack.c.h.b16 %v246
  %v935 = vunpack.c.l.b16 %v247
  %v936 = vunpack.c.h.b16 %v247
  %v937 = vunpack.c.l.b16 %v248
  %v938 = vunpack.c.h.b16 %v248
  %v939 = vunpack.c.l.b16 %v249
  %v940 = vunpack.c.h.b16 %v249
  %v941 = vunpack.c.l.b16 %v250
  %v942 = vunpack.c.h.b16 %v250
  %v943 = vunpack.c.l.b16 %v251
  %v944 = vunpack.c.h.b16 %v251
  %v945 = vunpack.c.l.b16 %v252
  %v946 = vunpack.c.h.b16 %v252
  %v947 = vunpack.c.l.b16 %v253
  %v948 = vunpack.c.h.b16 %v253
  %v949 = vunpack.c.l.b16 %v254
  %v950 = vunpack.c.h.b16 %v254
  %v951 = vunpack.c.l.b16 %v255
  %v952 = vunpack.c.h.b16 %v255
  %v953 = vunpack.c.l.b16 %v256
  %v954 = vunpack.c.h.b16 %v256
  %v955 = vunpack.c.l.b16 %v257
  %v956 = vunpack.c.h.b16 %v257
  %v957 = vunpack.c.l.b16 %v258
  %v958 = vunpack.c.h.b16 %v258
  %v959 = vunpack.c.l.b16 %v259
  %v960 = vunpack.c.h.b16 %v259
  %v961 = vunpack.c.l.b16 %v260
  %v962 = vunpack.c.h.b16 %v260
  %v963 = vunpack.c.l.b16 %v261
  %v964 = vunpack.c.h.b16 %v261
  %v965 = vunpack.c.l.b16 %v262
  %v966 = vunpack.c.h.b16 %v262
  %v967 = vunpack.c.l.b16 %v263
  %v968 = vunpack.c.h.b16 %v263
  %v969 = vunpack.c.l.b16 %v264
  %v970 = vunpack.c.h.b16 %v264
  %v971 = vunpack.c.l.b16 %v265
  %v972 = vunpack.c.h.b16 %v265
  %v973 = vunpack.c.l.b16 %v266
  %v974 = vunpack.c.h.b16 %v266
  %v975 = vunpack.c.l.b16 %v267
  %v976 = vunpack.c.h.b16 %v267
  %v977 = vunpack.c.l.b16 %v268
  %v978 = vunpack.c.h.b16 %v268
  %v979 = vunpack.c.l.b16 %v269
  %v980 = vunpack.c.h.b16 %v269
  %v981 = vunpack.c.l.b16 %v270
  %v982 = vunpack.c.h.b16 %v270
  %v983 = vunpack.c.l.b16 %v271
  %v984 = vunpack.c.h.b16 %v271
  %v985 = vunpack.c.l.b16 %v272
  %v986 = vunpack.c.h.b16 %v272
  %v987 = vunpack.c.l.b16 %v273
  %v988 = vunpack.c.h.b16 %v273
  %v989 = vunpack.c.l.b16 %v274
  %v990 = vunpack.c.h.b16 %v274
  %v991 = vunpack.c.l.b16 %v275
  %v992 = vunpack.c.h.b16 %v275
  %v993 = vunpack.c.l.b16 %v276
  %v994 = vunpack.c.h.b16 %v276
  %v995 = vunpack.c.l.b16 %v277
  %v996 = vunpack.c.h.b16 %v277
  %v997 = vunpack.c.l.b16 %v278
  %v998 = vunpack.c.h.b16 %v278
  %v999 = vunpack.c.l.b16 %v279
  %v1000 = vunpack.c.h.b16 %v279
  %v1001 = vunpack.c.l.b16 %v280
  %v1002 = vunpack.c.h.b16 %v280
  %v1003 = vunpack.c.l.b16 %v281
  %v1004 = vunpack.c.h.b16 %v281
  %v1005 = vunpack.c.l.b16 %v282
  %v1006 = vunpack.c.h.b16 %v282
  %v1007 = vunpack.c.l.b16 %v283
  %v1008 = vunpack.c.h.b16 %v283
  %v1009 = vunpack.c.l.b16 %v284
  %v1010 = vunpack.c.h.b16 %v284
  %v1011 = vunpack.c.l.b16 %v285
  %v1012 = vunpack.c.h.b16 %v285
  %v1013 = vunpack.c.l.b16 %v286
  %v1014 = vunpack.c.h.b16 %v286
  %v1015 = vunpack.c.l.b16 %v287
  %v1016 = vunpack.c.h.b16 %v287
  %v1017 = vunpack.c.l.b16 %v288
  %v1018 = vunpack.c.h.b16 %v288
  %v1019 = vunpack.c.l.b16 %v289
  %v1020 = vunpack.c.h.b16 %v289
  %v1021 = vunpack.c.l.b16 %v290
  %v1022 = vunpack.c.h.b16 %v290
  %v1023 = vunpack.c.l.b16 %v291
  %v1024 = vunpack.c.h.b16 %v291
  %v1025 = vunpack.c.l.b16 %v292
  %v1026 = vunpack.c.h.b16 %v292
  %v1027 = vunpack.c.l.b16 %v293
  %v1028 = vunpack.c.h.b16 %v293
  %v1029 = vunpack.c.l.b16 %v294
  %v1030 = vunpack.c.h.b16 %v294
  %v1031 = vunpack.c.l.b16 %v295
  %v1032 = vunpack.c.h.b16 %v295
  %v1033 = vunpack.c.l.b16 %v296
  %v1034 = vunpack.c.h.b16 %v296
  %v1035 = vunpack.c.l.b16 %v297
  %v1036 = vunpack.c.h.b16 %v297
  %v1037 = vunpack.c.l.b16 %v298
  %v1038 = vunpack.c.h.b16 %v298
  %v1039 = vunpack.c.l.b16 %v299
  %v1040 = vunpack.c.h.b16 %v299
  %v1041 = vunpack.c.l.b16 %v300
  %v1042 = vunpack.c.h.b16 %v300
  %v1043 = vunpack.c.l.b16 %v301
  %v1044 = vunpack.c.h.b16 %v301
  %v1045 = vunpack.c.l.b16 %v302
  %v1046 = vunpack.c.h.b16 %v302
  %v1047 = vunpack.c.l.b16 %v303
  %v1048 = vunpack.c.h.b16 %v303
  %v1049 = vunpack.c.l.b16 %v304
  %v1050 = vunpack.c.h.b16 %v304
  %v1051 = vunpack.c.l.b16 %v305
  %v1052 = vunpack.c.h.b16 %v305
  %v1053 = vunpack.c.l.b16 %v306
  %v1054 = vunpack.c.h.b16 %v306
  %v1055 = vunpack.c.l.b16 %v307
  %v1056 = vunpack.c.h.b16 %v307
  %v1057 = vunpack.c.l.b16 %v308
  %v1058 = vunpack.c.h.b16 %v308
  %v1059 = vunpack.c.l.b16 %v309
  %v1060 = vunpack.c.h.b16 %v309
  %v1061 = vunpack.c.l.b16 %v310
  %v1062 = vunpack.c.h.b16 %v310
  %v1063 = vunpack.c.l.b16 %v311
  %v1064 = vunpack.c.h.b16 %v311
  %v1065 = vunpack.c.l.b16 %v312
  %v1066 = vunpack.c.h.b16 %v312
  %v1067 = vunpack.c.l.b16 %v313
  %v1068 = vunpack.c.h.b16 %v313
  %v1069 = vunpack.c.l.b16 %v314
  %v1070 = vunpack.c.h.b16 %v314
  %v1071 = vunpack.c.l.b16 %v315
  %v1072 = vunpack.c.h.b16 %v315
  %v1073 = vunpack.c.l.b16 %v316
  %v1074 = vunpack.c.h.b16 %v316
  %v1075 = vunpack.c.l.b16 %v317
  %v1076 = vunpack.c.h.b16 %v317
  %v1077 = vunpack.c.l.b16 %v318
  %v1078 = vunpack.c.h.b16 %v318
  %v1079 = vunpack.c.l.b16 %v319
  %v1080 = vunpack.c.h.b16 %v319
  %v1081 = vunpack.c.l.b16 %v320
  %v1082 = vunpack.c.h.b16 %v320
  %v1083 = vunpack.c.l.b16 %v321
  %v1084 = vunpack.c.h.b16 %v321
  %v1085 = vunpack.c.l.b16 %v322
  %v1086 = vunpack.c.h.b16 %v322
  %v1087 = vunpack.c.l.b16 %v323
  %v1088 = vunpack.c.h.b16 %v323
  %v1089 = vunpack.c.l.b16 %v324
  %v1090 = vunpack.c.h.b16 %v324
  %v1091 = vunpack.c.l.b16 %v325
  %v1092 = vunpack.c.h.b16 %v325
  %v1093 = vunpack.c.l.b16 %v326
  %v1094 = vunpack.c.h.b16 %v326
  %v1095 = vunpack.c.l.b16 %v327
  %v1096 = vunpack.c.h.b16 %v327
  %v1097 = vunpack.c.l.b16 %v328
  %v1098 = vunpack.c.h.b16 %v328
  %v1099 = vunpack.c.l.b16 %v329
  %v1100 = vunpack.c.h.b16 %v329
  %v1101 = vunpack.c.l.b16 %v330
  %v1102 = vunpack.c.h.b16 %v330
  %v1103 = vunpack.c.l.b16 %v331
  %v1104 = vunpack.c.h.b16 %v331
  %v1105 = vunpack.c.l.b16 %v332
  %v1106 = vunpack.c.h.b16 %v332
  %v1107 = vunpack.c.l.b16 %v333
  %v1108 = vunpack.c.h.b16 %v333
  %v1109 = vunpack.c.l.b16 %v334
  %v1110 = vunpack.c.h.b16 %v334
  %v1111 = vunpack.c.l.b16 %v335
  %v1112 = vunpack.c.h.b16 %v335
  %v1113 = vunpack.c.l.b16 %v336
  %v1114 = vunpack.c.h.b16 %v336
  %v1115 = vunpack.c.l.b16 %v337
  %v1116 = vunpack.c.h.b16 %v337
  %v1117 = vunpack.c.l.b16 %v338
  %v1118 = vunpack.c.h.b16 %v338
  %v1119 = vunpack.c.l.b16 %v339
  %v1120 = vunpack.c.h.b16 %v339
  %v1121 = vunpack.c.l.b16 %v340
  %v1122 = vunpack.c.h.b16 %v340
  %v1123 = vunpack.c.l.b16 %v341
  %v1124 = vunpack.c.h.b16 %v341
  %v1125 = vunpack.c.l.b16 %v342
  %v1126 = vunpack.c.h.b16 %v342
  %v1127 = vunpack.c.l.b16 %v343
  %v1128 = vunpack.c.h.b16 %v343
  %v1129 = vunpack.c.l.b16 %v344
  %v1130 = vunpack.c.h.b16 %v344
  %v1131 = vunpack.c.l.b16 %v345
  %v1132 = vunpack.c.h.b16 %v345
  %v1133 = vunpack.c.l.b16 %v346
  %v1134 = vunpack.c.h.b16 %v346
  %v1135 = vunpack.c.l.b16 %v347
  %v1136 = vunpack.c.h.b16 %v347
  %v1137 = vunpack.c.l.b16 %v348
  %v1138 = vunpack.c.h.b16 %v348
  %v1139 = vpack.c.b16 %v631, %v627
  %v1140 = vpack.c.b16 %v632, %v628
  %v1141 = vpack.c.b16 %v633, %v629
  %v1142 = vpack.c.b16 %v634, %v630
  %v1143 = vpack.c.b16 %v639, %v635
  %v1144 = vpack.c.b16 %v640, %v636
  %v1145 = vpack.c.b16 %v641, %v637
  %v1146 = vpack.c.b16 %v642, %v638
  %v1147 = vpack.c.b16 %v647, %v643
  %v1148 = vpack.c.b16 %v648, %v644
  %v1149 = vpack.c.b16 %v649, %v645
  %v1150 = vpack.c.b16 %v650, %v646
  %v1151 = vpack.c.b16 %v655, %v651
  %v1152 = vpack.c.b16 %v656, %v652
  %v1153 = vpack.c.b16 %v657, %v653
  %v1154 = vpack.c.b16 %v658, %v654
  %v1155 = vpack.c.b16 %v663, %v659
  %v1156 = vpack.c.b16 %v664, %v660
  %v1157 = vpack.c.b16 %v665, %v661
  %v1158 = vpack.c.b16 %v666, %v662
  %v1159 = vpack.c.b16 %v671, %v667
  %v1160 = vpack.c.b16 %v672, %v668
  %v1161 = vpack.c.b16 %v673, %v669
  %v1162 = vpack.c.b16 %v674, %v670
  %v1163 = vpack.c.b16 %v679, %v675
  %v1164 = vpack.c.b16 %v680, %v676
  %v1165 = vpack.c.b16 %v681, %v677
  %v1166 = vpack.c.b16 %v682, %v678
  %v1167 = vpack.c.b16 %v687, %v683
  %v1168 = vpack.c.b16 %v688, %v684
  %v1169 = vpack.c.b16 %v689, %v685
  %v1170 = vpack.c.b16 %v690, %v686
  %v1171 = vpack.c.b16 %v695, %v691
  %v1172 = vpack.c.b16 %v696, %v692
  %v1173 = vpack.c.b16 %v697, %v693
  %v1174 = vpack.c.b16 %v698, %v694
  %v1175 = vpack.c.b16 %v703, %v699
  %v1176 = vpack.c.b16 %v704, %v700
  %v1177 = vpack.c.b16 %v705, %v701
  %v1178 = vpack.c.b16 %v706, %v702
  %v1179 = vpack.c.b16 %v711, %v707
  %v1180 = vpack.c.b16 %v712, %v708
  %v1181 = vpack.c.b16 %v713, %v709
  %v1182 = vpack.c.b16 %v714, %v710
  %v1183 = vpack.c.b16 %v719, %v715
  %v1184 = vpack.c.b16 %v720, %v716
  %v1185 = vpack.c.b16 %v721, %v717
  %v1186 = vpack.c.b16 %v722, %v718
  %v1187 = vpack.c.b16 %v727, %v723
  %v1188 = vpack.c.b16 %v728, %v724
  %v1189 = vpack.c.b16 %v729, %v725
  %v1190 = vpack.c.b16 %v730, %v726
  %v1191 = vpack.c.b16 %v735, %v731
  %v1192 = vpack.c.b16 %v736, %v732
  %v1193 = vpack.c.b16 %v737, %v733
  %v1194 = vpack.c.b16 %v738, %v734
  %v1195 = vpack.c.b16 %v743, %v739
  %v1196 = vpack.c.b16 %v744, %v740
  %v1197 = vpack.c.b16 %v745, %v741
  %v1198 = vpack.c.b16 %v746, %v742
  %v1199 = vpack.c.b16 %v751, %v747
  %v1200 = vpack.c.b16 %v752, %v748
  %v1201 = vpack.c.b16 %v753, %v749
  %v1202 = vpack.c.b16 %v754, %v750
  %v1203 = vpack.c.b16 %v759, %v755
  %v1204 = vpack.c.b16 %v760, %v756
  %v1205 = vpack.c.b16 %v761, %v757
  %v1206 = vpack.c.b16 %v762, %v758
  %v1207 = vpack.c.b16 %v767, %v763
  %v1208 = vpack.c.b16 %v768, %v764
  %v1209 = vpack.c.b16 %v769, %v765
  %v1210 = vpack.c.b16 %v770, %v766
  %v1211 = vpack.c.b16 %v775, %v771
  %v1212 = vpack.c.b16 %v776, %v772
  %v1213 = vpack.c.b16 %v777, %v773
  %v1214 = vpack.c.b16 %v778, %v774
  %v1215 = vpack.c.b16 %v783, %v779
  %v1216 = vpack.c.b16 %v784, %v780
  %v1217 = vpack.c.b16 %v785, %v781
  %v1218 = vpack.c.b16 %v786, %v782
  %v1219 = vpack.c.b16 %v791, %v787
  %v1220 = vpack.c.b16 %v792, %v788
  %v1221 = vpack.c.b16 %v793, %v789
  %v1222 = vpack.c.b16 %v794, %v790
  %v1223 = vpack.c.b16 %v799, %v795
  %v1224 = vpack.c.b16 %v800, %v796
  %v1225 = vpack.c.b16 %v801, %v797
  %v1226 = vpack.c.b16 %v802, %v798
  %v1227 = vpack.c.b16 %v807, %v803
  %v1228 = vpack.c.b16 %v808, %v804
  %v1229 = vpack.c.b16 %v809, %v805
  %v1230 = vpack.c.b16 %v810, %v806
  %v1231 = vpack.c.b16 %v815, %v811
  %v1232 = vpack.c.b16 %v816, %v812
  %v1233 = vpack.c.b16 %v817, %v813
  %v1234 = vpack.c.b16 %v818, %v814
  %v1235 = vpack.c.b16 %v823, %v819
  %v1236 = vpack.c.b16 %v824, %v820
  %v1237 = vpack.c.b16 %v825, %v821
  %v1238 = vpack.c.b16 %v826, %v822
  %v1239 = vpack.c.b16 %v831, %v827
  %v1240 = vpack.c.b16 %v832, %v828
  %v1241 = vpack.c.b16 %v833, %v829
  %v1242 = vpack.c.b16 %v834, %v830
  %v1243 = vpack.c.b16 %v839, %v835
  %v1244 = vpack.c.b16 %v840, %v836
  %v1245 = vpack.c.b16 %v841, %v837
  %v1246 = vpack.c.b16 %v842, %v838
  %v1247 = vpack.c.b16 %v847, %v843
  %v1248 = vpack.c.b16 %v848, %v844
  %v1249 = vpack.c.b16 %v849, %v845
  %v1250 = vpack.c.b16 %v850, %v846
  %v1251 = vpack.c.b16 %v855, %v851
  %v1252 = vpack.c.b16 %v856, %v852
  %v1253 = vpack.c.b16 %v857, %v853
  %v1254 = vpack.c.b16 %v858, %v854
  %v1255 = vpack.c.b16 %v863, %v859
  %v1256 = vpack.c.b16 %v864, %v860
  %v1257 = vpack.c.b16 %v865, %v861
  %v1258 = vpack.c.b16 %v866, %v862
  %v1259 = vpack.c.b16 %v871, %v867
  %v1260 = vpack.c.b16 %v872, %v868
  %v1261 = vpack.c.b16 %v873, %v869
  %v1262 = vpack.c.b16 %v874, %v870
  %v1263 = vpack.c.b16 %v879, %v875
  %v1264 = vpack.c.b16 %v880, %v876
  %v1265 = vpack.c.b16 %v881, %v877
  %v1266 = vpack.c.b16 %v882, %v878
  %v1267 = vpack.c.b16 %v887, %v883
  %v1268 = vpack.c.b16 %v888, %v884
  %v1269 = vpack.c.b16 %v889, %v885
  %v1270 = vpack.c.b16 %v890, %v886
  %v1271 = vpack.c.b16 %v895, %v891
  %v1272 = vpack.c.b16 %v896, %v892
  %v1273 = vpack.c.b16 %v897, %v893
  %v1274 = vpack.c.b16 %v898, %v894
  %v1275 = vpack.c.b16 %v903, %v899
  %v1276 = vpack.c.b16 %v904, %v900
  %v1277 = vpack.c.b16 %v905, %v901
  %v1278 = vpack.c.b16 %v906, %v902
  %v1279 = vpack.c.b16 %v911, %v907
  %v1280 = vpack.c.b16 %v912, %v908
  %v1281 = vpack.c.b16 %v913, %v909
  %v1282 = vpack.c.b16 %v914, %v910
  %v1283 = vpack.c.b16 %v919, %v915
  %v1284 = vpack.c.b16 %v920, %v916
  %v1285 = vpack.c.b16 %v921, %v917
  %v1286 = vpack.c.b16 %v922, %v918
  %v1287 = vpack.c.b16 %v927, %v923
  %v1288 = vpack.c.b16 %v928, %v924
  %v1289 = vpack.c.b16 %v929, %v925
  %v1290 = vpack.c.b16 %v930, %v926
  %v1291 = vpack.c.b16 %v935, %v931
  %v1292 = vpack.c.b16 %v936, %v932
  %v1293 = vpack.c.b16 %v937, %v933
  %v1294 = vpack.c.b16 %v938, %v934
  %v1295 = vpack.c.b16 %v943, %v939
  %v1296 = vpack.c.b16 %v944, %v940
  %v1297 = vpack.c.b16 %v945, %v941
  %v1298 = vpack.c.b16 %v946, %v942
  %v1299 = vpack.c.b16 %v951, %v947
  %v1300 = vpack.c.b16 %v952, %v948
  %v1301 = vpack.c.b16 %v953, %v949
  %v1302 = vpack.c.b16 %v954, %v950
  %v1303 = vpack.c.b16 %v959, %v955
  %v1304 = vpack.c.b16 %v960, %v956
  %v1305 = vpack.c.b16 %v961, %v957
  %v1306 = vpack.c.b16 %v962, %v958
  %v1307 = vpack.c.b16 %v967, %v963
  %v1308 = vpack.c.b16 %v968, %v964
  %v1309 = vpack.c.b16 %v969, %v965
  %v1310 = vpack.c.b16 %v970, %v966
  %v1311 = vpack.c.b16 %v975, %v971
  %v1312 = vpack.c.b16 %v976, %v972
  %v1313 = vpack.c.b16 %v977, %v973
  %v1314 = vpack.c.b16 %v978, %v974
  %v1315 = vpack.c.b16 %v983, %v979
  %v1316 = vpack.c.b16 %v984, %v980
  %v1317 = vpack.c.b16 %v985, %v981
  %v1318 = vpack.c.b16 %v986, %v982
  %v1319 = vpack.c.b16 %v991, %v987
  %v1320 = vpack.c.b16 %v992, %v988
  %v1321 = vpack.c.b16 %v993, %v989
  %v1322 = vpack.c.b16 %v994, %v990
  %v1323 = vpack.c.b16 %v999, %v995
  %v1324 = vpack.c.b16 %v1000, %v996
  %v1325 = vpack.c.b16 %v1001, %v997
  %v1326 = vpack.c.b16 %v1002, %v998
  %v1327 = vpack.c.b16 %v1007, %v1003
  %v1328 = vpack.c.b16 %v1008, %v1004
  %v1329 = vpack.c.b16 %v1009, %v1005
  %v1330 = vpack.c.b16 %v1010, %v1006
  %v1331 = vpack.c.b16 %v1015, %v1011
  %v1332 = vpack.c.b16 %v1016, %v1012
  %v1333 = vpack.c.b16 %v1017, %v1013
  %v1334 = vpack.c.b16 %v1018, %v1014
  %v1335 = vpack.c.b16 %v1023, %v1019
  %v1336 = vpack.c.b16 %v1024, %v1020
  %v1337 = vpack.c.b16 %v1025, %v1021
  %v1338 = vpack.c.b16 %v1026, %v1022
  %v1339 = vpack.c.b16 %v1031, %v1027
  %v1340 = vpack.c.b16 %v1032, %v1028
  %v1341 = vpack.c.b16 %v1033, %v1029
  %v1342 = vpack.c.b16 %v1034, %v1030
  %v1343 = vpack.c.b16 %v1039, %v1035
  %v1344 = vpack.c.b16 %v1040, %v1036
  %v1345 = vpack.c.b16 %v1041, %v1037
  %v1346 = vpack.c.b16 %v1042, %v1038
  %v1347 = vpack.c.b16 %v1047, %v1043
  %v1348 = vpack.c.b16 %v1048, %v1044
  %v1349 = vpack.c.b16 %v1049, %v1045
  %v1350 = vpack.c.b16 %v1050, %v1046
  %v1351 = vpack.c.b16 %v1055, %v1051
  %v1352 = vpack.c.b16 %v1056, %v1052
  %v1353 = vpack.c.b16 %v1057, %v1053
  %v1354 = vpack.c.b16 %v1058, %v1054
  %v1355 = vpack.c.b16 %v1063, %v1059
  %v1356 = vpack.c.b16 %v1064, %v1060
  %v1357 = vpack.c.b16 %v1065, %v1061
  %v1358 = vpack.c.b16 %v1066, %v1062
  %v1359 = vpack.c.b16 %v1071, %v1067
  %v1360 = vpack.c.b16 %v1072, %v1068
  %v1361 = vpack.c.b16 %v1073, %v1069
  %v1362 = vpack.c.b16 %v1074, %v1070
  %v1363 = vpack.c.b16 %v1079, %v1075
  %v1364 = vpack.c.b16 %v1080, %v1076
  %v1365 = vpack.c.b16 %v1081, %v1077
  %v1366 = vpack.c.b16 %v1082, %v1078
  %v1367 = vpack.c.b16 %v1087, %v1083
  %v1368 = vpack.c.b16 %v1088, %v1084
  %v1369 = vpack.c.b16 %v1089, %v1085
  %v1370 = vpack.c.b16 %v1090, %v1086
  %v1371 = vpack.c.b16 %v1095, %v1091
  %v1372 = vpack.c.b16 %v1096, %v1092
  %v1373 = vpack.c.b16 %v1097, %v1093
  %v1374 = vpack.c.b16 %v1098, %v1094
  %v1375 = vpack.c.b16 %v1103, %v1099
  %v1376 = vpack.c.b16 %v1104, %v1100
  %v1377 = vpack.c.b16 %v1105, %v1101
  %v1378 = vpack.c.b16 %v1106, %v1102
  %v1379 = vpack.c.b16 %v1111, %v1107
  %v1380 = vpack.c.b16 %v1112, %v1108
  %v1381 = vpack.c.b16 %v1113, %v1109
  %v1382 = vpack.c.b16 %v1114, %v1110
  %v1383 = vpack.c.b16 %v1119, %v1115
  %v1384 = vpack.c.b16 %v1120, %v1116
  %v1385 = vpack.c.b16 %v1121, %v1117
  %v1386 = vpack.c.b16 %v1122, %v1118
  %v1387 = vpack.c.b16 %v1127, %v1123
  %v1388 = vpack.c.b16 %v1128, %v1124
  %v1389 = vpack.c.b16 %v1129, %v1125
  %v1390 = vpack.c.b16 %v1130, %v1126
  %v1391 = vpack.c.b16 %v1135, %v1131
  %v1392 = vpack.c.b16 %v1136, %v1132
  %v1393 = vpack.c.b16 %v1137, %v1133
  %v1394 = vpack.c.b16 %v1138, %v1134
  %1651 = vmatprep.subr.bf16.mxu0 %v1140
  %1652 = vmatpush1.bf16.msra.mxu0 %v1139
  %1653 = vmatprep.subr.bf16.mxu0 %v1144
  %1654 = vmatpush1.bf16.msra.mxu0 %v1143
  %1655 = vmatprep.subr.bf16.mxu0 %v1148
  %1656 = vmatpush1.bf16.msra.mxu0 %v1147
  %1657 = vmatprep.subr.bf16.mxu0 %v1152
  %1658 = vmatpush1.bf16.msra.mxu0 %v1151
  %1659 = vmatprep.subr.bf16.mxu0 %v1156
  %1660 = vmatpush1.bf16.msra.mxu0 %v1155
  %1661 = vmatprep.subr.bf16.mxu0 %v1160
  %1662 = vmatpush1.bf16.msra.mxu0 %v1159
  %1663 = vmatprep.subr.bf16.mxu0 %v1164
  %1664 = vmatpush1.bf16.msra.mxu0 %v1163
  %1665 = vmatprep.subr.bf16.mxu0 %v1168
  %1666 = vmatpush1.bf16.msra.mxu0 %v1167
  %1667 = vmatprep.subr.bf16.mxu0 %v1172
  %1668 = vmatpush1.bf16.msra.mxu0 %v1171
  %1669 = vmatprep.subr.bf16.mxu0 %v1176
  %1670 = vmatpush1.bf16.msra.mxu0 %v1175
  %1671 = vmatprep.subr.bf16.mxu0 %v1180
  %1672 = vmatpush1.bf16.msra.mxu0 %v1179
  %1673 = vmatprep.subr.bf16.mxu0 %v1184
  %1674 = vmatpush1.bf16.msra.mxu0 %v1183
  %1675 = vmatprep.subr.bf16.mxu0 %v1188
  %1676 = vmatpush1.bf16.msra.mxu0 %v1187
  %1677 = vmatprep.subr.bf16.mxu0 %v1192
  %1678 = vmatpush1.bf16.msra.mxu0 %v1191
  %1679 = vmatprep.subr.bf16.mxu0 %v1196
  %1680 = vmatpush1.bf16.msra.mxu0 %v1195
  %1681 = vmatprep.subr.bf16.mxu0 %v1200
  %1682 = vmatpush1.bf16.msra.mxu0 %v1199
  %1683 = vmatprep.mubr.bf16.mxu0 %v86
  %1684 = vmatmul.mubr.bf16.gmra.mrb[0].mxu0 %v85
  %v1685 = vpop.f32.mrb[0].mxu0
  %v1686 = vadd.f32 %v354, %v1685
  %v1687 = vpop.f32.mrb[0].mxu0
  %v1688 = vadd.f32 %v358, %v1687
  %v1689 = vpop.f32.mrb[0].mxu0
  %v1690 = vpop.f32.mrb[0].mxu0
  %1691 = vdwg.mxu0
  %1692 = vmatprep.subr.bf16.mxu0 %v1204
  %1693 = vmatpush1.bf16.msra.mxu0 %v1203
  %1694 = vmatprep.subr.bf16.mxu0 %v1208
  %1695 = vmatpush1.bf16.msra.mxu0 %v1207
  %1696 = vmatprep.subr.bf16.mxu0 %v1212
  %1697 = vmatpush1.bf16.msra.mxu0 %v1211
  %1698 = vmatprep.subr.bf16.mxu0 %v1216
  %1699 = vmatpush1.bf16.msra.mxu0 %v1215
  %1700 = vmatprep.subr.bf16.mxu0 %v1220
  %1701 = vmatpush1.bf16.msra.mxu0 %v1219
  %1702 = vmatprep.subr.bf16.mxu0 %v1224
  %1703 = vmatpush1.bf16.msra.mxu0 %v1223
  %1704 = vmatprep.subr.bf16.mxu0 %v1228
  %1705 = vmatpush1.bf16.msra.mxu0 %v1227
  %1706 = vmatprep.subr.bf16.mxu0 %v1232
  %1707 = vmatpush1.bf16.msra.mxu0 %v1231
  %1708 = vmatprep.subr.bf16.mxu0 %v1236
  %1709 = vmatpush1.bf16.msra.mxu0 %v1235
  %1710 = vmatprep.subr.bf16.mxu0 %v1240
  %1711 = vmatpush1.bf16.msra.mxu0 %v1239
  %1712 = vmatprep.subr.bf16.mxu0 %v1244
  %1713 = vmatpush1.bf16.msra.mxu0 %v1243
  %1714 = vmatprep.subr.bf16.mxu0 %v1248
  %1715 = vmatpush1.bf16.msra.mxu0 %v1247
  %1716 = vmatprep.subr.bf16.mxu0 %v1252
  %1717 = vmatpush1.bf16.msra.mxu0 %v1251
  %1718 = vmatprep.subr.bf16.mxu0 %v1256
  %1719 = vmatpush1.bf16.msra.mxu0 %v1255
  %1720 = vmatprep.subr.bf16.mxu0 %v1260
  %1721 = vmatpush1.bf16.msra.mxu0 %v1259
  %1722 = vmatprep.subr.bf16.mxu0 %v1264
  %1723 = vmatpush1.bf16.msra.mxu0 %v1263
  %1724 = vmatprep.mubr.bf16.mxu0 %v88
  %1725 = vmatmul.mubr.bf16.gmra.mrb[0].mxu0 %v87
  %v1726 = vpop.f32.mrb[0].mxu0
  %v1727 = vadd.f32 %v1686, %v1726
  %v1728 = vpop.f32.mrb[0].mxu0
  %v1729 = vadd.f32 %v1688, %v1728
  %v1730 = vpop.f32.mrb[0].mxu0
  %v1731 = vpop.f32.mrb[0].mxu0
  %1732 = vdwg.mxu0
  %1733 = vmatprep.subr.bf16.mxu0 %v1268
  %1734 = vmatpush1.bf16.msra.mxu0 %v1267
  %1735 = vmatprep.subr.bf16.mxu0 %v1272
  %1736 = vmatpush1.bf16.msra.mxu0 %v1271
  %1737 = vmatprep.subr.bf16.mxu0 %v1276
  %1738 = vmatpush1.bf16.msra.mxu0 %v1275
  %1739 = vmatprep.subr.bf16.mxu0 %v1280
  %1740 = vmatpush1.bf16.msra.mxu0 %v1279
  %1741 = vmatprep.subr.bf16.mxu0 %v1284
  %1742 = vmatpush1.bf16.msra.mxu0 %v1283
  %1743 = vmatprep.subr.bf16.mxu0 %v1288
  %1744 = vmatpush1.bf16.msra.mxu0 %v1287
  %1745 = vmatprep.subr.bf16.mxu0 %v1292
  %1746 = vmatpush1.bf16.msra.mxu0 %v1291
  %1747 = vmatprep.subr.bf16.mxu0 %v1296
  %1748 = vmatpush1.bf16.msra.mxu0 %v1295
  %1749 = vmatprep.subr.bf16.mxu0 %v1300
  %1750 = vmatpush1.bf16.msra.mxu0 %v1299
  %1751 = vmatprep.subr.bf16.mxu0 %v1304
  %1752 = vmatpush1.bf16.msra.mxu0 %v1303
  %1753 = vmatprep.subr.bf16.mxu0 %v1308
  %1754 = vmatpush1.bf16.msra.mxu0 %v1307
  %1755 = vmatprep.subr.bf16.mxu0 %v1312
  %1756 = vmatpush1.bf16.msra.mxu0 %v1311
  %1757 = vmatprep.subr.bf16.mxu0 %v1316
  %1758 = vmatpush1.bf16.msra.mxu0 %v1315
  %1759 = vmatprep.subr.bf16.mxu0 %v1320
  %1760 = vmatpush1.bf16.msra.mxu0 %v1319
  %1761 = vmatprep.subr.bf16.mxu0 %v1324
  %1762 = vmatpush1.bf16.msra.mxu0 %v1323
  %1763 = vmatprep.subr.bf16.mxu0 %v1328
  %1764 = vmatpush1.bf16.msra.mxu0 %v1327
  %1765 = vmatprep.mubr.bf16.mxu0 %v90
  %1766 = vmatmul.mubr.bf16.gmra.mrb[0].mxu0 %v89
  %v1767 = vpop.f32.mrb[0].mxu0
  %v1768 = vadd.f32 %v1727, %v1767
  %v1769 = vpop.f32.mrb[0].mxu0
  %v1770 = vadd.f32 %v1729, %v1769
  %v1771 = vpop.f32.mrb[0].mxu0
  %v1772 = vpop.f32.mrb[0].mxu0
  %1773 = vdwg.mxu0
  %1774 = vmatprep.subr.bf16.mxu0 %v1332
  %1775 = vmatpush1.bf16.msra.mxu0 %v1331
  %1776 = vmatprep.subr.bf16.mxu0 %v1336
  %1777 = vmatpush1.bf16.msra.mxu0 %v1335
  %1778 = vmatprep.subr.bf16.mxu0 %v1340
  %1779 = vmatpush1.bf16.msra.mxu0 %v1339
  %1780 = vmatprep.subr.bf16.mxu0 %v1344
  %1781 = vmatpush1.bf16.msra.mxu0 %v1343
  %1782 = vmatprep.subr.bf16.mxu0 %v1348
  %1783 = vmatpush1.bf16.msra.mxu0 %v1347
  %1784 = vmatprep.subr.bf16.mxu0 %v1352
  %1785 = vmatpush1.bf16.msra.mxu0 %v1351
  %1786 = vmatprep.subr.bf16.mxu0 %v1356
  %1787 = vmatpush1.bf16.msra.mxu0 %v1355
  %1788 = vmatprep.subr.bf16.mxu0 %v1360
  %1789 = vmatpush1.bf16.msra.mxu0 %v1359
  %1790 = vmatprep.subr.bf16.mxu0 %v1364
  %1791 = vmatpush1.bf16.msra.mxu0 %v1363
  %1792 = vmatprep.subr.bf16.mxu0 %v1368
  %1793 = vmatpush1.bf16.msra.mxu0 %v1367
  %1794 = vmatprep.subr.bf16.mxu0 %v1372
  %1795 = vmatpush1.bf16.msra.mxu0 %v1371
  %1796 = vmatprep.subr.bf16.mxu0 %v1376
  %1797 = vmatpush1.bf16.msra.mxu0 %v1375
  %1798 = vmatprep.subr.bf16.mxu0 %v1380
  %1799 = vmatpush1.bf16.msra.mxu0 %v1379
  %1800 = vmatprep.subr.bf16.mxu0 %v1384
  %1801 = vmatpush1.bf16.msra.mxu0 %v1383
  %1802 = vmatprep.subr.bf16.mxu0 %v1388
  %1803 = vmatpush1.bf16.msra.mxu0 %v1387
  %1804 = vmatprep.subr.bf16.mxu0 %v1392
  %1805 = vmatpush1.bf16.msra.mxu0 %v1391
  %1806 = vmatprep.mubr.bf16.mxu0 %v92
  %1807 = vmatmul.mubr.bf16.gmra.mrb[0].mxu0 %v91
  %v1808 = vpop.f32.mrb[0].mxu0
  %v1809 = vadd.f32 %v1768, %v1808
  %v1810 = vpop.f32.mrb[0].mxu0
  %v1811 = vadd.f32 %v1770, %v1810
  %v1812 = vpop.f32.mrb[0].mxu0
  %v1813 = vpop.f32.mrb[0].mxu0
  %1814 = vdwg.mxu0
  %1815 = vmatprep.subr.bf16.mxu0 %v1142
  %1816 = vmatpush1.bf16.msra.mxu0 %v1141
  %1817 = vmatprep.subr.bf16.mxu0 %v1146
  %1818 = vmatpush1.bf16.msra.mxu0 %v1145
  %1819 = vmatprep.subr.bf16.mxu0 %v1150
  %1820 = vmatpush1.bf16.msra.mxu0 %v1149
  %1821 = vmatprep.subr.bf16.mxu0 %v1154
  %1822 = vmatpush1.bf16.msra.mxu0 %v1153
  %1823 = vmatprep.subr.bf16.mxu0 %v1158
  %1824 = vmatpush1.bf16.msra.mxu0 %v1157
  %1825 = vmatprep.subr.bf16.mxu0 %v1162
  %1826 = vmatpush1.bf16.msra.mxu0 %v1161
  %1827 = vmatprep.subr.bf16.mxu0 %v1166
  %1828 = vmatpush1.bf16.msra.mxu0 %v1165
  %1829 = vmatprep.subr.bf16.mxu0 %v1170
  %1830 = vmatpush1.bf16.msra.mxu0 %v1169
  %1831 = vmatprep.subr.bf16.mxu0 %v1174
  %1832 = vmatpush1.bf16.msra.mxu0 %v1173
  %1833 = vmatprep.subr.bf16.mxu0 %v1178
  %1834 = vmatpush1.bf16.msra.mxu0 %v1177
  %1835 = vmatprep.subr.bf16.mxu0 %v1182
  %1836 = vmatpush1.bf16.msra.mxu0 %v1181
  %1837 = vmatprep.subr.bf16.mxu0 %v1186
  %1838 = vmatpush1.bf16.msra.mxu0 %v1185
  %1839 = vmatprep.subr.bf16.mxu0 %v1190
  %1840 = vmatpush1.bf16.msra.mxu0 %v1189
  %1841 = vmatprep.subr.bf16.mxu0 %v1194
  %1842 = vmatpush1.bf16.msra.mxu0 %v1193
  %1843 = vmatprep.subr.bf16.mxu0 %v1198
  %1844 = vmatpush1.bf16.msra.mxu0 %v1197
  %1845 = vmatprep.subr.bf16.mxu0 %v1202
  %1846 = vmatpush1.bf16.msra.mxu0 %v1201
  %1847 = vmatprep.mubr.bf16.mxu0 %v86
  %1848 = vmatmul.mubr.bf16.gmra.mrb[0].mxu0 %v85
  %v1849 = vpop.f32.mrb[0].mxu0
  %v1850 = vadd.f32 %v362, %v1849
  %v1851 = vpop.f32.mrb[0].mxu0
  %v1852 = vadd.f32 %v366, %v1851
  %v1853 = vpop.f32.mrb[0].mxu0
  %v1854 = vpop.f32.mrb[0].mxu0
  %1855 = vdwg.mxu0
  %1856 = vmatprep.subr.bf16.mxu0 %v1206
  %1857 = vmatpush1.bf16.msra.mxu0 %v1205
  %1858 = vmatprep.subr.bf16.mxu0 %v1210
  %1859 = vmatpush1.bf16.msra.mxu0 %v1209
  %1860 = vmatprep.subr.bf16.mxu0 %v1214
  %1861 = vmatpush1.bf16.msra.mxu0 %v1213
  %1862 = vmatprep.subr.bf16.mxu0 %v1218
  %1863 = vmatpush1.bf16.msra.mxu0 %v1217
  %1864 = vmatprep.subr.bf16.mxu0 %v1222
  %1865 = vmatpush1.bf16.msra.mxu0 %v1221
  %1866 = vmatprep.subr.bf16.mxu0 %v1226
  %1867 = vmatpush1.bf16.msra.mxu0 %v1225
  %1868 = vmatprep.subr.bf16.mxu0 %v1230
  %1869 = vmatpush1.bf16.msra.mxu0 %v1229
  %1870 = vmatprep.subr.bf16.mxu0 %v1234
  %1871 = vmatpush1.bf16.msra.mxu0 %v1233
  %1872 = vmatprep.subr.bf16.mxu0 %v1238
  %1873 = vmatpush1.bf16.msra.mxu0 %v1237
  %1874 = vmatprep.subr.bf16.mxu0 %v1242
  %1875 = vmatpush1.bf16.msra.mxu0 %v1241
  %1876 = vmatprep.subr.bf16.mxu0 %v1246
  %1877 = vmatpush1.bf16.msra.mxu0 %v1245
  %1878 = vmatprep.subr.bf16.mxu0 %v1250
  %1879 = vmatpush1.bf16.msra.mxu0 %v1249
  %1880 = vmatprep.subr.bf16.mxu0 %v1254
  %1881 = vmatpush1.bf16.msra.mxu0 %v1253
  %1882 = vmatprep.subr.bf16.mxu0 %v1258
  %1883 = vmatpush1.bf16.msra.mxu0 %v1257
  %1884 = vmatprep.subr.bf16.mxu0 %v1262
  %1885 = vmatpush1.bf16.msra.mxu0 %v1261
  %1886 = vmatprep.subr.bf16.mxu0 %v1266
  %1887 = vmatpush1.bf16.msra.mxu0 %v1265
  %1888 = vmatprep.mubr.bf16.mxu0 %v88
  %1889 = vmatmul.mubr.bf16.gmra.mrb[0].mxu0 %v87
  %v1890 = vpop.f32.mrb[0].mxu0
  %v1891 = vadd.f32 %v1850, %v1890
  %v1892 = vpop.f32.mrb[0].mxu0
  %v1893 = vadd.f32 %v1852, %v1892
  %v1894 = vpop.f32.mrb[0].mxu0
  %v1895 = vpop.f32.mrb[0].mxu0
  %1896 = vdwg.mxu0
  %1897 = vmatprep.subr.bf16.mxu0 %v1270
  %1898 = vmatpush1.bf16.msra.mxu0 %v1269
  %1899 = vmatprep.subr.bf16.mxu0 %v1274
  %1900 = vmatpush1.bf16.msra.mxu0 %v1273
  %1901 = vmatprep.subr.bf16.mxu0 %v1278
  %1902 = vmatpush1.bf16.msra.mxu0 %v1277
  %1903 = vmatprep.subr.bf16.mxu0 %v1282
  %1904 = vmatpush1.bf16.msra.mxu0 %v1281
  %1905 = vmatprep.subr.bf16.mxu0 %v1286
  %1906 = vmatpush1.bf16.msra.mxu0 %v1285
  %1907 = vmatprep.subr.bf16.mxu0 %v1290
  %1908 = vmatpush1.bf16.msra.mxu0 %v1289
  %1909 = vmatprep.subr.bf16.mxu0 %v1294
  %1910 = vmatpush1.bf16.msra.mxu0 %v1293
  %1911 = vmatprep.subr.bf16.mxu0 %v1298
  %1912 = vmatpush1.bf16.msra.mxu0 %v1297
  %1913 = vmatprep.subr.bf16.mxu0 %v1302
  %1914 = vmatpush1.bf16.msra.mxu0 %v1301
  %1915 = vmatprep.subr.bf16.mxu0 %v1306
  %1916 = vmatpush1.bf16.msra.mxu0 %v1305
  %1917 = vmatprep.subr.bf16.mxu0 %v1310
  %1918 = vmatpush1.bf16.msra.mxu0 %v1309
  %1919 = vmatprep.subr.bf16.mxu0 %v1314
  %1920 = vmatpush1.bf16.msra.mxu0 %v1313
  %1921 = vmatprep.subr.bf16.mxu0 %v1318
  %1922 = vmatpush1.bf16.msra.mxu0 %v1317
  %1923 = vmatprep.subr.bf16.mxu0 %v1322
  %1924 = vmatpush1.bf16.msra.mxu0 %v1321
  %1925 = vmatprep.subr.bf16.mxu0 %v1326
  %1926 = vmatpush1.bf16.msra.mxu0 %v1325
  %1927 = vmatprep.subr.bf16.mxu0 %v1330
  %1928 = vmatpush1.bf16.msra.mxu0 %v1329
  %1929 = vmatprep.mubr.bf16.mxu0 %v90
  %1930 = vmatmul.mubr.bf16.gmra.mrb[0].mxu0 %v89
  %v1931 = vpop.f32.mrb[0].mxu0
  %v1932 = vadd.f32 %v1891, %v1931
  %v1933 = vpop.f32.mrb[0].mxu0
  %v1934 = vadd.f32 %v1893, %v1933
  %v1935 = vpop.f32.mrb[0].mxu0
  %v1936 = vpop.f32.mrb[0].mxu0
  %1937 = vdwg.mxu0
  %1938 = vmatprep.subr.bf16.mxu0 %v1334
  %1939 = vmatpush1.bf16.msra.mxu0 %v1333
  %1940 = vmatprep.subr.bf16.mxu0 %v1338
  %1941 = vmatpush1.bf16.msra.mxu0 %v1337
  %1942 = vmatprep.subr.bf16.mxu0 %v1342
  %1943 = vmatpush1.bf16.msra.mxu0 %v1341
  %1944 = vmatprep.subr.bf16.mxu0 %v1346
  %1945 = vmatpush1.bf16.msra.mxu0 %v1345
  %1946 = vmatprep.subr.bf16.mxu0 %v1350
  %1947 = vmatpush1.bf16.msra.mxu0 %v1349
  %1948 = vmatprep.subr.bf16.mxu0 %v1354
  %1949 = vmatpush1.bf16.msra.mxu0 %v1353
  %1950 = vmatprep.subr.bf16.mxu0 %v1358
  %1951 = vmatpush1.bf16.msra.mxu0 %v1357
  %1952 = vmatprep.subr.bf16.mxu0 %v1362
  %1953 = vmatpush1.bf16.msra.mxu0 %v1361
  %1954 = vmatprep.subr.bf16.mxu0 %v1366
  %1955 = vmatpush1.bf16.msra.mxu0 %v1365
  %1956 = vmatprep.subr.bf16.mxu0 %v1370
  %1957 = vmatpush1.bf16.msra.mxu0 %v1369
  %1958 = vmatprep.subr.bf16.mxu0 %v1374
  %1959 = vmatpush1.bf16.msra.mxu0 %v1373
  %1960 = vmatprep.subr.bf16.mxu0 %v1378
  %1961 = vmatpush1.bf16.msra.mxu0 %v1377
  %1962 = vmatprep.subr.bf16.mxu0 %v1382
  %1963 = vmatpush1.bf16.msra.mxu0 %v1381
  %1964 = vmatprep.subr.bf16.mxu0 %v1386
  %1965 = vmatpush1.bf16.msra.mxu0 %v1385
  %1966 = vmatprep.subr.bf16.mxu0 %v1390
  %1967 = vmatpush1.bf16.msra.mxu0 %v1389
  %1968 = vmatprep.subr.bf16.mxu0 %v1394
  %1969 = vmatpush1.bf16.msra.mxu0 %v1393
  %1970 = vmatprep.mubr.bf16.mxu0 %v92
  %1971 = vmatmul.mubr.bf16.gmra.mrb[0].mxu0 %v91
  %v1972 = vpop.f32.mrb[0].mxu0
  %v1973 = vadd.f32 %v1932, %v1972
  %v1974 = vpop.f32.mrb[0].mxu0
  %v1975 = vadd.f32 %v1934, %v1974
  %v1976 = vpop.f32.mrb[0].mxu0
  %v1977 = vpop.f32.mrb[0].mxu0
  %1978 = vdwg.mxu0
  %v1979 = vld [vmem:[%s3] sm:$0xf]
  %v1980 = vld [vmem:[%s4] sm:$0xf]
  %vm1981 = vcmask 1041408
  %v1982 = vsel %vm1981, %v1809, 0.0
  %v1983 = vrot.slane %v1982, 4
  %v1984 = vadd.f32 %v1982, %v1983
  %v1985 = vrot.slane %v1984, 2
  %v1986 = vadd.f32 %v1984, %v1985
  %v1987 = vrot.slane %v1986, 1
  %v1988 = vadd.f32 %v1986, %v1987
  %v1989 = vsel %vm1981, %v1811, 0.0
  %v1990 = vrot.slane %v1989, 4
  %v1991 = vadd.f32 %v1989, %v1990
  %v1992 = vrot.slane %v1991, 2
  %v1993 = vadd.f32 %v1991, %v1992
  %v1994 = vrot.slane %v1993, 1
  %v1995 = vadd.f32 %v1993, %v1994
  %v1996 = vsel %vm1981, %v1973, 0.0
  %v1997 = vrot.slane %v1996, 4
  %v1998 = vadd.f32 %v1996, %v1997
  %v1999 = vrot.slane %v1998, 2
  %v2000 = vadd.f32 %v1998, %v1999
  %v2001 = vrot.slane %v2000, 1
  %v2002 = vadd.f32 %v2000, %v2001
  %v2003 = vsel %vm1981, %v1975, 0.0
  %v2004 = vrot.slane %v2003, 4
  %v2005 = vadd.f32 %v2003, %v2004
  %v2006 = vrot.slane %v2005, 2
  %v2007 = vadd.f32 %v2005, %v2006
  %v2008 = vrot.slane %v2007, 1
  %v2009 = vadd.f32 %v2007, %v2008
  %v2010 = vrcp.pop 2.0
  %v2011 = vmul.f32 %v1988, %v2010
  %v2012 = vmul.f32 %v1995, %v2010
  %v2013 = vmul.f32 %v2002, %v2010
  %v2014 = vmul.f32 %v2009, %v2010
  %v2015 = vmul.f32 %v1809, %v1809
  %v2016 = vmul.f32 %v1811, %v1811
  %v2017 = vmul.f32 %v1973, %v1973
  %v2018 = vmul.f32 %v1975, %v1975
  %v2019 = vsel %vm1981, %v2015, 0.0
  %v2020 = vrot.slane %v2019, 4
  %v2021 = vadd.f32 %v2019, %v2020
  %v2022 = vrot.slane %v2021, 2
  %v2023 = vadd.f32 %v2021, %v2022
  %v2024 = vrot.slane %v2023, 1
  %v2025 = vadd.f32 %v2023, %v2024
  %v2026 = vsel %vm1981, %v2016, 0.0
  %v2027 = vrot.slane %v2026, 4
  %v2028 = vadd.f32 %v2026, %v2027
  %v2029 = vrot.slane %v2028, 2
  %v2030 = vadd.f32 %v2028, %v2029
  %v2031 = vrot.slane %v2030, 1
  %v2032 = vadd.f32 %v2030, %v2031
  %v2033 = vsel %vm1981, %v2017, 0.0
  %v2034 = vrot.slane %v2033, 4
  %v2035 = vadd.f32 %v2033, %v2034
  %v2036 = vrot.slane %v2035, 2
  %v2037 = vadd.f32 %v2035, %v2036
  %v2038 = vrot.slane %v2037, 1
  %v2039 = vadd.f32 %v2037, %v2038
  %v2040 = vsel %vm1981, %v2018, 0.0
  %v2041 = vrot.slane %v2040, 4
  %v2042 = vadd.f32 %v2040, %v2041
  %v2043 = vrot.slane %v2042, 2
  %v2044 = vadd.f32 %v2042, %v2043
  %v2045 = vrot.slane %v2044, 1
  %v2046 = vadd.f32 %v2044, %v2045
  %v2047 = vmul.f32 %v2025, %v2010
  %v2048 = vmul.f32 %v2032, %v2010
  %v2049 = vmul.f32 %v2039, %v2010
  %v2050 = vmul.f32 %v2046, %v2010
  %v2051 = vmul.f32 %v2011, %v2011
  %v2052 = vmul.f32 %v2012, %v2012
  %v2053 = vmul.f32 %v2013, %v2013
  %v2054 = vmul.f32 %v2014, %v2014
  %v2055 = vsub.f32 %v2047, %v2051
  %v2056 = vsub.f32 %v2048, %v2052
  %v2057 = vsub.f32 %v2049, %v2053
  %v2058 = vsub.f32 %v2050, %v2054
  %v2059 = vmax.f32 %v2055, 0.0
  %v2060 = vmax.f32 %v2056, 0.0
  %v2061 = vmax.f32 %v2057, 0.0
  %v2062 = vmax.f32 %v2058, 0.0
  %v2063 = vsub.f32 %v1809, %v2011
  %v2064 = vsub.f32 %v1811, %v2012
  %v2065 = vsub.f32 %v1973, %v2013
  %v2066 = vsub.f32 %v1975, %v2014
  %v2067 = vadd.f32 %v2059, 1e-05
  %v2068 = vadd.f32 %v2060, 1e-05
  %v2069 = vadd.f32 %v2061, 1e-05
  %v2070 = vadd.f32 %v2062, 1e-05
  %v2071 = vrsqrt.pop %v2067
  %v2072 = vrsqrt.pop %v2068
  %v2073 = vrsqrt.pop %v2069
  %v2074 = vrsqrt.pop %v2070
  %v2075 = vmul.f32 %v2063, %v2071
  %v2076 = vmul.f32 %v2064, %v2072
  %v2077 = vmul.f32 %v2065, %v2073
  %v2078 = vmul.f32 %v2066, %v2074
  %v2080 = vlaneseq
  %v2081 = vshrl.u32 %v2080, 7
  %v2082 = vsub.s32 0, %v2081
  %v2083 = vrot.slane %v1979, %v2082
  %v2084 = vlaneseq
  %v2085 = vshrl.u32 %v2084, 7
  %v2086 = vsub.s32 1, %v2085
  %v2087 = vrot.slane %v1979, %v2086
  %v2088 = vlaneseq
  %v2089 = vshrl.u32 %v2088, 7
  %v2090 = vsub.s32 2, %v2089
  %v2091 = vrot.slane %v1979, %v2090
  %v2092 = vlaneseq
  %v2093 = vshrl.u32 %v2092, 7
  %v2094 = vsub.s32 3, %v2093
  %v2095 = vrot.slane %v1979, %v2094
  %v2100 = vmul.f32 %v2075, %v2083
  %v2101 = vmul.f32 %v2076, %v2087
  %v2102 = vmul.f32 %v2077, %v2091
  %v2103 = vmul.f32 %v2078, %v2095
  %v2105 = vlaneseq
  %v2106 = vshrl.u32 %v2105, 7
  %v2107 = vsub.s32 0, %v2106
  %v2108 = vrot.slane %v1980, %v2107
  %v2109 = vlaneseq
  %v2110 = vshrl.u32 %v2109, 7
  %v2111 = vsub.s32 1, %v2110
  %v2112 = vrot.slane %v1980, %v2111
  %v2113 = vlaneseq
  %v2114 = vshrl.u32 %v2113, 7
  %v2115 = vsub.s32 2, %v2114
  %v2116 = vrot.slane %v1980, %v2115
  %v2117 = vlaneseq
  %v2118 = vshrl.u32 %v2117, 7
  %v2119 = vsub.s32 3, %v2118
  %v2120 = vrot.slane %v1980, %v2119
  %v2125 = vadd.f32 %v2100, %v2108
  %v2126 = vadd.f32 %v2101, %v2112
  %v2127 = vadd.f32 %v2102, %v2116
  %v2128 = vadd.f32 %v2103, %v2120
  %v2129 = vmax.f32 %v2125, 0.0
  %v2130 = vmax.f32 %v2126, 0.0
  %v2131 = vmax.f32 %v2127, 0.0
  %v2132 = vmax.f32 %v2128, 0.0
  %v2133 = vpack.c.bf16 %v2129, %v2129
  %v2134 = vpack.c.bf16 %v2130, %v2130
  %v2135 = vpack.c.bf16 %v2131, %v2131
  %v2136 = vpack.c.bf16 %v2132, %v2132
  %v2137 = vld [vmem:[%s5] sm:$0xff]
  %v2138 = vld [vmem:[%s5 + $0x8] sm:$0xff]
  %v2139 = vld [vmem:[%s5 + $0x10] sm:$0xff]
  %v2140 = vld [vmem:[%s5 + $0x18] sm:$0xff]
  %v2141 = vld [vmem:[%s5 + $0x20] sm:$0xff]
  %v2142 = vld [vmem:[%s5 + $0x28] sm:$0xff]
  %v2143 = vld [vmem:[%s5 + $0x30] sm:$0xff]
  %v2144 = vld [vmem:[%s5 + $0x38] sm:$0xff]
  %v2145 = vld [vmem:[%s5 + $0x40] sm:$0xff]
  %v2146 = vld [vmem:[%s5 + $0x48] sm:$0xff]
  %v2147 = vld [vmem:[%s5 + $0x50] sm:$0xff]
  %v2148 = vld [vmem:[%s5 + $0x58] sm:$0xff]
  %v2149 = vld [vmem:[%s5 + $0x60] sm:$0xff]
  %v2150 = vld [vmem:[%s5 + $0x68] sm:$0xff]
  %v2151 = vld [vmem:[%s5 + $0x70] sm:$0xff]
  %v2152 = vld [vmem:[%s5 + $0x78] sm:$0xff]
  %v2153 = vld [vmem:[%s5 + $0x80] sm:$0xff]
  %v2154 = vld [vmem:[%s5 + $0x88] sm:$0xff]
  %v2155 = vld [vmem:[%s5 + $0x90] sm:$0xff]
  %v2156 = vld [vmem:[%s5 + $0x98] sm:$0xff]
  %v2157 = vld [vmem:[%s5 + $0xa0] sm:$0xff]
  %v2158 = vld [vmem:[%s5 + $0xa8] sm:$0xff]
  %v2159 = vld [vmem:[%s5 + $0xb0] sm:$0xff]
  %v2160 = vld [vmem:[%s5 + $0xb8] sm:$0xff]
  %v2161 = vld [vmem:[%s5 + $0xc0] sm:$0xff]
  %v2162 = vld [vmem:[%s5 + $0xc8] sm:$0xff]
  %v2163 = vld [vmem:[%s5 + $0xd0] sm:$0xff]
  %v2164 = vld [vmem:[%s5 + $0xd8] sm:$0xff]
  %v2165 = vld [vmem:[%s5 + $0xe0] sm:$0xff]
  %v2166 = vld [vmem:[%s5 + $0xe8] sm:$0xff]
  %v2167 = vld [vmem:[%s5 + $0xf0] sm:$0xff]
  %v2168 = vld [vmem:[%s5 + $0xf8] sm:$0xff]
  %v2169 = vld [vmem:[%s5 + $0x100] sm:$0xff]
  %v2170 = vld [vmem:[%s5 + $0x108] sm:$0xff]
  %v2171 = vld [vmem:[%s5 + $0x110] sm:$0xff]
  %v2172 = vld [vmem:[%s5 + $0x118] sm:$0xff]
  %v2173 = vld [vmem:[%s5 + $0x120] sm:$0xff]
  %v2174 = vld [vmem:[%s5 + $0x128] sm:$0xff]
  %v2175 = vld [vmem:[%s5 + $0x130] sm:$0xff]
  %v2176 = vld [vmem:[%s5 + $0x138] sm:$0xff]
  %v2177 = vld [vmem:[%s5 + $0x140] sm:$0xff]
  %v2178 = vld [vmem:[%s5 + $0x148] sm:$0xff]
  %v2179 = vld [vmem:[%s5 + $0x150] sm:$0xff]
  %v2180 = vld [vmem:[%s5 + $0x158] sm:$0xff]
  %v2181 = vld [vmem:[%s5 + $0x160] sm:$0xff]
  %v2182 = vld [vmem:[%s5 + $0x168] sm:$0xff]
  %v2183 = vld [vmem:[%s5 + $0x170] sm:$0xff]
  %v2184 = vld [vmem:[%s5 + $0x178] sm:$0xff]
  %v2185 = vld [vmem:[%s5 + $0x180] sm:$0xff]
  %v2186 = vld [vmem:[%s5 + $0x188] sm:$0xff]
  %v2187 = vld [vmem:[%s5 + $0x190] sm:$0xff]
  %v2188 = vld [vmem:[%s5 + $0x198] sm:$0xff]
  %v2189 = vld [vmem:[%s5 + $0x1a0] sm:$0xff]
  %v2190 = vld [vmem:[%s5 + $0x1a8] sm:$0xff]
  %v2191 = vld [vmem:[%s5 + $0x1b0] sm:$0xff]
  %v2192 = vld [vmem:[%s5 + $0x1b8] sm:$0xff]
  %v2193 = vld [vmem:[%s5 + $0x1c0] sm:$0xff]
  %v2194 = vld [vmem:[%s5 + $0x1c8] sm:$0xff]
  %v2195 = vld [vmem:[%s5 + $0x1d0] sm:$0xff]
  %v2196 = vld [vmem:[%s5 + $0x1d8] sm:$0xff]
  %v2197 = vld [vmem:[%s5 + $0x1e0] sm:$0xff]
  %v2198 = vld [vmem:[%s5 + $0x1e8] sm:$0xff]
  %v2199 = vld [vmem:[%s5 + $0x1f0] sm:$0xff]
  %v2200 = vld [vmem:[%s5 + $0x1f8] sm:$0xff]
  %v2201 = vld [vmem:[%s6] sm:$0x3]
  %v2203 = vlaneseq
  %v2204 = vshrl.u32 %v2203, 7
  %v2205 = vsub.s32 0, %v2204
  %v2206 = vrot.slane %v2201, %v2205
  %v2207 = vlaneseq
  %v2208 = vshrl.u32 %v2207, 7
  %v2209 = vsub.s32 1, %v2208
  %v2210 = vrot.slane %v2201, %v2209
  %v2277 = vunpack.c.l.b16 %v2137
  %v2278 = vunpack.c.h.b16 %v2137
  %v2279 = vunpack.c.l.b16 %v2138
  %v2280 = vunpack.c.h.b16 %v2138
  %v2281 = vunpack.c.l.b16 %v2139
  %v2282 = vunpack.c.h.b16 %v2139
  %v2283 = vunpack.c.l.b16 %v2140
  %v2284 = vunpack.c.h.b16 %v2140
  %v2285 = vunpack.c.l.b16 %v2141
  %v2286 = vunpack.c.h.b16 %v2141
  %v2287 = vunpack.c.l.b16 %v2142
  %v2288 = vunpack.c.h.b16 %v2142
  %v2289 = vunpack.c.l.b16 %v2143
  %v2290 = vunpack.c.h.b16 %v2143
  %v2291 = vunpack.c.l.b16 %v2144
  %v2292 = vunpack.c.h.b16 %v2144
  %v2293 = vunpack.c.l.b16 %v2145
  %v2294 = vunpack.c.h.b16 %v2145
  %v2295 = vunpack.c.l.b16 %v2146
  %v2296 = vunpack.c.h.b16 %v2146
  %v2297 = vunpack.c.l.b16 %v2147
  %v2298 = vunpack.c.h.b16 %v2147
  %v2299 = vunpack.c.l.b16 %v2148
  %v2300 = vunpack.c.h.b16 %v2148
  %v2301 = vunpack.c.l.b16 %v2149
  %v2302 = vunpack.c.h.b16 %v2149
  %v2303 = vunpack.c.l.b16 %v2150
  %v2304 = vunpack.c.h.b16 %v2150
  %v2305 = vunpack.c.l.b16 %v2151
  %v2306 = vunpack.c.h.b16 %v2151
  %v2307 = vunpack.c.l.b16 %v2152
  %v2308 = vunpack.c.h.b16 %v2152
  %v2309 = vunpack.c.l.b16 %v2153
  %v2310 = vunpack.c.h.b16 %v2153
  %v2311 = vunpack.c.l.b16 %v2154
  %v2312 = vunpack.c.h.b16 %v2154
  %v2313 = vunpack.c.l.b16 %v2155
  %v2314 = vunpack.c.h.b16 %v2155
  %v2315 = vunpack.c.l.b16 %v2156
  %v2316 = vunpack.c.h.b16 %v2156
  %v2317 = vunpack.c.l.b16 %v2157
  %v2318 = vunpack.c.h.b16 %v2157
  %v2319 = vunpack.c.l.b16 %v2158
  %v2320 = vunpack.c.h.b16 %v2158
  %v2321 = vunpack.c.l.b16 %v2159
  %v2322 = vunpack.c.h.b16 %v2159
  %v2323 = vunpack.c.l.b16 %v2160
  %v2324 = vunpack.c.h.b16 %v2160
  %v2325 = vunpack.c.l.b16 %v2161
  %v2326 = vunpack.c.h.b16 %v2161
  %v2327 = vunpack.c.l.b16 %v2162
  %v2328 = vunpack.c.h.b16 %v2162
  %v2329 = vunpack.c.l.b16 %v2163
  %v2330 = vunpack.c.h.b16 %v2163
  %v2331 = vunpack.c.l.b16 %v2164
  %v2332 = vunpack.c.h.b16 %v2164
  %v2333 = vunpack.c.l.b16 %v2165
  %v2334 = vunpack.c.h.b16 %v2165
  %v2335 = vunpack.c.l.b16 %v2166
  %v2336 = vunpack.c.h.b16 %v2166
  %v2337 = vunpack.c.l.b16 %v2167
  %v2338 = vunpack.c.h.b16 %v2167
  %v2339 = vunpack.c.l.b16 %v2168
  %v2340 = vunpack.c.h.b16 %v2168
  %v2341 = vunpack.c.l.b16 %v2169
  %v2342 = vunpack.c.h.b16 %v2169
  %v2343 = vunpack.c.l.b16 %v2170
  %v2344 = vunpack.c.h.b16 %v2170
  %v2345 = vunpack.c.l.b16 %v2171
  %v2346 = vunpack.c.h.b16 %v2171
  %v2347 = vunpack.c.l.b16 %v2172
  %v2348 = vunpack.c.h.b16 %v2172
  %v2349 = vunpack.c.l.b16 %v2173
  %v2350 = vunpack.c.h.b16 %v2173
  %v2351 = vunpack.c.l.b16 %v2174
  %v2352 = vunpack.c.h.b16 %v2174
  %v2353 = vunpack.c.l.b16 %v2175
  %v2354 = vunpack.c.h.b16 %v2175
  %v2355 = vunpack.c.l.b16 %v2176
  %v2356 = vunpack.c.h.b16 %v2176
  %v2357 = vunpack.c.l.b16 %v2177
  %v2358 = vunpack.c.h.b16 %v2177
  %v2359 = vunpack.c.l.b16 %v2178
  %v2360 = vunpack.c.h.b16 %v2178
  %v2361 = vunpack.c.l.b16 %v2179
  %v2362 = vunpack.c.h.b16 %v2179
  %v2363 = vunpack.c.l.b16 %v2180
  %v2364 = vunpack.c.h.b16 %v2180
  %v2365 = vunpack.c.l.b16 %v2181
  %v2366 = vunpack.c.h.b16 %v2181
  %v2367 = vunpack.c.l.b16 %v2182
  %v2368 = vunpack.c.h.b16 %v2182
  %v2369 = vunpack.c.l.b16 %v2183
  %v2370 = vunpack.c.h.b16 %v2183
  %v2371 = vunpack.c.l.b16 %v2184
  %v2372 = vunpack.c.h.b16 %v2184
  %v2373 = vunpack.c.l.b16 %v2185
  %v2374 = vunpack.c.h.b16 %v2185
  %v2375 = vunpack.c.l.b16 %v2186
  %v2376 = vunpack.c.h.b16 %v2186
  %v2377 = vunpack.c.l.b16 %v2187
  %v2378 = vunpack.c.h.b16 %v2187
  %v2379 = vunpack.c.l.b16 %v2188
  %v2380 = vunpack.c.h.b16 %v2188
  %v2381 = vunpack.c.l.b16 %v2189
  %v2382 = vunpack.c.h.b16 %v2189
  %v2383 = vunpack.c.l.b16 %v2190
  %v2384 = vunpack.c.h.b16 %v2190
  %v2385 = vunpack.c.l.b16 %v2191
  %v2386 = vunpack.c.h.b16 %v2191
  %v2387 = vunpack.c.l.b16 %v2192
  %v2388 = vunpack.c.h.b16 %v2192
  %v2389 = vunpack.c.l.b16 %v2193
  %v2390 = vunpack.c.h.b16 %v2193
  %v2391 = vunpack.c.l.b16 %v2194
  %v2392 = vunpack.c.h.b16 %v2194
  %v2393 = vunpack.c.l.b16 %v2195
  %v2394 = vunpack.c.h.b16 %v2195
  %v2395 = vunpack.c.l.b16 %v2196
  %v2396 = vunpack.c.h.b16 %v2196
  %v2397 = vunpack.c.l.b16 %v2197
  %v2398 = vunpack.c.h.b16 %v2197
  %v2399 = vunpack.c.l.b16 %v2198
  %v2400 = vunpack.c.h.b16 %v2198
  %v2401 = vunpack.c.l.b16 %v2199
  %v2402 = vunpack.c.h.b16 %v2199
  %v2403 = vunpack.c.l.b16 %v2200
  %v2404 = vunpack.c.h.b16 %v2200
  %v2405 = vpack.c.b16 %v2279, %v2277
  %v2406 = vpack.c.b16 %v2280, %v2278
  %v2407 = vpack.c.b16 %v2283, %v2281
  %v2408 = vpack.c.b16 %v2284, %v2282
  %v2409 = vpack.c.b16 %v2287, %v2285
  %v2410 = vpack.c.b16 %v2288, %v2286
  %v2411 = vpack.c.b16 %v2291, %v2289
  %v2412 = vpack.c.b16 %v2292, %v2290
  %v2413 = vpack.c.b16 %v2295, %v2293
  %v2414 = vpack.c.b16 %v2296, %v2294
  %v2415 = vpack.c.b16 %v2299, %v2297
  %v2416 = vpack.c.b16 %v2300, %v2298
  %v2417 = vpack.c.b16 %v2303, %v2301
  %v2418 = vpack.c.b16 %v2304, %v2302
  %v2419 = vpack.c.b16 %v2307, %v2305
  %v2420 = vpack.c.b16 %v2308, %v2306
  %v2421 = vpack.c.b16 %v2311, %v2309
  %v2422 = vpack.c.b16 %v2312, %v2310
  %v2423 = vpack.c.b16 %v2315, %v2313
  %v2424 = vpack.c.b16 %v2316, %v2314
  %v2425 = vpack.c.b16 %v2319, %v2317
  %v2426 = vpack.c.b16 %v2320, %v2318
  %v2427 = vpack.c.b16 %v2323, %v2321
  %v2428 = vpack.c.b16 %v2324, %v2322
  %v2429 = vpack.c.b16 %v2327, %v2325
  %v2430 = vpack.c.b16 %v2328, %v2326
  %v2431 = vpack.c.b16 %v2331, %v2329
  %v2432 = vpack.c.b16 %v2332, %v2330
  %v2433 = vpack.c.b16 %v2335, %v2333
  %v2434 = vpack.c.b16 %v2336, %v2334
  %v2435 = vpack.c.b16 %v2339, %v2337
  %v2436 = vpack.c.b16 %v2340, %v2338
  %v2437 = vpack.c.b16 %v2343, %v2341
  %v2438 = vpack.c.b16 %v2344, %v2342
  %v2439 = vpack.c.b16 %v2347, %v2345
  %v2440 = vpack.c.b16 %v2348, %v2346
  %v2441 = vpack.c.b16 %v2351, %v2349
  %v2442 = vpack.c.b16 %v2352, %v2350
  %v2443 = vpack.c.b16 %v2355, %v2353
  %v2444 = vpack.c.b16 %v2356, %v2354
  %v2445 = vpack.c.b16 %v2359, %v2357
  %v2446 = vpack.c.b16 %v2360, %v2358
  %v2447 = vpack.c.b16 %v2363, %v2361
  %v2448 = vpack.c.b16 %v2364, %v2362
  %v2449 = vpack.c.b16 %v2367, %v2365
  %v2450 = vpack.c.b16 %v2368, %v2366
  %v2451 = vpack.c.b16 %v2371, %v2369
  %v2452 = vpack.c.b16 %v2372, %v2370
  %v2453 = vpack.c.b16 %v2375, %v2373
  %v2454 = vpack.c.b16 %v2376, %v2374
  %v2455 = vpack.c.b16 %v2379, %v2377
  %v2456 = vpack.c.b16 %v2380, %v2378
  %v2457 = vpack.c.b16 %v2383, %v2381
  %v2458 = vpack.c.b16 %v2384, %v2382
  %v2459 = vpack.c.b16 %v2387, %v2385
  %v2460 = vpack.c.b16 %v2388, %v2386
  %v2461 = vpack.c.b16 %v2391, %v2389
  %v2462 = vpack.c.b16 %v2392, %v2390
  %v2463 = vpack.c.b16 %v2395, %v2393
  %v2464 = vpack.c.b16 %v2396, %v2394
  %v2465 = vpack.c.b16 %v2399, %v2397
  %v2466 = vpack.c.b16 %v2400, %v2398
  %v2467 = vpack.c.b16 %v2403, %v2401
  %v2468 = vpack.c.b16 %v2404, %v2402
  %2533 = vmatprep.subr.bf16.mxu0 %v2406
  %2534 = vmatpush1.bf16.msra.mxu0 %v2405
  %2535 = vmatprep.subr.bf16.mxu0 %v2408
  %2536 = vmatpush1.bf16.msra.mxu0 %v2407
  %2537 = vmatprep.subr.bf16.mxu0 %v2410
  %2538 = vmatpush1.bf16.msra.mxu0 %v2409
  %2539 = vmatprep.subr.bf16.mxu0 %v2412
  %2540 = vmatpush1.bf16.msra.mxu0 %v2411
  %2541 = vmatprep.subr.bf16.mxu0 %v2414
  %2542 = vmatpush1.bf16.msra.mxu0 %v2413
  %2543 = vmatprep.subr.bf16.mxu0 %v2416
  %2544 = vmatpush1.bf16.msra.mxu0 %v2415
  %2545 = vmatprep.subr.bf16.mxu0 %v2418
  %2546 = vmatpush1.bf16.msra.mxu0 %v2417
  %2547 = vmatprep.subr.bf16.mxu0 %v2420
  %2548 = vmatpush1.bf16.msra.mxu0 %v2419
  %2549 = vmatprep.subr.bf16.mxu0 %v2422
  %2550 = vmatpush1.bf16.msra.mxu0 %v2421
  %2551 = vmatprep.subr.bf16.mxu0 %v2424
  %2552 = vmatpush1.bf16.msra.mxu0 %v2423
  %2553 = vmatprep.subr.bf16.mxu0 %v2426
  %2554 = vmatpush1.bf16.msra.mxu0 %v2425
  %2555 = vmatprep.subr.bf16.mxu0 %v2428
  %2556 = vmatpush1.bf16.msra.mxu0 %v2427
  %2557 = vmatprep.subr.bf16.mxu0 %v2430
  %2558 = vmatpush1.bf16.msra.mxu0 %v2429
  %2559 = vmatprep.subr.bf16.mxu0 %v2432
  %2560 = vmatpush1.bf16.msra.mxu0 %v2431
  %2561 = vmatprep.subr.bf16.mxu0 %v2434
  %2562 = vmatpush1.bf16.msra.mxu0 %v2433
  %2563 = vmatprep.subr.bf16.mxu0 %v2436
  %2564 = vmatpush1.bf16.msra.mxu0 %v2435
  %2565 = vmatprep.mubr.bf16.mxu0 %v2134
  %2566 = vmatmul.mubr.bf16.gmra.mrb[0].mxu0 %v2133
  %v2567 = vpop.f32.mrb[0].mxu0
  %v2568 = vadd.f32 %v2206, %v2567
  %v2569 = vpop.f32.mrb[0].mxu0
  %v2570 = vadd.f32 %v2210, %v2569
  %v2571 = vpop.f32.mrb[0].mxu0
  %v2572 = vpop.f32.mrb[0].mxu0
  %2573 = vdwg.mxu0
  %2574 = vmatprep.subr.bf16.mxu0 %v2438
  %2575 = vmatpush1.bf16.msra.mxu0 %v2437
  %2576 = vmatprep.subr.bf16.mxu0 %v2440
  %2577 = vmatpush1.bf16.msra.mxu0 %v2439
  %2578 = vmatprep.subr.bf16.mxu0 %v2442
  %2579 = vmatpush1.bf16.msra.mxu0 %v2441
  %2580 = vmatprep.subr.bf16.mxu0 %v2444
  %2581 = vmatpush1.bf16.msra.mxu0 %v2443
  %2582 = vmatprep.subr.bf16.mxu0 %v2446
  %2583 = vmatpush1.bf16.msra.mxu0 %v2445
  %2584 = vmatprep.subr.bf16.mxu0 %v2448
  %2585 = vmatpush1.bf16.msra.mxu0 %v2447
  %2586 = vmatprep.subr.bf16.mxu0 %v2450
  %2587 = vmatpush1.bf16.msra.mxu0 %v2449
  %2588 = vmatprep.subr.bf16.mxu0 %v2452
  %2589 = vmatpush1.bf16.msra.mxu0 %v2451
  %2590 = vmatprep.subr.bf16.mxu0 %v2454
  %2591 = vmatpush1.bf16.msra.mxu0 %v2453
  %2592 = vmatprep.subr.bf16.mxu0 %v2456
  %2593 = vmatpush1.bf16.msra.mxu0 %v2455
  %2594 = vmatprep.subr.bf16.mxu0 %v2458
  %2595 = vmatpush1.bf16.msra.mxu0 %v2457
  %2596 = vmatprep.subr.bf16.mxu0 %v2460
  %2597 = vmatpush1.bf16.msra.mxu0 %v2459
  %2598 = vmatprep.subr.bf16.mxu0 %v2462
  %2599 = vmatpush1.bf16.msra.mxu0 %v2461
  %2600 = vmatprep.subr.bf16.mxu0 %v2464
  %2601 = vmatpush1.bf16.msra.mxu0 %v2463
  %2602 = vmatprep.subr.bf16.mxu0 %v2466
  %2603 = vmatpush1.bf16.msra.mxu0 %v2465
  %2604 = vmatprep.subr.bf16.mxu0 %v2468
  %2605 = vmatpush1.bf16.msra.mxu0 %v2467
  %2606 = vmatprep.mubr.bf16.mxu0 %v2136
  %2607 = vmatmul.mubr.bf16.gmra.mrb[0].mxu0 %v2135
  %v2608 = vpop.f32.mrb[0].mxu0
  %v2609 = vadd.f32 %v2568, %v2608
  %v2610 = vpop.f32.mrb[0].mxu0
  %v2611 = vadd.f32 %v2570, %v2610
  %v2612 = vpop.f32.mrb[0].mxu0
  %v2613 = vpop.f32.mrb[0].mxu0
  %2614 = vdwg.mxu0
  %v2615 = vld [vmem:[%s7] sm:$0x3]
  %v2616 = vld [vmem:[%s8] sm:$0x3]
  %v2617 = vsel %vm1981, %v2609, 0.0
  %v2618 = vrot.slane %v2617, 4
  %v2619 = vadd.f32 %v2617, %v2618
  %v2620 = vrot.slane %v2619, 2
  %v2621 = vadd.f32 %v2619, %v2620
  %v2622 = vrot.slane %v2621, 1
  %v2623 = vadd.f32 %v2621, %v2622
  %v2624 = vsel %vm1981, %v2611, 0.0
  %v2625 = vrot.slane %v2624, 4
  %v2626 = vadd.f32 %v2624, %v2625
  %v2627 = vrot.slane %v2626, 2
  %v2628 = vadd.f32 %v2626, %v2627
  %v2629 = vrot.slane %v2628, 1
  %v2630 = vadd.f32 %v2628, %v2629
  %v2631 = vmul.f32 %v2623, %v2010
  %v2632 = vmul.f32 %v2630, %v2010
  %v2633 = vmul.f32 %v2609, %v2609
  %v2634 = vmul.f32 %v2611, %v2611
  %v2635 = vsel %vm1981, %v2633, 0.0
  %v2636 = vrot.slane %v2635, 4
  %v2637 = vadd.f32 %v2635, %v2636
  %v2638 = vrot.slane %v2637, 2
  %v2639 = vadd.f32 %v2637, %v2638
  %v2640 = vrot.slane %v2639, 1
  %v2641 = vadd.f32 %v2639, %v2640
  %v2642 = vsel %vm1981, %v2634, 0.0
  %v2643 = vrot.slane %v2642, 4
  %v2644 = vadd.f32 %v2642, %v2643
  %v2645 = vrot.slane %v2644, 2
  %v2646 = vadd.f32 %v2644, %v2645
  %v2647 = vrot.slane %v2646, 1
  %v2648 = vadd.f32 %v2646, %v2647
  %v2649 = vmul.f32 %v2641, %v2010
  %v2650 = vmul.f32 %v2648, %v2010
  %v2651 = vmul.f32 %v2631, %v2631
  %v2652 = vmul.f32 %v2632, %v2632
  %v2653 = vsub.f32 %v2649, %v2651
  %v2654 = vsub.f32 %v2650, %v2652
  %v2655 = vmax.f32 %v2653, 0.0
  %v2656 = vmax.f32 %v2654, 0.0
  %v2657 = vsub.f32 %v2609, %v2631
  %v2658 = vsub.f32 %v2611, %v2632
  %v2659 = vadd.f32 %v2655, 1e-05
  %v2660 = vadd.f32 %v2656, 1e-05
  %v2661 = vrsqrt.pop %v2659
  %v2662 = vrsqrt.pop %v2660
  %v2663 = vmul.f32 %v2657, %v2661
  %v2664 = vmul.f32 %v2658, %v2662
  %v2666 = vlaneseq
  %v2667 = vshrl.u32 %v2666, 7
  %v2668 = vsub.s32 0, %v2667
  %v2669 = vrot.slane %v2615, %v2668
  %v2670 = vlaneseq
  %v2671 = vshrl.u32 %v2670, 7
  %v2672 = vsub.s32 1, %v2671
  %v2673 = vrot.slane %v2615, %v2672
  %v2676 = vmul.f32 %v2663, %v2669
  %v2677 = vmul.f32 %v2664, %v2673
  %v2679 = vlaneseq
  %v2680 = vshrl.u32 %v2679, 7
  %v2681 = vsub.s32 0, %v2680
  %v2682 = vrot.slane %v2616, %v2681
  %v2683 = vlaneseq
  %v2684 = vshrl.u32 %v2683, 7
  %v2685 = vsub.s32 1, %v2684
  %v2686 = vrot.slane %v2616, %v2685
  %v2689 = vadd.f32 %v2676, %v2682
  %v2690 = vadd.f32 %v2677, %v2686
  %v2691 = vmax.f32 %v2689, 0.0
  %v2692 = vmax.f32 %v2690, 0.0
  %v2693 = vpack.c.bf16 %v2691, %v2691
  %v2694 = vpack.c.bf16 %v2692, %v2692
  %v2695 = vld [vmem:[%s9] sm:$0xf]
  %v2696 = vld [vmem:[%s9 + $0x4] sm:$0xf]
  %v2697 = vld [vmem:[%s9 + $0x8] sm:$0xf]
  %v2698 = vld [vmem:[%s9 + $0xc] sm:$0xf]
  %v2699 = vld [vmem:[%s9 + $0x10] sm:$0xf]
  %v2700 = vld [vmem:[%s9 + $0x14] sm:$0xf]
  %v2701 = vld [vmem:[%s9 + $0x18] sm:$0xf]
  %v2702 = vld [vmem:[%s9 + $0x1c] sm:$0xf]
  %v2703 = vld [vmem:[%s9 + $0x20] sm:$0xf]
  %v2704 = vld [vmem:[%s9 + $0x24] sm:$0xf]
  %v2705 = vld [vmem:[%s9 + $0x28] sm:$0xf]
  %v2706 = vld [vmem:[%s9 + $0x2c] sm:$0xf]
  %v2707 = vld [vmem:[%s9 + $0x30] sm:$0xf]
  %v2708 = vld [vmem:[%s9 + $0x34] sm:$0xf]
  %v2709 = vld [vmem:[%s9 + $0x38] sm:$0xf]
  %v2710 = vld [vmem:[%s9 + $0x3c] sm:$0xf]
  %v2711 = vld [vmem:[%s9 + $0x40] sm:$0xf]
  %v2712 = vld [vmem:[%s9 + $0x44] sm:$0xf]
  %v2713 = vld [vmem:[%s9 + $0x48] sm:$0xf]
  %v2714 = vld [vmem:[%s9 + $0x4c] sm:$0xf]
  %v2715 = vld [vmem:[%s9 + $0x50] sm:$0xf]
  %v2716 = vld [vmem:[%s9 + $0x54] sm:$0xf]
  %v2717 = vld [vmem:[%s9 + $0x58] sm:$0xf]
  %v2718 = vld [vmem:[%s9 + $0x5c] sm:$0xf]
  %v2719 = vld [vmem:[%s9 + $0x60] sm:$0xf]
  %v2720 = vld [vmem:[%s9 + $0x64] sm:$0xf]
  %v2721 = vld [vmem:[%s9 + $0x68] sm:$0xf]
  %v2722 = vld [vmem:[%s9 + $0x6c] sm:$0xf]
  %v2723 = vld [vmem:[%s9 + $0x70] sm:$0xf]
  %v2724 = vld [vmem:[%s9 + $0x74] sm:$0xf]
  %v2725 = vld [vmem:[%s9 + $0x78] sm:$0xf]
  %v2726 = vld [vmem:[%s9 + $0x7c] sm:$0xf]
  %v2727 = vld [vmem:[%s10] sm:$0x1]
  %v2729 = vlaneseq
  %v2730 = vshrl.u32 %v2729, 7
  %v2731 = vsub.s32 0, %v2730
  %v2732 = vrot.slane %v2727, %v2731
  %v2766 = vunpack.c.l.b16 %v2695
  %v2767 = vunpack.c.l.b16 %v2696
  %v2768 = vunpack.c.l.b16 %v2697
  %v2769 = vunpack.c.l.b16 %v2698
  %v2770 = vunpack.c.l.b16 %v2699
  %v2771 = vunpack.c.l.b16 %v2700
  %v2772 = vunpack.c.l.b16 %v2701
  %v2773 = vunpack.c.l.b16 %v2702
  %v2774 = vunpack.c.l.b16 %v2703
  %v2775 = vunpack.c.l.b16 %v2704
  %v2776 = vunpack.c.l.b16 %v2705
  %v2777 = vunpack.c.l.b16 %v2706
  %v2778 = vunpack.c.l.b16 %v2707
  %v2779 = vunpack.c.l.b16 %v2708
  %v2780 = vunpack.c.l.b16 %v2709
  %v2781 = vunpack.c.l.b16 %v2710
  %v2782 = vunpack.c.l.b16 %v2711
  %v2783 = vunpack.c.l.b16 %v2712
  %v2784 = vunpack.c.l.b16 %v2713
  %v2785 = vunpack.c.l.b16 %v2714
  %v2786 = vunpack.c.l.b16 %v2715
  %v2787 = vunpack.c.l.b16 %v2716
  %v2788 = vunpack.c.l.b16 %v2717
  %v2789 = vunpack.c.l.b16 %v2718
  %v2790 = vunpack.c.l.b16 %v2719
  %v2791 = vunpack.c.l.b16 %v2720
  %v2792 = vunpack.c.l.b16 %v2721
  %v2793 = vunpack.c.l.b16 %v2722
  %v2794 = vunpack.c.l.b16 %v2723
  %v2795 = vunpack.c.l.b16 %v2724
  %v2796 = vunpack.c.l.b16 %v2725
  %v2797 = vunpack.c.l.b16 %v2726
  %v2798 = vpack.c.b16 %v2767, %v2766
  %v2799 = vpack.c.b16 %v2769, %v2768
  %v2800 = vpack.c.b16 %v2771, %v2770
  %v2801 = vpack.c.b16 %v2773, %v2772
  %v2802 = vpack.c.b16 %v2775, %v2774
  %v2803 = vpack.c.b16 %v2777, %v2776
  %v2804 = vpack.c.b16 %v2779, %v2778
  %v2805 = vpack.c.b16 %v2781, %v2780
  %v2806 = vpack.c.b16 %v2783, %v2782
  %v2807 = vpack.c.b16 %v2785, %v2784
  %v2808 = vpack.c.b16 %v2787, %v2786
  %v2809 = vpack.c.b16 %v2789, %v2788
  %v2810 = vpack.c.b16 %v2791, %v2790
  %v2811 = vpack.c.b16 %v2793, %v2792
  %v2812 = vpack.c.b16 %v2795, %v2794
  %v2813 = vpack.c.b16 %v2797, %v2796
  %2830 = vmatprep.subr.bf16.mxu0 0
  %2831 = vmatpush1.bf16.msra.mxu0 %v2798
  %2832 = vmatprep.subr.bf16.mxu0 0
  %2833 = vmatpush1.bf16.msra.mxu0 %v2799
  %2834 = vmatprep.subr.bf16.mxu0 0
  %2835 = vmatpush1.bf16.msra.mxu0 %v2800
  %2836 = vmatprep.subr.bf16.mxu0 0
  %2837 = vmatpush1.bf16.msra.mxu0 %v2801
  %2838 = vmatprep.subr.bf16.mxu0 0
  %2839 = vmatpush1.bf16.msra.mxu0 %v2802
  %2840 = vmatprep.subr.bf16.mxu0 0
  %2841 = vmatpush1.bf16.msra.mxu0 %v2803
  %2842 = vmatprep.subr.bf16.mxu0 0
  %2843 = vmatpush1.bf16.msra.mxu0 %v2804
  %2844 = vmatprep.subr.bf16.mxu0 0
  %2845 = vmatpush1.bf16.msra.mxu0 %v2805
  %2846 = vmatprep.subr.bf16.mxu0 0
  %2847 = vmatpush1.bf16.msra.mxu0 %v2806
  %2848 = vmatprep.subr.bf16.mxu0 0
  %2849 = vmatpush1.bf16.msra.mxu0 %v2807
  %2850 = vmatprep.subr.bf16.mxu0 0
  %2851 = vmatpush1.bf16.msra.mxu0 %v2808
  %2852 = vmatprep.subr.bf16.mxu0 0
  %2853 = vmatpush1.bf16.msra.mxu0 %v2809
  %2854 = vmatprep.subr.bf16.mxu0 0
  %2855 = vmatpush1.bf16.msra.mxu0 %v2810
  %2856 = vmatprep.subr.bf16.mxu0 0
  %2857 = vmatpush1.bf16.msra.mxu0 %v2811
  %2858 = vmatprep.subr.bf16.mxu0 0
  %2859 = vmatpush1.bf16.msra.mxu0 %v2812
  %2860 = vmatprep.subr.bf16.mxu0 0
  %2861 = vmatpush1.bf16.msra.mxu0 %v2813
  %2862 = vmatprep.mubr.bf16.mxu0 %v2694
  %2863 = vmatmul.mubr.bf16.gmra.mrb[0].mxu0 %v2693
  %v2864 = vpop.f32.mrb[0].mxu0
  %v2865 = vadd.f32 %v2732, %v2864
  %v2866 = vpop.f32.mrb[0].mxu0
  %v2867 = vpop.f32.mrb[0].mxu0
  %v2868 = vpop.f32.mrb[0].mxu0
  %2869 = vdwg.mxu0
  %2870 = vst [vmem:[%s11] sm:$0x3] %v2865
  // Predicated region
  $region46: #{pointnet_cls_forward.8} parent=0 // pred_check
    _
  $region47: #{pointnet_cls_forward.8} parent=0 // pred_check_branch
    %2872 = sbr.rel (0) target = $region49
  $region48: #{pointnet_cls_forward.8} parent=0 // pred_region
    _
  $region49: #{pointnet_cls_forward.8} parent=0 // pred_fallthru
    _
  // Predicated region
  $region50: #{pointnet_cls_forward.8} parent=0 // pred_check
    _
  $region51: #{pointnet_cls_forward.8} parent=0 // pred_check_branch
    %2874 = sbr.rel (0) target = $region53
  $region52: #{pointnet_cls_forward.8} parent=0 // pred_region
    _
  $region53: #{pointnet_cls_forward.8} parent=0 // pred_fallthru
    _

// kernel: pointnet_cls_forward.10
$region0: #{pointnet_cls_forward.10}
  #allocation0 [shape = 'u32[]', space=smem, size = 0x4, offset = 0x4, fixed_abs, tag = 'smem constant byte address 0x4 - core index']
  #allocation1 [shape = 'u32[144,128]{1,0:T(1,128)}', space=vmem, size = 0x12000, scoped, tag = 'internal scratch']
  %s0 = inlined_call_operand.vmem [shape: bf16[2,16,3], index: 0, kind: input, shape index: {}]
  %s1 = inlined_call_operand.vmem [shape: bf16[2,3,64], index: 1, kind: input, shape index: {}]
  %s2 = inlined_call_operand.vmem [shape: f32[1,64], index: 2, kind: input, shape index: {}]
  %s3 = inlined_call_operand.vmem [shape: bf16[64,128], index: 3, kind: input, shape index: {}]
  %s4 = inlined_call_operand.vmem [shape: f32[1,128], index: 4, kind: input, shape index: {}]
  %s5 = inlined_call_operand.vmem [shape: bf16[128,1024], index: 5, kind: input, shape index: {}]
  %s6 = inlined_call_operand.vmem [shape: f32[2,1,128], index: 6, kind: output, shape index: {0}]
  %s7 = inlined_call_operand.vmem [shape: f32[2,128,128], index: 7, kind: output, shape index: {1}]
  %s8 = inlined_call_operand.vmem [shape: f32[2,1,1024], index: 8, kind: output, shape index: {2}]
  %s9 = inlined_call_operand.vmem [shape: f32[2,1,1024], index: 9, kind: output, shape index: {3}]
  %10 = xla_tuple %s6, %s7, %s8, %s9
  %s11 = sld [smem:[#allocation0]]
  $region89: #{pointnet_cls_forward.10} parent=0
    _
  %s13 = ssub.s32 1, %s11
  %s14 = scalar_select 0, %s13, %s11
  loop: start=0, step=1, limit=4
  $region2: #{pointnet_cls_forward.10} parent=0 // loop_pre_header
    _
  $region3: #{pointnet_cls_forward.10} parent=0 // loop_header
    %s16 = sphi 0, %s20
    %p17 = scmp.ge.s32.totalorder %s16, 4
    %s23 = sphi 0, %s35
    %s24 = sphi 0, %s31
    %s25 = sphi 0, %s23
    %s26 = sphi 0, %s24
    %s27 = sphi 0, %s25
    %s28 = sphi 0, %s26
    %s40 = sphi 0, %s42
    %s43 = sphi 0, %s40
    %s44 = sphi 0, %s43
    %s60 = sphi 0, %s44
    %s66 = sphi 0, %s68
    %s69 = sphi 0, %s66
    %s70 = sphi 0, %s69
    %s86 = sphi 0, %s70
    %s90 = sphi 0, %s90
    %s92 = sphi 0, %s90
    %s93 = sphi 0, %s92
    %s107 = sphi 0, %s93
    %s111 = sphi 0, %s111
    %s113 = sphi 0, %s111
    %s114 = sphi 0, %s113
    %s128 = sphi 0, %s114
    %s132 = sphi 0, %s132
    %s134 = sphi 0, %s132
    %s135 = sphi 0, %s134
    %s149 = sphi 0, %s135
    %s153 = sphi 0, %s153
    %s155 = sphi 0, %s153
    %s156 = sphi 0, %s155
    %s170 = sphi 0, %s156
    %s176 = sphi 0, %s178
    %s179 = sphi 0, %s176
    %s180 = sphi 0, %s179
    %s196 = sphi 0, %s180
    %s202 = sphi 0, %s204
    %s205 = sphi 0, %s202
    %s206 = sphi 0, %s205
    %s222 = sphi 0, %s206
    %s228 = sphi 0, %s230
    %s231 = sphi 0, %s228
    %s232 = sphi 0, %s231
    %s248 = sphi 0, %s232
    %s254 = sphi 0, %s256
    %s257 = sphi 0, %s254
    %s258 = sphi 0, %s257
    %s274 = sphi 0, %s258
  $region4: #{pointnet_cls_forward.10} parent=0 // loop_header_branch
    %19 = sbr.rel (%p17) target = $region8
  $region5: #{pointnet_cls_forward.10} parent=0 // loop_body
    %s21 = ssub.s32 %s16, 1
    %s22 = ssub.s32 %s16, 2
    %s29 = sadd.s32 1, %s24
    %p30 = scmp.ge.s32.totalorder %s29, 1
    %s31 = scalar_select %p30, 0, %s29
    %s32 = sadd.s32 1, %s23
    %s33 = scalar_select %p30, %s32, %s23
    %p34 = scmp.ge.s32.totalorder %s33, 2
    %s35 = scalar_select %p34, 0, %s33
    %s36 = ssub.s32 %s23, %s35
    %s37 = ssub.s32 %s24, %s31
    %s38 = sor.u32 %s36, %s37
    %p39 = scmp.eq.s32.totalorder %s38, 0
    %s41 = sadd.s32 %s40, 1
    %s42 = scalar_select %p39, %s40, %s41
    %p45 = pneg %p39
    %p46 = scmp.eq.s32.totalorder %s16, 1
    %p47 = por %p45, %p46
    %p48 = scmp.ne.s32.totalorder %s40, %s43
    %p49 = scmp.eq.s32.totalorder %s16, 0
    %p50 = por %p48, %p49
    %p51 = scmp.ne.s32.totalorder %s40, %s43
    %p52 = scmp.eq.s32.totalorder %s21, 1
    %p53 = por %p51, %p52
    %p54 = scmp.ne.s32.totalorder %s43, %s44
    %p55 = scmp.eq.s32.totalorder %s21, 0
    %p56 = por %p54, %p55
    %p57 = scmp.ne.s32.totalorder %s43, %s44
    %p58 = scmp.eq.s32.totalorder %s22, 1
    %p59 = por %p57, %p58
    %p61 = scmp.ne.s32.totalorder %s44, %s60
    %p62 = scmp.eq.s32.totalorder %s22, 0
    %p63 = por %p61, %p62
    %s64 = ssub.s32 %s23, %s35
    %p65 = scmp.eq.s32.totalorder %s64, 0
    %s67 = sadd.s32 %s66, 1
    %s68 = scalar_select %p65, %s66, %s67
    %p71 = pneg %p65
    %p72 = scmp.eq.s32.totalorder %s16, 1
    %p73 = por %p71, %p72
    %p74 = scmp.ne.s32.totalorder %s66, %s69
    %p75 = scmp.eq.s32.totalorder %s16, 0
    %p76 = por %p74, %p75
    %p77 = scmp.ne.s32.totalorder %s66, %s69
    %p78 = scmp.eq.s32.totalorder %s21, 1
    %p79 = por %p77, %p78
    %p80 = scmp.ne.s32.totalorder %s69, %s70
    %p81 = scmp.eq.s32.totalorder %s21, 0
    %p82 = por %p80, %p81
    %p83 = scmp.ne.s32.totalorder %s69, %s70
    %p84 = scmp.eq.s32.totalorder %s22, 1
    %p85 = por %p83, %p84
    %p87 = scmp.ne.s32.totalorder %s70, %s86
    %p88 = scmp.eq.s32.totalorder %s22, 0
    %p89 = por %p87, %p88
    %s91 = sadd.s32 %s90, 1
    %p94 = scmp.eq.s32.totalorder %s16, 1
    %p95 = scmp.ne.s32.totalorder %s90, %s92
    %p96 = scmp.eq.s32.totalorder %s16, 0
    %p97 = por %p95, %p96
    %p98 = scmp.ne.s32.totalorder %s90, %s92
    %p99 = scmp.eq.s32.totalorder %s21, 1
    %p100 = por %p98, %p99
    %p101 = scmp.ne.s32.totalorder %s92, %s93
    %p102 = scmp.eq.s32.totalorder %s21, 0
    %p103 = por %p101, %p102
    %p104 = scmp.ne.s32.totalorder %s92, %s93
    %p105 = scmp.eq.s32.totalorder %s22, 1
    %p106 = por %p104, %p105
    %p108 = scmp.ne.s32.totalorder %s93, %s107
    %p109 = scmp.eq.s32.totalorder %s22, 0
    %p110 = por %p108, %p109
    %s112 = sadd.s32 %s111, 1
    %p115 = scmp.eq.s32.totalorder %s16, 1
    %p116 = scmp.ne.s32.totalorder %s111, %s113
    %p117 = scmp.eq.s32.totalorder %s16, 0
    %p118 = por %p116, %p117
    %p119 = scmp.ne.s32.totalorder %s111, %s113
    %p120 = scmp.eq.s32.totalorder %s21, 1
    %p121 = por %p119, %p120
    %p122 = scmp.ne.s32.totalorder %s113, %s114
    %p123 = scmp.eq.s32.totalorder %s21, 0
    %p124 = por %p122, %p123
    %p125 = scmp.ne.s32.totalorder %s113, %s114
    %p126 = scmp.eq.s32.totalorder %s22, 1
    %p127 = por %p125, %p126
    %p129 = scmp.ne.s32.totalorder %s114, %s128
    %p130 = scmp.eq.s32.totalorder %s22, 0
    %p131 = por %p129, %p130
    %s133 = sadd.s32 %s132, 1
    %p136 = scmp.eq.s32.totalorder %s16, 1
    %p137 = scmp.ne.s32.totalorder %s132, %s134
    %p138 = scmp.eq.s32.totalorder %s16, 0
    %p139 = por %p137, %p138
    %p140 = scmp.ne.s32.totalorder %s132, %s134
    %p141 = scmp.eq.s32.totalorder %s21, 1
    %p142 = por %p140, %p141
    %p143 = scmp.ne.s32.totalorder %s134, %s135
    %p144 = scmp.eq.s32.totalorder %s21, 0
    %p145 = por %p143, %p144
    %p146 = scmp.ne.s32.totalorder %s134, %s135
    %p147 = scmp.eq.s32.totalorder %s22, 1
    %p148 = por %p146, %p147
    %p150 = scmp.ne.s32.totalorder %s135, %s149
    %p151 = scmp.eq.s32.totalorder %s22, 0
    %p152 = por %p150, %p151
    %s154 = sadd.s32 %s153, 1
    %p157 = scmp.eq.s32.totalorder %s16, 1
    %p158 = scmp.ne.s32.totalorder %s153, %s155
    %p159 = scmp.eq.s32.totalorder %s16, 0
    %p160 = por %p158, %p159
    %p161 = scmp.ne.s32.totalorder %s153, %s155
    %p162 = scmp.eq.s32.totalorder %s21, 1
    %p163 = por %p161, %p162
    %p164 = scmp.ne.s32.totalorder %s155, %s156
    %p165 = scmp.eq.s32.totalorder %s21, 0
    %p166 = por %p164, %p165
    %p167 = scmp.ne.s32.totalorder %s155, %s156
    %p168 = scmp.eq.s32.totalorder %s22, 1
    %p169 = por %p167, %p168
    %p171 = scmp.ne.s32.totalorder %s156, %s170
    %p172 = scmp.eq.s32.totalorder %s22, 0
    %p173 = por %p171, %p172
    %s174 = ssub.s32 %s23, %s35
    %p175 = scmp.eq.s32.totalorder %s174, 0
    %s177 = sadd.s32 %s176, 1
    %s178 = scalar_select %p175, %s176, %s177
    %p181 = pneg %p175
    %p182 = scmp.eq.s32.totalorder %s16, 1
    %p183 = por %p181, %p182
    %p184 = scmp.ne.s32.totalorder %s176, %s179
    %p185 = scmp.eq.s32.totalorder %s16, 0
    %p186 = por %p184, %p185
    %p187 = scmp.ne.s32.totalorder %s176, %s179
    %p188 = scmp.eq.s32.totalorder %s21, 1
    %p189 = por %p187, %p188
    %p190 = scmp.ne.s32.totalorder %s179, %s180
    %p191 = scmp.eq.s32.totalorder %s21, 0
    %p192 = por %p190, %p191
    %p193 = scmp.ne.s32.totalorder %s179, %s180
    %p194 = scmp.eq.s32.totalorder %s22, 1
    %p195 = por %p193, %p194
    %p197 = scmp.ne.s32.totalorder %s180, %s196
    %p198 = scmp.eq.s32.totalorder %s22, 0
    %p199 = por %p197, %p198
    %s200 = ssub.s32 %s23, %s35
    %p201 = scmp.eq.s32.totalorder %s200, 0
    %s203 = sadd.s32 %s202, 1
    %s204 = scalar_select %p201, %s202, %s203
    %p207 = pneg %p201
    %p208 = scmp.eq.s32.totalorder %s16, 1
    %p209 = por %p207, %p208
    %p210 = scmp.ne.s32.totalorder %s202, %s205
    %p211 = scmp.eq.s32.totalorder %s16, 0
    %p212 = por %p210, %p211
    %p213 = scmp.ne.s32.totalorder %s202, %s205
    %p214 = scmp.eq.s32.totalorder %s21, 1
    %p215 = por %p213, %p214
    %p216 = scmp.ne.s32.totalorder %s205, %s206
    %p217 = scmp.eq.s32.totalorder %s21, 0
    %p218 = por %p216, %p217
    %p219 = scmp.ne.s32.totalorder %s205, %s206
    %p220 = scmp.eq.s32.totalorder %s22, 1
    %p221 = por %p219, %p220
    %p223 = scmp.ne.s32.totalorder %s206, %s222
    %p224 = scmp.eq.s32.totalorder %s22, 0
    %p225 = por %p223, %p224
    %s226 = ssub.s32 %s23, %s35
    %p227 = scmp.eq.s32.totalorder %s226, 0
    %s229 = sadd.s32 %s228, 1
    %s230 = scalar_select %p227, %s228, %s229
    %p233 = pneg %p227
    %p234 = scmp.eq.s32.totalorder %s16, 1
    %p235 = por %p233, %p234
    %p236 = scmp.ne.s32.totalorder %s228, %s231
    %p237 = scmp.eq.s32.totalorder %s16, 0
    %p238 = por %p236, %p237
    %p239 = scmp.ne.s32.totalorder %s228, %s231
    %p240 = scmp.eq.s32.totalorder %s21, 1
    %p241 = por %p239, %p240
    %p242 = scmp.ne.s32.totalorder %s231, %s232
    %p243 = scmp.eq.s32.totalorder %s21, 0
    %p244 = por %p242, %p243
    %p245 = scmp.ne.s32.totalorder %s231, %s232
    %p246 = scmp.eq.s32.totalorder %s22, 1
    %p247 = por %p245, %p246
    %p249 = scmp.ne.s32.totalorder %s232, %s248
    %p250 = scmp.eq.s32.totalorder %s22, 0
    %p251 = por %p249, %p250
    %s252 = ssub.s32 %s23, %s35
    %p253 = scmp.eq.s32.totalorder %s252, 0
    %s255 = sadd.s32 %s254, 1
    %s256 = scalar_select %p253, %s254, %s255
    %p259 = pneg %p253
    %p260 = scmp.eq.s32.totalorder %s16, 1
    %p261 = por %p259, %p260
    %p262 = scmp.ne.s32.totalorder %s254, %s257
    %p263 = scmp.eq.s32.totalorder %s16, 0
    %p264 = por %p262, %p263
    %p265 = scmp.ne.s32.totalorder %s254, %s257
    %p266 = scmp.eq.s32.totalorder %s21, 1
    %p267 = por %p265, %p266
    %p268 = scmp.ne.s32.totalorder %s257, %s258
    %p269 = scmp.eq.s32.totalorder %s21, 0
    %p270 = por %p268, %p269
    %p271 = scmp.ne.s32.totalorder %s257, %s258
    %p272 = scmp.eq.s32.totalorder %s22, 1
    %p273 = por %p271, %p272
    %p275 = scmp.ne.s32.totalorder %s258, %s274
    %p276 = scmp.eq.s32.totalorder %s22, 0
    %p277 = por %p275, %p276
    %p278 = scmp.le.s32.totalorder 1, %s16
    %p279 = scmp.lt.s32.totalorder %s16, 3
    %p280 = pnand %p278, %p279
    %p281 = pneg %p280
    // Predicated region
    $region9: #{pointnet_cls_forward.10} parent=5 // pred_check
      _
    $region10: #{pointnet_cls_forward.10} parent=5 // pred_check_branch
      %283 = sbr.rel (%p280) target = $region12
    $region11: #{pointnet_cls_forward.10} parent=5 // pred_region
      %s284 = ssub.s32 %s16, 1
      // Predicated region
      $region13: #{pointnet_cls_forward.10} parent=11 // pred_check
        %p285 = pneg %p103
      $region14: #{pointnet_cls_forward.10} parent=11 // pred_check_branch
        %287 = sbr.rel (%p285) target = $region16
      $region15: #{pointnet_cls_forward.10} parent=11 // pred_region
        _
      $region16: #{pointnet_cls_forward.10} parent=11 // pred_fallthru
        _
      // Predicated region
      $region17: #{pointnet_cls_forward.10} parent=11 // pred_check
        %p288 = pneg %p124
      $region18: #{pointnet_cls_forward.10} parent=11 // pred_check_branch
        %290 = sbr.rel (%p288) target = $region20
      $region19: #{pointnet_cls_forward.10} parent=11 // pred_region
        _
      $region20: #{pointnet_cls_forward.10} parent=11 // pred_fallthru
        _
      // Predicated region
      $region21: #{pointnet_cls_forward.10} parent=11 // pred_check
        %p291 = pneg %p145
      $region22: #{pointnet_cls_forward.10} parent=11 // pred_check_branch
        %293 = sbr.rel (%p291) target = $region24
      $region23: #{pointnet_cls_forward.10} parent=11 // pred_region
        _
      $region24: #{pointnet_cls_forward.10} parent=11 // pred_fallthru
        _
      // Predicated region
      $region25: #{pointnet_cls_forward.10} parent=11 // pred_check
        %p294 = pneg %p166
      $region26: #{pointnet_cls_forward.10} parent=11 // pred_check_branch
        %296 = sbr.rel (%p294) target = $region28
      $region27: #{pointnet_cls_forward.10} parent=11 // pred_region
        _
      $region28: #{pointnet_cls_forward.10} parent=11 // pred_fallthru
        _
    $region12: #{pointnet_cls_forward.10} parent=5 // pred_fallthru
      _
    %p297 = scmp.lt.s32.totalorder %s16, 2
    // Predicated region
    $region29: #{pointnet_cls_forward.10} parent=5 // pred_check
      %p298 = pneg %p297
    $region30: #{pointnet_cls_forward.10} parent=5 // pred_check_branch
      %300 = sbr.rel (%p298) target = $region32
    $region31: #{pointnet_cls_forward.10} parent=5 // pred_region
      // Predicated region
      $region33: #{pointnet_cls_forward.10} parent=31 // pred_check
        %p301 = pneg %p50
      $region34: #{pointnet_cls_forward.10} parent=31 // pred_check_branch
        %303 = sbr.rel (%p301) target = $region36
      $region35: #{pointnet_cls_forward.10} parent=31 // pred_region
        %s304 = smul.u32 2, %s24
        %p305 = scmp.lt.s32.totalorder %s23, 1
        %s306 = scalar_select %p305, %s23, 1
        %p307 = scmp.lt.s32.totalorder %s304, 1
        %s308 = scalar_select %p307, %s304, 1
        %s309 = smul.addr %s306, 2
        %s310 = sadd.s32 %s308, %s309
        %s311 = smul.addr %s310, 4
        %s312 = scalar_lea.vmem %s0, %s311
        %s313 = smul.u32 2, %s24
      $region36: #{pointnet_cls_forward.10} parent=31 // pred_fallthru
        _
      // Predicated region
      $region37: #{pointnet_cls_forward.10} parent=31 // pred_check
        %p314 = pneg %p76
      $region38: #{pointnet_cls_forward.10} parent=31 // pred_check_branch
        %316 = sbr.rel (%p314) target = $region40
      $region39: #{pointnet_cls_forward.10} parent=31 // pred_region
        %p317 = scmp.lt.s32.totalorder %s23, 1
        %s318 = scalar_select %p317, %s23, 1
        %s319 = smul.addr %s318, 2
        %s320 = scalar_lea.vmem %s1, %s319
      $region40: #{pointnet_cls_forward.10} parent=31 // pred_fallthru
        _
    $region32: #{pointnet_cls_forward.10} parent=5 // pred_fallthru
      _
    %p321 = scmp.le.s32.totalorder 1, %s16
    %p322 = scmp.lt.s32.totalorder %s16, 3
    %p323 = pnand %p321, %p322
    %p324 = pneg %p323
    // Predicated region
    $region41: #{pointnet_cls_forward.10} parent=5 // pred_check
      _
    $region42: #{pointnet_cls_forward.10} parent=5 // pred_check_branch
      %326 = sbr.rel (%p323) target = $region44
    $region43: #{pointnet_cls_forward.10} parent=5 // pred_region
      %s327 = ssub.s32 %s16, 1
      %s328 = smul.u32 2, %s26
      %p329 = scmp.lt.s32.totalorder %s25, 1
      %s330 = scalar_select %p329, %s25, 1
      %p331 = scmp.lt.s32.totalorder %s328, 1
      %s332 = scalar_select %p331, %s328, 1
      %s333 = smul.addr %s330, 2
      %s334 = sadd.s32 %s332, %s333
      %s335 = smul.addr %s334, 4
      %s336 = scalar_lea.vmem %s0, %s335
      %p337 = pneg %p56
      %p338 = pneg %p53
      %p339 = scmp.lt.s32.totalorder %s25, 1
      %s340 = scalar_select %p339, %s25, 1
      %s341 = smul.addr %s340, 2
      %s342 = scalar_lea.vmem %s1, %s341
      %p343 = pneg %p82
      %p344 = pneg %p79
      %p345 = pneg %p103
      %p346 = pneg %p100
      %p347 = pneg %p124
      %p348 = pneg %p121
      %p349 = pneg %p145
      %p350 = pneg %p142
      %p351 = pneg %p166
      %p352 = pneg %p163
      %p353 = pneg %p192
      %p354 = pneg %p189
      %p355 = scmp.lt.s32.totalorder %s25, 1
      %s356 = scalar_select %p355, %s25, 1
      %s357 = scalar_lea.vmem %s6, %s356
      %p358 = pneg %p218
      %p359 = pneg %p215
      %p360 = scmp.lt.s32.totalorder %s25, 1
      %s361 = scalar_select %p360, %s25, 1
      %s362 = smul.addr %s361, 16
      %s363 = smul.addr %s362, 8
      %s364 = scalar_lea.vmem %s7, %s363
      %p365 = pneg %p244
      %p366 = pneg %p241
      %p367 = scmp.lt.s32.totalorder %s25, 1
      %s368 = scalar_select %p367, %s25, 1
      %s369 = smul.addr %s368, 8
      %s370 = scalar_lea.vmem %s8, %s369
      %p371 = pneg %p270
      %p372 = pneg %p267
      %p373 = scmp.lt.s32.totalorder %s25, 1
      %s374 = scalar_select %p373, %s25, 1
      %s375 = smul.addr %s374, 8
      %s376 = scalar_lea.vmem %s9, %s375
      %s377 = smul.u32 2, %s26
      %p378 = scmp.lt.s32.totalorder %s25, 1
      %s379 = scalar_select %p378, %s25, 1
      %p380 = scmp.lt.s32.totalorder %s377, 1
      %s381 = scalar_select %p380, %s377, 1
      %s382 = smul.addr %s379, 2
      %s383 = sadd.s32 %s381, %s382
      %s384 = smul.addr %s383, 4
      %s385 = scalar_lea.vmem %s0, %s384
      %s386 = smul.u32 2, %s26
      %p387 = scmp.lt.s32.totalorder %s25, 1
      %s388 = scalar_select %p387, %s25, 1
      %s389 = smul.addr %s388, 2
      %s390 = scalar_lea.vmem %s1, %s389
      %p391 = scmp.lt.s32.totalorder %s25, 1
      %s392 = scalar_select %p391, %s25, 1
      %s393 = scalar_lea.vmem %s6, %s392
      %p394 = scmp.lt.s32.totalorder %s25, 1
      %s395 = scalar_select %p394, %s25, 1
      %s396 = smul.addr %s395, 16
      %s397 = smul.addr %s396, 8
      %s398 = scalar_lea.vmem %s7, %s397
      %p399 = scmp.lt.s32.totalorder %s25, 1
      %s400 = scalar_select %p399, %s25, 1
      %s401 = smul.addr %s400, 8
      %s402 = scalar_lea.vmem %s8, %s401
      %p403 = scmp.lt.s32.totalorder %s25, 1
      %s404 = scalar_select %p403, %s25, 1
      %s405 = smul.addr %s404, 8
      %s406 = scalar_lea.vmem %s9, %s405
      %v408 = vld [vmem:[%s385] sm:$0xf]
      %v409 = vld [vmem:[%s385 + $0x4] sm:$0xf]
      %v410 = vld [vmem:[%s390] sm:$0x3]
      %v411 = vld [vmem:[%s2] sm:$0x1]
      %v413 = vlaneseq
      %v414 = vshrl.u32 %v413, 7
      %v415 = vsub.s32 0, %v414
      %v416 = vrot.slane %v411, %v415
      %v420 = vunpack.c.l.b16 %v408
      %v421 = vunpack.c.l.b16 %v409
      %v422 = vpack.c.b16 %v421, %v420
      %vm423 = vcmask 23552
      %v425 = vsel %vm423, %v422, 0
      %vm427 = vcmask 1040384
      %vm428 = vcmask 1041408
      %v429 = vsel %vm427, 4294967295, 65535
      %v430 = vsel %vm428, %v429, 0
      %v432 = vand.u32 %v410, %v430
      %434 = vmatprep.subr.bf16.mxu0 0
      %435 = vmatpush1.bf16.msra.mxu0 %v432
      %436 = vmatprep.subr.bf16.mxu0 0
      %437 = vmatpush1.bf16.msra.mxu0 0
      %438 = vmatprep.subr.bf16.mxu0 0
      %439 = vmatpush1.bf16.msra.mxu0 0
      %440 = vmatprep.subr.bf16.mxu0 0
      %441 = vmatpush1.bf16.msra.mxu0 0
      %442 = vmatprep.subr.bf16.mxu0 0
      %443 = vmatpush1.bf16.msra.mxu0 0
      %444 = vmatprep.subr.bf16.mxu0 0
      %445 = vmatpush1.bf16.msra.mxu0 0
      %446 = vmatprep.subr.bf16.mxu0 0
      %447 = vmatpush1.bf16.msra.mxu0 0
      %448 = vmatprep.subr.bf16.mxu0 0
      %449 = vmatpush1.bf16.msra.mxu0 0
      %450 = vmatprep.subr.bf16.mxu0 0
      %451 = vmatpush1.bf16.msra.mxu0 0
      %452 = vmatprep.subr.bf16.mxu0 0
      %453 = vmatpush1.bf16.msra.mxu0 0
      %454 = vmatprep.subr.bf16.mxu0 0
      %455 = vmatpush1.bf16.msra.mxu0 0
      %456 = vmatprep.subr.bf16.mxu0 0
      %457 = vmatpush1.bf16.msra.mxu0 0
      %458 = vmatprep.subr.bf16.mxu0 0
      %459 = vmatpush1.bf16.msra.mxu0 0
      %460 = vmatprep.subr.bf16.mxu0 0
      %461 = vmatpush1.bf16.msra.mxu0 0
      %462 = vmatprep.subr.bf16.mxu0 0
      %463 = vmatpush1.bf16.msra.mxu0 0
      %464 = vmatprep.subr.bf16.mxu0 0
      %465 = vmatpush1.bf16.msra.mxu0 0
      %466 = vmatprep.mubr.bf16.mxu0 0
      %467 = vmatmul.mubr.bf16.gmra.mrb[0].mxu0 %v425
      %v468 = vpop.f32.mrb[0].mxu0
      %v469 = vadd.f32 %v416, %v468
      %v470 = vpop.f32.mrb[0].mxu0
      %v471 = vpop.f32.mrb[0].mxu0
      %v472 = vadd.f32 %v416, %v471
      %v473 = vpop.f32.mrb[0].mxu0
      %474 = vdwg.mxu0
      %v475 = vmax.f32 %v469, 0.0
      %v476 = vmax.f32 %v472, 0.0
      %v477 = vpack.c.bf16 %v476, %v475
      %v478 = vld [vmem:[%s3] sm:$0xf]
      %v479 = vld [vmem:[%s3 + $0x4] sm:$0xf]
      %v480 = vld [vmem:[%s3 + $0x8] sm:$0xf]
      %v481 = vld [vmem:[%s3 + $0xc] sm:$0xf]
      %v482 = vld [vmem:[%s3 + $0x10] sm:$0xf]
      %v483 = vld [vmem:[%s3 + $0x14] sm:$0xf]
      %v484 = vld [vmem:[%s3 + $0x18] sm:$0xf]
      %v485 = vld [vmem:[%s3 + $0x1c] sm:$0xf]
      %v486 = vld [vmem:[%s4] sm:$0x1]
      %v488 = vlaneseq
      %v489 = vshrl.u32 %v488, 7
      %v490 = vsub.s32 0, %v489
      %v491 = vrot.slane %v486, %v490
      %v501 = vunpack.c.l.b16 %v478
      %v502 = vunpack.c.l.b16 %v479
      %v503 = vunpack.c.l.b16 %v480
      %v504 = vunpack.c.l.b16 %v481
      %v505 = vunpack.c.l.b16 %v482
      %v506 = vunpack.c.l.b16 %v483
      %v507 = vunpack.c.l.b16 %v484
      %v508 = vunpack.c.l.b16 %v485
      %v509 = vpack.c.b16 %v502, %v501
      %v510 = vpack.c.b16 %v504, %v503
      %v511 = vpack.c.b16 %v506, %v505
      %v512 = vpack.c.b16 %v508, %v507
      %vm517 = vcmask 523264
      %v519 = vsel %vm517, %v477, 0
      %521 = vmatprep.subr.bf16.mxu0 0
      %522 = vmatpush1.bf16.msra.mxu0 %v509
      %523 = vmatprep.subr.bf16.mxu0 0
      %524 = vmatpush1.bf16.msra.mxu0 %v510
      %525 = vmatprep.subr.bf16.mxu0 0
      %526 = vmatpush1.bf16.msra.mxu0 %v511
      %527 = vmatprep.subr.bf16.mxu0 0
      %528 = vmatpush1.bf16.msra.mxu0 %v512
      %529 = vmatprep.subr.bf16.mxu0 0
      %530 = vmatpush1.bf16.msra.mxu0 0
      %531 = vmatprep.subr.bf16.mxu0 0
      %532 = vmatpush1.bf16.msra.mxu0 0
      %533 = vmatprep.subr.bf16.mxu0 0
      %534 = vmatpush1.bf16.msra.mxu0 0
      %535 = vmatprep.subr.bf16.mxu0 0
      %536 = vmatpush1.bf16.msra.mxu0 0
      %537 = vmatprep.subr.bf16.mxu0 0
      %538 = vmatpush1.bf16.msra.mxu0 0
      %539 = vmatprep.subr.bf16.mxu0 0
      %540 = vmatpush1.bf16.msra.mxu0 0
      %541 = vmatprep.subr.bf16.mxu0 0
      %542 = vmatpush1.bf16.msra.mxu0 0
      %543 = vmatprep.subr.bf16.mxu0 0
      %544 = vmatpush1.bf16.msra.mxu0 0
      %545 = vmatprep.subr.bf16.mxu0 0
      %546 = vmatpush1.bf16.msra.mxu0 0
      %547 = vmatprep.subr.bf16.mxu0 0
      %548 = vmatpush1.bf16.msra.mxu0 0
      %549 = vmatprep.subr.bf16.mxu0 0
      %550 = vmatpush1.bf16.msra.mxu0 0
      %551 = vmatprep.subr.bf16.mxu0 0
      %552 = vmatpush1.bf16.msra.mxu0 0
      %553 = vmatprep.mubr.bf16.mxu0 0
      %554 = vmatmul.mubr.bf16.gmra.mrb[0].mxu0 %v519
      %v555 = vpop.f32.mrb[0].mxu0
      %v556 = vadd.f32 %v491, %v555
      %v557 = vpop.f32.mrb[0].mxu0
      %v558 = vpop.f32.mrb[0].mxu0
      %v559 = vadd.f32 %v491, %v558
      %v560 = vpop.f32.mrb[0].mxu0
      %561 = vdwg.mxu0
      %v562 = vmax.f32 %v556, 0.0
      %v563 = vmax.f32 %v559, 0.0
      %v564 = vpack.c.bf16 %v563, %v562
      %v565 = vadd.f32 %v562, %v563
      %v566 = vrot.slane %v565, 4
      %v567 = vadd.f32 %v565, %v566
      %v568 = vrot.slane %v567, 2
      %v569 = vadd.f32 %v567, %v568
      %v570 = vrot.slane %v569, 1
      %v571 = vadd.f32 %v569, %v570
      %572 = vxpose.xlu0.c.b16.start [1/8] %v564, 128
      %573 = vxpose.xlu0.c.b16.cont [2/8] 0, 128
      %574 = vxpose.xlu0.c.b16.cont [3/8] 0, 128
      %575 = vxpose.xlu0.c.b16.cont [4/8] 0, 128
      %576 = vxpose.xlu0.c.b16.cont [5/8] 0, 128
      %577 = vxpose.xlu0.c.b16.cont [6/8] 0, 128
      %578 = vxpose.xlu0.c.b16.cont [7/8] 0, 128
      %579 = vxpose.xlu0.c.b16.end [8/8] 0, 128
      %v580 = vpop.trf.xlu0
      %v581 = vpop.trf.xlu0
      %v582 = vpop.trf.xlu0
      %v583 = vpop.trf.xlu0
      %v584 = vpop.trf.xlu0
      %v585 = vpop.trf.xlu0
      %v586 = vpop.trf.xlu0
      %v587 = vpop.trf.xlu0
      %vm588 = vcmask 130048
      %v590 = vsel %vm588, %v580, 0
      %v593 = vsel %vm588, %v581, 0
      %v596 = vsel %vm588, %v582, 0
      %v599 = vsel %vm588, %v583, 0
      %v602 = vsel %vm588, %v584, 0
      %v605 = vsel %vm588, %v585, 0
      %v608 = vsel %vm588, %v586, 0
      %v611 = vsel %vm588, %v587, 0
      %613 = vmatprep.subr.bf16.mxu0 0
      %614 = vmatpush1.bf16.msra.mxu0 %v564
      %615 = vmatprep.subr.bf16.mxu0 0
      %616 = vmatpush1.bf16.msra.mxu0 0
      %617 = vmatprep.subr.bf16.mxu0 0
      %618 = vmatpush1.bf16.msra.mxu0 0
      %619 = vmatprep.subr.bf16.mxu0 0
      %620 = vmatpush1.bf16.msra.mxu0 0
      %621 = vmatprep.subr.bf16.mxu0 0
      %622 = vmatpush1.bf16.msra.mxu0 0
      %623 = vmatprep.subr.bf16.mxu0 0
      %624 = vmatpush1.bf16.msra.mxu0 0
      %625 = vmatprep.subr.bf16.mxu0 0
      %626 = vmatpush1.bf16.msra.mxu0 0
      %627 = vmatprep.subr.bf16.mxu0 0
      %628 = vmatpush1.bf16.msra.mxu0 0
      %629 = vmatprep.subr.bf16.mxu0 0
      %630 = vmatpush1.bf16.msra.mxu0 0
      %631 = vmatprep.subr.bf16.mxu0 0
      %632 = vmatpush1.bf16.msra.mxu0 0
      %633 = vmatprep.subr.bf16.mxu0 0
      %634 = vmatpush1.bf16.msra.mxu0 0
      %635 = vmatprep.subr.bf16.mxu0 0
      %636 = vmatpush1.bf16.msra.mxu0 0
      %637 = vmatprep.subr.bf16.mxu0 0
      %638 = vmatpush1.bf16.msra.mxu0 0
      %639 = vmatprep.subr.bf16.mxu0 0
      %640 = vmatpush1.bf16.msra.mxu0 0
      %641 = vmatprep.subr.bf16.mxu0 0
      %642 = vmatpush1.bf16.msra.mxu0 0
      %643 = vmatprep.subr.bf16.mxu0 0
      %644 = vmatpush1.bf16.msra.mxu0 0
      %645 = vmatprep.mubr.bf16.mxu0 0
      %646 = vmatmul.mubr.bf16.gmra.mrb[0].mxu0 %v590
      %v647 = vpop.f32.mrb[0].mxu0
      %v648 = vadd.f32 0.0, %v647
      %v649 = vpop.f32.mrb[0].mxu0
      %v650 = vpop.f32.mrb[0].mxu0
      %v651 = vadd.f32 0.0, %v650
      %v652 = vpop.f32.mrb[0].mxu0
      %653 = vmatprep.mubr.bf16.mxu0 0
      %654 = vmatmul.mubr.bf16.gmra.mrb[0].mxu0 %v593
      %v655 = vpop.f32.mrb[0].mxu0
      %v656 = vadd.f32 0.0, %v655
      %v657 = vpop.f32.mrb[0].mxu0
      %v658 = vpop.f32.mrb[0].mxu0
      %v659 = vadd.f32 0.0, %v658
      %v660 = vpop.f32.mrb[0].mxu0
      %661 = vmatprep.mubr.bf16.mxu0 0
      %662 = vmatmul.mubr.bf16.gmra.mrb[0].mxu0 %v596
      %v663 = vpop.f32.mrb[0].mxu0
      %v664 = vadd.f32 0.0, %v663
      %v665 = vpop.f32.mrb[0].mxu0
      %v666 = vpop.f32.mrb[0].mxu0
      %v667 = vadd.f32 0.0, %v666
      %v668 = vpop.f32.mrb[0].mxu0
      %669 = vmatprep.mubr.bf16.mxu0 0
      %670 = vmatmul.mubr.bf16.gmra.mrb[0].mxu0 %v599
      %v671 = vpop.f32.mrb[0].mxu0
      %v672 = vadd.f32 0.0, %v671
      %v673 = vpop.f32.mrb[0].mxu0
      %v674 = vpop.f32.mrb[0].mxu0
      %v675 = vadd.f32 0.0, %v674
      %v676 = vpop.f32.mrb[0].mxu0
      %677 = vmatprep.mubr.bf16.mxu0 0
      %678 = vmatmul.mubr.bf16.gmra.mrb[0].mxu0 %v602
      %v679 = vpop.f32.mrb[0].mxu0
      %v680 = vadd.f32 0.0, %v679
      %v681 = vpop.f32.mrb[0].mxu0
      %v682 = vpop.f32.mrb[0].mxu0
      %v683 = vadd.f32 0.0, %v682
      %v684 = vpop.f32.mrb[0].mxu0
      %685 = vmatprep.mubr.bf16.mxu0 0
      %686 = vmatmul.mubr.bf16.gmra.mrb[0].mxu0 %v605
      %v687 = vpop.f32.mrb[0].mxu0
      %v688 = vadd.f32 0.0, %v687
      %v689 = vpop.f32.mrb[0].mxu0
      %v690 = vpop.f32.mrb[0].mxu0
      %v691 = vadd.f32 0.0, %v690
      %v692 = vpop.f32.mrb[0].mxu0
      %693 = vmatprep.mubr.bf16.mxu0 0
      %694 = vmatmul.mubr.bf16.gmra.mrb[0].mxu0 %v608
      %v695 = vpop.f32.mrb[0].mxu0
      %v696 = vadd.f32 0.0, %v695
      %v697 = vpop.f32.mrb[0].mxu0
      %v698 = vpop.f32.mrb[0].mxu0
      %v699 = vadd.f32 0.0, %v698
      %v700 = vpop.f32.mrb[0].mxu0
      %701 = vmatprep.mubr.bf16.mxu0 0
      %702 = vmatmul.mubr.bf16.gmra.mrb[0].mxu0 %v611
      %v703 = vpop.f32.mrb[0].mxu0
      %v704 = vadd.f32 0.0, %v703
      %v705 = vpop.f32.mrb[0].mxu0
      %v706 = vpop.f32.mrb[0].mxu0
      %v707 = vadd.f32 0.0, %v706
      %v708 = vpop.f32.mrb[0].mxu0
      %709 = vdwg.mxu0
      %p710 = scmp.eq.s32.totalorder %s26, 0
      // Predicated region
      $region45: #{pointnet_cls_forward.10} parent=43 // pred_check
        %p711 = pneg %p710
      $region46: #{pointnet_cls_forward.10} parent=43 // pred_check_branch
        %713 = sbr.rel (%p711) target = $region48
      $region47: #{pointnet_cls_forward.10} parent=43 // pred_region
        %714 = vst [vmem:[%s393] sm:$0x1] %v571
        %715 = vst [vmem:[%s398] sm:$0xff] %v648
        %716 = vst [vmem:[%s398 + $0x8] sm:$0xff] %v651
        %717 = vst [vmem:[%s398 + $0x10] sm:$0xff] %v656
        %718 = vst [vmem:[%s398 + $0x18] sm:$0xff] %v659
        %719 = vst [vmem:[%s398 + $0x20] sm:$0xff] %v664
        %720 = vst [vmem:[%s398 + $0x28] sm:$0xff] %v667
        %721 = vst [vmem:[%s398 + $0x30] sm:$0xff] %v672
        %722 = vst [vmem:[%s398 + $0x38] sm:$0xff] %v675
        %723 = vst [vmem:[%s398 + $0x40] sm:$0xff] %v680
        %724 = vst [vmem:[%s398 + $0x48] sm:$0xff] %v683
        %725 = vst [vmem:[%s398 + $0x50] sm:$0xff] %v688
        %726 = vst [vmem:[%s398 + $0x58] sm:$0xff] %v691
        %727 = vst [vmem:[%s398 + $0x60] sm:$0xff] %v696
        %728 = vst [vmem:[%s398 + $0x68] sm:$0xff] %v699
        %729 = vst [vmem:[%s398 + $0x70] sm:$0xff] %v704
        %730 = vst [vmem:[%s398 + $0x78] sm:$0xff] %v707
        %731 = vst [vmem:[%s402] sm:$0xff] -inf
        %732 = vst [vmem:[%s406] sm:$0xff] inf
      $region48: #{pointnet_cls_forward.10} parent=43 // pred_fallthru
        _
      %p733 = scmp.ne.s32.totalorder %s26, 0
      // Predicated region
      $region49: #{pointnet_cls_forward.10} parent=43 // pred_check
        %p734 = pneg %p733
      $region50: #{pointnet_cls_forward.10} parent=43 // pred_check_branch
        %736 = sbr.rel (%p734) target = $region52
      $region51: #{pointnet_cls_forward.10} parent=43 // pred_region
        %v737 = vld [vmem:[%s393] sm:$0x1]
        %v738 = vadd.f32 %v737, %v571
        %739 = vst [vmem:[%s393] sm:$0x1] %v738
        %v740 = vld [vmem:[%s398] sm:$0xff]
        %v741 = vld [vmem:[%s398 + $0x8] sm:$0xff]
        %v742 = vld [vmem:[%s398 + $0x10] sm:$0xff]
        %v743 = vld [vmem:[%s398 + $0x18] sm:$0xff]
        %v744 = vld [vmem:[%s398 + $0x20] sm:$0xff]
        %v745 = vld [vmem:[%s398 + $0x28] sm:$0xff]
        %v746 = vld [vmem:[%s398 + $0x30] sm:$0xff]
        %v747 = vld [vmem:[%s398 + $0x38] sm:$0xff]
        %v748 = vld [vmem:[%s398 + $0x40] sm:$0xff]
        %v749 = vld [vmem:[%s398 + $0x48] sm:$0xff]
        %v750 = vld [vmem:[%s398 + $0x50] sm:$0xff]
        %v751 = vld [vmem:[%s398 + $0x58] sm:$0xff]
        %v752 = vld [vmem:[%s398 + $0x60] sm:$0xff]
        %v753 = vld [vmem:[%s398 + $0x68] sm:$0xff]
        %v754 = vld [vmem:[%s398 + $0x70] sm:$0xff]
        %v755 = vld [vmem:[%s398 + $0x78] sm:$0xff]
        %v756 = vadd.f32 %v740, %v648
        %v757 = vadd.f32 %v741, %v651
        %v758 = vadd.f32 %v742, %v656
        %v759 = vadd.f32 %v743, %v659
        %v760 = vadd.f32 %v744, %v664
        %v761 = vadd.f32 %v745, %v667
        %v762 = vadd.f32 %v746, %v672
        %v763 = vadd.f32 %v747, %v675
        %v764 = vadd.f32 %v748, %v680
        %v765 = vadd.f32 %v749, %v683
        %v766 = vadd.f32 %v750, %v688
        %v767 = vadd.f32 %v751, %v691
        %v768 = vadd.f32 %v752, %v696
        %v769 = vadd.f32 %v753, %v699
        %v770 = vadd.f32 %v754, %v704
        %v771 = vadd.f32 %v755, %v707
        %772 = vst [vmem:[%s398] sm:$0xff] %v756
        %773 = vst [vmem:[%s398 + $0x8] sm:$0xff] %v757
        %774 = vst [vmem:[%s398 + $0x10] sm:$0xff] %v758
        %775 = vst [vmem:[%s398 + $0x18] sm:$0xff] %v759
        %776 = vst [vmem:[%s398 + $0x20] sm:$0xff] %v760
        %777 = vst [vmem:[%s398 + $0x28] sm:$0xff] %v761
        %778 = vst [vmem:[%s398 + $0x30] sm:$0xff] %v762
        %779 = vst [vmem:[%s398 + $0x38] sm:$0xff] %v763
        %780 = vst [vmem:[%s398 + $0x40] sm:$0xff] %v764
        %781 = vst [vmem:[%s398 + $0x48] sm:$0xff] %v765
        %782 = vst [vmem:[%s398 + $0x50] sm:$0xff] %v766
        %783 = vst [vmem:[%s398 + $0x58] sm:$0xff] %v767
        %784 = vst [vmem:[%s398 + $0x60] sm:$0xff] %v768
        %785 = vst [vmem:[%s398 + $0x68] sm:$0xff] %v769
        %786 = vst [vmem:[%s398 + $0x70] sm:$0xff] %v770
        %787 = vst [vmem:[%s398 + $0x78] sm:$0xff] %v771
      $region52: #{pointnet_cls_forward.10} parent=43 // pred_fallthru
        _
      %v788 = vld [vmem:[%s5] sm:$0xff]
      %v789 = vld [vmem:[%s5 + $0x20] sm:$0xff]
      %v790 = vld [vmem:[%s5 + $0x40] sm:$0xff]
      %v791 = vld [vmem:[%s5 + $0x60] sm:$0xff]
      %v792 = vld [vmem:[%s5 + $0x80] sm:$0xff]
      %v793 = vld [vmem:[%s5 + $0xa0] sm:$0xff]
      %v794 = vld [vmem:[%s5 + $0xc0] sm:$0xff]
      %v795 = vld [vmem:[%s5 + $0xe0] sm:$0xff]
      %v796 = vld [vmem:[%s5 + $0x100] sm:$0xff]
      %v797 = vld [vmem:[%s5 + $0x120] sm:$0xff]
      %v798 = vld [vmem:[%s5 + $0x140] sm:$0xff]
      %v799 = vld [vmem:[%s5 + $0x160] sm:$0xff]
      %v800 = vld [vmem:[%s5 + $0x180] sm:$0xff]
      %v801 = vld [vmem:[%s5 + $0x1a0] sm:$0xff]
      %v802 = vld [vmem:[%s5 + $0x1c0] sm:$0xff]
      %v803 = vld [vmem:[%s5 + $0x1e0] sm:$0xff]
      %v820 = vunpack.c.l.b16 %v788
      %v821 = vunpack.c.h.b16 %v788
      %v822 = vunpack.c.l.b16 %v789
      %v823 = vunpack.c.h.b16 %v789
      %v824 = vunpack.c.l.b16 %v790
      %v825 = vunpack.c.h.b16 %v790
      %v826 = vunpack.c.l.b16 %v791
      %v827 = vunpack.c.h.b16 %v791
      %v828 = vunpack.c.l.b16 %v792
      %v829 = vunpack.c.h.b16 %v792
      %v830 = vunpack.c.l.b16 %v793
      %v831 = vunpack.c.h.b16 %v793
      %v832 = vunpack.c.l.b16 %v794
      %v833 = vunpack.c.h.b16 %v794
      %v834 = vunpack.c.l.b16 %v795
      %v835 = vunpack.c.h.b16 %v795
      %v836 = vunpack.c.l.b16 %v796
      %v837 = vunpack.c.h.b16 %v796
      %v838 = vunpack.c.l.b16 %v797
      %v839 = vunpack.c.h.b16 %v797
      %v840 = vunpack.c.l.b16 %v798
      %v841 = vunpack.c.h.b16 %v798
      %v842 = vunpack.c.l.b16 %v799
      %v843 = vunpack.c.h.b16 %v799
      %v844 = vunpack.c.l.b16 %v800
      %v845 = vunpack.c.h.b16 %v800
      %v846 = vunpack.c.l.b16 %v801
      %v847 = vunpack.c.h.b16 %v801
      %v848 = vunpack.c.l.b16 %v802
      %v849 = vunpack.c.h.b16 %v802
      %v850 = vunpack.c.l.b16 %v803
      %v851 = vunpack.c.h.b16 %v803
      %v852 = vpack.c.b16 %v822, %v820
      %v853 = vpack.c.b16 %v823, %v821
      %v854 = vpack.c.b16 %v826, %v824
      %v855 = vpack.c.b16 %v827, %v825
      %v856 = vpack.c.b16 %v830, %v828
      %v857 = vpack.c.b16 %v831, %v829
      %v858 = vpack.c.b16 %v834, %v832
      %v859 = vpack.c.b16 %v835, %v833
      %v860 = vpack.c.b16 %v838, %v836
      %v861 = vpack.c.b16 %v839, %v837
      %v862 = vpack.c.b16 %v842, %v840
      %v863 = vpack.c.b16 %v843, %v841
      %v864 = vpack.c.b16 %v846, %v844
      %v865 = vpack.c.b16 %v847, %v845
      %v866 = vpack.c.b16 %v850, %v848
      %v867 = vpack.c.b16 %v851, %v849
      %884 = vmatprep.subr.bf16.mxu0 %v853
      %885 = vmatpush1.bf16.msra.mxu0 %v852
      %886 = vmatprep.subr.bf16.mxu0 %v855
      %887 = vmatpush1.bf16.msra.mxu0 %v854
      %888 = vmatprep.subr.bf16.mxu0 %v857
      %889 = vmatpush1.bf16.msra.mxu0 %v856
      %890 = vmatprep.subr.bf16.mxu0 %v859
      %891 = vmatpush1.bf16.msra.mxu0 %v858
      %892 = vmatprep.subr.bf16.mxu0 %v861
      %893 = vmatpush1.bf16.msra.mxu0 %v860
      %894 = vmatprep.subr.bf16.mxu0 %v863
      %895 = vmatpush1.bf16.msra.mxu0 %v862
      %896 = vmatprep.subr.bf16.mxu0 %v865
      %897 = vmatpush1.bf16.msra.mxu0 %v864
      %898 = vmatprep.subr.bf16.mxu0 %v867
      %899 = vmatpush1.bf16.msra.mxu0 %v866
      %900 = vmatprep.subr.bf16.mxu0 0
      %901 = vmatpush1.bf16.msra.mxu0 0
      %902 = vmatprep.subr.bf16.mxu0 0
      %903 = vmatpush1.bf16.msra.mxu0 0
      %904 = vmatprep.subr.bf16.mxu0 0
      %905 = vmatpush1.bf16.msra.mxu0 0
      %906 = vmatprep.subr.bf16.mxu0 0
      %907 = vmatpush1.bf16.msra.mxu0 0
      %908 = vmatprep.subr.bf16.mxu0 0
      %909 = vmatpush1.bf16.msra.mxu0 0
      %910 = vmatprep.subr.bf16.mxu0 0
      %911 = vmatpush1.bf16.msra.mxu0 0
      %912 = vmatprep.subr.bf16.mxu0 0
      %913 = vmatpush1.bf16.msra.mxu0 0
      %914 = vmatprep.subr.bf16.mxu0 0
      %915 = vmatpush1.bf16.msra.mxu0 0
      %916 = vmatprep.mubr.bf16.mxu0 0
      %917 = vmatmul.mubr.bf16.gmra.mrb[0].mxu0 %v564
      %v918 = vpop.f32.mrb[0].mxu0
      %v919 = vadd.f32 0.0, %v918
      %v920 = vpop.f32.mrb[0].mxu0
      %v921 = vadd.f32 0.0, %v920
      %v922 = vpop.f32.mrb[0].mxu0
      %v923 = vadd.f32 0.0, %v922
      %v924 = vpop.f32.mrb[0].mxu0
      %v925 = vadd.f32 0.0, %v924
      %926 = vdwg.mxu0
      %v927 = vmax.f32 %v919, %v923
      %v928 = vrot.slane %v927, 4
      %v929 = vmax.f32 %v927, %v928
      %v930 = vrot.slane %v929, 2
      %v931 = vmax.f32 %v929, %v930
      %v932 = vrot.slane %v931, 1
      %v933 = vmax.f32 %v931, %v932
      %v934 = vmax.f32 %v921, %v925
      %v935 = vrot.slane %v934, 4
      %v936 = vmax.f32 %v934, %v935
      %v937 = vrot.slane %v936, 2
      %v938 = vmax.f32 %v936, %v937
      %v939 = vrot.slane %v938, 1
      %v940 = vmax.f32 %v938, %v939
      %v941 = vmin.f32 %v919, %v923
      %v942 = vrot.slane %v941, 4
      %v943 = vmin.f32 %v941, %v942
      %v944 = vrot.slane %v943, 2
      %v945 = vmin.f32 %v943, %v944
      %v946 = vrot.slane %v945, 1
      %v947 = vmin.f32 %v945, %v946
      %v948 = vmin.f32 %v921, %v925
      %v949 = vrot.slane %v948, 4
      %v950 = vmin.f32 %v948, %v949
      %v951 = vrot.slane %v950, 2
      %v952 = vmin.f32 %v950, %v951
      %v953 = vrot.slane %v952, 1
      %v954 = vmin.f32 %v952, %v953
      %v955 = vld [vmem:[%s402] sm:$0x3]
      %v958 = vcombine.low %v933, %v940
      %v960 = vunpack.c.l.s4 1966171168
      %v961 = vunpack.c.0.s8 %v960
      %v962 = vlaneseq
      %v963 = vshrl.u32 %v962, 7
      %v964 = vsub.s32 %v961, %v963
      %v965 = vrot.slane %v958, %v964
      %v967 = vunpack.c.l.s4 1966171168
      %v968 = vunpack.c.0.s8 %v967
      %v969 = vlaneseq
      %v970 = vshrl.u32 %v969, 7
      %v971 = vsub.s32 %v968, %v970
      %v972 = vrot.slane %v965, %v971
      %v974 = vmax.f32 %v955, %v972
      %v975 = vlaneseq
      %vm976 = vcmp.ge.s32.totalorder %v975, 0
      %vm977 = vcmp.lt.s32.totalorder %v975, 256
      %vm978 = vmand %vm976, %vm977
      %979 = vst.msk [vmem:[%s402] sm:$0x3] %vm978, %v974
      %v980 = vld [vmem:[%s406] sm:$0x3]
      %v983 = vcombine.low %v947, %v954
      %v985 = vunpack.c.l.s4 1966171168
      %v986 = vunpack.c.0.s8 %v985
      %v987 = vlaneseq
      %v988 = vshrl.u32 %v987, 7
      %v989 = vsub.s32 %v986, %v988
      %v990 = vrot.slane %v983, %v989
      %v992 = vunpack.c.l.s4 1966171168
      %v993 = vunpack.c.0.s8 %v992
      %v994 = vlaneseq
      %v995 = vshrl.u32 %v994, 7
      %v996 = vsub.s32 %v993, %v995
      %v997 = vrot.slane %v990, %v996
      %v999 = vmin.f32 %v980, %v997
      %1000 = vst.msk [vmem:[%s406] sm:$0x3] %vm978, %v999
      %v1001 = vld [vmem:[%s5 + $0x8] sm:$0xff]
      %v1002 = vld [vmem:[%s5 + $0x28] sm:$0xff]
      %v1003 = vld [vmem:[%s5 + $0x48] sm:$0xff]
      %v1004 = vld [vmem:[%s5 + $0x68] sm:$0xff]
      %v1005 = vld [vmem:[%s5 + $0x88] sm:$0xff]
      %v1006 = vld [vmem:[%s5 + $0xa8] sm:$0xff]
      %v1007 = vld [vmem:[%s5 + $0xc8] sm:$0xff]
      %v1008 = vld [vmem:[%s5 + $0xe8] sm:$0xff]
      %v1009 = vld [vmem:[%s5 + $0x108] sm:$0xff]
      %v1010 = vld [vmem:[%s5 + $0x128] sm:$0xff]
      %v1011 = vld [vmem:[%s5 + $0x148] sm:$0xff]
      %v1012 = vld [vmem:[%s5 + $0x168] sm:$0xff]
      %v1013 = vld [vmem:[%s5 + $0x188] sm:$0xff]
      %v1014 = vld [vmem:[%s5 + $0x1a8] sm:$0xff]
      %v1015 = vld [vmem:[%s5 + $0x1c8] sm:$0xff]
      %v1016 = vld [vmem:[%s5 + $0x1e8] sm:$0xff]
      %v1033 = vunpack.c.l.b16 %v1001
      %v1034 = vunpack.c.h.b16 %v1001
      %v1035 = vunpack.c.l.b16 %v1002
      %v1036 = vunpack.c.h.b16 %v1002
      %v1037 = vunpack.c.l.b16 %v1003
      %v1038 = vunpack.c.h.b16 %v1003
      %v1039 = vunpack.c.l.b16 %v1004
      %v1040 = vunpack.c.h.b16 %v1004
      %v1041 = vunpack.c.l.b16 %v1005
      %v1042 = vunpack.c.h.b16 %v1005
      %v1043 = vunpack.c.l.b16 %v1006
      %v1044 = vunpack.c.h.b16 %v1006
      %v1045 = vunpack.c.l.b16 %v1007
      %v1046 = vunpack.c.h.b16 %v1007
      %v1047 = vunpack.c.l.b16 %v1008
      %v1048 = vunpack.c.h.b16 %v1008
      %v1049 = vunpack.c.l.b16 %v1009
      %v1050 = vunpack.c.h.b16 %v1009
      %v1051 = vunpack.c.l.b16 %v1010
      %v1052 = vunpack.c.h.b16 %v1010
      %v1053 = vunpack.c.l.b16 %v1011
      %v1054 = vunpack.c.h.b16 %v1011
      %v1055 = vunpack.c.l.b16 %v1012
      %v1056 = vunpack.c.h.b16 %v1012
      %v1057 = vunpack.c.l.b16 %v1013
      %v1058 = vunpack.c.h.b16 %v1013
      %v1059 = vunpack.c.l.b16 %v1014
      %v1060 = vunpack.c.h.b16 %v1014
      %v1061 = vunpack.c.l.b16 %v1015
      %v1062 = vunpack.c.h.b16 %v1015
      %v1063 = vunpack.c.l.b16 %v1016
      %v1064 = vunpack.c.h.b16 %v1016
      %v1065 = vpack.c.b16 %v1035, %v1033
      %v1066 = vpack.c.b16 %v1036, %v1034
      %v1067 = vpack.c.b16 %v1039, %v1037
      %v1068 = vpack.c.b16 %v1040, %v1038
      %v1069 = vpack.c.b16 %v1043, %v1041
      %v1070 = vpack.c.b16 %v1044, %v1042
      %v1071 = vpack.c.b16 %v1047, %v1045
      %v1072 = vpack.c.b16 %v1048, %v1046
      %v1073 = vpack.c.b16 %v1051, %v1049
      %v1074 = vpack.c.b16 %v1052, %v1050
      %v1075 = vpack.c.b16 %v1055, %v1053
      %v1076 = vpack.c.b16 %v1056, %v1054
      %v1077 = vpack.c.b16 %v1059, %v1057
      %v1078 = vpack.c.b16 %v1060, %v1058
      %v1079 = vpack.c.b16 %v1063, %v1061
      %v1080 = vpack.c.b16 %v1064, %v1062
      %1097 = vmatprep.subr.bf16.mxu0 %v1066
      %1098 = vmatpush1.bf16.msra.mxu0 %v1065
      %1099 = vmatprep.subr.bf16.mxu0 %v1068
      %1100 = vmatpush1.bf16.msra.mxu0 %v1067
      %1101 = vmatprep.subr.bf16.mxu0 %v1070
      %1102 = vmatpush1.bf16.msra.mxu0 %v1069
      %1103 = vmatprep.subr.bf16.mxu0 %v1072
      %1104 = vmatpush1.bf16.msra.mxu0 %v1071
      %1105 = vmatprep.subr.bf16.mxu0 %v1074
      %1106 = vmatpush1.bf16.msra.mxu0 %v1073
      %1107 = vmatprep.subr.bf16.mxu0 %v1076
      %1108 = vmatpush1.bf16.msra.mxu0 %v1075
      %1109 = vmatprep.subr.bf16.mxu0 %v1078
      %1110 = vmatpush1.bf16.msra.mxu0 %v1077
      %1111 = vmatprep.subr.bf16.mxu0 %v1080
      %1112 = vmatpush1.bf16.msra.mxu0 %v1079
      %1113 = vmatprep.subr.bf16.mxu0 0
      %1114 = vmatpush1.bf16.msra.mxu0 0
      %1115 = vmatprep.subr.bf16.mxu0 0
      %1116 = vmatpush1.bf16.msra.mxu0 0
      %1117 = vmatprep.subr.bf16.mxu0 0
      %1118 = vmatpush1.bf16.msra.mxu0 0
      %1119 = vmatprep.subr.bf16.mxu0 0
      %1120 = vmatpush1.bf16.msra.mxu0 0
      %1121 = vmatprep.subr.bf16.mxu0 0
      %1122 = vmatpush1.bf16.msra.mxu0 0
      %1123 = vmatprep.subr.bf16.mxu0 0
      %1124 = vmatpush1.bf16.msra.mxu0 0
      %1125 = vmatprep.subr.bf16.mxu0 0
      %1126 = vmatpush1.bf16.msra.mxu0 0
      %1127 = vmatprep.subr.bf16.mxu0 0
      %1128 = vmatpush1.bf16.msra.mxu0 0
      %1129 = vmatprep.mubr.bf16.mxu0 0
      %1130 = vmatmul.mubr.bf16.gmra.mrb[0].mxu0 %v564
      %v1131 = vpop.f32.mrb[0].mxu0
      %v1132 = vadd.f32 0.0, %v1131
      %v1133 = vpop.f32.mrb[0].mxu0
      %v1134 = vadd.f32 0.0, %v1133
      %v1135 = vpop.f32.mrb[0].mxu0
      %v1136 = vadd.f32 0.0, %v1135
      %v1137 = vpop.f32.mrb[0].mxu0
      %v1138 = vadd.f32 0.0, %v1137
      %1139 = vdwg.mxu0
      %v1140 = vmax.f32 %v1132, %v1136
      %v1141 = vrot.slane %v1140, 4
      %v1142 = vmax.f32 %v1140, %v1141
      %v1143 = vrot.slane %v1142, 2
      %v1144 = vmax.f32 %v1142, %v1143
      %v1145 = vrot.slane %v1144, 1
      %v1146 = vmax.f32 %v1144, %v1145
      %v1147 = vmax.f32 %v1134, %v1138
      %v1148 = vrot.slane %v1147, 4
      %v1149 = vmax.f32 %v1147, %v1148
      %v1150 = vrot.slane %v1149, 2
      %v1151 = vmax.f32 %v1149, %v1150
      %v1152 = vrot.slane %v1151, 1
      %v1153 = vmax.f32 %v1151, %v1152
      %v1154 = vmin.f32 %v1132, %v1136
      %v1155 = vrot.slane %v1154, 4
      %v1156 = vmin.f32 %v1154, %v1155
      %v1157 = vrot.slane %v1156, 2
      %v1158 = vmin.f32 %v1156, %v1157
      %v1159 = vrot.slane %v1158, 1
      %v1160 = vmin.f32 %v1158, %v1159
      %v1161 = vmin.f32 %v1134, %v1138
      %v1162 = vrot.slane %v1161, 4
      %v1163 = vmin.f32 %v1161, %v1162
      %v1164 = vrot.slane %v1163, 2
      %v1165 = vmin.f32 %v1163, %v1164
      %v1166 = vrot.slane %v1165, 1
      %v1167 = vmin.f32 %v1165, %v1166
      %v1168 = vld [vmem:[%s402 + $0x2] sm:$0x3]
      %v1171 = vcombine.low %v1146, %v1153
      %v1173 = vunpack.c.l.s4 1966171168
      %v1174 = vunpack.c.0.s8 %v1173
      %v1175 = vlaneseq
      %v1176 = vshrl.u32 %v1175, 7
      %v1177 = vsub.s32 %v1174, %v1176
      %v1178 = vrot.slane %v1171, %v1177
      %v1180 = vunpack.c.l.s4 1966171168
      %v1181 = vunpack.c.0.s8 %v1180
      %v1182 = vlaneseq
      %v1183 = vshrl.u32 %v1182, 7
      %v1184 = vsub.s32 %v1181, %v1183
      %v1185 = vrot.slane %v1178, %v1184
      %v1187 = vmax.f32 %v1168, %v1185
      %1188 = vst.msk [vmem:[%s402 + $0x2] sm:$0x3] %vm978, %v1187
      %v1189 = vld [vmem:[%s406 + $0x2] sm:$0x3]
      %v1192 = vcombine.low %v1160, %v1167
      %v1194 = vunpack.c.l.s4 1966171168
      %v1195 = vunpack.c.0.s8 %v1194
      %v1196 = vlaneseq
      %v1197 = vshrl.u32 %v1196, 7
      %v1198 = vsub.s32 %v1195, %v1197
      %v1199 = vrot.slane %v1192, %v1198
      %v1201 = vunpack.c.l.s4 1966171168
      %v1202 = vunpack.c.0.s8 %v1201
      %v1203 = vlaneseq
      %v1204 = vshrl.u32 %v1203, 7
      %v1205 = vsub.s32 %v1202, %v1204
      %v1206 = vrot.slane %v1199, %v1205
      %v1208 = vmin.f32 %v1189, %v1206
      %1209 = vst.msk [vmem:[%s406 + $0x2] sm:$0x3] %vm978, %v1208
      %v1210 = vld [vmem:[%s5 + $0x10] sm:$0xff]
      %v1211 = vld [vmem:[%s5 + $0x30] sm:$0xff]
      %v1212 = vld [vmem:[%s5 + $0x50] sm:$0xff]
      %v1213 = vld [vmem:[%s5 + $0x70] sm:$0xff]
      %v1214 = vld [vmem:[%s5 + $0x90] sm:$0xff]
      %v1215 = vld [vmem:[%s5 + $0xb0] sm:$0xff]
      %v1216 = vld [vmem:[%s5 + $0xd0] sm:$0xff]
      %v1217 = vld [vmem:[%s5 + $0xf0] sm:$0xff]
      %v1218 = vld [vmem:[%s5 + $0x110] sm:$0xff]
      %v1219 = vld [vmem:[%s5 + $0x130] sm:$0xff]
      %v1220 = vld [vmem:[%s5 + $0x150] sm:$0xff]
      %v1221 = vld [vmem:[%s5 + $0x170] sm:$0xff]
      %v1222 = vld [vmem:[%s5 + $0x190] sm:$0xff]
      %v1223 = vld [vmem:[%s5 + $0x1b0] sm:$0xff]
      %v1224 = vld [vmem:[%s5 + $0x1d0] sm:$0xff]
      %v1225 = vld [vmem:[%s5 + $0x1f0] sm:$0xff]
      %v1242 = vunpack.c.l.b16 %v1210
      %v1243 = vunpack.c.h.b16 %v1210
      %v1244 = vunpack.c.l.b16 %v1211
      %v1245 = vunpack.c.h.b16 %v1211
      %v1246 = vunpack.c.l.b16 %v1212
      %v1247 = vunpack.c.h.b16 %v1212
      %v1248 = vunpack.c.l.b16 %v1213
      %v1249 = vunpack.c.h.b16 %v1213
      %v1250 = vunpack.c.l.b16 %v1214
      %v1251 = vunpack.c.h.b16 %v1214
      %v1252 = vunpack.c.l.b16 %v1215
      %v1253 = vunpack.c.h.b16 %v1215
      %v1254 = vunpack.c.l.b16 %v1216
      %v1255 = vunpack.c.h.b16 %v1216
      %v1256 = vunpack.c.l.b16 %v1217
      %v1257 = vunpack.c.h.b16 %v1217
      %v1258 = vunpack.c.l.b16 %v1218
      %v1259 = vunpack.c.h.b16 %v1218
      %v1260 = vunpack.c.l.b16 %v1219
      %v1261 = vunpack.c.h.b16 %v1219
      %v1262 = vunpack.c.l.b16 %v1220
      %v1263 = vunpack.c.h.b16 %v1220
      %v1264 = vunpack.c.l.b16 %v1221
      %v1265 = vunpack.c.h.b16 %v1221
      %v1266 = vunpack.c.l.b16 %v1222
      %v1267 = vunpack.c.h.b16 %v1222
      %v1268 = vunpack.c.l.b16 %v1223
      %v1269 = vunpack.c.h.b16 %v1223
      %v1270 = vunpack.c.l.b16 %v1224
      %v1271 = vunpack.c.h.b16 %v1224
      %v1272 = vunpack.c.l.b16 %v1225
      %v1273 = vunpack.c.h.b16 %v1225
      %v1274 = vpack.c.b16 %v1244, %v1242
      %v1275 = vpack.c.b16 %v1245, %v1243
      %v1276 = vpack.c.b16 %v1248, %v1246
      %v1277 = vpack.c.b16 %v1249, %v1247
      %v1278 = vpack.c.b16 %v1252, %v1250
      %v1279 = vpack.c.b16 %v1253, %v1251
      %v1280 = vpack.c.b16 %v1256, %v1254
      %v1281 = vpack.c.b16 %v1257, %v1255
      %v1282 = vpack.c.b16 %v1260, %v1258
      %v1283 = vpack.c.b16 %v1261, %v1259
      %v1284 = vpack.c.b16 %v1264, %v1262
      %v1285 = vpack.c.b16 %v1265, %v1263
      %v1286 = vpack.c.b16 %v1268, %v1266
      %v1287 = vpack.c.b16 %v1269, %v1267
      %v1288 = vpack.c.b16 %v1272, %v1270
      %v1289 = vpack.c.b16 %v1273, %v1271
      %1306 = vmatprep.subr.bf16.mxu0 %v1275
      %1307 = vmatpush1.bf16.msra.mxu0 %v1274
      %1308 = vmatprep.subr.bf16.mxu0 %v1277
      %1309 = vmatpush1.bf16.msra.mxu0 %v1276
      %1310 = vmatprep.subr.bf16.mxu0 %v1279
      %1311 = vmatpush1.bf16.msra.mxu0 %v1278
      %1312 = vmatprep.subr.bf16.mxu0 %v1281
      %1313 = vmatpush1.bf16.msra.mxu0 %v1280
      %1314 = vmatprep.subr.bf16.mxu0 %v1283
      %1315 = vmatpush1.bf16.msra.mxu0 %v1282
      %1316 = vmatprep.subr.bf16.mxu0 %v1285
      %1317 = vmatpush1.bf16.msra.mxu0 %v1284
      %1318 = vmatprep.subr.bf16.mxu0 %v1287
      %1319 = vmatpush1.bf16.msra.mxu0 %v1286
      %1320 = vmatprep.subr.bf16.mxu0 %v1289
      %1321 = vmatpush1.bf16.msra.mxu0 %v1288
      %1322 = vmatprep.subr.bf16.mxu0 0
      %1323 = vmatpush1.bf16.msra.mxu0 0
      %1324 = vmatprep.subr.bf16.mxu0 0
      %1325 = vmatpush1.bf16.msra.mxu0 0
      %1326 = vmatprep.subr.bf16.mxu0 0
      %1327 = vmatpush1.bf16.msra.mxu0 0
      %1328 = vmatprep.subr.bf16.mxu0 0
      %1329 = vmatpush1.bf16.msra.mxu0 0
      %1330 = vmatprep.subr.bf16.mxu0 0
      %1331 = vmatpush1.bf16.msra.mxu0 0
      %1332 = vmatprep.subr.bf16.mxu0 0
      %1333 = vmatpush1.bf16.msra.mxu0 0
      %1334 = vmatprep.subr.bf16.mxu0 0
      %1335 = vmatpush1.bf16.msra.mxu0 0
      %1336 = vmatprep.subr.bf16.mxu0 0
      %1337 = vmatpush1.bf16.msra.mxu0 0
      %1338 = vmatprep.mubr.bf16.mxu0 0
      %1339 = vmatmul.mubr.bf16.gmra.mrb[0].mxu0 %v564
      %v1340 = vpop.f32.mrb[0].mxu0
      %v1341 = vadd.f32 0.0, %v1340
      %v1342 = vpop.f32.mrb[0].mxu0
      %v1343 = vadd.f32 0.0, %v1342
      %v1344 = vpop.f32.mrb[0].mxu0
      %v1345 = vadd.f32 0.0, %v1344
      %v1346 = vpop.f32.mrb[0].mxu0
      %v1347 = vadd.f32 0.0, %v1346
      %1348 = vdwg.mxu0
      %v1349 = vmax.f32 %v1341, %v1345
      %v1350 = vrot.slane %v1349, 4
      %v1351 = vmax.f32 %v1349, %v1350
      %v1352 = vrot.slane %v1351, 2
      %v1353 = vmax.f32 %v1351, %v1352
      %v1354 = vrot.slane %v1353, 1
      %v1355 = vmax.f32 %v1353, %v1354
      %v1356 = vmax.f32 %v1343, %v1347
      %v1357 = vrot.slane %v1356, 4
      %v1358 = vmax.f32 %v1356, %v1357
      %v1359 = vrot.slane %v1358, 2
      %v1360 = vmax.f32 %v1358, %v1359
      %v1361 = vrot.slane %v1360, 1
      %v1362 = vmax.f32 %v1360, %v1361
      %v1363 = vmin.f32 %v1341, %v1345
      %v1364 = vrot.slane %v1363, 4
      %v1365 = vmin.f32 %v1363, %v1364
      %v1366 = vrot.slane %v1365, 2
      %v1367 = vmin.f32 %v1365, %v1366
      %v1368 = vrot.slane %v1367, 1
      %v1369 = vmin.f32 %v1367, %v1368
      %v1370 = vmin.f32 %v1343, %v1347
      %v1371 = vrot.slane %v1370, 4
      %v1372 = vmin.f32 %v1370, %v1371
      %v1373 = vrot.slane %v1372, 2
      %v1374 = vmin.f32 %v1372, %v1373
      %v1375 = vrot.slane %v1374, 1
      %v1376 = vmin.f32 %v1374, %v1375
      %v1377 = vld [vmem:[%s402 + $0x4] sm:$0x3]
      %v1380 = vcombine.low %v1355, %v1362
      %v1382 = vunpack.c.l.s4 1966171168
      %v1383 = vunpack.c.0.s8 %v1382
      %v1384 = vlaneseq
      %v1385 = vshrl.u32 %v1384, 7
      %v1386 = vsub.s32 %v1383, %v1385
      %v1387 = vrot.slane %v1380, %v1386
      %v1389 = vunpack.c.l.s4 1966171168
      %v1390 = vunpack.c.0.s8 %v1389
      %v1391 = vlaneseq
      %v1392 = vshrl.u32 %v1391, 7
      %v1393 = vsub.s32 %v1390, %v1392
      %v1394 = vrot.slane %v1387, %v1393
      %v1396 = vmax.f32 %v1377, %v1394
      %1397 = vst.msk [vmem:[%s402 + $0x4] sm:$0x3] %vm978, %v1396
      %v1398 = vld [vmem:[%s406 + $0x4] sm:$0x3]
      %v1401 = vcombine.low %v1369, %v1376
      %v1403 = vunpack.c.l.s4 1966171168
      %v1404 = vunpack.c.0.s8 %v1403
      %v1405 = vlaneseq
      %v1406 = vshrl.u32 %v1405, 7
      %v1407 = vsub.s32 %v1404, %v1406
      %v1408 = vrot.slane %v1401, %v1407
      %v1410 = vunpack.c.l.s4 1966171168
      %v1411 = vunpack.c.0.s8 %v1410
      %v1412 = vlaneseq
      %v1413 = vshrl.u32 %v1412, 7
      %v1414 = vsub.s32 %v1411, %v1413
      %v1415 = vrot.slane %v1408, %v1414
      %v1417 = vmin.f32 %v1398, %v1415
      %1418 = vst.msk [vmem:[%s406 + $0x4] sm:$0x3] %vm978, %v1417
      %v1419 = vld [vmem:[%s5 + $0x18] sm:$0xff]
      %v1420 = vld [vmem:[%s5 + $0x38] sm:$0xff]
      %v1421 = vld [vmem:[%s5 + $0x58] sm:$0xff]
      %v1422 = vld [vmem:[%s5 + $0x78] sm:$0xff]
      %v1423 = vld [vmem:[%s5 + $0x98] sm:$0xff]
      %v1424 = vld [vmem:[%s5 + $0xb8] sm:$0xff]
      %v1425 = vld [vmem:[%s5 + $0xd8] sm:$0xff]
      %v1426 = vld [vmem:[%s5 + $0xf8] sm:$0xff]
      %v1427 = vld [vmem:[%s5 + $0x118] sm:$0xff]
      %v1428 = vld [vmem:[%s5 + $0x138] sm:$0xff]
      %v1429 = vld [vmem:[%s5 + $0x158] sm:$0xff]
      %v1430 = vld [vmem:[%s5 + $0x178] sm:$0xff]
      %v1431 = vld [vmem:[%s5 + $0x198] sm:$0xff]
      %v1432 = vld [vmem:[%s5 + $0x1b8] sm:$0xff]
      %v1433 = vld [vmem:[%s5 + $0x1d8] sm:$0xff]
      %v1434 = vld [vmem:[%s5 + $0x1f8] sm:$0xff]
      %v1451 = vunpack.c.l.b16 %v1419
      %v1452 = vunpack.c.h.b16 %v1419
      %v1453 = vunpack.c.l.b16 %v1420
      %v1454 = vunpack.c.h.b16 %v1420
      %v1455 = vunpack.c.l.b16 %v1421
      %v1456 = vunpack.c.h.b16 %v1421
      %v1457 = vunpack.c.l.b16 %v1422
      %v1458 = vunpack.c.h.b16 %v1422
      %v1459 = vunpack.c.l.b16 %v1423
      %v1460 = vunpack.c.h.b16 %v1423
      %v1461 = vunpack.c.l.b16 %v1424
      %v1462 = vunpack.c.h.b16 %v1424
      %v1463 = vunpack.c.l.b16 %v1425
      %v1464 = vunpack.c.h.b16 %v1425
      %v1465 = vunpack.c.l.b16 %v1426
      %v1466 = vunpack.c.h.b16 %v1426
      %v1467 = vunpack.c.l.b16 %v1427
      %v1468 = vunpack.c.h.b16 %v1427
      %v1469 = vunpack.c.l.b16 %v1428
      %v1470 = vunpack.c.h.b16 %v1428
      %v1471 = vunpack.c.l.b16 %v1429
      %v1472 = vunpack.c.h.b16 %v1429
      %v1473 = vunpack.c.l.b16 %v1430
      %v1474 = vunpack.c.h.b16 %v1430
      %v1475 = vunpack.c.l.b16 %v1431
      %v1476 = vunpack.c.h.b16 %v1431
      %v1477 = vunpack.c.l.b16 %v1432
      %v1478 = vunpack.c.h.b16 %v1432
      %v1479 = vunpack.c.l.b16 %v1433
      %v1480 = vunpack.c.h.b16 %v1433
      %v1481 = vunpack.c.l.b16 %v1434
      %v1482 = vunpack.c.h.b16 %v1434
      %v1483 = vpack.c.b16 %v1453, %v1451
      %v1484 = vpack.c.b16 %v1454, %v1452
      %v1485 = vpack.c.b16 %v1457, %v1455
      %v1486 = vpack.c.b16 %v1458, %v1456
      %v1487 = vpack.c.b16 %v1461, %v1459
      %v1488 = vpack.c.b16 %v1462, %v1460
      %v1489 = vpack.c.b16 %v1465, %v1463
      %v1490 = vpack.c.b16 %v1466, %v1464
      %v1491 = vpack.c.b16 %v1469, %v1467
      %v1492 = vpack.c.b16 %v1470, %v1468
      %v1493 = vpack.c.b16 %v1473, %v1471
      %v1494 = vpack.c.b16 %v1474, %v1472
      %v1495 = vpack.c.b16 %v1477, %v1475
      %v1496 = vpack.c.b16 %v1478, %v1476
      %v1497 = vpack.c.b16 %v1481, %v1479
      %v1498 = vpack.c.b16 %v1482, %v1480
      %1515 = vmatprep.subr.bf16.mxu0 %v1484
      %1516 = vmatpush1.bf16.msra.mxu0 %v1483
      %1517 = vmatprep.subr.bf16.mxu0 %v1486
      %1518 = vmatpush1.bf16.msra.mxu0 %v1485
      %1519 = vmatprep.subr.bf16.mxu0 %v1488
      %1520 = vmatpush1.bf16.msra.mxu0 %v1487
      %1521 = vmatprep.subr.bf16.mxu0 %v1490
      %1522 = vmatpush1.bf16.msra.mxu0 %v1489
      %1523 = vmatprep.subr.bf16.mxu0 %v1492
      %1524 = vmatpush1.bf16.msra.mxu0 %v1491
      %1525 = vmatprep.subr.bf16.mxu0 %v1494
      %1526 = vmatpush1.bf16.msra.mxu0 %v1493
      %1527 = vmatprep.subr.bf16.mxu0 %v1496
      %1528 = vmatpush1.bf16.msra.mxu0 %v1495
      %1529 = vmatprep.subr.bf16.mxu0 %v1498
      %1530 = vmatpush1.bf16.msra.mxu0 %v1497
      %1531 = vmatprep.subr.bf16.mxu0 0
      %1532 = vmatpush1.bf16.msra.mxu0 0
      %1533 = vmatprep.subr.bf16.mxu0 0
      %1534 = vmatpush1.bf16.msra.mxu0 0
      %1535 = vmatprep.subr.bf16.mxu0 0
      %1536 = vmatpush1.bf16.msra.mxu0 0
      %1537 = vmatprep.subr.bf16.mxu0 0
      %1538 = vmatpush1.bf16.msra.mxu0 0
      %1539 = vmatprep.subr.bf16.mxu0 0
      %1540 = vmatpush1.bf16.msra.mxu0 0
      %1541 = vmatprep.subr.bf16.mxu0 0
      %1542 = vmatpush1.bf16.msra.mxu0 0
      %1543 = vmatprep.subr.bf16.mxu0 0
      %1544 = vmatpush1.bf16.msra.mxu0 0
      %1545 = vmatprep.subr.bf16.mxu0 0
      %1546 = vmatpush1.bf16.msra.mxu0 0
      %1547 = vmatprep.mubr.bf16.mxu0 0
      %1548 = vmatmul.mubr.bf16.gmra.mrb[0].mxu0 %v564
      %v1549 = vpop.f32.mrb[0].mxu0
      %v1550 = vadd.f32 0.0, %v1549
      %v1551 = vpop.f32.mrb[0].mxu0
      %v1552 = vadd.f32 0.0, %v1551
      %v1553 = vpop.f32.mrb[0].mxu0
      %v1554 = vadd.f32 0.0, %v1553
      %v1555 = vpop.f32.mrb[0].mxu0
      %v1556 = vadd.f32 0.0, %v1555
      %1557 = vdwg.mxu0
      %v1558 = vmax.f32 %v1550, %v1554
      %v1559 = vrot.slane %v1558, 4
      %v1560 = vmax.f32 %v1558, %v1559
      %v1561 = vrot.slane %v1560, 2
      %v1562 = vmax.f32 %v1560, %v1561
      %v1563 = vrot.slane %v1562, 1
      %v1564 = vmax.f32 %v1562, %v1563
      %v1565 = vmax.f32 %v1552, %v1556
      %v1566 = vrot.slane %v1565, 4
      %v1567 = vmax.f32 %v1565, %v1566
      %v1568 = vrot.slane %v1567, 2
      %v1569 = vmax.f32 %v1567, %v1568
      %v1570 = vrot.slane %v1569, 1
      %v1571 = vmax.f32 %v1569, %v1570
      %v1572 = vmin.f32 %v1550, %v1554
      %v1573 = vrot.slane %v1572, 4
      %v1574 = vmin.f32 %v1572, %v1573
      %v1575 = vrot.slane %v1574, 2
      %v1576 = vmin.f32 %v1574, %v1575
      %v1577 = vrot.slane %v1576, 1
      %v1578 = vmin.f32 %v1576, %v1577
      %v1579 = vmin.f32 %v1552, %v1556
      %v1580 = vrot.slane %v1579, 4
      %v1581 = vmin.f32 %v1579, %v1580
      %v1582 = vrot.slane %v1581, 2
      %v1583 = vmin.f32 %v1581, %v1582
      %v1584 = vrot.slane %v1583, 1
      %v1585 = vmin.f32 %v1583, %v1584
      %v1586 = vld [vmem:[%s402 + $0x6] sm:$0x3]
      %v1589 = vcombine.low %v1564, %v1571
      %v1591 = vunpack.c.l.s4 1966171168
      %v1592 = vunpack.c.0.s8 %v1591
      %v1593 = vlaneseq
      %v1594 = vshrl.u32 %v1593, 7
      %v1595 = vsub.s32 %v1592, %v1594
      %v1596 = vrot.slane %v1589, %v1595
      %v1598 = vunpack.c.l.s4 1966171168
      %v1599 = vunpack.c.0.s8 %v1598
      %v1600 = vlaneseq
      %v1601 = vshrl.u32 %v1600, 7
      %v1602 = vsub.s32 %v1599, %v1601
      %v1603 = vrot.slane %v1596, %v1602
      %v1605 = vmax.f32 %v1586, %v1603
      %1606 = vst.msk [vmem:[%s402 + $0x6] sm:$0x3] %vm978, %v1605
      %v1607 = vld [vmem:[%s406 + $0x6] sm:$0x3]
      %v1610 = vcombine.low %v1578, %v1585
      %v1612 = vunpack.c.l.s4 1966171168
      %v1613 = vunpack.c.0.s8 %v1612
      %v1614 = vlaneseq
      %v1615 = vshrl.u32 %v1614, 7
      %v1616 = vsub.s32 %v1613, %v1615
      %v1617 = vrot.slane %v1610, %v1616
      %v1619 = vunpack.c.l.s4 1966171168
      %v1620 = vunpack.c.0.s8 %v1619
      %v1621 = vlaneseq
      %v1622 = vshrl.u32 %v1621, 7
      %v1623 = vsub.s32 %v1620, %v1622
      %v1624 = vrot.slane %v1617, %v1623
      %v1626 = vmin.f32 %v1607, %v1624
      %1627 = vst.msk [vmem:[%s406 + $0x6] sm:$0x3] %vm978, %v1626
      %p1628 = scmp.lt.s32.totalorder %s25, 1
      %s1629 = scalar_select %p1628, %s25, 1
      %s1630 = scalar_lea.vmem %s6, %s1629
      %p1631 = scmp.lt.s32.totalorder %s25, 1
      %s1632 = scalar_select %p1631, %s25, 1
      %s1633 = smul.addr %s1632, 16
      %s1634 = smul.addr %s1633, 8
      %s1635 = scalar_lea.vmem %s7, %s1634
      %p1636 = scmp.lt.s32.totalorder %s25, 1
      %s1637 = scalar_select %p1636, %s25, 1
      %s1638 = smul.addr %s1637, 8
      %s1639 = scalar_lea.vmem %s8, %s1638
      %p1640 = scmp.lt.s32.totalorder %s25, 1
      %s1641 = scalar_select %p1640, %s25, 1
      %s1642 = smul.addr %s1641, 8
      %s1643 = scalar_lea.vmem %s9, %s1642
      // Predicated region
      $region53: #{pointnet_cls_forward.10} parent=43 // pred_check
        %p1644 = pneg %p189
      $region54: #{pointnet_cls_forward.10} parent=43 // pred_check_branch
        %1646 = sbr.rel (%p1644) target = $region56
      $region55: #{pointnet_cls_forward.10} parent=43 // pred_region
        _
      $region56: #{pointnet_cls_forward.10} parent=43 // pred_fallthru
        _
      // Predicated region
      $region57: #{pointnet_cls_forward.10} parent=43 // pred_check
        %p1647 = pneg %p215
      $region58: #{pointnet_cls_forward.10} parent=43 // pred_check_branch
        %1649 = sbr.rel (%p1647) target = $region60
      $region59: #{pointnet_cls_forward.10} parent=43 // pred_region
        _
      $region60: #{pointnet_cls_forward.10} parent=43 // pred_fallthru
        _
      // Predicated region
      $region61: #{pointnet_cls_forward.10} parent=43 // pred_check
        %p1650 = pneg %p241
      $region62: #{pointnet_cls_forward.10} parent=43 // pred_check_branch
        %1652 = sbr.rel (%p1650) target = $region64
      $region63: #{pointnet_cls_forward.10} parent=43 // pred_region
        _
      $region64: #{pointnet_cls_forward.10} parent=43 // pred_fallthru
        _
      // Predicated region
      $region65: #{pointnet_cls_forward.10} parent=43 // pred_check
        %p1653 = pneg %p267
      $region66: #{pointnet_cls_forward.10} parent=43 // pred_check_branch
        %1655 = sbr.rel (%p1653) target = $region68
      $region67: #{pointnet_cls_forward.10} parent=43 // pred_region
        _
      $region68: #{pointnet_cls_forward.10} parent=43 // pred_fallthru
        _
    $region44: #{pointnet_cls_forward.10} parent=5 // pred_fallthru
      _
    %p1656 = scmp.le.s32.totalorder 2, %s16
    // Predicated region
    $region69: #{pointnet_cls_forward.10} parent=5 // pred_check
      %p1657 = pneg %p1656
    $region70: #{pointnet_cls_forward.10} parent=5 // pred_check_branch
      %1659 = sbr.rel (%p1657) target = $region72
    $region71: #{pointnet_cls_forward.10} parent=5 // pred_region
      %s1660 = ssub.s32 %s16, 2
      // Predicated region
      $region73: #{pointnet_cls_forward.10} parent=71 // pred_check
        %p1661 = pneg %p195
      $region74: #{pointnet_cls_forward.10} parent=71 // pred_check_branch
        %1663 = sbr.rel (%p1661) target = $region76
      $region75: #{pointnet_cls_forward.10} parent=71 // pred_region
        %p1664 = scmp.lt.s32.totalorder %s27, 1
        %s1665 = scalar_select %p1664, %s27, 1
        %s1666 = scalar_lea.vmem %s6, %s1665
      $region76: #{pointnet_cls_forward.10} parent=71 // pred_fallthru
        _
      // Predicated region
      $region77: #{pointnet_cls_forward.10} parent=71 // pred_check
        %p1667 = pneg %p221
      $region78: #{pointnet_cls_forward.10} parent=71 // pred_check_branch
        %1669 = sbr.rel (%p1667) target = $region80
      $region79: #{pointnet_cls_forward.10} parent=71 // pred_region
        %p1670 = scmp.lt.s32.totalorder %s27, 1
        %s1671 = scalar_select %p1670, %s27, 1
        %s1672 = smul.addr %s1671, 16
        %s1673 = smul.addr %s1672, 8
        %s1674 = scalar_lea.vmem %s7, %s1673
      $region80: #{pointnet_cls_forward.10} parent=71 // pred_fallthru
        _
      // Predicated region
      $region81: #{pointnet_cls_forward.10} parent=71 // pred_check
        %p1675 = pneg %p247
      $region82: #{pointnet_cls_forward.10} parent=71 // pred_check_branch
        %1677 = sbr.rel (%p1675) target = $region84
      $region83: #{pointnet_cls_forward.10} parent=71 // pred_region
        %p1678 = scmp.lt.s32.totalorder %s27, 1
        %s1679 = scalar_select %p1678, %s27, 1
        %s1680 = smul.addr %s1679, 8
        %s1681 = scalar_lea.vmem %s8, %s1680
      $region84: #{pointnet_cls_forward.10} parent=71 // pred_fallthru
        _
      // Predicated region
      $region85: #{pointnet_cls_forward.10} parent=71 // pred_check
        %p1682 = pneg %p273
      $region86: #{pointnet_cls_forward.10} parent=71 // pred_check_branch
        %1684 = sbr.rel (%p1682) target = $region88
      $region87: #{pointnet_cls_forward.10} parent=71 // pred_region
        %p1685 = scmp.lt.s32.totalorder %s27, 1
        %s1686 = scalar_select %p1685, %s27, 1
        %s1687 = smul.addr %s1686, 8
        %s1688 = scalar_lea.vmem %s9, %s1687
      $region88: #{pointnet_cls_forward.10} parent=71 // pred_fallthru
        _
    $region72: #{pointnet_cls_forward.10} parent=5 // pred_fallthru
      _
  $region6: #{pointnet_cls_forward.10} parent=0 // loop_footer
    %s20 = sadd.s32 1, %s16
  $region7: #{pointnet_cls_forward.10} parent=0 // loop_footer_branch
    %15 = sbr.rel target = $region3
  $region8: #{pointnet_cls_forward.10} parent=0 // loop_exit
    _

// kernel: pointnet_cls_forward.11
$region0: #{pointnet_cls_forward.11}
  #allocation0 [shape = 'u32[]', space=smem, size = 0x4, offset = 0x4, fixed_abs, tag = 'smem constant byte address 0x4 - core index']
  #allocation1 [shape = 'u32[144,128]{1,0:T(1,128)}', space=vmem, size = 0x12000, scoped, tag = 'internal scratch']
  %s0 = inlined_call_operand.vmem [shape: f32[2,1024], index: 0, kind: input, shape index: {}]
  %s1 = inlined_call_operand.vmem [shape: bf16[1024,512], index: 1, kind: input, shape index: {}]
  %s2 = inlined_call_operand.vmem [shape: f32[1,512], index: 2, kind: input, shape index: {}]
  %s3 = inlined_call_operand.vmem [shape: f32[1,512], index: 3, kind: input, shape index: {}]
  %s4 = inlined_call_operand.vmem [shape: f32[1,512], index: 4, kind: input, shape index: {}]
  %s5 = inlined_call_operand.vmem [shape: bf16[512,256], index: 5, kind: input, shape index: {}]
  %s6 = inlined_call_operand.vmem [shape: f32[1,256], index: 6, kind: input, shape index: {}]
  %s7 = inlined_call_operand.vmem [shape: f32[1,256], index: 7, kind: input, shape index: {}]
  %s8 = inlined_call_operand.vmem [shape: f32[1,256], index: 8, kind: input, shape index: {}]
  %s9 = inlined_call_operand.vmem [shape: bf16[256,128], index: 9, kind: input, shape index: {}]
  %s10 = inlined_call_operand.vmem [shape: f32[1,128], index: 10, kind: input, shape index: {}]
  %s11 = inlined_call_operand.vmem [shape: f32[1,128], index: 11, kind: input, shape index: {}]
  %s12 = inlined_call_operand.vmem [shape: f32[1,128], index: 12, kind: input, shape index: {}]
  %s13 = inlined_call_operand.vmem [shape: bf16[128,128], index: 13, kind: input, shape index: {}]
  %s14 = inlined_call_operand.vmem [shape: f32[1,128], index: 14, kind: input, shape index: {}]
  %s15 = inlined_call_operand.hbm [shape: f32[2,128], index: 15, kind: output, shape index: {}]
  %s16 = sld [smem:[#allocation0]]
  $region70: #{pointnet_cls_forward.11} parent=0
    _
  %s18 = ssub.s32 1, %s16
  %s19 = scalar_select 0, %s18, %s16
  $region1: #{pointnet_cls_forward.11} parent=0
    #allocation2 [shape = 'u8[1024]{0}', space=vmem, size = 0x400, scoped, tag = 'output window, operand 0, single buffered']
    #allocation3 [shape = 's32[1]{0}', space=sflag, size = 0x4, scoped, tag = 'scoped memory for pointnet_cls_forward.11']
    %20 = vsyncpa [#allocation3], 0
    // Predicated region
    $region2: #{pointnet_cls_forward.11} parent=1 // pred_check
      _
    $region3: #{pointnet_cls_forward.11} parent=1 // pred_check_branch
      %22 = sbr.rel (0) target = $region5
    $region4: #{pointnet_cls_forward.11} parent=1 // pred_region
      _
    $region5: #{pointnet_cls_forward.11} parent=1 // pred_fallthru
      _
    // Predicated region
    $region6: #{pointnet_cls_forward.11} parent=1 // pred_check
      _
    $region7: #{pointnet_cls_forward.11} parent=1 // pred_check_branch
      %24 = sbr.rel (0) target = $region9
    $region8: #{pointnet_cls_forward.11} parent=1 // pred_region
      _
    $region9: #{pointnet_cls_forward.11} parent=1 // pred_fallthru
      _
    // Predicated region
    $region10: #{pointnet_cls_forward.11} parent=1 // pred_check
      _
    $region11: #{pointnet_cls_forward.11} parent=1 // pred_check_branch
      %26 = sbr.rel (0) target = $region13
    $region12: #{pointnet_cls_forward.11} parent=1 // pred_region
      _
    $region13: #{pointnet_cls_forward.11} parent=1 // pred_fallthru
      _
    // Predicated region
    $region14: #{pointnet_cls_forward.11} parent=1 // pred_check
      _
    $region15: #{pointnet_cls_forward.11} parent=1 // pred_check_branch
      %28 = sbr.rel (0) target = $region17
    $region16: #{pointnet_cls_forward.11} parent=1 // pred_region
      _
    $region17: #{pointnet_cls_forward.11} parent=1 // pred_fallthru
      _
    // Predicated region
    $region18: #{pointnet_cls_forward.11} parent=1 // pred_check
      _
    $region19: #{pointnet_cls_forward.11} parent=1 // pred_check_branch
      %30 = sbr.rel (0) target = $region21
    $region20: #{pointnet_cls_forward.11} parent=1 // pred_region
      _
    $region21: #{pointnet_cls_forward.11} parent=1 // pred_fallthru
      _
    // Predicated region
    $region22: #{pointnet_cls_forward.11} parent=1 // pred_check
      _
    $region23: #{pointnet_cls_forward.11} parent=1 // pred_check_branch
      %32 = sbr.rel (0) target = $region25
    $region24: #{pointnet_cls_forward.11} parent=1 // pred_region
      _
    $region25: #{pointnet_cls_forward.11} parent=1 // pred_fallthru
      _
    // Predicated region
    $region26: #{pointnet_cls_forward.11} parent=1 // pred_check
      _
    $region27: #{pointnet_cls_forward.11} parent=1 // pred_check_branch
      %34 = sbr.rel (0) target = $region29
    $region28: #{pointnet_cls_forward.11} parent=1 // pred_region
      _
    $region29: #{pointnet_cls_forward.11} parent=1 // pred_fallthru
      _
    // Predicated region
    $region30: #{pointnet_cls_forward.11} parent=1 // pred_check
      _
    $region31: #{pointnet_cls_forward.11} parent=1 // pred_check_branch
      %36 = sbr.rel (0) target = $region33
    $region32: #{pointnet_cls_forward.11} parent=1 // pred_region
      _
    $region33: #{pointnet_cls_forward.11} parent=1 // pred_fallthru
      _
    // Predicated region
    $region34: #{pointnet_cls_forward.11} parent=1 // pred_check
      _
    $region35: #{pointnet_cls_forward.11} parent=1 // pred_check_branch
      %38 = sbr.rel (0) target = $region37
    $region36: #{pointnet_cls_forward.11} parent=1 // pred_region
      _
    $region37: #{pointnet_cls_forward.11} parent=1 // pred_fallthru
      _
    // Predicated region
    $region38: #{pointnet_cls_forward.11} parent=1 // pred_check
      _
    $region39: #{pointnet_cls_forward.11} parent=1 // pred_check_branch
      %40 = sbr.rel (0) target = $region41
    $region40: #{pointnet_cls_forward.11} parent=1 // pred_region
      _
    $region41: #{pointnet_cls_forward.11} parent=1 // pred_fallthru
      _
    // Predicated region
    $region42: #{pointnet_cls_forward.11} parent=1 // pred_check
      _
    $region43: #{pointnet_cls_forward.11} parent=1 // pred_check_branch
      %42 = sbr.rel (0) target = $region45
    $region44: #{pointnet_cls_forward.11} parent=1 // pred_region
      _
    $region45: #{pointnet_cls_forward.11} parent=1 // pred_fallthru
      _
    // Predicated region
    $region46: #{pointnet_cls_forward.11} parent=1 // pred_check
      _
    $region47: #{pointnet_cls_forward.11} parent=1 // pred_check_branch
      %44 = sbr.rel (0) target = $region49
    $region48: #{pointnet_cls_forward.11} parent=1 // pred_region
      _
    $region49: #{pointnet_cls_forward.11} parent=1 // pred_fallthru
      _
    // Predicated region
    $region50: #{pointnet_cls_forward.11} parent=1 // pred_check
      _
    $region51: #{pointnet_cls_forward.11} parent=1 // pred_check_branch
      %46 = sbr.rel (0) target = $region53
    $region52: #{pointnet_cls_forward.11} parent=1 // pred_region
      _
    $region53: #{pointnet_cls_forward.11} parent=1 // pred_fallthru
      _
    // Predicated region
    $region54: #{pointnet_cls_forward.11} parent=1 // pred_check
      _
    $region55: #{pointnet_cls_forward.11} parent=1 // pred_check_branch
      %48 = sbr.rel (0) target = $region57
    $region56: #{pointnet_cls_forward.11} parent=1 // pred_region
      _
    $region57: #{pointnet_cls_forward.11} parent=1 // pred_fallthru
      _
    // Predicated region
    $region58: #{pointnet_cls_forward.11} parent=1 // pred_check
      _
    $region59: #{pointnet_cls_forward.11} parent=1 // pred_check_branch
      %50 = sbr.rel (0) target = $region61
    $region60: #{pointnet_cls_forward.11} parent=1 // pred_region
      _
    $region61: #{pointnet_cls_forward.11} parent=1 // pred_fallthru
      _
    %v52 = vld [vmem:[%s0] sm:$0xff]
    %v53 = vld [vmem:[%s0 + $0x8] sm:$0xff]
    %v56 = vcombine.high %v52, %v52
    %v58 = vunpack.c.l.s4 1983009808
    %v59 = vunpack.c.0.s8 %v58
    %v60 = vlaneseq
    %v61 = vshrl.u32 %v60, 7
    %v62 = vsub.s32 %v59, %v61
    %v63 = vrot.slane %v52, %v62
    %v65 = vunpack.c.l.s4 1983009808
    %v66 = vunpack.c.0.s8 %v65
    %v67 = vlaneseq
    %v68 = vshrl.u32 %v67, 7
    %v69 = vsub.s32 %v66, %v68
    %v70 = vrot.slane %v56, %v69
    %v71 = vcombine.high %v63, %v63
    %v72 = vcombine.high %v70, %v70
    %v73 = vcombine.high %v53, %v53
    %v75 = vunpack.c.l.s4 1983009808
    %v76 = vunpack.c.0.s8 %v75
    %v77 = vlaneseq
    %v78 = vshrl.u32 %v77, 7
    %v79 = vsub.s32 %v76, %v78
    %v80 = vrot.slane %v53, %v79
    %v82 = vunpack.c.l.s4 1983009808
    %v83 = vunpack.c.0.s8 %v82
    %v84 = vlaneseq
    %v85 = vshrl.u32 %v84, 7
    %v86 = vsub.s32 %v83, %v85
    %v87 = vrot.slane %v73, %v86
    %v88 = vcombine.high %v80, %v80
    %v89 = vcombine.high %v87, %v87
    %v98 = vpack.c.bf16 %v63, %v63
    %v99 = vpack.c.bf16 %v71, %v71
    %v100 = vpack.c.bf16 %v70, %v70
    %v101 = vpack.c.bf16 %v72, %v72
    %v102 = vpack.c.bf16 %v80, %v80
    %v103 = vpack.c.bf16 %v88, %v88
    %v104 = vpack.c.bf16 %v87, %v87
    %v105 = vpack.c.bf16 %v89, %v89
    %v106 = vld [vmem:[%s1] sm:$0xff]
    %v107 = vld [vmem:[%s1 + $0x8] sm:$0xff]
    %v108 = vld [vmem:[%s1 + $0x10] sm:$0xff]
    %v109 = vld [vmem:[%s1 + $0x18] sm:$0xff]
    %v110 = vld [vmem:[%s1 + $0x20] sm:$0xff]
    %v111 = vld [vmem:[%s1 + $0x28] sm:$0xff]
    %v112 = vld [vmem:[%s1 + $0x30] sm:$0xff]
    %v113 = vld [vmem:[%s1 + $0x38] sm:$0xff]
    %v114 = vld [vmem:[%s1 + $0x40] sm:$0xff]
    %v115 = vld [vmem:[%s1 + $0x48] sm:$0xff]
    %v116 = vld [vmem:[%s1 + $0x50] sm:$0xff]
    %v117 = vld [vmem:[%s1 + $0x58] sm:$0xff]
    %v118 = vld [vmem:[%s1 + $0x60] sm:$0xff]
    %v119 = vld [vmem:[%s1 + $0x68] sm:$0xff]
    %v120 = vld [vmem:[%s1 + $0x70] sm:$0xff]
    %v121 = vld [vmem:[%s1 + $0x78] sm:$0xff]
    %v122 = vld [vmem:[%s1 + $0x80] sm:$0xff]
    %v123 = vld [vmem:[%s1 + $0x88] sm:$0xff]
    %v124 = vld [vmem:[%s1 + $0x90] sm:$0xff]
    %v125 = vld [vmem:[%s1 + $0x98] sm:$0xff]
    %v126 = vld [vmem:[%s1 + $0xa0] sm:$0xff]
    %v127 = vld [vmem:[%s1 + $0xa8] sm:$0xff]
    %v128 = vld [vmem:[%s1 + $0xb0] sm:$0xff]
    %v129 = vld [vmem:[%s1 + $0xb8] sm:$0xff]
    %v130 = vld [vmem:[%s1 + $0xc0] sm:$0xff]
    %v131 = vld [vmem:[%s1 + $0xc8] sm:$0xff]
    %v132 = vld [vmem:[%s1 + $0xd0] sm:$0xff]
    %v133 = vld [vmem:[%s1 + $0xd8] sm:$0xff]
    %v134 = vld [vmem:[%s1 + $0xe0] sm:$0xff]
    %v135 = vld [vmem:[%s1 + $0xe8] sm:$0xff]
    %v136 = vld [vmem:[%s1 + $0xf0] sm:$0xff]
    %v137 = vld [vmem:[%s1 + $0xf8] sm:$0xff]
    %v138 = vld [vmem:[%s1 + $0x100] sm:$0xff]
    %v139 = vld [vmem:[%s1 + $0x108] sm:$0xff]
    %v140 = vld [vmem:[%s1 + $0x110] sm:$0xff]
    %v141 = vld [vmem:[%s1 + $0x118] sm:$0xff]
    %v142 = vld [vmem:[%s1 + $0x120] sm:$0xff]
    %v143 = vld [vmem:[%s1 + $0x128] sm:$0xff]
    %v144 = vld [vmem:[%s1 + $0x130] sm:$0xff]
    %v145 = vld [vmem:[%s1 + $0x138] sm:$0xff]
    %v146 = vld [vmem:[%s1 + $0x140] sm:$0xff]
    %v147 = vld [vmem:[%s1 + $0x148] sm:$0xff]
    %v148 = vld [vmem:[%s1 + $0x150] sm:$0xff]
    %v149 = vld [vmem:[%s1 + $0x158] sm:$0xff]
    %v150 = vld [vmem:[%s1 + $0x160] sm:$0xff]
    %v151 = vld [vmem:[%s1 + $0x168] sm:$0xff]
    %v152 = vld [vmem:[%s1 + $0x170] sm:$0xff]
    %v153 = vld [vmem:[%s1 + $0x178] sm:$0xff]
    %v154 = vld [vmem:[%s1 + $0x180] sm:$0xff]
    %v155 = vld [vmem:[%s1 + $0x188] sm:$0xff]
    %v156 = vld [vmem:[%s1 + $0x190] sm:$0xff]
    %v157 = vld [vmem:[%s1 + $0x198] sm:$0xff]
    %v158 = vld [vmem:[%s1 + $0x1a0] sm:$0xff]
    %v159 = vld [vmem:[%s1 + $0x1a8] sm:$0xff]
    %v160 = vld [vmem:[%s1 + $0x1b0] sm:$0xff]
    %v161 = vld [vmem:[%s1 + $0x1b8] sm:$0xff]
    %v162 = vld [vmem:[%s1 + $0x1c0] sm:$0xff]
    %v163 = vld [vmem:[%s1 + $0x1c8] sm:$0xff]
    %v164 = vld [vmem:[%s1 + $0x1d0] sm:$0xff]
    %v165 = vld [vmem:[%s1 + $0x1d8] sm:$0xff]
    %v166 = vld [vmem:[%s1 + $0x1e0] sm:$0xff]
    %v167 = vld [vmem:[%s1 + $0x1e8] sm:$0xff]
    %v168 = vld [vmem:[%s1 + $0x1f0] sm:$0xff]
    %v169 = vld [vmem:[%s1 + $0x1f8] sm:$0xff]
    %v170 = vld [vmem:[%s1 + $0x200] sm:$0xff]
    %v171 = vld [vmem:[%s1 + $0x208] sm:$0xff]
    %v172 = vld [vmem:[%s1 + $0x210] sm:$0xff]
    %v173 = vld [vmem:[%s1 + $0x218] sm:$0xff]
    %v174 = vld [vmem:[%s1 + $0x220] sm:$0xff]
    %v175 = vld [vmem:[%s1 + $0x228] sm:$0xff]
    %v176 = vld [vmem:[%s1 + $0x230] sm:$0xff]
    %v177 = vld [vmem:[%s1 + $0x238] sm:$0xff]
    %v178 = vld [vmem:[%s1 + $0x240] sm:$0xff]
    %v179 = vld [vmem:[%s1 + $0x248] sm:$0xff]
    %v180 = vld [vmem:[%s1 + $0x250] sm:$0xff]
    %v181 = vld [vmem:[%s1 + $0x258] sm:$0xff]
    %v182 = vld [vmem:[%s1 + $0x260] sm:$0xff]
    %v183 = vld [vmem:[%s1 + $0x268] sm:$0xff]
    %v184 = vld [vmem:[%s1 + $0x270] sm:$0xff]
    %v185 = vld [vmem:[%s1 + $0x278] sm:$0xff]
    %v186 = vld [vmem:[%s1 + $0x280] sm:$0xff]
    %v187 = vld [vmem:[%s1 + $0x288] sm:$0xff]
    %v188 = vld [vmem:[%s1 + $0x290] sm:$0xff]
    %v189 = vld [vmem:[%s1 + $0x298] sm:$0xff]
    %v190 = vld [vmem:[%s1 + $0x2a0] sm:$0xff]
    %v191 = vld [vmem:[%s1 + $0x2a8] sm:$0xff]
    %v192 = vld [vmem:[%s1 + $0x2b0] sm:$0xff]
    %v193 = vld [vmem:[%s1 + $0x2b8] sm:$0xff]
    %v194 = vld [vmem:[%s1 + $0x2c0] sm:$0xff]
    %v195 = vld [vmem:[%s1 + $0x2c8] sm:$0xff]
    %v196 = vld [vmem:[%s1 + $0x2d0] sm:$0xff]
    %v197 = vld [vmem:[%s1 + $0x2d8] sm:$0xff]
    %v198 = vld [vmem:[%s1 + $0x2e0] sm:$0xff]
    %v199 = vld [vmem:[%s1 + $0x2e8] sm:$0xff]
    %v200 = vld [vmem:[%s1 + $0x2f0] sm:$0xff]
    %v201 = vld [vmem:[%s1 + $0x2f8] sm:$0xff]
    %v202 = vld [vmem:[%s1 + $0x300] sm:$0xff]
    %v203 = vld [vmem:[%s1 + $0x308] sm:$0xff]
    %v204 = vld [vmem:[%s1 + $0x310] sm:$0xff]
    %v205 = vld [vmem:[%s1 + $0x318] sm:$0xff]
    %v206 = vld [vmem:[%s1 + $0x320] sm:$0xff]
    %v207 = vld [vmem:[%s1 + $0x328] sm:$0xff]
    %v208 = vld [vmem:[%s1 + $0x330] sm:$0xff]
    %v209 = vld [vmem:[%s1 + $0x338] sm:$0xff]
    %v210 = vld [vmem:[%s1 + $0x340] sm:$0xff]
    %v211 = vld [vmem:[%s1 + $0x348] sm:$0xff]
    %v212 = vld [vmem:[%s1 + $0x350] sm:$0xff]
    %v213 = vld [vmem:[%s1 + $0x358] sm:$0xff]
    %v214 = vld [vmem:[%s1 + $0x360] sm:$0xff]
    %v215 = vld [vmem:[%s1 + $0x368] sm:$0xff]
    %v216 = vld [vmem:[%s1 + $0x370] sm:$0xff]
    %v217 = vld [vmem:[%s1 + $0x378] sm:$0xff]
    %v218 = vld [vmem:[%s1 + $0x380] sm:$0xff]
    %v219 = vld [vmem:[%s1 + $0x388] sm:$0xff]
    %v220 = vld [vmem:[%s1 + $0x390] sm:$0xff]
    %v221 = vld [vmem:[%s1 + $0x398] sm:$0xff]
    %v222 = vld [vmem:[%s1 + $0x3a0] sm:$0xff]
    %v223 = vld [vmem:[%s1 + $0x3a8] sm:$0xff]
    %v224 = vld [vmem:[%s1 + $0x3b0] sm:$0xff]
    %v225 = vld [vmem:[%s1 + $0x3b8] sm:$0xff]
    %v226 = vld [vmem:[%s1 + $0x3c0] sm:$0xff]
    %v227 = vld [vmem:[%s1 + $0x3c8] sm:$0xff]
    %v228 = vld [vmem:[%s1 + $0x3d0] sm:$0xff]
    %v229 = vld [vmem:[%s1 + $0x3d8] sm:$0xff]
    %v230 = vld [vmem:[%s1 + $0x3e0] sm:$0xff]
    %v231 = vld [vmem:[%s1 + $0x3e8] sm:$0xff]
    %v232 = vld [vmem:[%s1 + $0x3f0] sm:$0xff]
    %v233 = vld [vmem:[%s1 + $0x3f8] sm:$0xff]
    %v234 = vld [vmem:[%s1 + $0x400] sm:$0xff]
    %v235 = vld [vmem:[%s1 + $0x408] sm:$0xff]
    %v236 = vld [vmem:[%s1 + $0x410] sm:$0xff]
    %v237 = vld [vmem:[%s1 + $0x418] sm:$0xff]
    %v238 = vld [vmem:[%s1 + $0x420] sm:$0xff]
    %v239 = vld [vmem:[%s1 + $0x428] sm:$0xff]
    %v240 = vld [vmem:[%s1 + $0x430] sm:$0xff]
    %v241 = vld [vmem:[%s1 + $0x438] sm:$0xff]
    %v242 = vld [vmem:[%s1 + $0x440] sm:$0xff]
    %v243 = vld [vmem:[%s1 + $0x448] sm:$0xff]
    %v244 = vld [vmem:[%s1 + $0x450] sm:$0xff]
    %v245 = vld [vmem:[%s1 + $0x458] sm:$0xff]
    %v246 = vld [vmem:[%s1 + $0x460] sm:$0xff]
    %v247 = vld [vmem:[%s1 + $0x468] sm:$0xff]
    %v248 = vld [vmem:[%s1 + $0x470] sm:$0xff]
    %v249 = vld [vmem:[%s1 + $0x478] sm:$0xff]
    %v250 = vld [vmem:[%s1 + $0x480] sm:$0xff]
    %v251 = vld [vmem:[%s1 + $0x488] sm:$0xff]
    %v252 = vld [vmem:[%s1 + $0x490] sm:$0xff]
    %v253 = vld [vmem:[%s1 + $0x498] sm:$0xff]
    %v254 = vld [vmem:[%s1 + $0x4a0] sm:$0xff]
    %v255 = vld [vmem:[%s1 + $0x4a8] sm:$0xff]
    %v256 = vld [vmem:[%s1 + $0x4b0] sm:$0xff]
    %v257 = vld [vmem:[%s1 + $0x4b8] sm:$0xff]
    %v258 = vld [vmem:[%s1 + $0x4c0] sm:$0xff]
    %v259 = vld [vmem:[%s1 + $0x4c8] sm:$0xff]
    %v260 = vld [vmem:[%s1 + $0x4d0] sm:$0xff]
    %v261 = vld [vmem:[%s1 + $0x4d8] sm:$0xff]
    %v262 = vld [vmem:[%s1 + $0x4e0] sm:$0xff]
    %v263 = vld [vmem:[%s1 + $0x4e8] sm:$0xff]
    %v264 = vld [vmem:[%s1 + $0x4f0] sm:$0xff]
    %v265 = vld [vmem:[%s1 + $0x4f8] sm:$0xff]
    %v266 = vld [vmem:[%s1 + $0x500] sm:$0xff]
    %v267 = vld [vmem:[%s1 + $0x508] sm:$0xff]
    %v268 = vld [vmem:[%s1 + $0x510] sm:$0xff]
    %v269 = vld [vmem:[%s1 + $0x518] sm:$0xff]
    %v270 = vld [vmem:[%s1 + $0x520] sm:$0xff]
    %v271 = vld [vmem:[%s1 + $0x528] sm:$0xff]
    %v272 = vld [vmem:[%s1 + $0x530] sm:$0xff]
    %v273 = vld [vmem:[%s1 + $0x538] sm:$0xff]
    %v274 = vld [vmem:[%s1 + $0x540] sm:$0xff]
    %v275 = vld [vmem:[%s1 + $0x548] sm:$0xff]
    %v276 = vld [vmem:[%s1 + $0x550] sm:$0xff]
    %v277 = vld [vmem:[%s1 + $0x558] sm:$0xff]
    %v278 = vld [vmem:[%s1 + $0x560] sm:$0xff]
    %v279 = vld [vmem:[%s1 + $0x568] sm:$0xff]
    %v280 = vld [vmem:[%s1 + $0x570] sm:$0xff]
    %v281 = vld [vmem:[%s1 + $0x578] sm:$0xff]
    %v282 = vld [vmem:[%s1 + $0x580] sm:$0xff]
    %v283 = vld [vmem:[%s1 + $0x588] sm:$0xff]
    %v284 = vld [vmem:[%s1 + $0x590] sm:$0xff]
    %v285 = vld [vmem:[%s1 + $0x598] sm:$0xff]
    %v286 = vld [vmem:[%s1 + $0x5a0] sm:$0xff]
    %v287 = vld [vmem:[%s1 + $0x5a8] sm:$0xff]
    %v288 = vld [vmem:[%s1 + $0x5b0] sm:$0xff]
    %v289 = vld [vmem:[%s1 + $0x5b8] sm:$0xff]
    %v290 = vld [vmem:[%s1 + $0x5c0] sm:$0xff]
    %v291 = vld [vmem:[%s1 + $0x5c8] sm:$0xff]
    %v292 = vld [vmem:[%s1 + $0x5d0] sm:$0xff]
    %v293 = vld [vmem:[%s1 + $0x5d8] sm:$0xff]
    %v294 = vld [vmem:[%s1 + $0x5e0] sm:$0xff]
    %v295 = vld [vmem:[%s1 + $0x5e8] sm:$0xff]
    %v296 = vld [vmem:[%s1 + $0x5f0] sm:$0xff]
    %v297 = vld [vmem:[%s1 + $0x5f8] sm:$0xff]
    %v298 = vld [vmem:[%s1 + $0x600] sm:$0xff]
    %v299 = vld [vmem:[%s1 + $0x608] sm:$0xff]
    %v300 = vld [vmem:[%s1 + $0x610] sm:$0xff]
    %v301 = vld [vmem:[%s1 + $0x618] sm:$0xff]
    %v302 = vld [vmem:[%s1 + $0x620] sm:$0xff]
    %v303 = vld [vmem:[%s1 + $0x628] sm:$0xff]
    %v304 = vld [vmem:[%s1 + $0x630] sm:$0xff]
    %v305 = vld [vmem:[%s1 + $0x638] sm:$0xff]
    %v306 = vld [vmem:[%s1 + $0x640] sm:$0xff]
    %v307 = vld [vmem:[%s1 + $0x648] sm:$0xff]
    %v308 = vld [vmem:[%s1 + $0x650] sm:$0xff]
    %v309 = vld [vmem:[%s1 + $0x658] sm:$0xff]
    %v310 = vld [vmem:[%s1 + $0x660] sm:$0xff]
    %v311 = vld [vmem:[%s1 + $0x668] sm:$0xff]
    %v312 = vld [vmem:[%s1 + $0x670] sm:$0xff]
    %v313 = vld [vmem:[%s1 + $0x678] sm:$0xff]
    %v314 = vld [vmem:[%s1 + $0x680] sm:$0xff]
    %v315 = vld [vmem:[%s1 + $0x688] sm:$0xff]
    %v316 = vld [vmem:[%s1 + $0x690] sm:$0xff]
    %v317 = vld [vmem:[%s1 + $0x698] sm:$0xff]
    %v318 = vld [vmem:[%s1 + $0x6a0] sm:$0xff]
    %v319 = vld [vmem:[%s1 + $0x6a8] sm:$0xff]
    %v320 = vld [vmem:[%s1 + $0x6b0] sm:$0xff]
    %v321 = vld [vmem:[%s1 + $0x6b8] sm:$0xff]
    %v322 = vld [vmem:[%s1 + $0x6c0] sm:$0xff]
    %v323 = vld [vmem:[%s1 + $0x6c8] sm:$0xff]
    %v324 = vld [vmem:[%s1 + $0x6d0] sm:$0xff]
    %v325 = vld [vmem:[%s1 + $0x6d8] sm:$0xff]
    %v326 = vld [vmem:[%s1 + $0x6e0] sm:$0xff]
    %v327 = vld [vmem:[%s1 + $0x6e8] sm:$0xff]
    %v328 = vld [vmem:[%s1 + $0x6f0] sm:$0xff]
    %v329 = vld [vmem:[%s1 + $0x6f8] sm:$0xff]
    %v330 = vld [vmem:[%s1 + $0x700] sm:$0xff]
    %v331 = vld [vmem:[%s1 + $0x708] sm:$0xff]
    %v332 = vld [vmem:[%s1 + $0x710] sm:$0xff]
    %v333 = vld [vmem:[%s1 + $0x718] sm:$0xff]
    %v334 = vld [vmem:[%s1 + $0x720] sm:$0xff]
    %v335 = vld [vmem:[%s1 + $0x728] sm:$0xff]
    %v336 = vld [vmem:[%s1 + $0x730] sm:$0xff]
    %v337 = vld [vmem:[%s1 + $0x738] sm:$0xff]
    %v338 = vld [vmem:[%s1 + $0x740] sm:$0xff]
    %v339 = vld [vmem:[%s1 + $0x748] sm:$0xff]
    %v340 = vld [vmem:[%s1 + $0x750] sm:$0xff]
    %v341 = vld [vmem:[%s1 + $0x758] sm:$0xff]
    %v342 = vld [vmem:[%s1 + $0x760] sm:$0xff]
    %v343 = vld [vmem:[%s1 + $0x768] sm:$0xff]
    %v344 = vld [vmem:[%s1 + $0x770] sm:$0xff]
    %v345 = vld [vmem:[%s1 + $0x778] sm:$0xff]
    %v346 = vld [vmem:[%s1 + $0x780] sm:$0xff]
    %v347 = vld [vmem:[%s1 + $0x788] sm:$0xff]
    %v348 = vld [vmem:[%s1 + $0x790] sm:$0xff]
    %v349 = vld [vmem:[%s1 + $0x798] sm:$0xff]
    %v350 = vld [vmem:[%s1 + $0x7a0] sm:$0xff]
    %v351 = vld [vmem:[%s1 + $0x7a8] sm:$0xff]
    %v352 = vld [vmem:[%s1 + $0x7b0] sm:$0xff]
    %v353 = vld [vmem:[%s1 + $0x7b8] sm:$0xff]
    %v354 = vld [vmem:[%s1 + $0x7c0] sm:$0xff]
    %v355 = vld [vmem:[%s1 + $0x7c8] sm:$0xff]
    %v356 = vld [vmem:[%s1 + $0x7d0] sm:$0xff]
    %v357 = vld [vmem:[%s1 + $0x7d8] sm:$0xff]
    %v358 = vld [vmem:[%s1 + $0x7e0] sm:$0xff]
    %v359 = vld [vmem:[%s1 + $0x7e8] sm:$0xff]
    %v360 = vld [vmem:[%s1 + $0x7f0] sm:$0xff]
    %v361 = vld [vmem:[%s1 + $0x7f8] sm:$0xff]
    %v362 = vld [vmem:[%s2] sm:$0xf]
    %v364 = vlaneseq
    %v365 = vshrl.u32 %v364, 7
    %v366 = vsub.s32 0, %v365
    %v367 = vrot.slane %v362, %v366
    %v368 = vlaneseq
    %v369 = vshrl.u32 %v368, 7
    %v370 = vsub.s32 1, %v369
    %v371 = vrot.slane %v362, %v370
    %v372 = vlaneseq
    %v373 = vshrl.u32 %v372, 7
    %v374 = vsub.s32 2, %v373
    %v375 = vrot.slane %v362, %v374
    %v376 = vlaneseq
    %v377 = vshrl.u32 %v376, 7
    %v378 = vsub.s32 3, %v377
    %v379 = vrot.slane %v362, %v378
    %v640 = vunpack.c.l.b16 %v106
    %v641 = vunpack.c.h.b16 %v106
    %v642 = vunpack.c.l.b16 %v107
    %v643 = vunpack.c.h.b16 %v107
    %v644 = vunpack.c.l.b16 %v108
    %v645 = vunpack.c.h.b16 %v108
    %v646 = vunpack.c.l.b16 %v109
    %v647 = vunpack.c.h.b16 %v109
    %v648 = vunpack.c.l.b16 %v110
    %v649 = vunpack.c.h.b16 %v110
    %v650 = vunpack.c.l.b16 %v111
    %v651 = vunpack.c.h.b16 %v111
    %v652 = vunpack.c.l.b16 %v112
    %v653 = vunpack.c.h.b16 %v112
    %v654 = vunpack.c.l.b16 %v113
    %v655 = vunpack.c.h.b16 %v113
    %v656 = vunpack.c.l.b16 %v114
    %v657 = vunpack.c.h.b16 %v114
    %v658 = vunpack.c.l.b16 %v115
    %v659 = vunpack.c.h.b16 %v115
    %v660 = vunpack.c.l.b16 %v116
    %v661 = vunpack.c.h.b16 %v116
    %v662 = vunpack.c.l.b16 %v117
    %v663 = vunpack.c.h.b16 %v117
    %v664 = vunpack.c.l.b16 %v118
    %v665 = vunpack.c.h.b16 %v118
    %v666 = vunpack.c.l.b16 %v119
    %v667 = vunpack.c.h.b16 %v119
    %v668 = vunpack.c.l.b16 %v120
    %v669 = vunpack.c.h.b16 %v120
    %v670 = vunpack.c.l.b16 %v121
    %v671 = vunpack.c.h.b16 %v121
    %v672 = vunpack.c.l.b16 %v122
    %v673 = vunpack.c.h.b16 %v122
    %v674 = vunpack.c.l.b16 %v123
    %v675 = vunpack.c.h.b16 %v123
    %v676 = vunpack.c.l.b16 %v124
    %v677 = vunpack.c.h.b16 %v124
    %v678 = vunpack.c.l.b16 %v125
    %v679 = vunpack.c.h.b16 %v125
    %v680 = vunpack.c.l.b16 %v126
    %v681 = vunpack.c.h.b16 %v126
    %v682 = vunpack.c.l.b16 %v127
    %v683 = vunpack.c.h.b16 %v127
    %v684 = vunpack.c.l.b16 %v128
    %v685 = vunpack.c.h.b16 %v128
    %v686 = vunpack.c.l.b16 %v129
    %v687 = vunpack.c.h.b16 %v129
    %v688 = vunpack.c.l.b16 %v130
    %v689 = vunpack.c.h.b16 %v130
    %v690 = vunpack.c.l.b16 %v131
    %v691 = vunpack.c.h.b16 %v131
    %v692 = vunpack.c.l.b16 %v132
    %v693 = vunpack.c.h.b16 %v132
    %v694 = vunpack.c.l.b16 %v133
    %v695 = vunpack.c.h.b16 %v133
    %v696 = vunpack.c.l.b16 %v134
    %v697 = vunpack.c.h.b16 %v134
    %v698 = vunpack.c.l.b16 %v135
    %v699 = vunpack.c.h.b16 %v135
    %v700 = vunpack.c.l.b16 %v136
    %v701 = vunpack.c.h.b16 %v136
    %v702 = vunpack.c.l.b16 %v137
    %v703 = vunpack.c.h.b16 %v137
    %v704 = vunpack.c.l.b16 %v138
    %v705 = vunpack.c.h.b16 %v138
    %v706 = vunpack.c.l.b16 %v139
    %v707 = vunpack.c.h.b16 %v139
    %v708 = vunpack.c.l.b16 %v140
    %v709 = vunpack.c.h.b16 %v140
    %v710 = vunpack.c.l.b16 %v141
    %v711 = vunpack.c.h.b16 %v141
    %v712 = vunpack.c.l.b16 %v142
    %v713 = vunpack.c.h.b16 %v142
    %v714 = vunpack.c.l.b16 %v143
    %v715 = vunpack.c.h.b16 %v143
    %v716 = vunpack.c.l.b16 %v144
    %v717 = vunpack.c.h.b16 %v144
    %v718 = vunpack.c.l.b16 %v145
    %v719 = vunpack.c.h.b16 %v145
    %v720 = vunpack.c.l.b16 %v146
    %v721 = vunpack.c.h.b16 %v146
    %v722 = vunpack.c.l.b16 %v147
    %v723 = vunpack.c.h.b16 %v147
    %v724 = vunpack.c.l.b16 %v148
    %v725 = vunpack.c.h.b16 %v148
    %v726 = vunpack.c.l.b16 %v149
    %v727 = vunpack.c.h.b16 %v149
    %v728 = vunpack.c.l.b16 %v150
    %v729 = vunpack.c.h.b16 %v150
    %v730 = vunpack.c.l.b16 %v151
    %v731 = vunpack.c.h.b16 %v151
    %v732 = vunpack.c.l.b16 %v152
    %v733 = vunpack.c.h.b16 %v152
    %v734 = vunpack.c.l.b16 %v153
    %v735 = vunpack.c.h.b16 %v153
    %v736 = vunpack.c.l.b16 %v154
    %v737 = vunpack.c.h.b16 %v154
    %v738 = vunpack.c.l.b16 %v155
    %v739 = vunpack.c.h.b16 %v155
    %v740 = vunpack.c.l.b16 %v156
    %v741 = vunpack.c.h.b16 %v156
    %v742 = vunpack.c.l.b16 %v157
    %v743 = vunpack.c.h.b16 %v157
    %v744 = vunpack.c.l.b16 %v158
    %v745 = vunpack.c.h.b16 %v158
    %v746 = vunpack.c.l.b16 %v159
    %v747 = vunpack.c.h.b16 %v159
    %v748 = vunpack.c.l.b16 %v160
    %v749 = vunpack.c.h.b16 %v160
    %v750 = vunpack.c.l.b16 %v161
    %v751 = vunpack.c.h.b16 %v161
    %v752 = vunpack.c.l.b16 %v162
    %v753 = vunpack.c.h.b16 %v162
    %v754 = vunpack.c.l.b16 %v163
    %v755 = vunpack.c.h.b16 %v163
    %v756 = vunpack.c.l.b16 %v164
    %v757 = vunpack.c.h.b16 %v164
    %v758 = vunpack.c.l.b16 %v165
    %v759 = vunpack.c.h.b16 %v165
    %v760 = vunpack.c.l.b16 %v166
    %v761 = vunpack.c.h.b16 %v166
    %v762 = vunpack.c.l.b16 %v167
    %v763 = vunpack.c.h.b16 %v167
    %v764 = vunpack.c.l.b16 %v168
    %v765 = vunpack.c.h.b16 %v168
    %v766 = vunpack.c.l.b16 %v169
    %v767 = vunpack.c.h.b16 %v169
    %v768 = vunpack.c.l.b16 %v170
    %v769 = vunpack.c.h.b16 %v170
    %v770 = vunpack.c.l.b16 %v171
    %v771 = vunpack.c.h.b16 %v171
    %v772 = vunpack.c.l.b16 %v172
    %v773 = vunpack.c.h.b16 %v172
    %v774 = vunpack.c.l.b16 %v173
    %v775 = vunpack.c.h.b16 %v173
    %v776 = vunpack.c.l.b16 %v174
    %v777 = vunpack.c.h.b16 %v174
    %v778 = vunpack.c.l.b16 %v175
    %v779 = vunpack.c.h.b16 %v175
    %v780 = vunpack.c.l.b16 %v176
    %v781 = vunpack.c.h.b16 %v176
    %v782 = vunpack.c.l.b16 %v177
    %v783 = vunpack.c.h.b16 %v177
    %v784 = vunpack.c.l.b16 %v178
    %v785 = vunpack.c.h.b16 %v178
    %v786 = vunpack.c.l.b16 %v179
    %v787 = vunpack.c.h.b16 %v179
    %v788 = vunpack.c.l.b16 %v180
    %v789 = vunpack.c.h.b16 %v180
    %v790 = vunpack.c.l.b16 %v181
    %v791 = vunpack.c.h.b16 %v181
    %v792 = vunpack.c.l.b16 %v182
    %v793 = vunpack.c.h.b16 %v182
    %v794 = vunpack.c.l.b16 %v183
    %v795 = vunpack.c.h.b16 %v183
    %v796 = vunpack.c.l.b16 %v184
    %v797 = vunpack.c.h.b16 %v184
    %v798 = vunpack.c.l.b16 %v185
    %v799 = vunpack.c.h.b16 %v185
    %v800 = vunpack.c.l.b16 %v186
    %v801 = vunpack.c.h.b16 %v186
    %v802 = vunpack.c.l.b16 %v187
    %v803 = vunpack.c.h.b16 %v187
    %v804 = vunpack.c.l.b16 %v188
    %v805 = vunpack.c.h.b16 %v188
    %v806 = vunpack.c.l.b16 %v189
    %v807 = vunpack.c.h.b16 %v189
    %v808 = vunpack.c.l.b16 %v190
    %v809 = vunpack.c.h.b16 %v190
    %v810 = vunpack.c.l.b16 %v191
    %v811 = vunpack.c.h.b16 %v191
    %v812 = vunpack.c.l.b16 %v192
    %v813 = vunpack.c.h.b16 %v192
    %v814 = vunpack.c.l.b16 %v193
    %v815 = vunpack.c.h.b16 %v193
    %v816 = vunpack.c.l.b16 %v194
    %v817 = vunpack.c.h.b16 %v194
    %v818 = vunpack.c.l.b16 %v195
    %v819 = vunpack.c.h.b16 %v195
    %v820 = vunpack.c.l.b16 %v196
    %v821 = vunpack.c.h.b16 %v196
    %v822 = vunpack.c.l.b16 %v197
    %v823 = vunpack.c.h.b16 %v197
    %v824 = vunpack.c.l.b16 %v198
    %v825 = vunpack.c.h.b16 %v198
    %v826 = vunpack.c.l.b16 %v199
    %v827 = vunpack.c.h.b16 %v199
    %v828 = vunpack.c.l.b16 %v200
    %v829 = vunpack.c.h.b16 %v200
    %v830 = vunpack.c.l.b16 %v201
    %v831 = vunpack.c.h.b16 %v201
    %v832 = vunpack.c.l.b16 %v202
    %v833 = vunpack.c.h.b16 %v202
    %v834 = vunpack.c.l.b16 %v203
    %v835 = vunpack.c.h.b16 %v203
    %v836 = vunpack.c.l.b16 %v204
    %v837 = vunpack.c.h.b16 %v204
    %v838 = vunpack.c.l.b16 %v205
    %v839 = vunpack.c.h.b16 %v205
    %v840 = vunpack.c.l.b16 %v206
    %v841 = vunpack.c.h.b16 %v206
    %v842 = vunpack.c.l.b16 %v207
    %v843 = vunpack.c.h.b16 %v207
    %v844 = vunpack.c.l.b16 %v208
    %v845 = vunpack.c.h.b16 %v208
    %v846 = vunpack.c.l.b16 %v209
    %v847 = vunpack.c.h.b16 %v209
    %v848 = vunpack.c.l.b16 %v210
    %v849 = vunpack.c.h.b16 %v210
    %v850 = vunpack.c.l.b16 %v211
    %v851 = vunpack.c.h.b16 %v211
    %v852 = vunpack.c.l.b16 %v212
    %v853 = vunpack.c.h.b16 %v212
    %v854 = vunpack.c.l.b16 %v213
    %v855 = vunpack.c.h.b16 %v213
    %v856 = vunpack.c.l.b16 %v214
    %v857 = vunpack.c.h.b16 %v214
    %v858 = vunpack.c.l.b16 %v215
    %v859 = vunpack.c.h.b16 %v215
    %v860 = vunpack.c.l.b16 %v216
    %v861 = vunpack.c.h.b16 %v216
    %v862 = vunpack.c.l.b16 %v217
    %v863 = vunpack.c.h.b16 %v217
    %v864 = vunpack.c.l.b16 %v218
    %v865 = vunpack.c.h.b16 %v218
    %v866 = vunpack.c.l.b16 %v219
    %v867 = vunpack.c.h.b16 %v219
    %v868 = vunpack.c.l.b16 %v220
    %v869 = vunpack.c.h.b16 %v220
    %v870 = vunpack.c.l.b16 %v221
    %v871 = vunpack.c.h.b16 %v221
    %v872 = vunpack.c.l.b16 %v222
    %v873 = vunpack.c.h.b16 %v222
    %v874 = vunpack.c.l.b16 %v223
    %v875 = vunpack.c.h.b16 %v223
    %v876 = vunpack.c.l.b16 %v224
    %v877 = vunpack.c.h.b16 %v224
    %v878 = vunpack.c.l.b16 %v225
    %v879 = vunpack.c.h.b16 %v225
    %v880 = vunpack.c.l.b16 %v226
    %v881 = vunpack.c.h.b16 %v226
    %v882 = vunpack.c.l.b16 %v227
    %v883 = vunpack.c.h.b16 %v227
    %v884 = vunpack.c.l.b16 %v228
    %v885 = vunpack.c.h.b16 %v228
    %v886 = vunpack.c.l.b16 %v229
    %v887 = vunpack.c.h.b16 %v229
    %v888 = vunpack.c.l.b16 %v230
    %v889 = vunpack.c.h.b16 %v230
    %v890 = vunpack.c.l.b16 %v231
    %v891 = vunpack.c.h.b16 %v231
    %v892 = vunpack.c.l.b16 %v232
    %v893 = vunpack.c.h.b16 %v232
    %v894 = vunpack.c.l.b16 %v233
    %v895 = vunpack.c.h.b16 %v233
    %v896 = vunpack.c.l.b16 %v234
    %v897 = vunpack.c.h.b16 %v234
    %v898 = vunpack.c.l.b16 %v235
    %v899 = vunpack.c.h.b16 %v235
    %v900 = vunpack.c.l.b16 %v236
    %v901 = vunpack.c.h.b16 %v236
    %v902 = vunpack.c.l.b16 %v237
    %v903 = vunpack.c.h.b16 %v237
    %v904 = vunpack.c.l.b16 %v238
    %v905 = vunpack.c.h.b16 %v238
    %v906 = vunpack.c.l.b16 %v239
    %v907 = vunpack.c.h.b16 %v239
    %v908 = vunpack.c.l.b16 %v240
    %v909 = vunpack.c.h.b16 %v240
    %v910 = vunpack.c.l.b16 %v241
    %v911 = vunpack.c.h.b16 %v241
    %v912 = vunpack.c.l.b16 %v242
    %v913 = vunpack.c.h.b16 %v242
    %v914 = vunpack.c.l.b16 %v243
    %v915 = vunpack.c.h.b16 %v243
    %v916 = vunpack.c.l.b16 %v244
    %v917 = vunpack.c.h.b16 %v244
    %v918 = vunpack.c.l.b16 %v245
    %v919 = vunpack.c.h.b16 %v245
    %v920 = vunpack.c.l.b16 %v246
    %v921 = vunpack.c.h.b16 %v246
    %v922 = vunpack.c.l.b16 %v247
    %v923 = vunpack.c.h.b16 %v247
    %v924 = vunpack.c.l.b16 %v248
    %v925 = vunpack.c.h.b16 %v248
    %v926 = vunpack.c.l.b16 %v249
    %v927 = vunpack.c.h.b16 %v249
    %v928 = vunpack.c.l.b16 %v250
    %v929 = vunpack.c.h.b16 %v250
    %v930 = vunpack.c.l.b16 %v251
    %v931 = vunpack.c.h.b16 %v251
    %v932 = vunpack.c.l.b16 %v252
    %v933 = vunpack.c.h.b16 %v252
    %v934 = vunpack.c.l.b16 %v253
    %v935 = vunpack.c.h.b16 %v253
    %v936 = vunpack.c.l.b16 %v254
    %v937 = vunpack.c.h.b16 %v254
    %v938 = vunpack.c.l.b16 %v255
    %v939 = vunpack.c.h.b16 %v255
    %v940 = vunpack.c.l.b16 %v256
    %v941 = vunpack.c.h.b16 %v256
    %v942 = vunpack.c.l.b16 %v257
    %v943 = vunpack.c.h.b16 %v257
    %v944 = vunpack.c.l.b16 %v258
    %v945 = vunpack.c.h.b16 %v258
    %v946 = vunpack.c.l.b16 %v259
    %v947 = vunpack.c.h.b16 %v259
    %v948 = vunpack.c.l.b16 %v260
    %v949 = vunpack.c.h.b16 %v260
    %v950 = vunpack.c.l.b16 %v261
    %v951 = vunpack.c.h.b16 %v261
    %v952 = vunpack.c.l.b16 %v262
    %v953 = vunpack.c.h.b16 %v262
    %v954 = vunpack.c.l.b16 %v263
    %v955 = vunpack.c.h.b16 %v263
    %v956 = vunpack.c.l.b16 %v264
    %v957 = vunpack.c.h.b16 %v264
    %v958 = vunpack.c.l.b16 %v265
    %v959 = vunpack.c.h.b16 %v265
    %v960 = vunpack.c.l.b16 %v266
    %v961 = vunpack.c.h.b16 %v266
    %v962 = vunpack.c.l.b16 %v267
    %v963 = vunpack.c.h.b16 %v267
    %v964 = vunpack.c.l.b16 %v268
    %v965 = vunpack.c.h.b16 %v268
    %v966 = vunpack.c.l.b16 %v269
    %v967 = vunpack.c.h.b16 %v269
    %v968 = vunpack.c.l.b16 %v270
    %v969 = vunpack.c.h.b16 %v270
    %v970 = vunpack.c.l.b16 %v271
    %v971 = vunpack.c.h.b16 %v271
    %v972 = vunpack.c.l.b16 %v272
    %v973 = vunpack.c.h.b16 %v272
    %v974 = vunpack.c.l.b16 %v273
    %v975 = vunpack.c.h.b16 %v273
    %v976 = vunpack.c.l.b16 %v274
    %v977 = vunpack.c.h.b16 %v274
    %v978 = vunpack.c.l.b16 %v275
    %v979 = vunpack.c.h.b16 %v275
    %v980 = vunpack.c.l.b16 %v276
    %v981 = vunpack.c.h.b16 %v276
    %v982 = vunpack.c.l.b16 %v277
    %v983 = vunpack.c.h.b16 %v277
    %v984 = vunpack.c.l.b16 %v278
    %v985 = vunpack.c.h.b16 %v278
    %v986 = vunpack.c.l.b16 %v279
    %v987 = vunpack.c.h.b16 %v279
    %v988 = vunpack.c.l.b16 %v280
    %v989 = vunpack.c.h.b16 %v280
    %v990 = vunpack.c.l.b16 %v281
    %v991 = vunpack.c.h.b16 %v281
    %v992 = vunpack.c.l.b16 %v282
    %v993 = vunpack.c.h.b16 %v282
    %v994 = vunpack.c.l.b16 %v283
    %v995 = vunpack.c.h.b16 %v283
    %v996 = vunpack.c.l.b16 %v284
    %v997 = vunpack.c.h.b16 %v284
    %v998 = vunpack.c.l.b16 %v285
    %v999 = vunpack.c.h.b16 %v285
    %v1000 = vunpack.c.l.b16 %v286
    %v1001 = vunpack.c.h.b16 %v286
    %v1002 = vunpack.c.l.b16 %v287
    %v1003 = vunpack.c.h.b16 %v287
    %v1004 = vunpack.c.l.b16 %v288
    %v1005 = vunpack.c.h.b16 %v288
    %v1006 = vunpack.c.l.b16 %v289
    %v1007 = vunpack.c.h.b16 %v289
    %v1008 = vunpack.c.l.b16 %v290
    %v1009 = vunpack.c.h.b16 %v290
    %v1010 = vunpack.c.l.b16 %v291
    %v1011 = vunpack.c.h.b16 %v291
    %v1012 = vunpack.c.l.b16 %v292
    %v1013 = vunpack.c.h.b16 %v292
    %v1014 = vunpack.c.l.b16 %v293
    %v1015 = vunpack.c.h.b16 %v293
    %v1016 = vunpack.c.l.b16 %v294
    %v1017 = vunpack.c.h.b16 %v294
    %v1018 = vunpack.c.l.b16 %v295
    %v1019 = vunpack.c.h.b16 %v295
    %v1020 = vunpack.c.l.b16 %v296
    %v1021 = vunpack.c.h.b16 %v296
    %v1022 = vunpack.c.l.b16 %v297
    %v1023 = vunpack.c.h.b16 %v297
    %v1024 = vunpack.c.l.b16 %v298
    %v1025 = vunpack.c.h.b16 %v298
    %v1026 = vunpack.c.l.b16 %v299
    %v1027 = vunpack.c.h.b16 %v299
    %v1028 = vunpack.c.l.b16 %v300
    %v1029 = vunpack.c.h.b16 %v300
    %v1030 = vunpack.c.l.b16 %v301
    %v1031 = vunpack.c.h.b16 %v301
    %v1032 = vunpack.c.l.b16 %v302
    %v1033 = vunpack.c.h.b16 %v302
    %v1034 = vunpack.c.l.b16 %v303
    %v1035 = vunpack.c.h.b16 %v303
    %v1036 = vunpack.c.l.b16 %v304
    %v1037 = vunpack.c.h.b16 %v304
    %v1038 = vunpack.c.l.b16 %v305
    %v1039 = vunpack.c.h.b16 %v305
    %v1040 = vunpack.c.l.b16 %v306
    %v1041 = vunpack.c.h.b16 %v306
    %v1042 = vunpack.c.l.b16 %v307
    %v1043 = vunpack.c.h.b16 %v307
    %v1044 = vunpack.c.l.b16 %v308
    %v1045 = vunpack.c.h.b16 %v308
    %v1046 = vunpack.c.l.b16 %v309
    %v1047 = vunpack.c.h.b16 %v309
    %v1048 = vunpack.c.l.b16 %v310
    %v1049 = vunpack.c.h.b16 %v310
    %v1050 = vunpack.c.l.b16 %v311
    %v1051 = vunpack.c.h.b16 %v311
    %v1052 = vunpack.c.l.b16 %v312
    %v1053 = vunpack.c.h.b16 %v312
    %v1054 = vunpack.c.l.b16 %v313
    %v1055 = vunpack.c.h.b16 %v313
    %v1056 = vunpack.c.l.b16 %v314
    %v1057 = vunpack.c.h.b16 %v314
    %v1058 = vunpack.c.l.b16 %v315
    %v1059 = vunpack.c.h.b16 %v315
    %v1060 = vunpack.c.l.b16 %v316
    %v1061 = vunpack.c.h.b16 %v316
    %v1062 = vunpack.c.l.b16 %v317
    %v1063 = vunpack.c.h.b16 %v317
    %v1064 = vunpack.c.l.b16 %v318
    %v1065 = vunpack.c.h.b16 %v318
    %v1066 = vunpack.c.l.b16 %v319
    %v1067 = vunpack.c.h.b16 %v319
    %v1068 = vunpack.c.l.b16 %v320
    %v1069 = vunpack.c.h.b16 %v320
    %v1070 = vunpack.c.l.b16 %v321
    %v1071 = vunpack.c.h.b16 %v321
    %v1072 = vunpack.c.l.b16 %v322
    %v1073 = vunpack.c.h.b16 %v322
    %v1074 = vunpack.c.l.b16 %v323
    %v1075 = vunpack.c.h.b16 %v323
    %v1076 = vunpack.c.l.b16 %v324
    %v1077 = vunpack.c.h.b16 %v324
    %v1078 = vunpack.c.l.b16 %v325
    %v1079 = vunpack.c.h.b16 %v325
    %v1080 = vunpack.c.l.b16 %v326
    %v1081 = vunpack.c.h.b16 %v326
    %v1082 = vunpack.c.l.b16 %v327
    %v1083 = vunpack.c.h.b16 %v327
    %v1084 = vunpack.c.l.b16 %v328
    %v1085 = vunpack.c.h.b16 %v328
    %v1086 = vunpack.c.l.b16 %v329
    %v1087 = vunpack.c.h.b16 %v329
    %v1088 = vunpack.c.l.b16 %v330
    %v1089 = vunpack.c.h.b16 %v330
    %v1090 = vunpack.c.l.b16 %v331
    %v1091 = vunpack.c.h.b16 %v331
    %v1092 = vunpack.c.l.b16 %v332
    %v1093 = vunpack.c.h.b16 %v332
    %v1094 = vunpack.c.l.b16 %v333
    %v1095 = vunpack.c.h.b16 %v333
    %v1096 = vunpack.c.l.b16 %v334
    %v1097 = vunpack.c.h.b16 %v334
    %v1098 = vunpack.c.l.b16 %v335
    %v1099 = vunpack.c.h.b16 %v335
    %v1100 = vunpack.c.l.b16 %v336
    %v1101 = vunpack.c.h.b16 %v336
    %v1102 = vunpack.c.l.b16 %v337
    %v1103 = vunpack.c.h.b16 %v337
    %v1104 = vunpack.c.l.b16 %v338
    %v1105 = vunpack.c.h.b16 %v338
    %v1106 = vunpack.c.l.b16 %v339
    %v1107 = vunpack.c.h.b16 %v339
    %v1108 = vunpack.c.l.b16 %v340
    %v1109 = vunpack.c.h.b16 %v340
    %v1110 = vunpack.c.l.b16 %v341
    %v1111 = vunpack.c.h.b16 %v341
    %v1112 = vunpack.c.l.b16 %v342
    %v1113 = vunpack.c.h.b16 %v342
    %v1114 = vunpack.c.l.b16 %v343
    %v1115 = vunpack.c.h.b16 %v343
    %v1116 = vunpack.c.l.b16 %v344
    %v1117 = vunpack.c.h.b16 %v344
    %v1118 = vunpack.c.l.b16 %v345
    %v1119 = vunpack.c.h.b16 %v345
    %v1120 = vunpack.c.l.b16 %v346
    %v1121 = vunpack.c.h.b16 %v346
    %v1122 = vunpack.c.l.b16 %v347
    %v1123 = vunpack.c.h.b16 %v347
    %v1124 = vunpack.c.l.b16 %v348
    %v1125 = vunpack.c.h.b16 %v348
    %v1126 = vunpack.c.l.b16 %v349
    %v1127 = vunpack.c.h.b16 %v349
    %v1128 = vunpack.c.l.b16 %v350
    %v1129 = vunpack.c.h.b16 %v350
    %v1130 = vunpack.c.l.b16 %v351
    %v1131 = vunpack.c.h.b16 %v351
    %v1132 = vunpack.c.l.b16 %v352
    %v1133 = vunpack.c.h.b16 %v352
    %v1134 = vunpack.c.l.b16 %v353
    %v1135 = vunpack.c.h.b16 %v353
    %v1136 = vunpack.c.l.b16 %v354
    %v1137 = vunpack.c.h.b16 %v354
    %v1138 = vunpack.c.l.b16 %v355
    %v1139 = vunpack.c.h.b16 %v355
    %v1140 = vunpack.c.l.b16 %v356
    %v1141 = vunpack.c.h.b16 %v356
    %v1142 = vunpack.c.l.b16 %v357
    %v1143 = vunpack.c.h.b16 %v357
    %v1144 = vunpack.c.l.b16 %v358
    %v1145 = vunpack.c.h.b16 %v358
    %v1146 = vunpack.c.l.b16 %v359
    %v1147 = vunpack.c.h.b16 %v359
    %v1148 = vunpack.c.l.b16 %v360
    %v1149 = vunpack.c.h.b16 %v360
    %v1150 = vunpack.c.l.b16 %v361
    %v1151 = vunpack.c.h.b16 %v361
    %v1152 = vpack.c.b16 %v644, %v640
    %v1153 = vpack.c.b16 %v645, %v641
    %v1154 = vpack.c.b16 %v646, %v642
    %v1155 = vpack.c.b16 %v647, %v643
    %v1156 = vpack.c.b16 %v652, %v648
    %v1157 = vpack.c.b16 %v653, %v649
    %v1158 = vpack.c.b16 %v654, %v650
    %v1159 = vpack.c.b16 %v655, %v651
    %v1160 = vpack.c.b16 %v660, %v656
    %v1161 = vpack.c.b16 %v661, %v657
    %v1162 = vpack.c.b16 %v662, %v658
    %v1163 = vpack.c.b16 %v663, %v659
    %v1164 = vpack.c.b16 %v668, %v664
    %v1165 = vpack.c.b16 %v669, %v665
    %v1166 = vpack.c.b16 %v670, %v666
    %v1167 = vpack.c.b16 %v671, %v667
    %v1168 = vpack.c.b16 %v676, %v672
    %v1169 = vpack.c.b16 %v677, %v673
    %v1170 = vpack.c.b16 %v678, %v674
    %v1171 = vpack.c.b16 %v679, %v675
    %v1172 = vpack.c.b16 %v684, %v680
    %v1173 = vpack.c.b16 %v685, %v681
    %v1174 = vpack.c.b16 %v686, %v682
    %v1175 = vpack.c.b16 %v687, %v683
    %v1176 = vpack.c.b16 %v692, %v688
    %v1177 = vpack.c.b16 %v693, %v689
    %v1178 = vpack.c.b16 %v694, %v690
    %v1179 = vpack.c.b16 %v695, %v691
    %v1180 = vpack.c.b16 %v700, %v696
    %v1181 = vpack.c.b16 %v701, %v697
    %v1182 = vpack.c.b16 %v702, %v698
    %v1183 = vpack.c.b16 %v703, %v699
    %v1184 = vpack.c.b16 %v708, %v704
    %v1185 = vpack.c.b16 %v709, %v705
    %v1186 = vpack.c.b16 %v710, %v706
    %v1187 = vpack.c.b16 %v711, %v707
    %v1188 = vpack.c.b16 %v716, %v712
    %v1189 = vpack.c.b16 %v717, %v713
    %v1190 = vpack.c.b16 %v718, %v714
    %v1191 = vpack.c.b16 %v719, %v715
    %v1192 = vpack.c.b16 %v724, %v720
    %v1193 = vpack.c.b16 %v725, %v721
    %v1194 = vpack.c.b16 %v726, %v722
    %v1195 = vpack.c.b16 %v727, %v723
    %v1196 = vpack.c.b16 %v732, %v728
    %v1197 = vpack.c.b16 %v733, %v729
    %v1198 = vpack.c.b16 %v734, %v730
    %v1199 = vpack.c.b16 %v735, %v731
    %v1200 = vpack.c.b16 %v740, %v736
    %v1201 = vpack.c.b16 %v741, %v737
    %v1202 = vpack.c.b16 %v742, %v738
    %v1203 = vpack.c.b16 %v743, %v739
    %v1204 = vpack.c.b16 %v748, %v744
    %v1205 = vpack.c.b16 %v749, %v745
    %v1206 = vpack.c.b16 %v750, %v746
    %v1207 = vpack.c.b16 %v751, %v747
    %v1208 = vpack.c.b16 %v756, %v752
    %v1209 = vpack.c.b16 %v757, %v753
    %v1210 = vpack.c.b16 %v758, %v754
    %v1211 = vpack.c.b16 %v759, %v755
    %v1212 = vpack.c.b16 %v764, %v760
    %v1213 = vpack.c.b16 %v765, %v761
    %v1214 = vpack.c.b16 %v766, %v762
    %v1215 = vpack.c.b16 %v767, %v763
    %v1216 = vpack.c.b16 %v772, %v768
    %v1217 = vpack.c.b16 %v773, %v769
    %v1218 = vpack.c.b16 %v774, %v770
    %v1219 = vpack.c.b16 %v775, %v771
    %v1220 = vpack.c.b16 %v780, %v776
    %v1221 = vpack.c.b16 %v781, %v777
    %v1222 = vpack.c.b16 %v782, %v778
    %v1223 = vpack.c.b16 %v783, %v779
    %v1224 = vpack.c.b16 %v788, %v784
    %v1225 = vpack.c.b16 %v789, %v785
    %v1226 = vpack.c.b16 %v790, %v786
    %v1227 = vpack.c.b16 %v791, %v787
    %v1228 = vpack.c.b16 %v796, %v792
    %v1229 = vpack.c.b16 %v797, %v793
    %v1230 = vpack.c.b16 %v798, %v794
    %v1231 = vpack.c.b16 %v799, %v795
    %v1232 = vpack.c.b16 %v804, %v800
    %v1233 = vpack.c.b16 %v805, %v801
    %v1234 = vpack.c.b16 %v806, %v802
    %v1235 = vpack.c.b16 %v807, %v803
    %v1236 = vpack.c.b16 %v812, %v808
    %v1237 = vpack.c.b16 %v813, %v809
    %v1238 = vpack.c.b16 %v814, %v810
    %v1239 = vpack.c.b16 %v815, %v811
    %v1240 = vpack.c.b16 %v820, %v816
    %v1241 = vpack.c.b16 %v821, %v817
    %v1242 = vpack.c.b16 %v822, %v818
    %v1243 = vpack.c.b16 %v823, %v819
    %v1244 = vpack.c.b16 %v828, %v824
    %v1245 = vpack.c.b16 %v829, %v825
    %v1246 = vpack.c.b16 %v830, %v826
    %v1247 = vpack.c.b16 %v831, %v827
    %v1248 = vpack.c.b16 %v836, %v832
    %v1249 = vpack.c.b16 %v837, %v833
    %v1250 = vpack.c.b16 %v838, %v834
    %v1251 = vpack.c.b16 %v839, %v835
    %v1252 = vpack.c.b16 %v844, %v840
    %v1253 = vpack.c.b16 %v845, %v841
    %v1254 = vpack.c.b16 %v846, %v842
    %v1255 = vpack.c.b16 %v847, %v843
    %v1256 = vpack.c.b16 %v852, %v848
    %v1257 = vpack.c.b16 %v853, %v849
    %v1258 = vpack.c.b16 %v854, %v850
    %v1259 = vpack.c.b16 %v855, %v851
    %v1260 = vpack.c.b16 %v860, %v856
    %v1261 = vpack.c.b16 %v861, %v857
    %v1262 = vpack.c.b16 %v862, %v858
    %v1263 = vpack.c.b16 %v863, %v859
    %v1264 = vpack.c.b16 %v868, %v864
    %v1265 = vpack.c.b16 %v869, %v865
    %v1266 = vpack.c.b16 %v870, %v866
    %v1267 = vpack.c.b16 %v871, %v867
    %v1268 = vpack.c.b16 %v876, %v872
    %v1269 = vpack.c.b16 %v877, %v873
    %v1270 = vpack.c.b16 %v878, %v874
    %v1271 = vpack.c.b16 %v879, %v875
    %v1272 = vpack.c.b16 %v884, %v880
    %v1273 = vpack.c.b16 %v885, %v881
    %v1274 = vpack.c.b16 %v886, %v882
    %v1275 = vpack.c.b16 %v887, %v883
    %v1276 = vpack.c.b16 %v892, %v888
    %v1277 = vpack.c.b16 %v893, %v889
    %v1278 = vpack.c.b16 %v894, %v890
    %v1279 = vpack.c.b16 %v895, %v891
    %v1280 = vpack.c.b16 %v900, %v896
    %v1281 = vpack.c.b16 %v901, %v897
    %v1282 = vpack.c.b16 %v902, %v898
    %v1283 = vpack.c.b16 %v903, %v899
    %v1284 = vpack.c.b16 %v908, %v904
    %v1285 = vpack.c.b16 %v909, %v905
    %v1286 = vpack.c.b16 %v910, %v906
    %v1287 = vpack.c.b16 %v911, %v907
    %v1288 = vpack.c.b16 %v916, %v912
    %v1289 = vpack.c.b16 %v917, %v913
    %v1290 = vpack.c.b16 %v918, %v914
    %v1291 = vpack.c.b16 %v919, %v915
    %v1292 = vpack.c.b16 %v924, %v920
    %v1293 = vpack.c.b16 %v925, %v921
    %v1294 = vpack.c.b16 %v926, %v922
    %v1295 = vpack.c.b16 %v927, %v923
    %v1296 = vpack.c.b16 %v932, %v928
    %v1297 = vpack.c.b16 %v933, %v929
    %v1298 = vpack.c.b16 %v934, %v930
    %v1299 = vpack.c.b16 %v935, %v931
    %v1300 = vpack.c.b16 %v940, %v936
    %v1301 = vpack.c.b16 %v941, %v937
    %v1302 = vpack.c.b16 %v942, %v938
    %v1303 = vpack.c.b16 %v943, %v939
    %v1304 = vpack.c.b16 %v948, %v944
    %v1305 = vpack.c.b16 %v949, %v945
    %v1306 = vpack.c.b16 %v950, %v946
    %v1307 = vpack.c.b16 %v951, %v947
    %v1308 = vpack.c.b16 %v956, %v952
    %v1309 = vpack.c.b16 %v957, %v953
    %v1310 = vpack.c.b16 %v958, %v954
    %v1311 = vpack.c.b16 %v959, %v955
    %v1312 = vpack.c.b16 %v964, %v960
    %v1313 = vpack.c.b16 %v965, %v961
    %v1314 = vpack.c.b16 %v966, %v962
    %v1315 = vpack.c.b16 %v967, %v963
    %v1316 = vpack.c.b16 %v972, %v968
    %v1317 = vpack.c.b16 %v973, %v969
    %v1318 = vpack.c.b16 %v974, %v970
    %v1319 = vpack.c.b16 %v975, %v971
    %v1320 = vpack.c.b16 %v980, %v976
    %v1321 = vpack.c.b16 %v981, %v977
    %v1322 = vpack.c.b16 %v982, %v978
    %v1323 = vpack.c.b16 %v983, %v979
    %v1324 = vpack.c.b16 %v988, %v984
    %v1325 = vpack.c.b16 %v989, %v985
    %v1326 = vpack.c.b16 %v990, %v986
    %v1327 = vpack.c.b16 %v991, %v987
    %v1328 = vpack.c.b16 %v996, %v992
    %v1329 = vpack.c.b16 %v997, %v993
    %v1330 = vpack.c.b16 %v998, %v994
    %v1331 = vpack.c.b16 %v999, %v995
    %v1332 = vpack.c.b16 %v1004, %v1000
    %v1333 = vpack.c.b16 %v1005, %v1001
    %v1334 = vpack.c.b16 %v1006, %v1002
    %v1335 = vpack.c.b16 %v1007, %v1003
    %v1336 = vpack.c.b16 %v1012, %v1008
    %v1337 = vpack.c.b16 %v1013, %v1009
    %v1338 = vpack.c.b16 %v1014, %v1010
    %v1339 = vpack.c.b16 %v1015, %v1011
    %v1340 = vpack.c.b16 %v1020, %v1016
    %v1341 = vpack.c.b16 %v1021, %v1017
    %v1342 = vpack.c.b16 %v1022, %v1018
    %v1343 = vpack.c.b16 %v1023, %v1019
    %v1344 = vpack.c.b16 %v1028, %v1024
    %v1345 = vpack.c.b16 %v1029, %v1025
    %v1346 = vpack.c.b16 %v1030, %v1026
    %v1347 = vpack.c.b16 %v1031, %v1027
    %v1348 = vpack.c.b16 %v1036, %v1032
    %v1349 = vpack.c.b16 %v1037, %v1033
    %v1350 = vpack.c.b16 %v1038, %v1034
    %v1351 = vpack.c.b16 %v1039, %v1035
    %v1352 = vpack.c.b16 %v1044, %v1040
    %v1353 = vpack.c.b16 %v1045, %v1041
    %v1354 = vpack.c.b16 %v1046, %v1042
    %v1355 = vpack.c.b16 %v1047, %v1043
    %v1356 = vpack.c.b16 %v1052, %v1048
    %v1357 = vpack.c.b16 %v1053, %v1049
    %v1358 = vpack.c.b16 %v1054, %v1050
    %v1359 = vpack.c.b16 %v1055, %v1051
    %v1360 = vpack.c.b16 %v1060, %v1056
    %v1361 = vpack.c.b16 %v1061, %v1057
    %v1362 = vpack.c.b16 %v1062, %v1058
    %v1363 = vpack.c.b16 %v1063, %v1059
    %v1364 = vpack.c.b16 %v1068, %v1064
    %v1365 = vpack.c.b16 %v1069, %v1065
    %v1366 = vpack.c.b16 %v1070, %v1066
    %v1367 = vpack.c.b16 %v1071, %v1067
    %v1368 = vpack.c.b16 %v1076, %v1072
    %v1369 = vpack.c.b16 %v1077, %v1073
    %v1370 = vpack.c.b16 %v1078, %v1074
    %v1371 = vpack.c.b16 %v1079, %v1075
    %v1372 = vpack.c.b16 %v1084, %v1080
    %v1373 = vpack.c.b16 %v1085, %v1081
    %v1374 = vpack.c.b16 %v1086, %v1082
    %v1375 = vpack.c.b16 %v1087, %v1083
    %v1376 = vpack.c.b16 %v1092, %v1088
    %v1377 = vpack.c.b16 %v1093, %v1089
    %v1378 = vpack.c.b16 %v1094, %v1090
    %v1379 = vpack.c.b16 %v1095, %v1091
    %v1380 = vpack.c.b16 %v1100, %v1096
    %v1381 = vpack.c.b16 %v1101, %v1097
    %v1382 = vpack.c.b16 %v1102, %v1098
    %v1383 = vpack.c.b16 %v1103, %v1099
    %v1384 = vpack.c.b16 %v1108, %v1104
    %v1385 = vpack.c.b16 %v1109, %v1105
    %v1386 = vpack.c.b16 %v1110, %v1106
    %v1387 = vpack.c.b16 %v1111, %v1107
    %v1388 = vpack.c.b16 %v1116, %v1112
    %v1389 = vpack.c.b16 %v1117, %v1113
    %v1390 = vpack.c.b16 %v1118, %v1114
    %v1391 = vpack.c.b16 %v1119, %v1115
    %v1392 = vpack.c.b16 %v1124, %v1120
    %v1393 = vpack.c.b16 %v1125, %v1121
    %v1394 = vpack.c.b16 %v1126, %v1122
    %v1395 = vpack.c.b16 %v1127, %v1123
    %v1396 = vpack.c.b16 %v1132, %v1128
    %v1397 = vpack.c.b16 %v1133, %v1129
    %v1398 = vpack.c.b16 %v1134, %v1130
    %v1399 = vpack.c.b16 %v1135, %v1131
    %v1400 = vpack.c.b16 %v1140, %v1136
    %v1401 = vpack.c.b16 %v1141, %v1137
    %v1402 = vpack.c.b16 %v1142, %v1138
    %v1403 = vpack.c.b16 %v1143, %v1139
    %v1404 = vpack.c.b16 %v1148, %v1144
    %v1405 = vpack.c.b16 %v1149, %v1145
    %v1406 = vpack.c.b16 %v1150, %v1146
    %v1407 = vpack.c.b16 %v1151, %v1147
    %1664 = vmatprep.subr.bf16.mxu0 %v1153
    %1665 = vmatpush1.bf16.msra.mxu0 %v1152
    %1666 = vmatprep.subr.bf16.mxu0 %v1157
    %1667 = vmatpush1.bf16.msra.mxu0 %v1156
    %1668 = vmatprep.subr.bf16.mxu0 %v1161
    %1669 = vmatpush1.bf16.msra.mxu0 %v1160
    %1670 = vmatprep.subr.bf16.mxu0 %v1165
    %1671 = vmatpush1.bf16.msra.mxu0 %v1164
    %1672 = vmatprep.subr.bf16.mxu0 %v1169
    %1673 = vmatpush1.bf16.msra.mxu0 %v1168
    %1674 = vmatprep.subr.bf16.mxu0 %v1173
    %1675 = vmatpush1.bf16.msra.mxu0 %v1172
    %1676 = vmatprep.subr.bf16.mxu0 %v1177
    %1677 = vmatpush1.bf16.msra.mxu0 %v1176
    %1678 = vmatprep.subr.bf16.mxu0 %v1181
    %1679 = vmatpush1.bf16.msra.mxu0 %v1180
    %1680 = vmatprep.subr.bf16.mxu0 %v1185
    %1681 = vmatpush1.bf16.msra.mxu0 %v1184
    %1682 = vmatprep.subr.bf16.mxu0 %v1189
    %1683 = vmatpush1.bf16.msra.mxu0 %v1188
    %1684 = vmatprep.subr.bf16.mxu0 %v1193
    %1685 = vmatpush1.bf16.msra.mxu0 %v1192
    %1686 = vmatprep.subr.bf16.mxu0 %v1197
    %1687 = vmatpush1.bf16.msra.mxu0 %v1196
    %1688 = vmatprep.subr.bf16.mxu0 %v1201
    %1689 = vmatpush1.bf16.msra.mxu0 %v1200
    %1690 = vmatprep.subr.bf16.mxu0 %v1205
    %1691 = vmatpush1.bf16.msra.mxu0 %v1204
    %1692 = vmatprep.subr.bf16.mxu0 %v1209
    %1693 = vmatpush1.bf16.msra.mxu0 %v1208
    %1694 = vmatprep.subr.bf16.mxu0 %v1213
    %1695 = vmatpush1.bf16.msra.mxu0 %v1212
    %1696 = vmatprep.mubr.bf16.mxu0 %v99
    %1697 = vmatmul.mubr.bf16.gmra.mrb[0].mxu0 %v98
    %v1698 = vpop.f32.mrb[0].mxu0
    %v1699 = vadd.f32 %v367, %v1698
    %v1700 = vpop.f32.mrb[0].mxu0
    %v1701 = vadd.f32 %v371, %v1700
    %v1702 = vpop.f32.mrb[0].mxu0
    %v1703 = vpop.f32.mrb[0].mxu0
    %1704 = vdwg.mxu0
    %1705 = vmatprep.subr.bf16.mxu0 %v1217
    %1706 = vmatpush1.bf16.msra.mxu0 %v1216
    %1707 = vmatprep.subr.bf16.mxu0 %v1221
    %1708 = vmatpush1.bf16.msra.mxu0 %v1220
    %1709 = vmatprep.subr.bf16.mxu0 %v1225
    %1710 = vmatpush1.bf16.msra.mxu0 %v1224
    %1711 = vmatprep.subr.bf16.mxu0 %v1229
    %1712 = vmatpush1.bf16.msra.mxu0 %v1228
    %1713 = vmatprep.subr.bf16.mxu0 %v1233
    %1714 = vmatpush1.bf16.msra.mxu0 %v1232
    %1715 = vmatprep.subr.bf16.mxu0 %v1237
    %1716 = vmatpush1.bf16.msra.mxu0 %v1236
    %1717 = vmatprep.subr.bf16.mxu0 %v1241
    %1718 = vmatpush1.bf16.msra.mxu0 %v1240
    %1719 = vmatprep.subr.bf16.mxu0 %v1245
    %1720 = vmatpush1.bf16.msra.mxu0 %v1244
    %1721 = vmatprep.subr.bf16.mxu0 %v1249
    %1722 = vmatpush1.bf16.msra.mxu0 %v1248
    %1723 = vmatprep.subr.bf16.mxu0 %v1253
    %1724 = vmatpush1.bf16.msra.mxu0 %v1252
    %1725 = vmatprep.subr.bf16.mxu0 %v1257
    %1726 = vmatpush1.bf16.msra.mxu0 %v1256
    %1727 = vmatprep.subr.bf16.mxu0 %v1261
    %1728 = vmatpush1.bf16.msra.mxu0 %v1260
    %1729 = vmatprep.subr.bf16.mxu0 %v1265
    %1730 = vmatpush1.bf16.msra.mxu0 %v1264
    %1731 = vmatprep.subr.bf16.mxu0 %v1269
    %1732 = vmatpush1.bf16.msra.mxu0 %v1268
    %1733 = vmatprep.subr.bf16.mxu0 %v1273
    %1734 = vmatpush1.bf16.msra.mxu0 %v1272
    %1735 = vmatprep.subr.bf16.mxu0 %v1277
    %1736 = vmatpush1.bf16.msra.mxu0 %v1276
    %1737 = vmatprep.mubr.bf16.mxu0 %v101
    %1738 = vmatmul.mubr.bf16.gmra.mrb[0].mxu0 %v100
    %v1739 = vpop.f32.mrb[0].mxu0
    %v1740 = vadd.f32 %v1699, %v1739
    %v1741 = vpop.f32.mrb[0].mxu0
    %v1742 = vadd.f32 %v1701, %v1741
    %v1743 = vpop.f32.mrb[0].mxu0
    %v1744 = vpop.f32.mrb[0].mxu0
    %1745 = vdwg.mxu0
    %1746 = vmatprep.subr.bf16.mxu0 %v1281
    %1747 = vmatpush1.bf16.msra.mxu0 %v1280
    %1748 = vmatprep.subr.bf16.mxu0 %v1285
    %1749 = vmatpush1.bf16.msra.mxu0 %v1284
    %1750 = vmatprep.subr.bf16.mxu0 %v1289
    %1751 = vmatpush1.bf16.msra.mxu0 %v1288
    %1752 = vmatprep.subr.bf16.mxu0 %v1293
    %1753 = vmatpush1.bf16.msra.mxu0 %v1292
    %1754 = vmatprep.subr.bf16.mxu0 %v1297
    %1755 = vmatpush1.bf16.msra.mxu0 %v1296
    %1756 = vmatprep.subr.bf16.mxu0 %v1301
    %1757 = vmatpush1.bf16.msra.mxu0 %v1300
    %1758 = vmatprep.subr.bf16.mxu0 %v1305
    %1759 = vmatpush1.bf16.msra.mxu0 %v1304
    %1760 = vmatprep.subr.bf16.mxu0 %v1309
    %1761 = vmatpush1.bf16.msra.mxu0 %v1308
    %1762 = vmatprep.subr.bf16.mxu0 %v1313
    %1763 = vmatpush1.bf16.msra.mxu0 %v1312
    %1764 = vmatprep.subr.bf16.mxu0 %v1317
    %1765 = vmatpush1.bf16.msra.mxu0 %v1316
    %1766 = vmatprep.subr.bf16.mxu0 %v1321
    %1767 = vmatpush1.bf16.msra.mxu0 %v1320
    %1768 = vmatprep.subr.bf16.mxu0 %v1325
    %1769 = vmatpush1.bf16.msra.mxu0 %v1324
    %1770 = vmatprep.subr.bf16.mxu0 %v1329
    %1771 = vmatpush1.bf16.msra.mxu0 %v1328
    %1772 = vmatprep.subr.bf16.mxu0 %v1333
    %1773 = vmatpush1.bf16.msra.mxu0 %v1332
    %1774 = vmatprep.subr.bf16.mxu0 %v1337
    %1775 = vmatpush1.bf16.msra.mxu0 %v1336
    %1776 = vmatprep.subr.bf16.mxu0 %v1341
    %1777 = vmatpush1.bf16.msra.mxu0 %v1340
    %1778 = vmatprep.mubr.bf16.mxu0 %v103
    %1779 = vmatmul.mubr.bf16.gmra.mrb[0].mxu0 %v102
    %v1780 = vpop.f32.mrb[0].mxu0
    %v1781 = vadd.f32 %v1740, %v1780
    %v1782 = vpop.f32.mrb[0].mxu0
    %v1783 = vadd.f32 %v1742, %v1782
    %v1784 = vpop.f32.mrb[0].mxu0
    %v1785 = vpop.f32.mrb[0].mxu0
    %1786 = vdwg.mxu0
    %1787 = vmatprep.subr.bf16.mxu0 %v1345
    %1788 = vmatpush1.bf16.msra.mxu0 %v1344
    %1789 = vmatprep.subr.bf16.mxu0 %v1349
    %1790 = vmatpush1.bf16.msra.mxu0 %v1348
    %1791 = vmatprep.subr.bf16.mxu0 %v1353
    %1792 = vmatpush1.bf16.msra.mxu0 %v1352
    %1793 = vmatprep.subr.bf16.mxu0 %v1357
    %1794 = vmatpush1.bf16.msra.mxu0 %v1356
    %1795 = vmatprep.subr.bf16.mxu0 %v1361
    %1796 = vmatpush1.bf16.msra.mxu0 %v1360
    %1797 = vmatprep.subr.bf16.mxu0 %v1365
    %1798 = vmatpush1.bf16.msra.mxu0 %v1364
    %1799 = vmatprep.subr.bf16.mxu0 %v1369
    %1800 = vmatpush1.bf16.msra.mxu0 %v1368
    %1801 = vmatprep.subr.bf16.mxu0 %v1373
    %1802 = vmatpush1.bf16.msra.mxu0 %v1372
    %1803 = vmatprep.subr.bf16.mxu0 %v1377
    %1804 = vmatpush1.bf16.msra.mxu0 %v1376
    %1805 = vmatprep.subr.bf16.mxu0 %v1381
    %1806 = vmatpush1.bf16.msra.mxu0 %v1380
    %1807 = vmatprep.subr.bf16.mxu0 %v1385
    %1808 = vmatpush1.bf16.msra.mxu0 %v1384
    %1809 = vmatprep.subr.bf16.mxu0 %v1389
    %1810 = vmatpush1.bf16.msra.mxu0 %v1388
    %1811 = vmatprep.subr.bf16.mxu0 %v1393
    %1812 = vmatpush1.bf16.msra.mxu0 %v1392
    %1813 = vmatprep.subr.bf16.mxu0 %v1397
    %1814 = vmatpush1.bf16.msra.mxu0 %v1396
    %1815 = vmatprep.subr.bf16.mxu0 %v1401
    %1816 = vmatpush1.bf16.msra.mxu0 %v1400
    %1817 = vmatprep.subr.bf16.mxu0 %v1405
    %1818 = vmatpush1.bf16.msra.mxu0 %v1404
    %1819 = vmatprep.mubr.bf16.mxu0 %v105
    %1820 = vmatmul.mubr.bf16.gmra.mrb[0].mxu0 %v104
    %v1821 = vpop.f32.mrb[0].mxu0
    %v1822 = vadd.f32 %v1781, %v1821
    %v1823 = vpop.f32.mrb[0].mxu0
    %v1824 = vadd.f32 %v1783, %v1823
    %v1825 = vpop.f32.mrb[0].mxu0
    %v1826 = vpop.f32.mrb[0].mxu0
    %1827 = vdwg.mxu0
    %1828 = vmatprep.subr.bf16.mxu0 %v1155
    %1829 = vmatpush1.bf16.msra.mxu0 %v1154
    %1830 = vmatprep.subr.bf16.mxu0 %v1159
    %1831 = vmatpush1.bf16.msra.mxu0 %v1158
    %1832 = vmatprep.subr.bf16.mxu0 %v1163
    %1833 = vmatpush1.bf16.msra.mxu0 %v1162
    %1834 = vmatprep.subr.bf16.mxu0 %v1167
    %1835 = vmatpush1.bf16.msra.mxu0 %v1166
    %1836 = vmatprep.subr.bf16.mxu0 %v1171
    %1837 = vmatpush1.bf16.msra.mxu0 %v1170
    %1838 = vmatprep.subr.bf16.mxu0 %v1175
    %1839 = vmatpush1.bf16.msra.mxu0 %v1174
    %1840 = vmatprep.subr.bf16.mxu0 %v1179
    %1841 = vmatpush1.bf16.msra.mxu0 %v1178
    %1842 = vmatprep.subr.bf16.mxu0 %v1183
    %1843 = vmatpush1.bf16.msra.mxu0 %v1182
    %1844 = vmatprep.subr.bf16.mxu0 %v1187
    %1845 = vmatpush1.bf16.msra.mxu0 %v1186
    %1846 = vmatprep.subr.bf16.mxu0 %v1191
    %1847 = vmatpush1.bf16.msra.mxu0 %v1190
    %1848 = vmatprep.subr.bf16.mxu0 %v1195
    %1849 = vmatpush1.bf16.msra.mxu0 %v1194
    %1850 = vmatprep.subr.bf16.mxu0 %v1199
    %1851 = vmatpush1.bf16.msra.mxu0 %v1198
    %1852 = vmatprep.subr.bf16.mxu0 %v1203
    %1853 = vmatpush1.bf16.msra.mxu0 %v1202
    %1854 = vmatprep.subr.bf16.mxu0 %v1207
    %1855 = vmatpush1.bf16.msra.mxu0 %v1206
    %1856 = vmatprep.subr.bf16.mxu0 %v1211
    %1857 = vmatpush1.bf16.msra.mxu0 %v1210
    %1858 = vmatprep.subr.bf16.mxu0 %v1215
    %1859 = vmatpush1.bf16.msra.mxu0 %v1214
    %1860 = vmatprep.mubr.bf16.mxu0 %v99
    %1861 = vmatmul.mubr.bf16.gmra.mrb[0].mxu0 %v98
    %v1862 = vpop.f32.mrb[0].mxu0
    %v1863 = vadd.f32 %v375, %v1862
    %v1864 = vpop.f32.mrb[0].mxu0
    %v1865 = vadd.f32 %v379, %v1864
    %v1866 = vpop.f32.mrb[0].mxu0
    %v1867 = vpop.f32.mrb[0].mxu0
    %1868 = vdwg.mxu0
    %1869 = vmatprep.subr.bf16.mxu0 %v1219
    %1870 = vmatpush1.bf16.msra.mxu0 %v1218
    %1871 = vmatprep.subr.bf16.mxu0 %v1223
    %1872 = vmatpush1.bf16.msra.mxu0 %v1222
    %1873 = vmatprep.subr.bf16.mxu0 %v1227
    %1874 = vmatpush1.bf16.msra.mxu0 %v1226
    %1875 = vmatprep.subr.bf16.mxu0 %v1231
    %1876 = vmatpush1.bf16.msra.mxu0 %v1230
    %1877 = vmatprep.subr.bf16.mxu0 %v1235
    %1878 = vmatpush1.bf16.msra.mxu0 %v1234
    %1879 = vmatprep.subr.bf16.mxu0 %v1239
    %1880 = vmatpush1.bf16.msra.mxu0 %v1238
    %1881 = vmatprep.subr.bf16.mxu0 %v1243
    %1882 = vmatpush1.bf16.msra.mxu0 %v1242
    %1883 = vmatprep.subr.bf16.mxu0 %v1247
    %1884 = vmatpush1.bf16.msra.mxu0 %v1246
    %1885 = vmatprep.subr.bf16.mxu0 %v1251
    %1886 = vmatpush1.bf16.msra.mxu0 %v1250
    %1887 = vmatprep.subr.bf16.mxu0 %v1255
    %1888 = vmatpush1.bf16.msra.mxu0 %v1254
    %1889 = vmatprep.subr.bf16.mxu0 %v1259
    %1890 = vmatpush1.bf16.msra.mxu0 %v1258
    %1891 = vmatprep.subr.bf16.mxu0 %v1263
    %1892 = vmatpush1.bf16.msra.mxu0 %v1262
    %1893 = vmatprep.subr.bf16.mxu0 %v1267
    %1894 = vmatpush1.bf16.msra.mxu0 %v1266
    %1895 = vmatprep.subr.bf16.mxu0 %v1271
    %1896 = vmatpush1.bf16.msra.mxu0 %v1270
    %1897 = vmatprep.subr.bf16.mxu0 %v1275
    %1898 = vmatpush1.bf16.msra.mxu0 %v1274
    %1899 = vmatprep.subr.bf16.mxu0 %v1279
    %1900 = vmatpush1.bf16.msra.mxu0 %v1278
    %1901 = vmatprep.mubr.bf16.mxu0 %v101
    %1902 = vmatmul.mubr.bf16.gmra.mrb[0].mxu0 %v100
    %v1903 = vpop.f32.mrb[0].mxu0
    %v1904 = vadd.f32 %v1863, %v1903
    %v1905 = vpop.f32.mrb[0].mxu0
    %v1906 = vadd.f32 %v1865, %v1905
    %v1907 = vpop.f32.mrb[0].mxu0
    %v1908 = vpop.f32.mrb[0].mxu0
    %1909 = vdwg.mxu0
    %1910 = vmatprep.subr.bf16.mxu0 %v1283
    %1911 = vmatpush1.bf16.msra.mxu0 %v1282
    %1912 = vmatprep.subr.bf16.mxu0 %v1287
    %1913 = vmatpush1.bf16.msra.mxu0 %v1286
    %1914 = vmatprep.subr.bf16.mxu0 %v1291
    %1915 = vmatpush1.bf16.msra.mxu0 %v1290
    %1916 = vmatprep.subr.bf16.mxu0 %v1295
    %1917 = vmatpush1.bf16.msra.mxu0 %v1294
    %1918 = vmatprep.subr.bf16.mxu0 %v1299
    %1919 = vmatpush1.bf16.msra.mxu0 %v1298
    %1920 = vmatprep.subr.bf16.mxu0 %v1303
    %1921 = vmatpush1.bf16.msra.mxu0 %v1302
    %1922 = vmatprep.subr.bf16.mxu0 %v1307
    %1923 = vmatpush1.bf16.msra.mxu0 %v1306
    %1924 = vmatprep.subr.bf16.mxu0 %v1311
    %1925 = vmatpush1.bf16.msra.mxu0 %v1310
    %1926 = vmatprep.subr.bf16.mxu0 %v1315
    %1927 = vmatpush1.bf16.msra.mxu0 %v1314
    %1928 = vmatprep.subr.bf16.mxu0 %v1319
    %1929 = vmatpush1.bf16.msra.mxu0 %v1318
    %1930 = vmatprep.subr.bf16.mxu0 %v1323
    %1931 = vmatpush1.bf16.msra.mxu0 %v1322
    %1932 = vmatprep.subr.bf16.mxu0 %v1327
    %1933 = vmatpush1.bf16.msra.mxu0 %v1326
    %1934 = vmatprep.subr.bf16.mxu0 %v1331
    %1935 = vmatpush1.bf16.msra.mxu0 %v1330
    %1936 = vmatprep.subr.bf16.mxu0 %v1335
    %1937 = vmatpush1.bf16.msra.mxu0 %v1334
    %1938 = vmatprep.subr.bf16.mxu0 %v1339
    %1939 = vmatpush1.bf16.msra.mxu0 %v1338
    %1940 = vmatprep.subr.bf16.mxu0 %v1343
    %1941 = vmatpush1.bf16.msra.mxu0 %v1342
    %1942 = vmatprep.mubr.bf16.mxu0 %v103
    %1943 = vmatmul.mubr.bf16.gmra.mrb[0].mxu0 %v102
    %v1944 = vpop.f32.mrb[0].mxu0
    %v1945 = vadd.f32 %v1904, %v1944
    %v1946 = vpop.f32.mrb[0].mxu0
    %v1947 = vadd.f32 %v1906, %v1946
    %v1948 = vpop.f32.mrb[0].mxu0
    %v1949 = vpop.f32.mrb[0].mxu0
    %1950 = vdwg.mxu0
    %1951 = vmatprep.subr.bf16.mxu0 %v1347
    %1952 = vmatpush1.bf16.msra.mxu0 %v1346
    %1953 = vmatprep.subr.bf16.mxu0 %v1351
    %1954 = vmatpush1.bf16.msra.mxu0 %v1350
    %1955 = vmatprep.subr.bf16.mxu0 %v1355
    %1956 = vmatpush1.bf16.msra.mxu0 %v1354
    %1957 = vmatprep.subr.bf16.mxu0 %v1359
    %1958 = vmatpush1.bf16.msra.mxu0 %v1358
    %1959 = vmatprep.subr.bf16.mxu0 %v1363
    %1960 = vmatpush1.bf16.msra.mxu0 %v1362
    %1961 = vmatprep.subr.bf16.mxu0 %v1367
    %1962 = vmatpush1.bf16.msra.mxu0 %v1366
    %1963 = vmatprep.subr.bf16.mxu0 %v1371
    %1964 = vmatpush1.bf16.msra.mxu0 %v1370
    %1965 = vmatprep.subr.bf16.mxu0 %v1375
    %1966 = vmatpush1.bf16.msra.mxu0 %v1374
    %1967 = vmatprep.subr.bf16.mxu0 %v1379
    %1968 = vmatpush1.bf16.msra.mxu0 %v1378
    %1969 = vmatprep.subr.bf16.mxu0 %v1383
    %1970 = vmatpush1.bf16.msra.mxu0 %v1382
    %1971 = vmatprep.subr.bf16.mxu0 %v1387
    %1972 = vmatpush1.bf16.msra.mxu0 %v1386
    %1973 = vmatprep.subr.bf16.mxu0 %v1391
    %1974 = vmatpush1.bf16.msra.mxu0 %v1390
    %1975 = vmatprep.subr.bf16.mxu0 %v1395
    %1976 = vmatpush1.bf16.msra.mxu0 %v1394
    %1977 = vmatprep.subr.bf16.mxu0 %v1399
    %1978 = vmatpush1.bf16.msra.mxu0 %v1398
    %1979 = vmatprep.subr.bf16.mxu0 %v1403
    %1980 = vmatpush1.bf16.msra.mxu0 %v1402
    %1981 = vmatprep.subr.bf16.mxu0 %v1407
    %1982 = vmatpush1.bf16.msra.mxu0 %v1406
    %1983 = vmatprep.mubr.bf16.mxu0 %v105
    %1984 = vmatmul.mubr.bf16.gmra.mrb[0].mxu0 %v104
    %v1985 = vpop.f32.mrb[0].mxu0
    %v1986 = vadd.f32 %v1945, %v1985
    %v1987 = vpop.f32.mrb[0].mxu0
    %v1988 = vadd.f32 %v1947, %v1987
    %v1989 = vpop.f32.mrb[0].mxu0
    %v1990 = vpop.f32.mrb[0].mxu0
    %1991 = vdwg.mxu0
    %v1992 = vld [vmem:[%s3] sm:$0xf]
    %v1993 = vld [vmem:[%s4] sm:$0xf]
    %vm1994 = vcmask 1041408
    %v1995 = vsel %vm1994, %v1822, 0.0
    %v1996 = vrot.slane %v1995, 4
    %v1997 = vadd.f32 %v1995, %v1996
    %v1998 = vrot.slane %v1997, 2
    %v1999 = vadd.f32 %v1997, %v1998
    %v2000 = vrot.slane %v1999, 1
    %v2001 = vadd.f32 %v1999, %v2000
    %v2002 = vsel %vm1994, %v1824, 0.0
    %v2003 = vrot.slane %v2002, 4
    %v2004 = vadd.f32 %v2002, %v2003
    %v2005 = vrot.slane %v2004, 2
    %v2006 = vadd.f32 %v2004, %v2005
    %v2007 = vrot.slane %v2006, 1
    %v2008 = vadd.f32 %v2006, %v2007
    %v2009 = vsel %vm1994, %v1986, 0.0
    %v2010 = vrot.slane %v2009, 4
    %v2011 = vadd.f32 %v2009, %v2010
    %v2012 = vrot.slane %v2011, 2
    %v2013 = vadd.f32 %v2011, %v2012
    %v2014 = vrot.slane %v2013, 1
    %v2015 = vadd.f32 %v2013, %v2014
    %v2016 = vsel %vm1994, %v1988, 0.0
    %v2017 = vrot.slane %v2016, 4
    %v2018 = vadd.f32 %v2016, %v2017
    %v2019 = vrot.slane %v2018, 2
    %v2020 = vadd.f32 %v2018, %v2019
    %v2021 = vrot.slane %v2020, 1
    %v2022 = vadd.f32 %v2020, %v2021
    %v2023 = vrcp.pop 2.0
    %v2024 = vmul.f32 %v2001, %v2023
    %v2025 = vmul.f32 %v2008, %v2023
    %v2026 = vmul.f32 %v2015, %v2023
    %v2027 = vmul.f32 %v2022, %v2023
    %v2028 = vmul.f32 %v1822, %v1822
    %v2029 = vmul.f32 %v1824, %v1824
    %v2030 = vmul.f32 %v1986, %v1986
    %v2031 = vmul.f32 %v1988, %v1988
    %v2032 = vsel %vm1994, %v2028, 0.0
    %v2033 = vrot.slane %v2032, 4
    %v2034 = vadd.f32 %v2032, %v2033
    %v2035 = vrot.slane %v2034, 2
    %v2036 = vadd.f32 %v2034, %v2035
    %v2037 = vrot.slane %v2036, 1
    %v2038 = vadd.f32 %v2036, %v2037
    %v2039 = vsel %vm1994, %v2029, 0.0
    %v2040 = vrot.slane %v2039, 4
    %v2041 = vadd.f32 %v2039, %v2040
    %v2042 = vrot.slane %v2041, 2
    %v2043 = vadd.f32 %v2041, %v2042
    %v2044 = vrot.slane %v2043, 1
    %v2045 = vadd.f32 %v2043, %v2044
    %v2046 = vsel %vm1994, %v2030, 0.0
    %v2047 = vrot.slane %v2046, 4
    %v2048 = vadd.f32 %v2046, %v2047
    %v2049 = vrot.slane %v2048, 2
    %v2050 = vadd.f32 %v2048, %v2049
    %v2051 = vrot.slane %v2050, 1
    %v2052 = vadd.f32 %v2050, %v2051
    %v2053 = vsel %vm1994, %v2031, 0.0
    %v2054 = vrot.slane %v2053, 4
    %v2055 = vadd.f32 %v2053, %v2054
    %v2056 = vrot.slane %v2055, 2
    %v2057 = vadd.f32 %v2055, %v2056
    %v2058 = vrot.slane %v2057, 1
    %v2059 = vadd.f32 %v2057, %v2058
    %v2060 = vmul.f32 %v2038, %v2023
    %v2061 = vmul.f32 %v2045, %v2023
    %v2062 = vmul.f32 %v2052, %v2023
    %v2063 = vmul.f32 %v2059, %v2023
    %v2064 = vmul.f32 %v2024, %v2024
    %v2065 = vmul.f32 %v2025, %v2025
    %v2066 = vmul.f32 %v2026, %v2026
    %v2067 = vmul.f32 %v2027, %v2027
    %v2068 = vsub.f32 %v2060, %v2064
    %v2069 = vsub.f32 %v2061, %v2065
    %v2070 = vsub.f32 %v2062, %v2066
    %v2071 = vsub.f32 %v2063, %v2067
    %v2072 = vmax.f32 %v2068, 0.0
    %v2073 = vmax.f32 %v2069, 0.0
    %v2074 = vmax.f32 %v2070, 0.0
    %v2075 = vmax.f32 %v2071, 0.0
    %v2076 = vsub.f32 %v1822, %v2024
    %v2077 = vsub.f32 %v1824, %v2025
    %v2078 = vsub.f32 %v1986, %v2026
    %v2079 = vsub.f32 %v1988, %v2027
    %v2080 = vadd.f32 %v2072, 1e-05
    %v2081 = vadd.f32 %v2073, 1e-05
    %v2082 = vadd.f32 %v2074, 1e-05
    %v2083 = vadd.f32 %v2075, 1e-05
    %v2084 = vrsqrt.pop %v2080
    %v2085 = vrsqrt.pop %v2081
    %v2086 = vrsqrt.pop %v2082
    %v2087 = vrsqrt.pop %v2083
    %v2088 = vmul.f32 %v2076, %v2084
    %v2089 = vmul.f32 %v2077, %v2085
    %v2090 = vmul.f32 %v2078, %v2086
    %v2091 = vmul.f32 %v2079, %v2087
    %v2093 = vlaneseq
    %v2094 = vshrl.u32 %v2093, 7
    %v2095 = vsub.s32 0, %v2094
    %v2096 = vrot.slane %v1992, %v2095
    %v2097 = vlaneseq
    %v2098 = vshrl.u32 %v2097, 7
    %v2099 = vsub.s32 1, %v2098
    %v2100 = vrot.slane %v1992, %v2099
    %v2101 = vlaneseq
    %v2102 = vshrl.u32 %v2101, 7
    %v2103 = vsub.s32 2, %v2102
    %v2104 = vrot.slane %v1992, %v2103
    %v2105 = vlaneseq
    %v2106 = vshrl.u32 %v2105, 7
    %v2107 = vsub.s32 3, %v2106
    %v2108 = vrot.slane %v1992, %v2107
    %v2113 = vmul.f32 %v2088, %v2096
    %v2114 = vmul.f32 %v2089, %v2100
    %v2115 = vmul.f32 %v2090, %v2104
    %v2116 = vmul.f32 %v2091, %v2108
    %v2118 = vlaneseq
    %v2119 = vshrl.u32 %v2118, 7
    %v2120 = vsub.s32 0, %v2119
    %v2121 = vrot.slane %v1993, %v2120
    %v2122 = vlaneseq
    %v2123 = vshrl.u32 %v2122, 7
    %v2124 = vsub.s32 1, %v2123
    %v2125 = vrot.slane %v1993, %v2124
    %v2126 = vlaneseq
    %v2127 = vshrl.u32 %v2126, 7
    %v2128 = vsub.s32 2, %v2127
    %v2129 = vrot.slane %v1993, %v2128
    %v2130 = vlaneseq
    %v2131 = vshrl.u32 %v2130, 7
    %v2132 = vsub.s32 3, %v2131
    %v2133 = vrot.slane %v1993, %v2132
    %v2138 = vadd.f32 %v2113, %v2121
    %v2139 = vadd.f32 %v2114, %v2125
    %v2140 = vadd.f32 %v2115, %v2129
    %v2141 = vadd.f32 %v2116, %v2133
    %v2142 = vmax.f32 %v2138, 0.0
    %v2143 = vmax.f32 %v2139, 0.0
    %v2144 = vmax.f32 %v2140, 0.0
    %v2145 = vmax.f32 %v2141, 0.0
    %v2146 = vpack.c.bf16 %v2142, %v2142
    %v2147 = vpack.c.bf16 %v2143, %v2143
    %v2148 = vpack.c.bf16 %v2144, %v2144
    %v2149 = vpack.c.bf16 %v2145, %v2145
    %v2150 = vld [vmem:[%s5] sm:$0xff]
    %v2151 = vld [vmem:[%s5 + $0x8] sm:$0xff]
    %v2152 = vld [vmem:[%s5 + $0x10] sm:$0xff]
    %v2153 = vld [vmem:[%s5 + $0x18] sm:$0xff]
    %v2154 = vld [vmem:[%s5 + $0x20] sm:$0xff]
    %v2155 = vld [vmem:[%s5 + $0x28] sm:$0xff]
    %v2156 = vld [vmem:[%s5 + $0x30] sm:$0xff]
    %v2157 = vld [vmem:[%s5 + $0x38] sm:$0xff]
    %v2158 = vld [vmem:[%s5 + $0x40] sm:$0xff]
    %v2159 = vld [vmem:[%s5 + $0x48] sm:$0xff]
    %v2160 = vld [vmem:[%s5 + $0x50] sm:$0xff]
    %v2161 = vld [vmem:[%s5 + $0x58] sm:$0xff]
    %v2162 = vld [vmem:[%s5 + $0x60] sm:$0xff]
    %v2163 = vld [vmem:[%s5 + $0x68] sm:$0xff]
    %v2164 = vld [vmem:[%s5 + $0x70] sm:$0xff]
    %v2165 = vld [vmem:[%s5 + $0x78] sm:$0xff]
    %v2166 = vld [vmem:[%s5 + $0x80] sm:$0xff]
    %v2167 = vld [vmem:[%s5 + $0x88] sm:$0xff]
    %v2168 = vld [vmem:[%s5 + $0x90] sm:$0xff]
    %v2169 = vld [vmem:[%s5 + $0x98] sm:$0xff]
    %v2170 = vld [vmem:[%s5 + $0xa0] sm:$0xff]
    %v2171 = vld [vmem:[%s5 + $0xa8] sm:$0xff]
    %v2172 = vld [vmem:[%s5 + $0xb0] sm:$0xff]
    %v2173 = vld [vmem:[%s5 + $0xb8] sm:$0xff]
    %v2174 = vld [vmem:[%s5 + $0xc0] sm:$0xff]
    %v2175 = vld [vmem:[%s5 + $0xc8] sm:$0xff]
    %v2176 = vld [vmem:[%s5 + $0xd0] sm:$0xff]
    %v2177 = vld [vmem:[%s5 + $0xd8] sm:$0xff]
    %v2178 = vld [vmem:[%s5 + $0xe0] sm:$0xff]
    %v2179 = vld [vmem:[%s5 + $0xe8] sm:$0xff]
    %v2180 = vld [vmem:[%s5 + $0xf0] sm:$0xff]
    %v2181 = vld [vmem:[%s5 + $0xf8] sm:$0xff]
    %v2182 = vld [vmem:[%s5 + $0x100] sm:$0xff]
    %v2183 = vld [vmem:[%s5 + $0x108] sm:$0xff]
    %v2184 = vld [vmem:[%s5 + $0x110] sm:$0xff]
    %v2185 = vld [vmem:[%s5 + $0x118] sm:$0xff]
    %v2186 = vld [vmem:[%s5 + $0x120] sm:$0xff]
    %v2187 = vld [vmem:[%s5 + $0x128] sm:$0xff]
    %v2188 = vld [vmem:[%s5 + $0x130] sm:$0xff]
    %v2189 = vld [vmem:[%s5 + $0x138] sm:$0xff]
    %v2190 = vld [vmem:[%s5 + $0x140] sm:$0xff]
    %v2191 = vld [vmem:[%s5 + $0x148] sm:$0xff]
    %v2192 = vld [vmem:[%s5 + $0x150] sm:$0xff]
    %v2193 = vld [vmem:[%s5 + $0x158] sm:$0xff]
    %v2194 = vld [vmem:[%s5 + $0x160] sm:$0xff]
    %v2195 = vld [vmem:[%s5 + $0x168] sm:$0xff]
    %v2196 = vld [vmem:[%s5 + $0x170] sm:$0xff]
    %v2197 = vld [vmem:[%s5 + $0x178] sm:$0xff]
    %v2198 = vld [vmem:[%s5 + $0x180] sm:$0xff]
    %v2199 = vld [vmem:[%s5 + $0x188] sm:$0xff]
    %v2200 = vld [vmem:[%s5 + $0x190] sm:$0xff]
    %v2201 = vld [vmem:[%s5 + $0x198] sm:$0xff]
    %v2202 = vld [vmem:[%s5 + $0x1a0] sm:$0xff]
    %v2203 = vld [vmem:[%s5 + $0x1a8] sm:$0xff]
    %v2204 = vld [vmem:[%s5 + $0x1b0] sm:$0xff]
    %v2205 = vld [vmem:[%s5 + $0x1b8] sm:$0xff]
    %v2206 = vld [vmem:[%s5 + $0x1c0] sm:$0xff]
    %v2207 = vld [vmem:[%s5 + $0x1c8] sm:$0xff]
    %v2208 = vld [vmem:[%s5 + $0x1d0] sm:$0xff]
    %v2209 = vld [vmem:[%s5 + $0x1d8] sm:$0xff]
    %v2210 = vld [vmem:[%s5 + $0x1e0] sm:$0xff]
    %v2211 = vld [vmem:[%s5 + $0x1e8] sm:$0xff]
    %v2212 = vld [vmem:[%s5 + $0x1f0] sm:$0xff]
    %v2213 = vld [vmem:[%s5 + $0x1f8] sm:$0xff]
    %v2214 = vld [vmem:[%s6] sm:$0x3]
    %v2216 = vlaneseq
    %v2217 = vshrl.u32 %v2216, 7
    %v2218 = vsub.s32 0, %v2217
    %v2219 = vrot.slane %v2214, %v2218
    %v2220 = vlaneseq
    %v2221 = vshrl.u32 %v2220, 7
    %v2222 = vsub.s32 1, %v2221
    %v2223 = vrot.slane %v2214, %v2222
    %v2290 = vunpack.c.l.b16 %v2150
    %v2291 = vunpack.c.h.b16 %v2150
    %v2292 = vunpack.c.l.b16 %v2151
    %v2293 = vunpack.c.h.b16 %v2151
    %v2294 = vunpack.c.l.b16 %v2152
    %v2295 = vunpack.c.h.b16 %v2152
    %v2296 = vunpack.c.l.b16 %v2153
    %v2297 = vunpack.c.h.b16 %v2153
    %v2298 = vunpack.c.l.b16 %v2154
    %v2299 = vunpack.c.h.b16 %v2154
    %v2300 = vunpack.c.l.b16 %v2155
    %v2301 = vunpack.c.h.b16 %v2155
    %v2302 = vunpack.c.l.b16 %v2156
    %v2303 = vunpack.c.h.b16 %v2156
    %v2304 = vunpack.c.l.b16 %v2157
    %v2305 = vunpack.c.h.b16 %v2157
    %v2306 = vunpack.c.l.b16 %v2158
    %v2307 = vunpack.c.h.b16 %v2158
    %v2308 = vunpack.c.l.b16 %v2159
    %v2309 = vunpack.c.h.b16 %v2159
    %v2310 = vunpack.c.l.b16 %v2160
    %v2311 = vunpack.c.h.b16 %v2160
    %v2312 = vunpack.c.l.b16 %v2161
    %v2313 = vunpack.c.h.b16 %v2161
    %v2314 = vunpack.c.l.b16 %v2162
    %v2315 = vunpack.c.h.b16 %v2162
    %v2316 = vunpack.c.l.b16 %v2163
    %v2317 = vunpack.c.h.b16 %v2163
    %v2318 = vunpack.c.l.b16 %v2164
    %v2319 = vunpack.c.h.b16 %v2164
    %v2320 = vunpack.c.l.b16 %v2165
    %v2321 = vunpack.c.h.b16 %v2165
    %v2322 = vunpack.c.l.b16 %v2166
    %v2323 = vunpack.c.h.b16 %v2166
    %v2324 = vunpack.c.l.b16 %v2167
    %v2325 = vunpack.c.h.b16 %v2167
    %v2326 = vunpack.c.l.b16 %v2168
    %v2327 = vunpack.c.h.b16 %v2168
    %v2328 = vunpack.c.l.b16 %v2169
    %v2329 = vunpack.c.h.b16 %v2169
    %v2330 = vunpack.c.l.b16 %v2170
    %v2331 = vunpack.c.h.b16 %v2170
    %v2332 = vunpack.c.l.b16 %v2171
    %v2333 = vunpack.c.h.b16 %v2171
    %v2334 = vunpack.c.l.b16 %v2172
    %v2335 = vunpack.c.h.b16 %v2172
    %v2336 = vunpack.c.l.b16 %v2173
    %v2337 = vunpack.c.h.b16 %v2173
    %v2338 = vunpack.c.l.b16 %v2174
    %v2339 = vunpack.c.h.b16 %v2174
    %v2340 = vunpack.c.l.b16 %v2175
    %v2341 = vunpack.c.h.b16 %v2175
    %v2342 = vunpack.c.l.b16 %v2176
    %v2343 = vunpack.c.h.b16 %v2176
    %v2344 = vunpack.c.l.b16 %v2177
    %v2345 = vunpack.c.h.b16 %v2177
    %v2346 = vunpack.c.l.b16 %v2178
    %v2347 = vunpack.c.h.b16 %v2178
    %v2348 = vunpack.c.l.b16 %v2179
    %v2349 = vunpack.c.h.b16 %v2179
    %v2350 = vunpack.c.l.b16 %v2180
    %v2351 = vunpack.c.h.b16 %v2180
    %v2352 = vunpack.c.l.b16 %v2181
    %v2353 = vunpack.c.h.b16 %v2181
    %v2354 = vunpack.c.l.b16 %v2182
    %v2355 = vunpack.c.h.b16 %v2182
    %v2356 = vunpack.c.l.b16 %v2183
    %v2357 = vunpack.c.h.b16 %v2183
    %v2358 = vunpack.c.l.b16 %v2184
    %v2359 = vunpack.c.h.b16 %v2184
    %v2360 = vunpack.c.l.b16 %v2185
    %v2361 = vunpack.c.h.b16 %v2185
    %v2362 = vunpack.c.l.b16 %v2186
    %v2363 = vunpack.c.h.b16 %v2186
    %v2364 = vunpack.c.l.b16 %v2187
    %v2365 = vunpack.c.h.b16 %v2187
    %v2366 = vunpack.c.l.b16 %v2188
    %v2367 = vunpack.c.h.b16 %v2188
    %v2368 = vunpack.c.l.b16 %v2189
    %v2369 = vunpack.c.h.b16 %v2189
    %v2370 = vunpack.c.l.b16 %v2190
    %v2371 = vunpack.c.h.b16 %v2190
    %v2372 = vunpack.c.l.b16 %v2191
    %v2373 = vunpack.c.h.b16 %v2191
    %v2374 = vunpack.c.l.b16 %v2192
    %v2375 = vunpack.c.h.b16 %v2192
    %v2376 = vunpack.c.l.b16 %v2193
    %v2377 = vunpack.c.h.b16 %v2193
    %v2378 = vunpack.c.l.b16 %v2194
    %v2379 = vunpack.c.h.b16 %v2194
    %v2380 = vunpack.c.l.b16 %v2195
    %v2381 = vunpack.c.h.b16 %v2195
    %v2382 = vunpack.c.l.b16 %v2196
    %v2383 = vunpack.c.h.b16 %v2196
    %v2384 = vunpack.c.l.b16 %v2197
    %v2385 = vunpack.c.h.b16 %v2197
    %v2386 = vunpack.c.l.b16 %v2198
    %v2387 = vunpack.c.h.b16 %v2198
    %v2388 = vunpack.c.l.b16 %v2199
    %v2389 = vunpack.c.h.b16 %v2199
    %v2390 = vunpack.c.l.b16 %v2200
    %v2391 = vunpack.c.h.b16 %v2200
    %v2392 = vunpack.c.l.b16 %v2201
    %v2393 = vunpack.c.h.b16 %v2201
    %v2394 = vunpack.c.l.b16 %v2202
    %v2395 = vunpack.c.h.b16 %v2202
    %v2396 = vunpack.c.l.b16 %v2203
    %v2397 = vunpack.c.h.b16 %v2203
    %v2398 = vunpack.c.l.b16 %v2204
    %v2399 = vunpack.c.h.b16 %v2204
    %v2400 = vunpack.c.l.b16 %v2205
    %v2401 = vunpack.c.h.b16 %v2205
    %v2402 = vunpack.c.l.b16 %v2206
    %v2403 = vunpack.c.h.b16 %v2206
    %v2404 = vunpack.c.l.b16 %v2207
    %v2405 = vunpack.c.h.b16 %v2207
    %v2406 = vunpack.c.l.b16 %v2208
    %v2407 = vunpack.c.h.b16 %v2208
    %v2408 = vunpack.c.l.b16 %v2209
    %v2409 = vunpack.c.h.b16 %v2209
    %v2410 = vunpack.c.l.b16 %v2210
    %v2411 = vunpack.c.h.b16 %v2210
    %v2412 = vunpack.c.l.b16 %v2211
    %v2413 = vunpack.c.h.b16 %v2211
    %v2414 = vunpack.c.l.b16 %v2212
    %v2415 = vunpack.c.h.b16 %v2212
    %v2416 = vunpack.c.l.b16 %v2213
    %v2417 = vunpack.c.h.b16 %v2213
    %v2418 = vpack.c.b16 %v2292, %v2290
    %v2419 = vpack.c.b16 %v2293, %v2291
    %v2420 = vpack.c.b16 %v2296, %v2294
    %v2421 = vpack.c.b16 %v2297, %v2295
    %v2422 = vpack.c.b16 %v2300, %v2298
    %v2423 = vpack.c.b16 %v2301, %v2299
    %v2424 = vpack.c.b16 %v2304, %v2302
    %v2425 = vpack.c.b16 %v2305, %v2303
    %v2426 = vpack.c.b16 %v2308, %v2306
    %v2427 = vpack.c.b16 %v2309, %v2307
    %v2428 = vpack.c.b16 %v2312, %v2310
    %v2429 = vpack.c.b16 %v2313, %v2311
    %v2430 = vpack.c.b16 %v2316, %v2314
    %v2431 = vpack.c.b16 %v2317, %v2315
    %v2432 = vpack.c.b16 %v2320, %v2318
    %v2433 = vpack.c.b16 %v2321, %v2319
    %v2434 = vpack.c.b16 %v2324, %v2322
    %v2435 = vpack.c.b16 %v2325, %v2323
    %v2436 = vpack.c.b16 %v2328, %v2326
    %v2437 = vpack.c.b16 %v2329, %v2327
    %v2438 = vpack.c.b16 %v2332, %v2330
    %v2439 = vpack.c.b16 %v2333, %v2331
    %v2440 = vpack.c.b16 %v2336, %v2334
    %v2441 = vpack.c.b16 %v2337, %v2335
    %v2442 = vpack.c.b16 %v2340, %v2338
    %v2443 = vpack.c.b16 %v2341, %v2339
    %v2444 = vpack.c.b16 %v2344, %v2342
    %v2445 = vpack.c.b16 %v2345, %v2343
    %v2446 = vpack.c.b16 %v2348, %v2346
    %v2447 = vpack.c.b16 %v2349, %v2347
    %v2448 = vpack.c.b16 %v2352, %v2350
    %v2449 = vpack.c.b16 %v2353, %v2351
    %v2450 = vpack.c.b16 %v2356, %v2354
    %v2451 = vpack.c.b16 %v2357, %v2355
    %v2452 = vpack.c.b16 %v2360, %v2358
    %v2453 = vpack.c.b16 %v2361, %v2359
    %v2454 = vpack.c.b16 %v2364, %v2362
    %v2455 = vpack.c.b16 %v2365, %v2363
    %v2456 = vpack.c.b16 %v2368, %v2366
    %v2457 = vpack.c.b16 %v2369, %v2367
    %v2458 = vpack.c.b16 %v2372, %v2370
    %v2459 = vpack.c.b16 %v2373, %v2371
    %v2460 = vpack.c.b16 %v2376, %v2374
    %v2461 = vpack.c.b16 %v2377, %v2375
    %v2462 = vpack.c.b16 %v2380, %v2378
    %v2463 = vpack.c.b16 %v2381, %v2379
    %v2464 = vpack.c.b16 %v2384, %v2382
    %v2465 = vpack.c.b16 %v2385, %v2383
    %v2466 = vpack.c.b16 %v2388, %v2386
    %v2467 = vpack.c.b16 %v2389, %v2387
    %v2468 = vpack.c.b16 %v2392, %v2390
    %v2469 = vpack.c.b16 %v2393, %v2391
    %v2470 = vpack.c.b16 %v2396, %v2394
    %v2471 = vpack.c.b16 %v2397, %v2395
    %v2472 = vpack.c.b16 %v2400, %v2398
    %v2473 = vpack.c.b16 %v2401, %v2399
    %v2474 = vpack.c.b16 %v2404, %v2402
    %v2475 = vpack.c.b16 %v2405, %v2403
    %v2476 = vpack.c.b16 %v2408, %v2406
    %v2477 = vpack.c.b16 %v2409, %v2407
    %v2478 = vpack.c.b16 %v2412, %v2410
    %v2479 = vpack.c.b16 %v2413, %v2411
    %v2480 = vpack.c.b16 %v2416, %v2414
    %v2481 = vpack.c.b16 %v2417, %v2415
    %2546 = vmatprep.subr.bf16.mxu0 %v2419
    %2547 = vmatpush1.bf16.msra.mxu0 %v2418
    %2548 = vmatprep.subr.bf16.mxu0 %v2421
    %2549 = vmatpush1.bf16.msra.mxu0 %v2420
    %2550 = vmatprep.subr.bf16.mxu0 %v2423
    %2551 = vmatpush1.bf16.msra.mxu0 %v2422
    %2552 = vmatprep.subr.bf16.mxu0 %v2425
    %2553 = vmatpush1.bf16.msra.mxu0 %v2424
    %2554 = vmatprep.subr.bf16.mxu0 %v2427
    %2555 = vmatpush1.bf16.msra.mxu0 %v2426
    %2556 = vmatprep.subr.bf16.mxu0 %v2429
    %2557 = vmatpush1.bf16.msra.mxu0 %v2428
    %2558 = vmatprep.subr.bf16.mxu0 %v2431
    %2559 = vmatpush1.bf16.msra.mxu0 %v2430
    %2560 = vmatprep.subr.bf16.mxu0 %v2433
    %2561 = vmatpush1.bf16.msra.mxu0 %v2432
    %2562 = vmatprep.subr.bf16.mxu0 %v2435
    %2563 = vmatpush1.bf16.msra.mxu0 %v2434
    %2564 = vmatprep.subr.bf16.mxu0 %v2437
    %2565 = vmatpush1.bf16.msra.mxu0 %v2436
    %2566 = vmatprep.subr.bf16.mxu0 %v2439
    %2567 = vmatpush1.bf16.msra.mxu0 %v2438
    %2568 = vmatprep.subr.bf16.mxu0 %v2441
    %2569 = vmatpush1.bf16.msra.mxu0 %v2440
    %2570 = vmatprep.subr.bf16.mxu0 %v2443
    %2571 = vmatpush1.bf16.msra.mxu0 %v2442
    %2572 = vmatprep.subr.bf16.mxu0 %v2445
    %2573 = vmatpush1.bf16.msra.mxu0 %v2444
    %2574 = vmatprep.subr.bf16.mxu0 %v2447
    %2575 = vmatpush1.bf16.msra.mxu0 %v2446
    %2576 = vmatprep.subr.bf16.mxu0 %v2449
    %2577 = vmatpush1.bf16.msra.mxu0 %v2448
    %2578 = vmatprep.mubr.bf16.mxu0 %v2147
    %2579 = vmatmul.mubr.bf16.gmra.mrb[0].mxu0 %v2146
    %v2580 = vpop.f32.mrb[0].mxu0
    %v2581 = vadd.f32 %v2219, %v2580
    %v2582 = vpop.f32.mrb[0].mxu0
    %v2583 = vadd.f32 %v2223, %v2582
    %v2584 = vpop.f32.mrb[0].mxu0
    %v2585 = vpop.f32.mrb[0].mxu0
    %2586 = vdwg.mxu0
    %2587 = vmatprep.subr.bf16.mxu0 %v2451
    %2588 = vmatpush1.bf16.msra.mxu0 %v2450
    %2589 = vmatprep.subr.bf16.mxu0 %v2453
    %2590 = vmatpush1.bf16.msra.mxu0 %v2452
    %2591 = vmatprep.subr.bf16.mxu0 %v2455
    %2592 = vmatpush1.bf16.msra.mxu0 %v2454
    %2593 = vmatprep.subr.bf16.mxu0 %v2457
    %2594 = vmatpush1.bf16.msra.mxu0 %v2456
    %2595 = vmatprep.subr.bf16.mxu0 %v2459
    %2596 = vmatpush1.bf16.msra.mxu0 %v2458
    %2597 = vmatprep.subr.bf16.mxu0 %v2461
    %2598 = vmatpush1.bf16.msra.mxu0 %v2460
    %2599 = vmatprep.subr.bf16.mxu0 %v2463
    %2600 = vmatpush1.bf16.msra.mxu0 %v2462
    %2601 = vmatprep.subr.bf16.mxu0 %v2465
    %2602 = vmatpush1.bf16.msra.mxu0 %v2464
    %2603 = vmatprep.subr.bf16.mxu0 %v2467
    %2604 = vmatpush1.bf16.msra.mxu0 %v2466
    %2605 = vmatprep.subr.bf16.mxu0 %v2469
    %2606 = vmatpush1.bf16.msra.mxu0 %v2468
    %2607 = vmatprep.subr.bf16.mxu0 %v2471
    %2608 = vmatpush1.bf16.msra.mxu0 %v2470
    %2609 = vmatprep.subr.bf16.mxu0 %v2473
    %2610 = vmatpush1.bf16.msra.mxu0 %v2472
    %2611 = vmatprep.subr.bf16.mxu0 %v2475
    %2612 = vmatpush1.bf16.msra.mxu0 %v2474
    %2613 = vmatprep.subr.bf16.mxu0 %v2477
    %2614 = vmatpush1.bf16.msra.mxu0 %v2476
    %2615 = vmatprep.subr.bf16.mxu0 %v2479
    %2616 = vmatpush1.bf16.msra.mxu0 %v2478
    %2617 = vmatprep.subr.bf16.mxu0 %v2481
    %2618 = vmatpush1.bf16.msra.mxu0 %v2480
    %2619 = vmatprep.mubr.bf16.mxu0 %v2149
    %2620 = vmatmul.mubr.bf16.gmra.mrb[0].mxu0 %v2148
    %v2621 = vpop.f32.mrb[0].mxu0
    %v2622 = vadd.f32 %v2581, %v2621
    %v2623 = vpop.f32.mrb[0].mxu0
    %v2624 = vadd.f32 %v2583, %v2623
    %v2625 = vpop.f32.mrb[0].mxu0
    %v2626 = vpop.f32.mrb[0].mxu0
    %2627 = vdwg.mxu0
    %v2628 = vld [vmem:[%s7] sm:$0x3]
    %v2629 = vld [vmem:[%s8] sm:$0x3]
    %v2630 = vsel %vm1994, %v2622, 0.0
    %v2631 = vrot.slane %v2630, 4
    %v2632 = vadd.f32 %v2630, %v2631
    %v2633 = vrot.slane %v2632, 2
    %v2634 = vadd.f32 %v2632, %v2633
    %v2635 = vrot.slane %v2634, 1
    %v2636 = vadd.f32 %v2634, %v2635
    %v2637 = vsel %vm1994, %v2624, 0.0
    %v2638 = vrot.slane %v2637, 4
    %v2639 = vadd.f32 %v2637, %v2638
    %v2640 = vrot.slane %v2639, 2
    %v2641 = vadd.f32 %v2639, %v2640
    %v2642 = vrot.slane %v2641, 1
    %v2643 = vadd.f32 %v2641, %v2642
    %v2644 = vmul.f32 %v2636, %v2023
    %v2645 = vmul.f32 %v2643, %v2023
    %v2646 = vmul.f32 %v2622, %v2622
    %v2647 = vmul.f32 %v2624, %v2624
    %v2648 = vsel %vm1994, %v2646, 0.0
    %v2649 = vrot.slane %v2648, 4
    %v2650 = vadd.f32 %v2648, %v2649
    %v2651 = vrot.slane %v2650, 2
    %v2652 = vadd.f32 %v2650, %v2651
    %v2653 = vrot.slane %v2652, 1
    %v2654 = vadd.f32 %v2652, %v2653
    %v2655 = vsel %vm1994, %v2647, 0.0
    %v2656 = vrot.slane %v2655, 4
    %v2657 = vadd.f32 %v2655, %v2656
    %v2658 = vrot.slane %v2657, 2
    %v2659 = vadd.f32 %v2657, %v2658
    %v2660 = vrot.slane %v2659, 1
    %v2661 = vadd.f32 %v2659, %v2660
    %v2662 = vmul.f32 %v2654, %v2023
    %v2663 = vmul.f32 %v2661, %v2023
    %v2664 = vmul.f32 %v2644, %v2644
    %v2665 = vmul.f32 %v2645, %v2645
    %v2666 = vsub.f32 %v2662, %v2664
    %v2667 = vsub.f32 %v2663, %v2665
    %v2668 = vmax.f32 %v2666, 0.0
    %v2669 = vmax.f32 %v2667, 0.0
    %v2670 = vsub.f32 %v2622, %v2644
    %v2671 = vsub.f32 %v2624, %v2645
    %v2672 = vadd.f32 %v2668, 1e-05
    %v2673 = vadd.f32 %v2669, 1e-05
    %v2674 = vrsqrt.pop %v2672
    %v2675 = vrsqrt.pop %v2673
    %v2676 = vmul.f32 %v2670, %v2674
    %v2677 = vmul.f32 %v2671, %v2675
    %v2679 = vlaneseq
    %v2680 = vshrl.u32 %v2679, 7
    %v2681 = vsub.s32 0, %v2680
    %v2682 = vrot.slane %v2628, %v2681
    %v2683 = vlaneseq
    %v2684 = vshrl.u32 %v2683, 7
    %v2685 = vsub.s32 1, %v2684
    %v2686 = vrot.slane %v2628, %v2685
    %v2689 = vmul.f32 %v2676, %v2682
    %v2690 = vmul.f32 %v2677, %v2686
    %v2692 = vlaneseq
    %v2693 = vshrl.u32 %v2692, 7
    %v2694 = vsub.s32 0, %v2693
    %v2695 = vrot.slane %v2629, %v2694
    %v2696 = vlaneseq
    %v2697 = vshrl.u32 %v2696, 7
    %v2698 = vsub.s32 1, %v2697
    %v2699 = vrot.slane %v2629, %v2698
    %v2702 = vadd.f32 %v2689, %v2695
    %v2703 = vadd.f32 %v2690, %v2699
    %v2704 = vmax.f32 %v2702, 0.0
    %v2705 = vmax.f32 %v2703, 0.0
    %v2706 = vpack.c.bf16 %v2704, %v2704
    %v2707 = vpack.c.bf16 %v2705, %v2705
    %v2708 = vld [vmem:[%s9] sm:$0xf]
    %v2709 = vld [vmem:[%s9 + $0x4] sm:$0xf]
    %v2710 = vld [vmem:[%s9 + $0x8] sm:$0xf]
    %v2711 = vld [vmem:[%s9 + $0xc] sm:$0xf]
    %v2712 = vld [vmem:[%s9 + $0x10] sm:$0xf]
    %v2713 = vld [vmem:[%s9 + $0x14] sm:$0xf]
    %v2714 = vld [vmem:[%s9 + $0x18] sm:$0xf]
    %v2715 = vld [vmem:[%s9 + $0x1c] sm:$0xf]
    %v2716 = vld [vmem:[%s9 + $0x20] sm:$0xf]
    %v2717 = vld [vmem:[%s9 + $0x24] sm:$0xf]
    %v2718 = vld [vmem:[%s9 + $0x28] sm:$0xf]
    %v2719 = vld [vmem:[%s9 + $0x2c] sm:$0xf]
    %v2720 = vld [vmem:[%s9 + $0x30] sm:$0xf]
    %v2721 = vld [vmem:[%s9 + $0x34] sm:$0xf]
    %v2722 = vld [vmem:[%s9 + $0x38] sm:$0xf]
    %v2723 = vld [vmem:[%s9 + $0x3c] sm:$0xf]
    %v2724 = vld [vmem:[%s9 + $0x40] sm:$0xf]
    %v2725 = vld [vmem:[%s9 + $0x44] sm:$0xf]
    %v2726 = vld [vmem:[%s9 + $0x48] sm:$0xf]
    %v2727 = vld [vmem:[%s9 + $0x4c] sm:$0xf]
    %v2728 = vld [vmem:[%s9 + $0x50] sm:$0xf]
    %v2729 = vld [vmem:[%s9 + $0x54] sm:$0xf]
    %v2730 = vld [vmem:[%s9 + $0x58] sm:$0xf]
    %v2731 = vld [vmem:[%s9 + $0x5c] sm:$0xf]
    %v2732 = vld [vmem:[%s9 + $0x60] sm:$0xf]
    %v2733 = vld [vmem:[%s9 + $0x64] sm:$0xf]
    %v2734 = vld [vmem:[%s9 + $0x68] sm:$0xf]
    %v2735 = vld [vmem:[%s9 + $0x6c] sm:$0xf]
    %v2736 = vld [vmem:[%s9 + $0x70] sm:$0xf]
    %v2737 = vld [vmem:[%s9 + $0x74] sm:$0xf]
    %v2738 = vld [vmem:[%s9 + $0x78] sm:$0xf]
    %v2739 = vld [vmem:[%s9 + $0x7c] sm:$0xf]
    %v2740 = vld [vmem:[%s10] sm:$0x1]
    %v2742 = vlaneseq
    %v2743 = vshrl.u32 %v2742, 7
    %v2744 = vsub.s32 0, %v2743
    %v2745 = vrot.slane %v2740, %v2744
    %v2779 = vunpack.c.l.b16 %v2708
    %v2780 = vunpack.c.l.b16 %v2709
    %v2781 = vunpack.c.l.b16 %v2710
    %v2782 = vunpack.c.l.b16 %v2711
    %v2783 = vunpack.c.l.b16 %v2712
    %v2784 = vunpack.c.l.b16 %v2713
    %v2785 = vunpack.c.l.b16 %v2714
    %v2786 = vunpack.c.l.b16 %v2715
    %v2787 = vunpack.c.l.b16 %v2716
    %v2788 = vunpack.c.l.b16 %v2717
    %v2789 = vunpack.c.l.b16 %v2718
    %v2790 = vunpack.c.l.b16 %v2719
    %v2791 = vunpack.c.l.b16 %v2720
    %v2792 = vunpack.c.l.b16 %v2721
    %v2793 = vunpack.c.l.b16 %v2722
    %v2794 = vunpack.c.l.b16 %v2723
    %v2795 = vunpack.c.l.b16 %v2724
    %v2796 = vunpack.c.l.b16 %v2725
    %v2797 = vunpack.c.l.b16 %v2726
    %v2798 = vunpack.c.l.b16 %v2727
    %v2799 = vunpack.c.l.b16 %v2728
    %v2800 = vunpack.c.l.b16 %v2729
    %v2801 = vunpack.c.l.b16 %v2730
    %v2802 = vunpack.c.l.b16 %v2731
    %v2803 = vunpack.c.l.b16 %v2732
    %v2804 = vunpack.c.l.b16 %v2733
    %v2805 = vunpack.c.l.b16 %v2734
    %v2806 = vunpack.c.l.b16 %v2735
    %v2807 = vunpack.c.l.b16 %v2736
    %v2808 = vunpack.c.l.b16 %v2737
    %v2809 = vunpack.c.l.b16 %v2738
    %v2810 = vunpack.c.l.b16 %v2739
    %v2811 = vpack.c.b16 %v2780, %v2779
    %v2812 = vpack.c.b16 %v2782, %v2781
    %v2813 = vpack.c.b16 %v2784, %v2783
    %v2814 = vpack.c.b16 %v2786, %v2785
    %v2815 = vpack.c.b16 %v2788, %v2787
    %v2816 = vpack.c.b16 %v2790, %v2789
    %v2817 = vpack.c.b16 %v2792, %v2791
    %v2818 = vpack.c.b16 %v2794, %v2793
    %v2819 = vpack.c.b16 %v2796, %v2795
    %v2820 = vpack.c.b16 %v2798, %v2797
    %v2821 = vpack.c.b16 %v2800, %v2799
    %v2822 = vpack.c.b16 %v2802, %v2801
    %v2823 = vpack.c.b16 %v2804, %v2803
    %v2824 = vpack.c.b16 %v2806, %v2805
    %v2825 = vpack.c.b16 %v2808, %v2807
    %v2826 = vpack.c.b16 %v2810, %v2809
    %2843 = vmatprep.subr.bf16.mxu0 0
    %2844 = vmatpush1.bf16.msra.mxu0 %v2811
    %2845 = vmatprep.subr.bf16.mxu0 0
    %2846 = vmatpush1.bf16.msra.mxu0 %v2812
    %2847 = vmatprep.subr.bf16.mxu0 0
    %2848 = vmatpush1.bf16.msra.mxu0 %v2813
    %2849 = vmatprep.subr.bf16.mxu0 0
    %2850 = vmatpush1.bf16.msra.mxu0 %v2814
    %2851 = vmatprep.subr.bf16.mxu0 0
    %2852 = vmatpush1.bf16.msra.mxu0 %v2815
    %2853 = vmatprep.subr.bf16.mxu0 0
    %2854 = vmatpush1.bf16.msra.mxu0 %v2816
    %2855 = vmatprep.subr.bf16.mxu0 0
    %2856 = vmatpush1.bf16.msra.mxu0 %v2817
    %2857 = vmatprep.subr.bf16.mxu0 0
    %2858 = vmatpush1.bf16.msra.mxu0 %v2818
    %2859 = vmatprep.subr.bf16.mxu0 0
    %2860 = vmatpush1.bf16.msra.mxu0 %v2819
    %2861 = vmatprep.subr.bf16.mxu0 0
    %2862 = vmatpush1.bf16.msra.mxu0 %v2820
    %2863 = vmatprep.subr.bf16.mxu0 0
    %2864 = vmatpush1.bf16.msra.mxu0 %v2821
    %2865 = vmatprep.subr.bf16.mxu0 0
    %2866 = vmatpush1.bf16.msra.mxu0 %v2822
    %2867 = vmatprep.subr.bf16.mxu0 0
    %2868 = vmatpush1.bf16.msra.mxu0 %v2823
    %2869 = vmatprep.subr.bf16.mxu0 0
    %2870 = vmatpush1.bf16.msra.mxu0 %v2824
    %2871 = vmatprep.subr.bf16.mxu0 0
    %2872 = vmatpush1.bf16.msra.mxu0 %v2825
    %2873 = vmatprep.subr.bf16.mxu0 0
    %2874 = vmatpush1.bf16.msra.mxu0 %v2826
    %2875 = vmatprep.mubr.bf16.mxu0 %v2707
    %2876 = vmatmul.mubr.bf16.gmra.mrb[0].mxu0 %v2706
    %v2877 = vpop.f32.mrb[0].mxu0
    %v2878 = vadd.f32 %v2745, %v2877
    %v2879 = vpop.f32.mrb[0].mxu0
    %v2880 = vpop.f32.mrb[0].mxu0
    %v2881 = vpop.f32.mrb[0].mxu0
    %2882 = vdwg.mxu0
    %v2883 = vld [vmem:[%s11] sm:$0x1]
    %v2884 = vld [vmem:[%s12] sm:$0x1]
    %v2885 = vsel %vm1994, %v2878, 0.0
    %v2886 = vrot.slane %v2885, 4
    %v2887 = vadd.f32 %v2885, %v2886
    %v2888 = vrot.slane %v2887, 2
    %v2889 = vadd.f32 %v2887, %v2888
    %v2890 = vrot.slane %v2889, 1
    %v2891 = vadd.f32 %v2889, %v2890
    %v2892 = vmul.f32 %v2891, %v2023
    %v2893 = vmul.f32 %v2878, %v2878
    %v2894 = vsel %vm1994, %v2893, 0.0
    %v2895 = vrot.slane %v2894, 4
    %v2896 = vadd.f32 %v2894, %v2895
    %v2897 = vrot.slane %v2896, 2
    %v2898 = vadd.f32 %v2896, %v2897
    %v2899 = vrot.slane %v2898, 1
    %v2900 = vadd.f32 %v2898, %v2899
    %v2901 = vmul.f32 %v2900, %v2023
    %v2902 = vmul.f32 %v2892, %v2892
    %v2903 = vsub.f32 %v2901, %v2902
    %v2904 = vmax.f32 %v2903, 0.0
    %v2905 = vsub.f32 %v2878, %v2892
    %v2906 = vadd.f32 %v2904, 1e-05
    %v2907 = vrsqrt.pop %v2906
    %v2908 = vmul.f32 %v2905, %v2907
    %v2910 = vlaneseq
    %v2911 = vshrl.u32 %v2910, 7
    %v2912 = vsub.s32 0, %v2911
    %v2913 = vrot.slane %v2883, %v2912
    %v2915 = vmul.f32 %v2908, %v2913
    %v2917 = vlaneseq
    %v2918 = vshrl.u32 %v2917, 7
    %v2919 = vsub.s32 0, %v2918
    %v2920 = vrot.slane %v2884, %v2919
    %v2922 = vadd.f32 %v2915, %v2920
    %v2923 = vmax.f32 %v2922, 0.0
    %v2924 = vpack.c.bf16 %v2923, %v2923
    %v2925 = vld [vmem:[%s13] sm:$0xf]
    %v2926 = vld [vmem:[%s13 + $0x4] sm:$0xf]
    %v2927 = vld [vmem:[%s13 + $0x8] sm:$0xf]
    %v2928 = vld [vmem:[%s13 + $0xc] sm:$0xf]
    %v2929 = vld [vmem:[%s13 + $0x10] sm:$0xf]
    %v2930 = vld [vmem:[%s13 + $0x14] sm:$0xf]
    %v2931 = vld [vmem:[%s13 + $0x18] sm:$0xf]
    %v2932 = vld [vmem:[%s13 + $0x1c] sm:$0xf]
    %v2933 = vld [vmem:[%s13 + $0x20] sm:$0xf]
    %v2934 = vld [vmem:[%s13 + $0x24] sm:$0xf]
    %v2935 = vld [vmem:[%s13 + $0x28] sm:$0xf]
    %v2936 = vld [vmem:[%s13 + $0x2c] sm:$0xf]
    %v2937 = vld [vmem:[%s13 + $0x30] sm:$0xf]
    %v2938 = vld [vmem:[%s13 + $0x34] sm:$0xf]
    %v2939 = vld [vmem:[%s13 + $0x38] sm:$0xf]
    %v2940 = vld [vmem:[%s13 + $0x3c] sm:$0xf]
    %v2941 = vld [vmem:[%s14] sm:$0x1]
    %v2943 = vlaneseq
    %v2944 = vshrl.u32 %v2943, 7
    %v2945 = vsub.s32 0, %v2944
    %v2946 = vrot.slane %v2941, %v2945
    %v2964 = vunpack.c.l.b16 %v2925
    %v2965 = vunpack.c.l.b16 %v2926
    %v2966 = vunpack.c.l.b16 %v2927
    %v2967 = vunpack.c.l.b16 %v2928
    %v2968 = vunpack.c.l.b16 %v2929
    %v2969 = vunpack.c.l.b16 %v2930
    %v2970 = vunpack.c.l.b16 %v2931
    %v2971 = vunpack.c.l.b16 %v2932
    %v2972 = vunpack.c.l.b16 %v2933
    %v2973 = vunpack.c.l.b16 %v2934
    %v2974 = vunpack.c.l.b16 %v2935
    %v2975 = vunpack.c.l.b16 %v2936
    %v2976 = vunpack.c.l.b16 %v2937
    %v2977 = vunpack.c.l.b16 %v2938
    %v2978 = vunpack.c.l.b16 %v2939
    %v2979 = vunpack.c.l.b16 %v2940
    %v2980 = vpack.c.b16 %v2965, %v2964
    %v2981 = vpack.c.b16 %v2967, %v2966
    %v2982 = vpack.c.b16 %v2969, %v2968
    %v2983 = vpack.c.b16 %v2971, %v2970
    %v2984 = vpack.c.b16 %v2973, %v2972
    %v2985 = vpack.c.b16 %v2975, %v2974
    %v2986 = vpack.c.b16 %v2977, %v2976
    %v2987 = vpack.c.b16 %v2979, %v2978
    %2996 = vmatprep.subr.bf16.mxu0 0
    %2997 = vmatpush1.bf16.msra.mxu0 %v2980
    %2998 = vmatprep.subr.bf16.mxu0 0
    %2999 = vmatpush1.bf16.msra.mxu0 %v2981
    %3000 = vmatprep.subr.bf16.mxu0 0
    %3001 = vmatpush1.bf16.msra.mxu0 %v2982
    %3002 = vmatprep.subr.bf16.mxu0 0
    %3003 = vmatpush1.bf16.msra.mxu0 %v2983
    %3004 = vmatprep.subr.bf16.mxu0 0
    %3005 = vmatpush1.bf16.msra.mxu0 %v2984
    %3006 = vmatprep.subr.bf16.mxu0 0
    %3007 = vmatpush1.bf16.msra.mxu0 %v2985
    %3008 = vmatprep.subr.bf16.mxu0 0
    %3009 = vmatpush1.bf16.msra.mxu0 %v2986
    %3010 = vmatprep.subr.bf16.mxu0 0
    %3011 = vmatpush1.bf16.msra.mxu0 %v2987
    %3012 = vmatprep.subr.bf16.mxu0 0
    %3013 = vmatpush1.bf16.msra.mxu0 0
    %3014 = vmatprep.subr.bf16.mxu0 0
    %3015 = vmatpush1.bf16.msra.mxu0 0
    %3016 = vmatprep.subr.bf16.mxu0 0
    %3017 = vmatpush1.bf16.msra.mxu0 0
    %3018 = vmatprep.subr.bf16.mxu0 0
    %3019 = vmatpush1.bf16.msra.mxu0 0
    %3020 = vmatprep.subr.bf16.mxu0 0
    %3021 = vmatpush1.bf16.msra.mxu0 0
    %3022 = vmatprep.subr.bf16.mxu0 0
    %3023 = vmatpush1.bf16.msra.mxu0 0
    %3024 = vmatprep.subr.bf16.mxu0 0
    %3025 = vmatpush1.bf16.msra.mxu0 0
    %3026 = vmatprep.subr.bf16.mxu0 0
    %3027 = vmatpush1.bf16.msra.mxu0 0
    %3028 = vmatprep.mubr.bf16.mxu0 0
    %3029 = vmatmul.mubr.bf16.gmra.mrb[0].mxu0 %v2924
    %v3030 = vpop.f32.mrb[0].mxu0
    %v3031 = vadd.f32 %v2946, %v3030
    %v3032 = vpop.f32.mrb[0].mxu0
    %v3033 = vpop.f32.mrb[0].mxu0
    %v3034 = vpop.f32.mrb[0].mxu0
    %3035 = vdwg.mxu0
    %v3036 = vlaneseq
    %v3037 = vand.u32 %v3036, 127
    %vm3038 = vcmp.lt.s32.totalorder %v3037, 2
    %v3039 = vsel %vm3038, %v3031, -1e+30
    %v3040 = vsel %vm1994, %v3039, -inf
    %3041 = vmax.xlane.f32.xlu0 %v3040
    %v3042 = vpop.xlane.xlu0 %3041
    %v3043 = vsub.f32 %v3039, %v3042
    %v3044 = vmul.f32 %v3043, 1.442695
    %v3045 = vpow.pop %v3044
    %v3046 = vsel %vm1994, %v3045, 0.0
    %3047 = vadd.xlane.f32.xlu0 %v3046
    %v3048 = vpop.xlane.xlu0 %3047
    %v3049 = vlog2.pop %v3048
    %v3050 = vmul.f32 %v3049, 0.6931472
    %v3051 = vsub.f32 %v3043, %v3050
    %3052 = vst [vmem:[#allocation2] sm:$0x3] %v3051
    // Predicated region
    $region62: #{pointnet_cls_forward.11} parent=1 // pred_check
      _
    $region63: #{pointnet_cls_forward.11} parent=1 // pred_check_branch
      %3054 = sbr.rel (0) target = $region65
    $region64: #{pointnet_cls_forward.11} parent=1 // pred_region
      %s3056 = ssub.s32 32, 32
      %3057 = vsyncadd [#allocation3], %s3056
      %s3059 = sshll.u32 [#allocation2], 4
      %s3060 = int_to_ptr.vmem [resolvable:$true] %s3059
      %3062 = dma.vmem_to_hbm [thread:$0]  %s3060, 32, %s15, [#allocation3]
    $region65: #{pointnet_cls_forward.11} parent=1 // pred_fallthru
      _
    // Predicated region
    $region66: #{pointnet_cls_forward.11} parent=1 // pred_check
      _
    $region67: #{pointnet_cls_forward.11} parent=1 // pred_check_branch
      %3064 = sbr.rel (0) target = $region69
    $region68: #{pointnet_cls_forward.11} parent=1 // pred_region
      %3065 = dma.done [#allocation3], 32
    $region69: #{pointnet_cls_forward.11} parent=1 // pred_fallthru
      _
    %3066 = vsyncpa [#allocation3], 1

</llo_original>
